<compile_context>
chip_gen: v7x
topology: tpu7x:2x2x1
jax: 0.10.0
libtpu: 0.0.40
codegen_flags: <defaults>
</compile_context>

<pallas_src>
import jax
import jax.numpy as jnp
from jax import lax
from jax.experimental import pallas as pl
from jax.experimental.pallas import tpu as pltpu

NEG_SLOPE = 0.01   # nn.LeakyReLU default negative slope
BN_EPS = 1e-5      # nn.BatchNorm2d default eps
VMEM_LIMIT = 32 * 1024 * 1024


# ----------------------------- Pallas kernels ------------------------------

def _make_conv3x3_stats_kernel(H, W):
    """3x3 'same' conv (+bias) for one image, with fused BN batch statistics.

    xs_ref : (1, 3, (H+2)*W, Cin) f32  column-shifted, row-flattened padded input
    w_ref  : (9, Cin, Cout)       bf16 tap-major weights
    b_ref  : (1, Cout)            f32  bias
    y_ref  : (1, H*W, Cout)       f32  conv output rows for this image
    s_ref  : (1, Cout)            f32  running per-channel sum       (resident)
    q_ref  : (1, Cout)            f32  running per-channel sum(x^2)  (resident)
    """

    def kernel(xs_ref, w_ref, b_ref, y_ref, s_ref, q_ref):
        # Zero the resident statistics accumulators on the first grid step.
        @pl.when(pl.program_id(0) == 0)
        def _():
            s_ref[...] = jnp.zeros_like(s_ref)
            q_ref[...] = jnp.zeros_like(q_ref)

        # 9-tap accumulation: each tap is an aligned (H*W, Cin) row window
        # (row offset kh*W, a multiple of 8) of one of the three column-shifted
        # views; operands are cast to bf16 for the MXU, accumulation is f32.
        acc = None
        for kh in range(3):
            for kw in range(3):
                tap = xs_ref[0, kw, kh * W:(kh + H) * W, :]          # (H*W, Cin)
                d = jnp.dot(tap.astype(jnp.bfloat16),
                            w_ref[kh * 3 + kw],
                            preferred_element_type=jnp.float32)      # (H*W, Cout)
                acc = d if acc is None else acc + d
        acc = acc + b_ref[...]                                       # + bias row

        y_ref[0] = acc.astype(y_ref.dtype)
        # Fused BatchNorm batch statistics (biased-variance form).
        s_ref[...] += jnp.sum(acc, axis=0, keepdims=True)
        q_ref[...] += jnp.sum(acc * acc, axis=0, keepdims=True)

    return kernel


def _affine_pair_lrelu_kernel(y_ref, sb_ref, tb_ref, sa_ref, ta_ref,
                              bn_ref, act_ref):
    """bn = sb*y + tb ; act = LeakyReLU(sa*y + ta)   (fused per-channel FMAs)."""
    y = y_ref[...]
    bn_ref[...] = (y * sb_ref[...] + tb_ref[...]).astype(bn_ref.dtype)
    a = y * sa_ref[...] + ta_ref[...]
    act_ref[...] = jnp.where(a >= 0, a, NEG_SLOPE * a).astype(act_ref.dtype)


# ------------------------------- wrappers -----------------------------------

def conv3x3_bn_stats(x_nhwc, w_oihw, bias):
    """3x3 'same' conv + bias with fused per-channel sum / sum-of-squares.

    Returns (y, s, q): y of shape (N, H*W, Cout) f32, s/q of shape (1, Cout).
    """
    N, H, W, Cin = x_nhwc.shape
    Cout = w_oihw.shape[0]
    if W % 8 != 0:
        raise ValueError("conv3x3_bn_stats requires W % 8 == 0 "
                         "(aligned in-kernel tap windows)")

    Hp = H + 2
    x_pad = jnp.pad(x_nhwc.astype(jnp.float32), ((0, 0), (1, 1), (1, 1), (0, 0)))
    # Three thin column-shifted views (kw = 0, 1, 2), each row-flattened to
    # (Hp*W, Cin).  This replaces the old (M, 9*Cin) im2col array; the three
    # row (kh) shifts are resolved in-kernel by aligned row-window loads.
    xs = jnp.stack(
        [x_pad[:, :, kw:kw + W, :].reshape(N, Hp * W, Cin) for kw in range(3)],
        axis=1)                                               # (N, 3, Hp*W, Cin)

    # (Cout, Cin, kh, kw) -> (kh*3+kw, Cin, Cout); bf16 weights feed the MXU.
    w_taps = (jnp.transpose(w_oihw, (2, 3, 1, 0))
              .reshape(9, Cin, Cout).astype(jnp.bfloat16))
    b_row = bias.reshape(1, Cout).astype(jnp.float32)

    flops = 2 * N * H * W * 9 * Cin * Cout
    bytes_accessed = (xs.size * 4 + w_taps.size * 2 + b_row.size * 4
                      + N * H * W * Cout * 4 + 2 * Cout * 4)

    kernel = _make_conv3x3_stats_kernel(H, W)
    y, s, q = pl.pallas_call(
        kernel,
        out_shape=(jax.ShapeDtypeStruct((N, H * W, Cout), jnp.float32),
                   jax.ShapeDtypeStruct((1, Cout), jnp.float32),
                   jax.ShapeDtypeStruct((1, Cout), jnp.float32)),
        grid_spec=pltpu.PrefetchScalarGridSpec(
            num_scalar_prefetch=0,
            grid=(N,),
            in_specs=[
                pl.BlockSpec((1, 3, Hp * W, Cin), lambda n: (n, 0, 0, 0)),
                pl.BlockSpec((9, Cin, Cout), lambda n: (0, 0, 0)),
                pl.BlockSpec((1, Cout), lambda n: (0, 0)),
            ],
            out_specs=(
                pl.BlockSpec((1, H * W, Cout), lambda n: (n, 0, 0)),
                pl.BlockSpec((1, Cout), lambda n: (0, 0)),
                pl.BlockSpec((1, Cout), lambda n: (0, 0)),
            ),
        ),
        compiler_params=pltpu.CompilerParams(
            # the batch axis carries the fused-stats reduction -> "arbitrary"
            dimension_semantics=("arbitrary",),
            vmem_limit_bytes=VMEM_LIMIT),
        cost_estimate=pl.CostEstimate(flops=flops, transcendentals=0,
                                      bytes_accessed=bytes_accessed),
    )(xs, w_taps, b_row)
    return y, s, q


def _lane_pack_factor(m, c):
    """How many consecutive rows to fold into lanes for a 128-wide last dim."""
    if c % 128 == 0:
        return 1
    if c < 128 and 128 % c == 0 and m % (128 // c) == 0:
        return 128 // c
    return 1


def _pick_row_tile(m):
    for t in (512, 256, 128, 64, 32, 16, 8):
        if m % t == 0 and m // t >= 2:      # keep >= 2 grid steps (pipelining)
            return t
    return m


def bn_affine_lrelu(y_rows, mean, inv, gamma, beta):
    """bn = (y - mean) * inv ; act = LeakyReLU(gamma * bn + beta), per channel.

    Returns (bn, act), both (M, C) float32.
    """
    M, C = y_rows.shape
    mean = mean.reshape(1, C)
    inv = inv.reshape(1, C)
    gamma = gamma.reshape(1, C)
    beta = beta.reshape(1, C)

    # Fused per-channel coefficients: the kernel runs two FMAs + one select.
    sb = inv
    tb = -mean * inv
    sa = gamma * inv
    ta = beta - gamma * mean * inv

    # Lane-dense view: fold g consecutive rows into lanes so every store is a
    # full-width vst instead of a C-of-128-lane masked store.
    g = _lane_pack_factor(M, C)
    Mp, Cp = M // g, C * g
    y_p = y_rows.reshape(Mp, Cp)

    def coef(v):
        return jnp.tile(v, (1, g)).astype(jnp.float32)      # (1, Cp)

    tm = _pick_row_tile(Mp)
    row_spec = pl.BlockSpec((1, Cp), lambda i: (0, 0))
    blk_spec = pl.BlockSpec((tm, Cp), lambda i: (i, 0))
    bn_p, act_p = pl.pallas_call(
        _affine_pair_lrelu_kernel,
        out_shape=(jax.ShapeDtypeStruct((Mp, Cp), jnp.float32),
                   jax.ShapeDtypeStruct((Mp, Cp), jnp.float32)),
        grid_spec=pltpu.PrefetchScalarGridSpec(
            num_scalar_prefetch=0,
            grid=(Mp // tm,),
            in_specs=[blk_spec, row_spec, row_spec, row_spec, row_spec],
            out_specs=(blk_spec, blk_spec),
        ),
        compiler_params=pltpu.CompilerParams(
            dimension_semantics=("parallel",),
            vmem_limit_bytes=VMEM_LIMIT),
    )(y_p, coef(sb), coef(tb), coef(sa), coef(ta))
    return bn_p.reshape(M, C), act_p.reshape(M, C)


def conv_block_forward(x_nchw, params):
    """Pallas ConvBlock.forward.  Returns (out, [bn1, bn2]) in NCHW layout."""
    N, Cin, H, W = x_nchw.shape
    Cout = params["w1"].shape[0]
    M = N * H * W
    x = jnp.transpose(x_nchw, (0, 2, 3, 1))                     # NHWC

    # conv1 (+ fused batch statistics)
    y1, s1, q1 = conv3x3_bn_stats(x, params["w1"], params["b1"])
    mean1 = s1 / M
    # Biased variance via E[x^2]-E[x]^2 (f32 accumulation; clamped against
    # catastrophic cancellation for large M / large magnitudes).
    var1 = jnp.maximum(q1 / M - mean1 * mean1, 0.0)
    inv1 = lax.rsqrt(var1 + BN_EPS)
    bn1, act1 = bn_affine_lrelu(y1.reshape(M, Cout), mean1, inv1,
                                params["gamma1"], params["beta1"])

    # Dropout: inference-mode identity.
    # TODO(synk): training-mode stochastic dropout (pltpu.prng_random_bits).

    # conv2 (+ fused batch statistics)
    y2, s2, q2 = conv3x3_bn_stats(act1.reshape(N, H, W, Cout),
                                  params["w2"], params["b2"])
    mean2 = s2 / M
    var2 = jnp.maximum(q2 / M - mean2 * mean2, 0.0)
    inv2 = lax.rsqrt(var2 + BN_EPS)
    bn2, act2 = bn_affine_lrelu(y2.reshape(M, Cout), mean2, inv2,
                                params["gamma2"], params["beta2"])

    def to_nchw(rows):
        return jnp.transpose(rows.reshape(N, H, W, Cout), (0, 3, 1, 2))

    return to_nchw(act2), [to_nchw(bn1), to_nchw(bn2)]


# ------------------------- pure-JAX reference (check) -----------------------

def reference_forward(x_nchw, params):
    def conv(x, w, b):
        y = lax.conv_general_dilated(x, w, (1, 1), "SAME",
                                     dimension_numbers=("NCHW", "OIHW", "NCHW"))
        return y + b[None, :, None, None]

    def bn(x):
        mean = jnp.mean(x, axis=(0, 2, 3), keepdims=True)
        var = jnp.mean((x - mean) ** 2, axis=(0, 2, 3), keepdims=True)
        return (x - mean) * lax.rsqrt(var + BN_EPS)

    def lrelu(x):
        return jnp.where(x >= 0, x, NEG_SLOPE * x)

    y1 = conv(x_nchw, params["w1"], params["b1"])
    bn1 = bn(y1)
    out = lrelu(params["gamma1"][None, :, None, None] * bn1
                + params["beta1"][None, :, None, None])
    y2 = conv(out, params["w2"], params["b2"])
    bn2 = bn(y2)
    out = lrelu(params["gamma2"][None, :, None, None] * bn2
                + params["beta2"][None, :, None, None])
    return out, [bn1, bn2]


# ---------------------------------- main -------------------------------------

if __name__ == "__main__":
    N, Cin, Cout, H, W = 2, 4, 8, 16, 16   # dropout_p unused (inference identity)

    key = jax.random.PRNGKey(0)
    ks = jax.random.split(key, 9)
    params = {
        "w1": jax.random.normal(ks[0], (Cout, Cin, 3, 3), jnp.float32) * 0.2,
        "b1": jax.random.normal(ks[1], (Cout,), jnp.float32) * 0.1,
        "gamma1": 1.0 + 0.1 * jax.random.normal(ks[2], (Cout,), jnp.float32),
        "beta1": 0.1 * jax.random.normal(ks[3], (Cout,), jnp.float32),
        "w2": jax.random.normal(ks[4], (Cout, Cout, 3, 3), jnp.float32) * 0.2,
        "b2": jax.random.normal(ks[5], (Cout,), jnp.float32) * 0.1,
        "gamma2": 1.0 + 0.1 * jax.random.normal(ks[6], (Cout,), jnp.float32),
        "beta2": 0.1 * jax.random.normal(ks[7], (Cout,), jnp.float32),
    }
    x = jax.random.normal(ks[8], (N, Cin, H, W), jnp.float32)

    fwd = jax.jit(conv_block_forward)
    out, bn_outputs = jax.block_until_ready(fwd(x, params))
    out_ref, bn_ref = reference_forward(x, params)

    assert out.shape == (N, Cout, H, W)
    assert bn_outputs[0].shape == (N, Cout, H, W)
    assert bn_outputs[1].shape == (N, Cout, H, W)
    # Tolerances reflect bf16 MXU operands (per perf review) against the
    # pure-f32 reference; all BN / affine / LeakyReLU math is f32.
    assert jnp.allclose(out, out_ref, atol=5e-2, rtol=2e-2)
    assert jnp.allclose(bn_outputs[0], bn_ref[0], atol=5e-2, rtol=2e-2)
    assert jnp.allclose(bn_outputs[1], bn_ref[1], atol=5e-2, rtol=2e-2)

    print("KERNEL_OK")
</pallas_src>

<mosaic_0001>
module attributes {stable_mosaic.version = 11 : i64} {
  func.func @kernel(%arg0: i32, %arg1: memref<1x3x288x4xf32, #tpu.memory_space<vmem>>, %arg2: memref<9x4x8xbf16, #tpu.memory_space<vmem>>, %arg3: memref<1x8xf32, #tpu.memory_space<vmem>>, %arg4: memref<1x256x8xf32, #tpu.memory_space<vmem>>, %arg5: memref<1x8xf32, #tpu.memory_space<vmem>>, %arg6: memref<1x8xf32, #tpu.memory_space<vmem>>) attributes {dimension_semantics = [#tpu.dimension_semantics<arbitrary>], iteration_bounds = array<i64: 2>, scalar_prefetch = 0 : i64, scratch_operands = 0 : i64, tpu.core_type = #tpu.core_type<tc>, window_params = [{transform_indices = @transform_0, window_bounds = array<i64: 1, 3, 288, 4>}, {pipeline_mode = #tpu.pipeline_mode<synchronous>, transform_indices = @transform_1, window_bounds = array<i64: 9, 4, 8>}, {pipeline_mode = #tpu.pipeline_mode<synchronous>, transform_indices = @transform_2, window_bounds = array<i64: 1, 8>}, {transform_indices = @transform_3, window_bounds = array<i64: 1, 256, 8>}, {pipeline_mode = #tpu.pipeline_mode<synchronous>, transform_indices = @transform_4, window_bounds = array<i64: 1, 8>}, {pipeline_mode = #tpu.pipeline_mode<synchronous>, transform_indices = @transform_5, window_bounds = array<i64: 1, 8>}]} {
    %c0_i32 = arith.constant 0 : i32
    %0 = arith.cmpi eq, %arg0, %c0_i32 : i32
    %1 = arith.extui %0 : i1 to i32
    %c0_i32_0 = arith.constant 0 : i32
    %2 = arith.cmpi ne, %1, %c0_i32_0 : i32
    scf.if %2 {
      %cst_76 = arith.constant 0.000000e+00 : f32
      %82 = vector.broadcast %cst_76 : f32 to vector<1x8xf32>
      %c0_77 = arith.constant 0 : index
      %c0_78 = arith.constant 0 : index
      %83 = vector.load %arg5[%c0_77, %c0_78] : memref<1x8xf32, #tpu.memory_space<vmem>>, vector<1x8xf32>
      tpu.vector_store %arg5[%c0_77, %c0_78], %82 {strides = array<i32>} : memref<1x8xf32, #tpu.memory_space<vmem>>, vector<1x8xf32>,
      %cst_79 = arith.constant 0.000000e+00 : f32
      %84 = vector.broadcast %cst_79 : f32 to vector<1x8xf32>
      %c0_80 = arith.constant 0 : index
      %c0_81 = arith.constant 0 : index
      %85 = vector.load %arg6[%c0_80, %c0_81] : memref<1x8xf32, #tpu.memory_space<vmem>>, vector<1x8xf32>
      tpu.vector_store %arg6[%c0_80, %c0_81], %84 {strides = array<i32>} : memref<1x8xf32, #tpu.memory_space<vmem>>, vector<1x8xf32>,
    } else {
    }
    %c0 = arith.constant 0 : index
    %c0_1 = arith.constant 0 : index
    %c0_2 = arith.constant 0 : index
    %c0_3 = arith.constant 0 : index
    %3 = vector.load %arg1[%c0, %c0_1, %c0_2, %c0_3] : memref<1x3x288x4xf32, #tpu.memory_space<vmem>>, vector<1x1x256x4xf32>
    %4 = vector.shape_cast %3 : vector<1x1x256x4xf32> to vector<256x4xf32>
    %5 = arith.truncf %4 : vector<256x4xf32> to vector<256x4xbf16>
    %c0_4 = arith.constant 0 : index
    %c0_5 = arith.constant 0 : index
    %c0_6 = arith.constant 0 : index
    %6 = vector.load %arg2[%c0_4, %c0_5, %c0_6] : memref<9x4x8xbf16, #tpu.memory_space<vmem>>, vector<1x4x8xbf16>
    %7 = vector.shape_cast %6 : vector<1x4x8xbf16> to vector<4x8xbf16>
    %cst = arith.constant dense<0.000000e+00> : vector<256x8xf32>
    %8 = tpu.matmul %5, %7, %cst {dimension_numbers = #tpu.dot_dimension_numbers<[1], [0], [0], [1], [0, 0, 1, 1], [], []>} : vector<256x4xbf16>, vector<4x8xbf16>, vector<256x8xf32> -> vector<256x8xf32>
    %c0_7 = arith.constant 0 : index
    %c1 = arith.constant 1 : index
    %c0_8 = arith.constant 0 : index
    %c0_9 = arith.constant 0 : index
    %9 = vector.load %arg1[%c0_7, %c1, %c0_8, %c0_9] : memref<1x3x288x4xf32, #tpu.memory_space<vmem>>, vector<1x1x256x4xf32>
    %10 = vector.shape_cast %9 : vector<1x1x256x4xf32> to vector<256x4xf32>
    %11 = arith.truncf %10 : vector<256x4xf32> to vector<256x4xbf16>
    %c1_10 = arith.constant 1 : index
    %c0_11 = arith.constant 0 : index
    %c0_12 = arith.constant 0 : index
    %12 = vector.load %arg2[%c1_10, %c0_11, %c0_12] : memref<9x4x8xbf16, #tpu.memory_space<vmem>>, vector<1x4x8xbf16>
    %13 = vector.shape_cast %12 : vector<1x4x8xbf16> to vector<4x8xbf16>
    %cst_13 = arith.constant dense<0.000000e+00> : vector<256x8xf32>
    %14 = tpu.matmul %11, %13, %cst_13 {dimension_numbers = #tpu.dot_dimension_numbers<[1], [0], [0], [1], [0, 0, 1, 1], [], []>} : vector<256x4xbf16>, vector<4x8xbf16>, vector<256x8xf32> -> vector<256x8xf32>
    %15 = arith.addf %8, %14 : vector<256x8xf32>
    %c0_14 = arith.constant 0 : index
    %c2 = arith.constant 2 : index
    %c0_15 = arith.constant 0 : index
    %c0_16 = arith.constant 0 : index
    %16 = vector.load %arg1[%c0_14, %c2, %c0_15, %c0_16] : memref<1x3x288x4xf32, #tpu.memory_space<vmem>>, vector<1x1x256x4xf32>
    %17 = vector.shape_cast %16 : vector<1x1x256x4xf32> to vector<256x4xf32>
    %18 = arith.truncf %17 : vector<256x4xf32> to vector<256x4xbf16>
    %c2_17 = arith.constant 2 : index
    %c0_18 = arith.constant 0 : index
    %c0_19 = arith.constant 0 : index
    %19 = vector.load %arg2[%c2_17, %c0_18, %c0_19] : memref<9x4x8xbf16, #tpu.memory_space<vmem>>, vector<1x4x8xbf16>
    %20 = vector.shape_cast %19 : vector<1x4x8xbf16> to vector<4x8xbf16>
    %cst_20 = arith.constant dense<0.000000e+00> : vector<256x8xf32>
    %21 = tpu.matmul %18, %20, %cst_20 {dimension_numbers = #tpu.dot_dimension_numbers<[1], [0], [0], [1], [0, 0, 1, 1], [], []>} : vector<256x4xbf16>, vector<4x8xbf16>, vector<256x8xf32> -> vector<256x8xf32>
    %22 = arith.addf %15, %21 : vector<256x8xf32>
    %c0_21 = arith.constant 0 : index
    %c0_22 = arith.constant 0 : index
    %c16 = arith.constant 16 : index
    %c0_23 = arith.constant 0 : index
    %23 = vector.load %arg1[%c0_21, %c0_22, %c16, %c0_23] : memref<1x3x288x4xf32, #tpu.memory_space<vmem>>, vector<1x1x256x4xf32>
    %24 = vector.shape_cast %23 : vector<1x1x256x4xf32> to vector<256x4xf32>
    %25 = arith.truncf %24 : vector<256x4xf32> to vector<256x4xbf16>
    %c3 = arith.constant 3 : index
    %c0_24 = arith.constant 0 : index
    %c0_25 = arith.constant 0 : index
    %26 = vector.load %arg2[%c3, %c0_24, %c0_25] : memref<9x4x8xbf16, #tpu.memory_space<vmem>>, vector<1x4x8xbf16>
    %27 = vector.shape_cast %26 : vector<1x4x8xbf16> to vector<4x8xbf16>
    %cst_26 = arith.constant dense<0.000000e+00> : vector<256x8xf32>
    %28 = tpu.matmul %25, %27, %cst_26 {dimension_numbers = #tpu.dot_dimension_numbers<[1], [0], [0], [1], [0, 0, 1, 1], [], []>} : vector<256x4xbf16>, vector<4x8xbf16>, vector<256x8xf32> -> vector<256x8xf32>
    %29 = arith.addf %22, %28 : vector<256x8xf32>
    %c0_27 = arith.constant 0 : index
    %c1_28 = arith.constant 1 : index
    %c16_29 = arith.constant 16 : index
    %c0_30 = arith.constant 0 : index
    %30 = vector.load %arg1[%c0_27, %c1_28, %c16_29, %c0_30] : memref<1x3x288x4xf32, #tpu.memory_space<vmem>>, vector<1x1x256x4xf32>
    %31 = vector.shape_cast %30 : vector<1x1x256x4xf32> to vector<256x4xf32>
    %32 = arith.truncf %31 : vector<256x4xf32> to vector<256x4xbf16>
    %c4 = arith.constant 4 : index
    %c0_31 = arith.constant 0 : index
    %c0_32 = arith.constant 0 : index
    %33 = vector.load %arg2[%c4, %c0_31, %c0_32] : memref<9x4x8xbf16, #tpu.memory_space<vmem>>, vector<1x4x8xbf16>
    %34 = vector.shape_cast %33 : vector<1x4x8xbf16> to vector<4x8xbf16>
    %cst_33 = arith.constant dense<0.000000e+00> : vector<256x8xf32>
    %35 = tpu.matmul %32, %34, %cst_33 {dimension_numbers = #tpu.dot_dimension_numbers<[1], [0], [0], [1], [0, 0, 1, 1], [], []>} : vector<256x4xbf16>, vector<4x8xbf16>, vector<256x8xf32> -> vector<256x8xf32>
    %36 = arith.addf %29, %35 : vector<256x8xf32>
    %c0_34 = arith.constant 0 : index
    %c2_35 = arith.constant 2 : index
    %c16_36 = arith.constant 16 : index
    %c0_37 = arith.constant 0 : index
    %37 = vector.load %arg1[%c0_34, %c2_35, %c16_36, %c0_37] : memref<1x3x288x4xf32, #tpu.memory_space<vmem>>, vector<1x1x256x4xf32>
    %38 = vector.shape_cast %37 : vector<1x1x256x4xf32> to vector<256x4xf32>
    %39 = arith.truncf %38 : vector<256x4xf32> to vector<256x4xbf16>
    %c5 = arith.constant 5 : index
    %c0_38 = arith.constant 0 : index
    %c0_39 = arith.constant 0 : index
    %40 = vector.load %arg2[%c5, %c0_38, %c0_39] : memref<9x4x8xbf16, #tpu.memory_space<vmem>>, vector<1x4x8xbf16>
    %41 = vector.shape_cast %40 : vector<1x4x8xbf16> to vector<4x8xbf16>
    %cst_40 = arith.constant dense<0.000000e+00> : vector<256x8xf32>
    %42 = tpu.matmul %39, %41, %cst_40 {dimension_numbers = #tpu.dot_dimension_numbers<[1], [0], [0], [1], [0, 0, 1, 1], [], []>} : vector<256x4xbf16>, vector<4x8xbf16>, vector<256x8xf32> -> vector<256x8xf32>
    %43 = arith.addf %36, %42 : vector<256x8xf32>
    %c0_41 = arith.constant 0 : index
    %c0_42 = arith.constant 0 : index
    %c32 = arith.constant 32 : index
    %c0_43 = arith.constant 0 : index
    %44 = vector.load %arg1[%c0_41, %c0_42, %c32, %c0_43] : memref<1x3x288x4xf32, #tpu.memory_space<vmem>>, vector<1x1x256x4xf32>
    %45 = vector.shape_cast %44 : vector<1x1x256x4xf32> to vector<256x4xf32>
    %46 = arith.truncf %45 : vector<256x4xf32> to vector<256x4xbf16>
    %c6 = arith.constant 6 : index
    %c0_44 = arith.constant 0 : index
    %c0_45 = arith.constant 0 : index
    %47 = vector.load %arg2[%c6, %c0_44, %c0_45] : memref<9x4x8xbf16, #tpu.memory_space<vmem>>, vector<1x4x8xbf16>
    %48 = vector.shape_cast %47 : vector<1x4x8xbf16> to vector<4x8xbf16>
    %cst_46 = arith.constant dense<0.000000e+00> : vector<256x8xf32>
    %49 = tpu.matmul %46, %48, %cst_46 {dimension_numbers = #tpu.dot_dimension_numbers<[1], [0], [0], [1], [0, 0, 1, 1], [], []>} : vector<256x4xbf16>, vector<4x8xbf16>, vector<256x8xf32> -> vector<256x8xf32>
    %50 = arith.addf %43, %49 : vector<256x8xf32>
    %c0_47 = arith.constant 0 : index
    %c1_48 = arith.constant 1 : index
    %c32_49 = arith.constant 32 : index
    %c0_50 = arith.constant 0 : index
    %51 = vector.load %arg1[%c0_47, %c1_48, %c32_49, %c0_50] : memref<1x3x288x4xf32, #tpu.memory_space<vmem>>, vector<1x1x256x4xf32>
    %52 = vector.shape_cast %51 : vector<1x1x256x4xf32> to vector<256x4xf32>
    %53 = arith.truncf %52 : vector<256x4xf32> to vector<256x4xbf16>
    %c7 = arith.constant 7 : index
    %c0_51 = arith.constant 0 : index
    %c0_52 = arith.constant 0 : index
    %54 = vector.load %arg2[%c7, %c0_51, %c0_52] : memref<9x4x8xbf16, #tpu.memory_space<vmem>>, vector<1x4x8xbf16>
    %55 = vector.shape_cast %54 : vector<1x4x8xbf16> to vector<4x8xbf16>
    %cst_53 = arith.constant dense<0.000000e+00> : vector<256x8xf32>
    %56 = tpu.matmul %53, %55, %cst_53 {dimension_numbers = #tpu.dot_dimension_numbers<[1], [0], [0], [1], [0, 0, 1, 1], [], []>} : vector<256x4xbf16>, vector<4x8xbf16>, vector<256x8xf32> -> vector<256x8xf32>
    %57 = arith.addf %50, %56 : vector<256x8xf32>
    %c0_54 = arith.constant 0 : index
    %c2_55 = arith.constant 2 : index
    %c32_56 = arith.constant 32 : index
    %c0_57 = arith.constant 0 : index
    %58 = vector.load %arg1[%c0_54, %c2_55, %c32_56, %c0_57] : memref<1x3x288x4xf32, #tpu.memory_space<vmem>>, vector<1x1x256x4xf32>
    %59 = vector.shape_cast %58 : vector<1x1x256x4xf32> to vector<256x4xf32>
    %60 = arith.truncf %59 : vector<256x4xf32> to vector<256x4xbf16>
    %c8 = arith.constant 8 : index
    %c0_58 = arith.constant 0 : index
    %c0_59 = arith.constant 0 : index
    %61 = vector.load %arg2[%c8, %c0_58, %c0_59] : memref<9x4x8xbf16, #tpu.memory_space<vmem>>, vector<1x4x8xbf16>
    %62 = vector.shape_cast %61 : vector<1x4x8xbf16> to vector<4x8xbf16>
    %cst_60 = arith.constant dense<0.000000e+00> : vector<256x8xf32>
    %63 = tpu.matmul %60, %62, %cst_60 {dimension_numbers = #tpu.dot_dimension_numbers<[1], [0], [0], [1], [0, 0, 1, 1], [], []>} : vector<256x4xbf16>, vector<4x8xbf16>, vector<256x8xf32> -> vector<256x8xf32>
    %64 = arith.addf %57, %63 : vector<256x8xf32>
    %c0_61 = arith.constant 0 : index
    %c0_62 = arith.constant 0 : index
    %65 = vector.load %arg3[%c0_61, %c0_62] : memref<1x8xf32, #tpu.memory_space<vmem>>, vector<1x8xf32>
    %66 = vector.broadcast %65 : vector<1x8xf32> to vector<256x8xf32>
    %67 = arith.addf %64, %66 : vector<256x8xf32>
    %c0_63 = arith.constant 0 : index
    %c0_64 = arith.constant 0 : index
    %c0_65 = arith.constant 0 : index
    %68 = vector.load %arg4[%c0_63, %c0_64, %c0_65] : memref<1x256x8xf32, #tpu.memory_space<vmem>>, vector<1x256x8xf32>
    %69 = vector.shape_cast %68 : vector<1x256x8xf32> to vector<256x8xf32>
    %70 = vector.shape_cast %67 : vector<256x8xf32> to vector<1x256x8xf32>
    tpu.vector_store %arg4[%c0_63, %c0_64, %c0_65], %70 {strides = array<i32>} : memref<1x256x8xf32, #tpu.memory_space<vmem>>, vector<1x256x8xf32>,
    %c0_66 = arith.constant 0 : index
    %c0_67 = arith.constant 0 : index
    %71 = vector.load %arg5[%c0_66, %c0_67] : memref<1x8xf32, #tpu.memory_space<vmem>>, vector<1x8xf32>
    %cst_68 = arith.constant dense<0.000000e+00> : vector<8xf32>
    %72 = vector.multi_reduction <add>, %67, %cst_68 [0] : vector<256x8xf32> to vector<8xf32>
    %73 = vector.shape_cast %72 : vector<8xf32> to vector<1x8xf32>
    %74 = arith.addf %71, %73 : vector<1x8xf32>
    %c0_69 = arith.constant 0 : index
    %c0_70 = arith.constant 0 : index
    %75 = vector.load %arg5[%c0_69, %c0_70] : memref<1x8xf32, #tpu.memory_space<vmem>>, vector<1x8xf32>
    tpu.vector_store %arg5[%c0_69, %c0_70], %74 {strides = array<i32>} : memref<1x8xf32, #tpu.memory_space<vmem>>, vector<1x8xf32>,
    %c0_71 = arith.constant 0 : index
    %c0_72 = arith.constant 0 : index
    %76 = vector.load %arg6[%c0_71, %c0_72] : memref<1x8xf32, #tpu.memory_space<vmem>>, vector<1x8xf32>
    %77 = arith.mulf %67, %67 : vector<256x8xf32>
    %cst_73 = arith.constant dense<0.000000e+00> : vector<8xf32>
    %78 = vector.multi_reduction <add>, %77, %cst_73 [0] : vector<256x8xf32> to vector<8xf32>
    %79 = vector.shape_cast %78 : vector<8xf32> to vector<1x8xf32>
    %80 = arith.addf %76, %79 : vector<1x8xf32>
    %c0_74 = arith.constant 0 : index
    %c0_75 = arith.constant 0 : index
    %81 = vector.load %arg6[%c0_74, %c0_75] : memref<1x8xf32, #tpu.memory_space<vmem>>, vector<1x8xf32>
    tpu.vector_store %arg6[%c0_74, %c0_75], %80 {strides = array<i32>} : memref<1x8xf32, #tpu.memory_space<vmem>>, vector<1x8xf32>,
    return
  }
  func.func @transform_0(%arg0: i32) -> (i32, i32, i32, i32) {
    %c0_i32 = arith.constant 0 : i32
    %c0_i32_0 = arith.constant 0 : i32
    %c0_i32_1 = arith.constant 0 : i32
    %c0_i32_2 = arith.constant 0 : i32
    return %arg0, %c0_i32, %c0_i32_0, %c0_i32_1 : i32, i32, i32, i32
  }
  func.func @transform_1(%arg0: i32) -> (i32, i32, i32) {
    %c0_i32 = arith.constant 0 : i32
    %c0_i32_0 = arith.constant 0 : i32
    %c0_i32_1 = arith.constant 0 : i32
    %c0_i32_2 = arith.constant 0 : i32
    return %c0_i32, %c0_i32_0, %c0_i32_1 : i32, i32, i32
  }
  func.func @transform_2(%arg0: i32) -> (i32, i32) {
    %c0_i32 = arith.constant 0 : i32
    %c0_i32_0 = arith.constant 0 : i32
    %c0_i32_1 = arith.constant 0 : i32
    return %c0_i32, %c0_i32_0 : i32, i32
  }
  func.func @transform_3(%arg0: i32) -> (i32, i32, i32) {
    %c0_i32 = arith.constant 0 : i32
    %c0_i32_0 = arith.constant 0 : i32
    %c0_i32_1 = arith.constant 0 : i32
    return %arg0, %c0_i32, %c0_i32_0 : i32, i32, i32
  }
  func.func @transform_4(%arg0: i32) -> (i32, i32) {
    %c0_i32 = arith.constant 0 : i32
    %c0_i32_0 = arith.constant 0 : i32
    %c0_i32_1 = arith.constant 0 : i32
    return %c0_i32, %c0_i32_0 : i32, i32
  }
  func.func @transform_5(%arg0: i32) -> (i32, i32) {
    %c0_i32 = arith.constant 0 : i32
    %c0_i32_0 = arith.constant 0 : i32
    %c0_i32_1 = arith.constant 0 : i32
    return %c0_i32, %c0_i32_0 : i32, i32
  }
}

module attributes {stable_mosaic.version = 11 : i64} {
  func.func @_affine_pair_lrelu_kernel(%arg0: i32, %arg1: memref<16x128xf32, #tpu.memory_space<vmem>>, %arg2: memref<1x128xf32, #tpu.memory_space<vmem>>, %arg3: memref<1x128xf32, #tpu.memory_space<vmem>>, %arg4: memref<1x128xf32, #tpu.memory_space<vmem>>, %arg5: memref<1x128xf32, #tpu.memory_space<vmem>>, %arg6: memref<16x128xf32, #tpu.memory_space<vmem>>, %arg7: memref<16x128xf32, #tpu.memory_space<vmem>>) attributes {dimension_semantics = [#tpu.dimension_semantics<parallel>], iteration_bounds = array<i64: 2>, scalar_prefetch = 0 : i64, scratch_operands = 0 : i64, tpu.core_type = #tpu.core_type<tc>, window_params = [{transform_indices = @transform_0, window_bounds = array<i64: 16, 128>}, {pipeline_mode = #tpu.pipeline_mode<synchronous>, transform_indices = @transform_1, window_bounds = array<i64: 1, 128>}, {pipeline_mode = #tpu.pipeline_mode<synchronous>, transform_indices = @transform_2, window_bounds = array<i64: 1, 128>}, {pipeline_mode = #tpu.pipeline_mode<synchronous>, transform_indices = @transform_3, window_bounds = array<i64: 1, 128>}, {pipeline_mode = #tpu.pipeline_mode<synchronous>, transform_indices = @transform_4, window_bounds = array<i64: 1, 128>}, {transform_indices = @transform_5, window_bounds = array<i64: 16, 128>}, {transform_indices = @transform_6, window_bounds = array<i64: 16, 128>}]} {
    %c0 = arith.constant 0 : index
    %c0_0 = arith.constant 0 : index
    %0 = vector.load %arg1[%c0, %c0_0] : memref<16x128xf32, #tpu.memory_space<vmem>>, vector<16x128xf32>
    %c0_1 = arith.constant 0 : index
    %c0_2 = arith.constant 0 : index
    %1 = vector.load %arg2[%c0_1, %c0_2] : memref<1x128xf32, #tpu.memory_space<vmem>>, vector<1x128xf32>
    %2 = vector.broadcast %1 : vector<1x128xf32> to vector<16x128xf32>
    %3 = arith.mulf %0, %2 : vector<16x128xf32>
    %c0_3 = arith.constant 0 : index
    %c0_4 = arith.constant 0 : index
    %4 = vector.load %arg3[%c0_3, %c0_4] : memref<1x128xf32, #tpu.memory_space<vmem>>, vector<1x128xf32>
    %5 = vector.broadcast %4 : vector<1x128xf32> to vector<16x128xf32>
    %6 = arith.addf %3, %5 : vector<16x128xf32>
    %c0_5 = arith.constant 0 : index
    %c0_6 = arith.constant 0 : index
    %7 = vector.load %arg6[%c0_5, %c0_6] : memref<16x128xf32, #tpu.memory_space<vmem>>, vector<16x128xf32>
    tpu.vector_store %arg6[%c0_5, %c0_6], %6 {strides = array<i32>} : memref<16x128xf32, #tpu.memory_space<vmem>>, vector<16x128xf32>,
    %c0_7 = arith.constant 0 : index
    %c0_8 = arith.constant 0 : index
    %8 = vector.load %arg4[%c0_7, %c0_8] : memref<1x128xf32, #tpu.memory_space<vmem>>, vector<1x128xf32>
    %9 = vector.broadcast %8 : vector<1x128xf32> to vector<16x128xf32>
    %10 = arith.mulf %0, %9 : vector<16x128xf32>
    %c0_9 = arith.constant 0 : index
    %c0_10 = arith.constant 0 : index
    %11 = vector.load %arg5[%c0_9, %c0_10] : memref<1x128xf32, #tpu.memory_space<vmem>>, vector<1x128xf32>
    %12 = vector.broadcast %11 : vector<1x128xf32> to vector<16x128xf32>
    %13 = arith.addf %10, %12 : vector<16x128xf32>
    %cst = arith.constant 0.000000e+00 : f32
    %14 = vector.broadcast %cst : f32 to vector<16x128xf32>
    %15 = arith.cmpf oge, %13, %14 : vector<16x128xf32>
    %cst_11 = arith.constant 0.00999999977 : f32
    %16 = vector.broadcast %cst_11 : f32 to vector<16x128xf32>
    %17 = arith.mulf %16, %13 : vector<16x128xf32>
    %18 = arith.select %15, %13, %17 : vector<16x128xi1>, vector<16x128xf32>
    %c0_12 = arith.constant 0 : index
    %c0_13 = arith.constant 0 : index
    %19 = vector.load %arg7[%c0_12, %c0_13] : memref<16x128xf32, #tpu.memory_space<vmem>>, vector<16x128xf32>
    tpu.vector_store %arg7[%c0_12, %c0_13], %18 {strides = array<i32>} : memref<16x128xf32, #tpu.memory_space<vmem>>, vector<16x128xf32>,
    return
  }
  func.func @transform_0(%arg0: i32) -> (i32, i32) {
    %c0_i32 = arith.constant 0 : i32
    %c0_i32_0 = arith.constant 0 : i32
    return %arg0, %c0_i32 : i32, i32
  }
  func.func @transform_1(%arg0: i32) -> (i32, i32) {
    %c0_i32 = arith.constant 0 : i32
    %c0_i32_0 = arith.constant 0 : i32
    %c0_i32_1 = arith.constant 0 : i32
    return %c0_i32, %c0_i32_0 : i32, i32
  }
  func.func @transform_2(%arg0: i32) -> (i32, i32) {
    %c0_i32 = arith.constant 0 : i32
    %c0_i32_0 = arith.constant 0 : i32
    %c0_i32_1 = arith.constant 0 : i32
    return %c0_i32, %c0_i32_0 : i32, i32
  }
  func.func @transform_3(%arg0: i32) -> (i32, i32) {
    %c0_i32 = arith.constant 0 : i32
    %c0_i32_0 = arith.constant 0 : i32
    %c0_i32_1 = arith.constant 0 : i32
    return %c0_i32, %c0_i32_0 : i32, i32
  }
  func.func @transform_4(%arg0: i32) -> (i32, i32) {
    %c0_i32 = arith.constant 0 : i32
    %c0_i32_0 = arith.constant 0 : i32
    %c0_i32_1 = arith.constant 0 : i32
    return %c0_i32, %c0_i32_0 : i32, i32
  }
  func.func @transform_5(%arg0: i32) -> (i32, i32) {
    %c0_i32 = arith.constant 0 : i32
    %c0_i32_0 = arith.constant 0 : i32
    return %arg0, %c0_i32 : i32, i32
  }
  func.func @transform_6(%arg0: i32) -> (i32, i32) {
    %c0_i32 = arith.constant 0 : i32
    %c0_i32_0 = arith.constant 0 : i32
    return %arg0, %c0_i32 : i32, i32
  }
}

module attributes {stable_mosaic.version = 11 : i64} {
  func.func @kernel(%arg0: i32, %arg1: memref<1x3x288x8xf32, #tpu.memory_space<vmem>>, %arg2: memref<9x8x8xbf16, #tpu.memory_space<vmem>>, %arg3: memref<1x8xf32, #tpu.memory_space<vmem>>, %arg4: memref<1x256x8xf32, #tpu.memory_space<vmem>>, %arg5: memref<1x8xf32, #tpu.memory_space<vmem>>, %arg6: memref<1x8xf32, #tpu.memory_space<vmem>>) attributes {dimension_semantics = [#tpu.dimension_semantics<arbitrary>], iteration_bounds = array<i64: 2>, scalar_prefetch = 0 : i64, scratch_operands = 0 : i64, tpu.core_type = #tpu.core_type<tc>, window_params = [{transform_indices = @transform_0, window_bounds = array<i64: 1, 3, 288, 8>}, {pipeline_mode = #tpu.pipeline_mode<synchronous>, transform_indices = @transform_1, window_bounds = array<i64: 9, 8, 8>}, {pipeline_mode = #tpu.pipeline_mode<synchronous>, transform_indices = @transform_2, window_bounds = array<i64: 1, 8>}, {transform_indices = @transform_3, window_bounds = array<i64: 1, 256, 8>}, {pipeline_mode = #tpu.pipeline_mode<synchronous>, transform_indices = @transform_4, window_bounds = array<i64: 1, 8>}, {pipeline_mode = #tpu.pipeline_mode<synchronous>, transform_indices = @transform_5, window_bounds = array<i64: 1, 8>}]} {
    %c0_i32 = arith.constant 0 : i32
    %0 = arith.cmpi eq, %arg0, %c0_i32 : i32
    %1 = arith.extui %0 : i1 to i32
    %c0_i32_0 = arith.constant 0 : i32
    %2 = arith.cmpi ne, %1, %c0_i32_0 : i32
    scf.if %2 {
      %cst_76 = arith.constant 0.000000e+00 : f32
      %82 = vector.broadcast %cst_76 : f32 to vector<1x8xf32>
      %c0_77 = arith.constant 0 : index
      %c0_78 = arith.constant 0 : index
      %83 = vector.load %arg5[%c0_77, %c0_78] : memref<1x8xf32, #tpu.memory_space<vmem>>, vector<1x8xf32>
      tpu.vector_store %arg5[%c0_77, %c0_78], %82 {strides = array<i32>} : memref<1x8xf32, #tpu.memory_space<vmem>>, vector<1x8xf32>,
      %cst_79 = arith.constant 0.000000e+00 : f32
      %84 = vector.broadcast %cst_79 : f32 to vector<1x8xf32>
      %c0_80 = arith.constant 0 : index
      %c0_81 = arith.constant 0 : index
      %85 = vector.load %arg6[%c0_80, %c0_81] : memref<1x8xf32, #tpu.memory_space<vmem>>, vector<1x8xf32>
      tpu.vector_store %arg6[%c0_80, %c0_81], %84 {strides = array<i32>} : memref<1x8xf32, #tpu.memory_space<vmem>>, vector<1x8xf32>,
    } else {
    }
    %c0 = arith.constant 0 : index
    %c0_1 = arith.constant 0 : index
    %c0_2 = arith.constant 0 : index
    %c0_3 = arith.constant 0 : index
    %3 = vector.load %arg1[%c0, %c0_1, %c0_2, %c0_3] : memref<1x3x288x8xf32, #tpu.memory_space<vmem>>, vector<1x1x256x8xf32>
    %4 = vector.shape_cast %3 : vector<1x1x256x8xf32> to vector<256x8xf32>
    %5 = arith.truncf %4 : vector<256x8xf32> to vector<256x8xbf16>
    %c0_4 = arith.constant 0 : index
    %c0_5 = arith.constant 0 : index
    %c0_6 = arith.constant 0 : index
    %6 = vector.load %arg2[%c0_4, %c0_5, %c0_6] : memref<9x8x8xbf16, #tpu.memory_space<vmem>>, vector<1x8x8xbf16>
    %7 = vector.shape_cast %6 : vector<1x8x8xbf16> to vector<8x8xbf16>
    %cst = arith.constant dense<0.000000e+00> : vector<256x8xf32>
    %8 = tpu.matmul %5, %7, %cst {dimension_numbers = #tpu.dot_dimension_numbers<[1], [0], [0], [1], [0, 0, 1, 1], [], []>} : vector<256x8xbf16>, vector<8x8xbf16>, vector<256x8xf32> -> vector<256x8xf32>
    %c0_7 = arith.constant 0 : index
    %c1 = arith.constant 1 : index
    %c0_8 = arith.constant 0 : index
    %c0_9 = arith.constant 0 : index
    %9 = vector.load %arg1[%c0_7, %c1, %c0_8, %c0_9] : memref<1x3x288x8xf32, #tpu.memory_space<vmem>>, vector<1x1x256x8xf32>
    %10 = vector.shape_cast %9 : vector<1x1x256x8xf32> to vector<256x8xf32>
    %11 = arith.truncf %10 : vector<256x8xf32> to vector<256x8xbf16>
    %c1_10 = arith.constant 1 : index
    %c0_11 = arith.constant 0 : index
    %c0_12 = arith.constant 0 : index
    %12 = vector.load %arg2[%c1_10, %c0_11, %c0_12] : memref<9x8x8xbf16, #tpu.memory_space<vmem>>, vector<1x8x8xbf16>
    %13 = vector.shape_cast %12 : vector<1x8x8xbf16> to vector<8x8xbf16>
    %cst_13 = arith.constant dense<0.000000e+00> : vector<256x8xf32>
    %14 = tpu.matmul %11, %13, %cst_13 {dimension_numbers = #tpu.dot_dimension_numbers<[1], [0], [0], [1], [0, 0, 1, 1], [], []>} : vector<256x8xbf16>, vector<8x8xbf16>, vector<256x8xf32> -> vector<256x8xf32>
    %15 = arith.addf %8, %14 : vector<256x8xf32>
    %c0_14 = arith.constant 0 : index
    %c2 = arith.constant 2 : index
    %c0_15 = arith.constant 0 : index
    %c0_16 = arith.constant 0 : index
    %16 = vector.load %arg1[%c0_14, %c2, %c0_15, %c0_16] : memref<1x3x288x8xf32, #tpu.memory_space<vmem>>, vector<1x1x256x8xf32>
    %17 = vector.shape_cast %16 : vector<1x1x256x8xf32> to vector<256x8xf32>
    %18 = arith.truncf %17 : vector<256x8xf32> to vector<256x8xbf16>
    %c2_17 = arith.constant 2 : index
    %c0_18 = arith.constant 0 : index
    %c0_19 = arith.constant 0 : index
    %19 = vector.load %arg2[%c2_17, %c0_18, %c0_19] : memref<9x8x8xbf16, #tpu.memory_space<vmem>>, vector<1x8x8xbf16>
    %20 = vector.shape_cast %19 : vector<1x8x8xbf16> to vector<8x8xbf16>
    %cst_20 = arith.constant dense<0.000000e+00> : vector<256x8xf32>
    %21 = tpu.matmul %18, %20, %cst_20 {dimension_numbers = #tpu.dot_dimension_numbers<[1], [0], [0], [1], [0, 0, 1, 1], [], []>} : vector<256x8xbf16>, vector<8x8xbf16>, vector<256x8xf32> -> vector<256x8xf32>
    %22 = arith.addf %15, %21 : vector<256x8xf32>
    %c0_21 = arith.constant 0 : index
    %c0_22 = arith.constant 0 : index
    %c16 = arith.constant 16 : index
    %c0_23 = arith.constant 0 : index
    %23 = vector.load %arg1[%c0_21, %c0_22, %c16, %c0_23] : memref<1x3x288x8xf32, #tpu.memory_space<vmem>>, vector<1x1x256x8xf32>
    %24 = vector.shape_cast %23 : vector<1x1x256x8xf32> to vector<256x8xf32>
    %25 = arith.truncf %24 : vector<256x8xf32> to vector<256x8xbf16>
    %c3 = arith.constant 3 : index
    %c0_24 = arith.constant 0 : index
    %c0_25 = arith.constant 0 : index
    %26 = vector.load %arg2[%c3, %c0_24, %c0_25] : memref<9x8x8xbf16, #tpu.memory_space<vmem>>, vector<1x8x8xbf16>
    %27 = vector.shape_cast %26 : vector<1x8x8xbf16> to vector<8x8xbf16>
    %cst_26 = arith.constant dense<0.000000e+00> : vector<256x8xf32>
    %28 = tpu.matmul %25, %27, %cst_26 {dimension_numbers = #tpu.dot_dimension_numbers<[1], [0], [0], [1], [0, 0, 1, 1], [], []>} : vector<256x8xbf16>, vector<8x8xbf16>, vector<256x8xf32> -> vector<256x8xf32>
    %29 = arith.addf %22, %28 : vector<256x8xf32>
    %c0_27 = arith.constant 0 : index
    %c1_28 = arith.constant 1 : index
    %c16_29 = arith.constant 16 : index
    %c0_30 = arith.constant 0 : index
    %30 = vector.load %arg1[%c0_27, %c1_28, %c16_29, %c0_30] : memref<1x3x288x8xf32, #tpu.memory_space<vmem>>, vector<1x1x256x8xf32>
    %31 = vector.shape_cast %30 : vector<1x1x256x8xf32> to vector<256x8xf32>
    %32 = arith.truncf %31 : vector<256x8xf32> to vector<256x8xbf16>
    %c4 = arith.constant 4 : index
    %c0_31 = arith.constant 0 : index
    %c0_32 = arith.constant 0 : index
    %33 = vector.load %arg2[%c4, %c0_31, %c0_32] : memref<9x8x8xbf16, #tpu.memory_space<vmem>>, vector<1x8x8xbf16>
    %34 = vector.shape_cast %33 : vector<1x8x8xbf16> to vector<8x8xbf16>
    %cst_33 = arith.constant dense<0.000000e+00> : vector<256x8xf32>
    %35 = tpu.matmul %32, %34, %cst_33 {dimension_numbers = #tpu.dot_dimension_numbers<[1], [0], [0], [1], [0, 0, 1, 1], [], []>} : vector<256x8xbf16>, vector<8x8xbf16>, vector<256x8xf32> -> vector<256x8xf32>
    %36 = arith.addf %29, %35 : vector<256x8xf32>
    %c0_34 = arith.constant 0 : index
    %c2_35 = arith.constant 2 : index
    %c16_36 = arith.constant 16 : index
    %c0_37 = arith.constant 0 : index
    %37 = vector.load %arg1[%c0_34, %c2_35, %c16_36, %c0_37] : memref<1x3x288x8xf32, #tpu.memory_space<vmem>>, vector<1x1x256x8xf32>
    %38 = vector.shape_cast %37 : vector<1x1x256x8xf32> to vector<256x8xf32>
    %39 = arith.truncf %38 : vector<256x8xf32> to vector<256x8xbf16>
    %c5 = arith.constant 5 : index
    %c0_38 = arith.constant 0 : index
    %c0_39 = arith.constant 0 : index
    %40 = vector.load %arg2[%c5, %c0_38, %c0_39] : memref<9x8x8xbf16, #tpu.memory_space<vmem>>, vector<1x8x8xbf16>
    %41 = vector.shape_cast %40 : vector<1x8x8xbf16> to vector<8x8xbf16>
    %cst_40 = arith.constant dense<0.000000e+00> : vector<256x8xf32>
    %42 = tpu.matmul %39, %41, %cst_40 {dimension_numbers = #tpu.dot_dimension_numbers<[1], [0], [0], [1], [0, 0, 1, 1], [], []>} : vector<256x8xbf16>, vector<8x8xbf16>, vector<256x8xf32> -> vector<256x8xf32>
    %43 = arith.addf %36, %42 : vector<256x8xf32>
    %c0_41 = arith.constant 0 : index
    %c0_42 = arith.constant 0 : index
    %c32 = arith.constant 32 : index
    %c0_43 = arith.constant 0 : index
    %44 = vector.load %arg1[%c0_41, %c0_42, %c32, %c0_43] : memref<1x3x288x8xf32, #tpu.memory_space<vmem>>, vector<1x1x256x8xf32>
    %45 = vector.shape_cast %44 : vector<1x1x256x8xf32> to vector<256x8xf32>
    %46 = arith.truncf %45 : vector<256x8xf32> to vector<256x8xbf16>
    %c6 = arith.constant 6 : index
    %c0_44 = arith.constant 0 : index
    %c0_45 = arith.constant 0 : index
    %47 = vector.load %arg2[%c6, %c0_44, %c0_45] : memref<9x8x8xbf16, #tpu.memory_space<vmem>>, vector<1x8x8xbf16>
    %48 = vector.shape_cast %47 : vector<1x8x8xbf16> to vector<8x8xbf16>
    %cst_46 = arith.constant dense<0.000000e+00> : vector<256x8xf32>
    %49 = tpu.matmul %46, %48, %cst_46 {dimension_numbers = #tpu.dot_dimension_numbers<[1], [0], [0], [1], [0, 0, 1, 1], [], []>} : vector<256x8xbf16>, vector<8x8xbf16>, vector<256x8xf32> -> vector<256x8xf32>
    %50 = arith.addf %43, %49 : vector<256x8xf32>
    %c0_47 = arith.constant 0 : index
    %c1_48 = arith.constant 1 : index
    %c32_49 = arith.constant 32 : index
    %c0_50 = arith.constant 0 : index
    %51 = vector.load %arg1[%c0_47, %c1_48, %c32_49, %c0_50] : memref<1x3x288x8xf32, #tpu.memory_space<vmem>>, vector<1x1x256x8xf32>
    %52 = vector.shape_cast %51 : vector<1x1x256x8xf32> to vector<256x8xf32>
    %53 = arith.truncf %52 : vector<256x8xf32> to vector<256x8xbf16>
    %c7 = arith.constant 7 : index
    %c0_51 = arith.constant 0 : index
    %c0_52 = arith.constant 0 : index
    %54 = vector.load %arg2[%c7, %c0_51, %c0_52] : memref<9x8x8xbf16, #tpu.memory_space<vmem>>, vector<1x8x8xbf16>
    %55 = vector.shape_cast %54 : vector<1x8x8xbf16> to vector<8x8xbf16>
    %cst_53 = arith.constant dense<0.000000e+00> : vector<256x8xf32>
    %56 = tpu.matmul %53, %55, %cst_53 {dimension_numbers = #tpu.dot_dimension_numbers<[1], [0], [0], [1], [0, 0, 1, 1], [], []>} : vector<256x8xbf16>, vector<8x8xbf16>, vector<256x8xf32> -> vector<256x8xf32>
    %57 = arith.addf %50, %56 : vector<256x8xf32>
    %c0_54 = arith.constant 0 : index
    %c2_55 = arith.constant 2 : index
    %c32_56 = arith.constant 32 : index
    %c0_57 = arith.constant 0 : index
    %58 = vector.load %arg1[%c0_54, %c2_55, %c32_56, %c0_57] : memref<1x3x288x8xf32, #tpu.memory_space<vmem>>, vector<1x1x256x8xf32>
    %59 = vector.shape_cast %58 : vector<1x1x256x8xf32> to vector<256x8xf32>
    %60 = arith.truncf %59 : vector<256x8xf32> to vector<256x8xbf16>
    %c8 = arith.constant 8 : index
    %c0_58 = arith.constant 0 : index
    %c0_59 = arith.constant 0 : index
    %61 = vector.load %arg2[%c8, %c0_58, %c0_59] : memref<9x8x8xbf16, #tpu.memory_space<vmem>>, vector<1x8x8xbf16>
    %62 = vector.shape_cast %61 : vector<1x8x8xbf16> to vector<8x8xbf16>
    %cst_60 = arith.constant dense<0.000000e+00> : vector<256x8xf32>
    %63 = tpu.matmul %60, %62, %cst_60 {dimension_numbers = #tpu.dot_dimension_numbers<[1], [0], [0], [1], [0, 0, 1, 1], [], []>} : vector<256x8xbf16>, vector<8x8xbf16>, vector<256x8xf32> -> vector<256x8xf32>
    %64 = arith.addf %57, %63 : vector<256x8xf32>
    %c0_61 = arith.constant 0 : index
    %c0_62 = arith.constant 0 : index
    %65 = vector.load %arg3[%c0_61, %c0_62] : memref<1x8xf32, #tpu.memory_space<vmem>>, vector<1x8xf32>
    %66 = vector.broadcast %65 : vector<1x8xf32> to vector<256x8xf32>
    %67 = arith.addf %64, %66 : vector<256x8xf32>
    %c0_63 = arith.constant 0 : index
    %c0_64 = arith.constant 0 : index
    %c0_65 = arith.constant 0 : index
    %68 = vector.load %arg4[%c0_63, %c0_64, %c0_65] : memref<1x256x8xf32, #tpu.memory_space<vmem>>, vector<1x256x8xf32>
    %69 = vector.shape_cast %68 : vector<1x256x8xf32> to vector<256x8xf32>
    %70 = vector.shape_cast %67 : vector<256x8xf32> to vector<1x256x8xf32>
    tpu.vector_store %arg4[%c0_63, %c0_64, %c0_65], %70 {strides = array<i32>} : memref<1x256x8xf32, #tpu.memory_space<vmem>>, vector<1x256x8xf32>,
    %c0_66 = arith.constant 0 : index
    %c0_67 = arith.constant 0 : index
    %71 = vector.load %arg5[%c0_66, %c0_67] : memref<1x8xf32, #tpu.memory_space<vmem>>, vector<1x8xf32>
    %cst_68 = arith.constant dense<0.000000e+00> : vector<8xf32>
    %72 = vector.multi_reduction <add>, %67, %cst_68 [0] : vector<256x8xf32> to vector<8xf32>
    %73 = vector.shape_cast %72 : vector<8xf32> to vector<1x8xf32>
    %74 = arith.addf %71, %73 : vector<1x8xf32>
    %c0_69 = arith.constant 0 : index
    %c0_70 = arith.constant 0 : index
    %75 = vector.load %arg5[%c0_69, %c0_70] : memref<1x8xf32, #tpu.memory_space<vmem>>, vector<1x8xf32>
    tpu.vector_store %arg5[%c0_69, %c0_70], %74 {strides = array<i32>} : memref<1x8xf32, #tpu.memory_space<vmem>>, vector<1x8xf32>,
    %c0_71 = arith.constant 0 : index
    %c0_72 = arith.constant 0 : index
    %76 = vector.load %arg6[%c0_71, %c0_72] : memref<1x8xf32, #tpu.memory_space<vmem>>, vector<1x8xf32>
    %77 = arith.mulf %67, %67 : vector<256x8xf32>
    %cst_73 = arith.constant dense<0.000000e+00> : vector<8xf32>
    %78 = vector.multi_reduction <add>, %77, %cst_73 [0] : vector<256x8xf32> to vector<8xf32>
    %79 = vector.shape_cast %78 : vector<8xf32> to vector<1x8xf32>
    %80 = arith.addf %76, %79 : vector<1x8xf32>
    %c0_74 = arith.constant 0 : index
    %c0_75 = arith.constant 0 : index
    %81 = vector.load %arg6[%c0_74, %c0_75] : memref<1x8xf32, #tpu.memory_space<vmem>>, vector<1x8xf32>
    tpu.vector_store %arg6[%c0_74, %c0_75], %80 {strides = array<i32>} : memref<1x8xf32, #tpu.memory_space<vmem>>, vector<1x8xf32>,
    return
  }
  func.func @transform_0(%arg0: i32) -> (i32, i32, i32, i32) {
    %c0_i32 = arith.constant 0 : i32
    %c0_i32_0 = arith.constant 0 : i32
    %c0_i32_1 = arith.constant 0 : i32
    %c0_i32_2 = arith.constant 0 : i32
    return %arg0, %c0_i32, %c0_i32_0, %c0_i32_1 : i32, i32, i32, i32
  }
  func.func @transform_1(%arg0: i32) -> (i32, i32, i32) {
    %c0_i32 = arith.constant 0 : i32
    %c0_i32_0 = arith.constant 0 : i32
    %c0_i32_1 = arith.constant 0 : i32
    %c0_i32_2 = arith.constant 0 : i32
    return %c0_i32, %c0_i32_0, %c0_i32_1 : i32, i32, i32
  }
  func.func @transform_2(%arg0: i32) -> (i32, i32) {
    %c0_i32 = arith.constant 0 : i32
    %c0_i32_0 = arith.constant 0 : i32
    %c0_i32_1 = arith.constant 0 : i32
    return %c0_i32, %c0_i32_0 : i32, i32
  }
  func.func @transform_3(%arg0: i32) -> (i32, i32, i32) {
    %c0_i32 = arith.constant 0 : i32
    %c0_i32_0 = arith.constant 0 : i32
    %c0_i32_1 = arith.constant 0 : i32
    return %arg0, %c0_i32, %c0_i32_0 : i32, i32, i32
  }
  func.func @transform_4(%arg0: i32) -> (i32, i32) {
    %c0_i32 = arith.constant 0 : i32
    %c0_i32_0 = arith.constant 0 : i32
    %c0_i32_1 = arith.constant 0 : i32
    return %c0_i32, %c0_i32_0 : i32, i32
  }
  func.func @transform_5(%arg0: i32) -> (i32, i32) {
    %c0_i32 = arith.constant 0 : i32
    %c0_i32_0 = arith.constant 0 : i32
    %c0_i32_1 = arith.constant 0 : i32
    return %c0_i32, %c0_i32_0 : i32, i32
  }
}

</mosaic_0001>

<llo_original>
// kernel: conv_block_forward.5
$region0: #{conv_block_forward.5}
  #allocation0 [shape = 'u32[]', space=smem, size = 0x4, offset = 0x4, fixed_abs, tag = 'smem constant byte address 0x4 - core index']
  #allocation1 [shape = 'u32[144,128]{1,0:T(1,128)}', space=vmem, size = 0x12000, scoped, tag = 'internal scratch']
  %s0 = inlined_call_operand.vmem [shape: f32[32,128], index: 0, kind: input, shape index: {}]
  %s1 = inlined_call_operand.vmem [shape: f32[1,128], index: 1, kind: input, shape index: {}]
  %s2 = inlined_call_operand.vmem [shape: f32[1,128], index: 2, kind: input, shape index: {}]
  %s3 = inlined_call_operand.vmem [shape: f32[1,128], index: 3, kind: input, shape index: {}]
  %s4 = inlined_call_operand.vmem [shape: f32[1,128], index: 4, kind: input, shape index: {}]
  %s5 = inlined_call_operand.vmem [shape: f32[32,128], index: 5, kind: output, shape index: {0}]
  %s6 = inlined_call_operand.vmem [shape: f32[32,128], index: 6, kind: output, shape index: {1}]
  %7 = xla_tuple %s5, %s6
  %s8 = sld [smem:[#allocation0]]
  $region61: #{conv_block_forward.5} parent=0
    _
  %s10 = ssub.s32 1, %s8
  %s11 = scalar_select 0, %s10, %s8
  loop: start=0, step=1, limit=4
  $region2: #{conv_block_forward.5} parent=0 // loop_pre_header
    _
  $region3: #{conv_block_forward.5} parent=0 // loop_header
    %s13 = sphi 0, %s17
    %p14 = scmp.ge.s32.totalorder %s13, 4
    %s23 = sphi 0, %s25
    %s26 = sphi 0, %s23
    %s27 = sphi 0, %s26
    %s43 = sphi 0, %s27
    %s47 = sphi 0, %s47
    %s49 = sphi 0, %s47
    %s50 = sphi 0, %s49
    %s64 = sphi 0, %s50
    %s68 = sphi 0, %s68
    %s70 = sphi 0, %s68
    %s71 = sphi 0, %s70
    %s85 = sphi 0, %s71
    %s89 = sphi 0, %s89
    %s91 = sphi 0, %s89
    %s92 = sphi 0, %s91
    %s106 = sphi 0, %s92
    %s110 = sphi 0, %s110
    %s112 = sphi 0, %s110
    %s113 = sphi 0, %s112
    %s127 = sphi 0, %s113
    %s133 = sphi 0, %s135
    %s136 = sphi 0, %s133
    %s137 = sphi 0, %s136
    %s153 = sphi 0, %s137
    %s159 = sphi 0, %s161
    %s162 = sphi 0, %s159
    %s163 = sphi 0, %s162
    %s179 = sphi 0, %s163
  $region4: #{conv_block_forward.5} parent=0 // loop_header_branch
    %16 = sbr.rel (%p14) target = $region8
  $region5: #{conv_block_forward.5} parent=0 // loop_body
    %s18 = ssub.s32 %s13, 1
    %s19 = ssub.s32 %s13, 2
    %s20 = sadd.s32 %s13, 1
    %s21 = ssub.s32 %s13, %s20
    %p22 = scmp.eq.s32.totalorder %s21, 0
    %s24 = sadd.s32 %s23, 1
    %s25 = scalar_select %p22, %s23, %s24
    %p28 = pneg %p22
    %p29 = scmp.eq.s32.totalorder %s13, 1
    %p30 = por %p28, %p29
    %p31 = scmp.ne.s32.totalorder %s23, %s26
    %p32 = scmp.eq.s32.totalorder %s13, 0
    %p33 = por %p31, %p32
    %p34 = scmp.ne.s32.totalorder %s23, %s26
    %p35 = scmp.eq.s32.totalorder %s18, 1
    %p36 = por %p34, %p35
    %p37 = scmp.ne.s32.totalorder %s26, %s27
    %p38 = scmp.eq.s32.totalorder %s18, 0
    %p39 = por %p37, %p38
    %p40 = scmp.ne.s32.totalorder %s26, %s27
    %p41 = scmp.eq.s32.totalorder %s19, 1
    %p42 = por %p40, %p41
    %p44 = scmp.ne.s32.totalorder %s27, %s43
    %p45 = scmp.eq.s32.totalorder %s19, 0
    %p46 = por %p44, %p45
    %s48 = sadd.s32 %s47, 1
    %p51 = scmp.eq.s32.totalorder %s13, 1
    %p52 = scmp.ne.s32.totalorder %s47, %s49
    %p53 = scmp.eq.s32.totalorder %s13, 0
    %p54 = por %p52, %p53
    %p55 = scmp.ne.s32.totalorder %s47, %s49
    %p56 = scmp.eq.s32.totalorder %s18, 1
    %p57 = por %p55, %p56
    %p58 = scmp.ne.s32.totalorder %s49, %s50
    %p59 = scmp.eq.s32.totalorder %s18, 0
    %p60 = por %p58, %p59
    %p61 = scmp.ne.s32.totalorder %s49, %s50
    %p62 = scmp.eq.s32.totalorder %s19, 1
    %p63 = por %p61, %p62
    %p65 = scmp.ne.s32.totalorder %s50, %s64
    %p66 = scmp.eq.s32.totalorder %s19, 0
    %p67 = por %p65, %p66
    %s69 = sadd.s32 %s68, 1
    %p72 = scmp.eq.s32.totalorder %s13, 1
    %p73 = scmp.ne.s32.totalorder %s68, %s70
    %p74 = scmp.eq.s32.totalorder %s13, 0
    %p75 = por %p73, %p74
    %p76 = scmp.ne.s32.totalorder %s68, %s70
    %p77 = scmp.eq.s32.totalorder %s18, 1
    %p78 = por %p76, %p77
    %p79 = scmp.ne.s32.totalorder %s70, %s71
    %p80 = scmp.eq.s32.totalorder %s18, 0
    %p81 = por %p79, %p80
    %p82 = scmp.ne.s32.totalorder %s70, %s71
    %p83 = scmp.eq.s32.totalorder %s19, 1
    %p84 = por %p82, %p83
    %p86 = scmp.ne.s32.totalorder %s71, %s85
    %p87 = scmp.eq.s32.totalorder %s19, 0
    %p88 = por %p86, %p87
    %s90 = sadd.s32 %s89, 1
    %p93 = scmp.eq.s32.totalorder %s13, 1
    %p94 = scmp.ne.s32.totalorder %s89, %s91
    %p95 = scmp.eq.s32.totalorder %s13, 0
    %p96 = por %p94, %p95
    %p97 = scmp.ne.s32.totalorder %s89, %s91
    %p98 = scmp.eq.s32.totalorder %s18, 1
    %p99 = por %p97, %p98
    %p100 = scmp.ne.s32.totalorder %s91, %s92
    %p101 = scmp.eq.s32.totalorder %s18, 0
    %p102 = por %p100, %p101
    %p103 = scmp.ne.s32.totalorder %s91, %s92
    %p104 = scmp.eq.s32.totalorder %s19, 1
    %p105 = por %p103, %p104
    %p107 = scmp.ne.s32.totalorder %s92, %s106
    %p108 = scmp.eq.s32.totalorder %s19, 0
    %p109 = por %p107, %p108
    %s111 = sadd.s32 %s110, 1
    %p114 = scmp.eq.s32.totalorder %s13, 1
    %p115 = scmp.ne.s32.totalorder %s110, %s112
    %p116 = scmp.eq.s32.totalorder %s13, 0
    %p117 = por %p115, %p116
    %p118 = scmp.ne.s32.totalorder %s110, %s112
    %p119 = scmp.eq.s32.totalorder %s18, 1
    %p120 = por %p118, %p119
    %p121 = scmp.ne.s32.totalorder %s112, %s113
    %p122 = scmp.eq.s32.totalorder %s18, 0
    %p123 = por %p121, %p122
    %p124 = scmp.ne.s32.totalorder %s112, %s113
    %p125 = scmp.eq.s32.totalorder %s19, 1
    %p126 = por %p124, %p125
    %p128 = scmp.ne.s32.totalorder %s113, %s127
    %p129 = scmp.eq.s32.totalorder %s19, 0
    %p130 = por %p128, %p129
    %s131 = ssub.s32 %s13, %s20
    %p132 = scmp.eq.s32.totalorder %s131, 0
    %s134 = sadd.s32 %s133, 1
    %s135 = scalar_select %p132, %s133, %s134
    %p138 = pneg %p132
    %p139 = scmp.eq.s32.totalorder %s13, 1
    %p140 = por %p138, %p139
    %p141 = scmp.ne.s32.totalorder %s133, %s136
    %p142 = scmp.eq.s32.totalorder %s13, 0
    %p143 = por %p141, %p142
    %p144 = scmp.ne.s32.totalorder %s133, %s136
    %p145 = scmp.eq.s32.totalorder %s18, 1
    %p146 = por %p144, %p145
    %p147 = scmp.ne.s32.totalorder %s136, %s137
    %p148 = scmp.eq.s32.totalorder %s18, 0
    %p149 = por %p147, %p148
    %p150 = scmp.ne.s32.totalorder %s136, %s137
    %p151 = scmp.eq.s32.totalorder %s19, 1
    %p152 = por %p150, %p151
    %p154 = scmp.ne.s32.totalorder %s137, %s153
    %p155 = scmp.eq.s32.totalorder %s19, 0
    %p156 = por %p154, %p155
    %s157 = ssub.s32 %s13, %s20
    %p158 = scmp.eq.s32.totalorder %s157, 0
    %s160 = sadd.s32 %s159, 1
    %s161 = scalar_select %p158, %s159, %s160
    %p164 = pneg %p158
    %p165 = scmp.eq.s32.totalorder %s13, 1
    %p166 = por %p164, %p165
    %p167 = scmp.ne.s32.totalorder %s159, %s162
    %p168 = scmp.eq.s32.totalorder %s13, 0
    %p169 = por %p167, %p168
    %p170 = scmp.ne.s32.totalorder %s159, %s162
    %p171 = scmp.eq.s32.totalorder %s18, 1
    %p172 = por %p170, %p171
    %p173 = scmp.ne.s32.totalorder %s162, %s163
    %p174 = scmp.eq.s32.totalorder %s18, 0
    %p175 = por %p173, %p174
    %p176 = scmp.ne.s32.totalorder %s162, %s163
    %p177 = scmp.eq.s32.totalorder %s19, 1
    %p178 = por %p176, %p177
    %p180 = scmp.ne.s32.totalorder %s163, %s179
    %p181 = scmp.eq.s32.totalorder %s19, 0
    %p182 = por %p180, %p181
    %p183 = scmp.le.s32.totalorder 1, %s13
    %p184 = scmp.lt.s32.totalorder %s13, 3
    %p185 = pnand %p183, %p184
    %p186 = pneg %p185
    // Predicated region
    $region9: #{conv_block_forward.5} parent=5 // pred_check
      _
    $region10: #{conv_block_forward.5} parent=5 // pred_check_branch
      %188 = sbr.rel (%p185) target = $region12
    $region11: #{conv_block_forward.5} parent=5 // pred_region
      %s189 = ssub.s32 %s13, 1
      // Predicated region
      $region13: #{conv_block_forward.5} parent=11 // pred_check
        %p190 = pneg %p60
      $region14: #{conv_block_forward.5} parent=11 // pred_check_branch
        %192 = sbr.rel (%p190) target = $region16
      $region15: #{conv_block_forward.5} parent=11 // pred_region
        _
      $region16: #{conv_block_forward.5} parent=11 // pred_fallthru
        _
      // Predicated region
      $region17: #{conv_block_forward.5} parent=11 // pred_check
        %p193 = pneg %p81
      $region18: #{conv_block_forward.5} parent=11 // pred_check_branch
        %195 = sbr.rel (%p193) target = $region20
      $region19: #{conv_block_forward.5} parent=11 // pred_region
        _
      $region20: #{conv_block_forward.5} parent=11 // pred_fallthru
        _
      // Predicated region
      $region21: #{conv_block_forward.5} parent=11 // pred_check
        %p196 = pneg %p102
      $region22: #{conv_block_forward.5} parent=11 // pred_check_branch
        %198 = sbr.rel (%p196) target = $region24
      $region23: #{conv_block_forward.5} parent=11 // pred_region
        _
      $region24: #{conv_block_forward.5} parent=11 // pred_fallthru
        _
      // Predicated region
      $region25: #{conv_block_forward.5} parent=11 // pred_check
        %p199 = pneg %p123
      $region26: #{conv_block_forward.5} parent=11 // pred_check_branch
        %201 = sbr.rel (%p199) target = $region28
      $region27: #{conv_block_forward.5} parent=11 // pred_region
        _
      $region28: #{conv_block_forward.5} parent=11 // pred_fallthru
        _
    $region12: #{conv_block_forward.5} parent=5 // pred_fallthru
      _
    %p202 = scmp.lt.s32.totalorder %s13, 2
    // Predicated region
    $region29: #{conv_block_forward.5} parent=5 // pred_check
      %p203 = pneg %p202
    $region30: #{conv_block_forward.5} parent=5 // pred_check_branch
      %205 = sbr.rel (%p203) target = $region32
    $region31: #{conv_block_forward.5} parent=5 // pred_region
      // Predicated region
      $region33: #{conv_block_forward.5} parent=31 // pred_check
        %p206 = pneg %p33
      $region34: #{conv_block_forward.5} parent=31 // pred_check_branch
        %208 = sbr.rel (%p206) target = $region36
      $region35: #{conv_block_forward.5} parent=31 // pred_region
        %s209 = smul.u32 2, %s13
        %p210 = scmp.lt.s32.totalorder %s209, 3
        %s211 = scalar_select %p210, %s209, 3
        %s212 = smul.addr %s211, 8
        %s213 = scalar_lea.vmem %s0, %s212
        %s214 = smul.u32 2, %s13
      $region36: #{conv_block_forward.5} parent=31 // pred_fallthru
        _
    $region32: #{conv_block_forward.5} parent=5 // pred_fallthru
      _
    %p215 = scmp.le.s32.totalorder 1, %s13
    %p216 = scmp.lt.s32.totalorder %s13, 3
    %p217 = pnand %p215, %p216
    %p218 = pneg %p217
    // Predicated region
    $region37: #{conv_block_forward.5} parent=5 // pred_check
      _
    $region38: #{conv_block_forward.5} parent=5 // pred_check_branch
      %220 = sbr.rel (%p217) target = $region40
    $region39: #{conv_block_forward.5} parent=5 // pred_region
      %s221 = ssub.s32 %s13, 1
      %s222 = smul.u32 2, %s18
      %p223 = scmp.lt.s32.totalorder %s222, 3
      %s224 = scalar_select %p223, %s222, 3
      %s225 = smul.addr %s224, 8
      %s226 = scalar_lea.vmem %s0, %s225
      %p227 = pneg %p39
      %p228 = pneg %p36
      %p229 = pneg %p60
      %p230 = pneg %p57
      %p231 = pneg %p81
      %p232 = pneg %p78
      %p233 = pneg %p102
      %p234 = pneg %p99
      %p235 = pneg %p123
      %p236 = pneg %p120
      %p237 = pneg %p149
      %p238 = pneg %p146
      %s239 = smul.u32 2, %s18
      %p240 = scmp.lt.s32.totalorder %s239, 3
      %s241 = scalar_select %p240, %s239, 3
      %s242 = smul.addr %s241, 8
      %s243 = scalar_lea.vmem %s5, %s242
      %p244 = pneg %p175
      %p245 = pneg %p172
      %s246 = smul.u32 2, %s18
      %p247 = scmp.lt.s32.totalorder %s246, 3
      %s248 = scalar_select %p247, %s246, 3
      %s249 = smul.addr %s248, 8
      %s250 = scalar_lea.vmem %s6, %s249
      %s251 = smul.u32 2, %s18
      %p252 = scmp.lt.s32.totalorder %s251, 3
      %s253 = scalar_select %p252, %s251, 3
      %s254 = smul.addr %s253, 8
      %s255 = scalar_lea.vmem %s0, %s254
      %s256 = smul.u32 2, %s18
      %s257 = smul.u32 2, %s18
      %p258 = scmp.lt.s32.totalorder %s257, 3
      %s259 = scalar_select %p258, %s257, 3
      %s260 = smul.addr %s259, 8
      %s261 = scalar_lea.vmem %s5, %s260
      %s262 = smul.u32 2, %s18
      %s263 = smul.u32 2, %s18
      %p264 = scmp.lt.s32.totalorder %s263, 3
      %s265 = scalar_select %p264, %s263, 3
      %s266 = smul.addr %s265, 8
      %s267 = scalar_lea.vmem %s6, %s266
      %s268 = smul.u32 2, %s18
      %v269 = vld [vmem:[%s255] sm:$0xff]
      %v270 = vld [vmem:[%s255 + $0x8] sm:$0xff]
      %v271 = vld [vmem:[%s1] sm:$0x1]
      %v273 = vlaneseq
      %v274 = vshrl.u32 %v273, 7
      %v275 = vsub.s32 0, %v274
      %v276 = vrot.slane %v271, %v275
      %v278 = vmul.f32 %v269, %v276
      %v279 = vmul.f32 %v270, %v276
      %v280 = vld [vmem:[%s2] sm:$0x1]
      %v282 = vlaneseq
      %v283 = vshrl.u32 %v282, 7
      %v284 = vsub.s32 0, %v283
      %v285 = vrot.slane %v280, %v284
      %v287 = vadd.f32 %v278, %v285
      %v288 = vadd.f32 %v279, %v285
      %289 = vst [vmem:[%s261] sm:$0xff] %v287
      %290 = vst [vmem:[%s261 + $0x8] sm:$0xff] %v288
      %v291 = vld [vmem:[%s3] sm:$0x1]
      %v293 = vlaneseq
      %v294 = vshrl.u32 %v293, 7
      %v295 = vsub.s32 0, %v294
      %v296 = vrot.slane %v291, %v295
      %v298 = vmul.f32 %v269, %v296
      %v299 = vmul.f32 %v270, %v296
      %v300 = vld [vmem:[%s4] sm:$0x1]
      %v302 = vlaneseq
      %v303 = vshrl.u32 %v302, 7
      %v304 = vsub.s32 0, %v303
      %v305 = vrot.slane %v300, %v304
      %v307 = vadd.f32 %v298, %v305
      %v308 = vadd.f32 %v299, %v305
      %vm309 = vcmp.ge.f32.partialorder %v307, 0.0
      %vm310 = vcmp.ge.f32.partialorder %v308, 0.0
      %v311 = vmul.f32 %v307, 0.01
      %v312 = vmul.f32 %v308, 0.01
      %v313 = vsel %vm309, %v307, %v311
      %v314 = vsel %vm310, %v308, %v312
      %315 = vst [vmem:[%s267] sm:$0xff] %v313
      %316 = vst [vmem:[%s267 + $0x8] sm:$0xff] %v314
      %s317 = smul.u32 2, %s18
      %p318 = scmp.lt.s32.totalorder %s317, 3
      %s319 = scalar_select %p318, %s317, 3
      %s320 = smul.addr %s319, 8
      %s321 = scalar_lea.vmem %s5, %s320
      %s322 = smul.u32 2, %s18
      %p323 = scmp.lt.s32.totalorder %s322, 3
      %s324 = scalar_select %p323, %s322, 3
      %s325 = smul.addr %s324, 8
      %s326 = scalar_lea.vmem %s6, %s325
      // Predicated region
      $region41: #{conv_block_forward.5} parent=39 // pred_check
        %p327 = pneg %p146
      $region42: #{conv_block_forward.5} parent=39 // pred_check_branch
        %329 = sbr.rel (%p327) target = $region44
      $region43: #{conv_block_forward.5} parent=39 // pred_region
        %s330 = smul.u32 2, %s18
      $region44: #{conv_block_forward.5} parent=39 // pred_fallthru
        _
      // Predicated region
      $region45: #{conv_block_forward.5} parent=39 // pred_check
        %p331 = pneg %p172
      $region46: #{conv_block_forward.5} parent=39 // pred_check_branch
        %333 = sbr.rel (%p331) target = $region48
      $region47: #{conv_block_forward.5} parent=39 // pred_region
        %s334 = smul.u32 2, %s18
      $region48: #{conv_block_forward.5} parent=39 // pred_fallthru
        _
    $region40: #{conv_block_forward.5} parent=5 // pred_fallthru
      _
    %p335 = scmp.le.s32.totalorder 2, %s13
    // Predicated region
    $region49: #{conv_block_forward.5} parent=5 // pred_check
      %p336 = pneg %p335
    $region50: #{conv_block_forward.5} parent=5 // pred_check_branch
      %338 = sbr.rel (%p336) target = $region52
    $region51: #{conv_block_forward.5} parent=5 // pred_region
      %s339 = ssub.s32 %s13, 2
      // Predicated region
      $region53: #{conv_block_forward.5} parent=51 // pred_check
        %p340 = pneg %p152
      $region54: #{conv_block_forward.5} parent=51 // pred_check_branch
        %342 = sbr.rel (%p340) target = $region56
      $region55: #{conv_block_forward.5} parent=51 // pred_region
        %s343 = smul.u32 2, %s19
        %p344 = scmp.lt.s32.totalorder %s343, 3
        %s345 = scalar_select %p344, %s343, 3
        %s346 = smul.addr %s345, 8
        %s347 = scalar_lea.vmem %s5, %s346
      $region56: #{conv_block_forward.5} parent=51 // pred_fallthru
        _
      // Predicated region
      $region57: #{conv_block_forward.5} parent=51 // pred_check
        %p348 = pneg %p178
      $region58: #{conv_block_forward.5} parent=51 // pred_check_branch
        %350 = sbr.rel (%p348) target = $region60
      $region59: #{conv_block_forward.5} parent=51 // pred_region
        %s351 = smul.u32 2, %s19
        %p352 = scmp.lt.s32.totalorder %s351, 3
        %s353 = scalar_select %p352, %s351, 3
        %s354 = smul.addr %s353, 8
        %s355 = scalar_lea.vmem %s6, %s354
      $region60: #{conv_block_forward.5} parent=51 // pred_fallthru
        _
    $region52: #{conv_block_forward.5} parent=5 // pred_fallthru
      _
  $region6: #{conv_block_forward.5} parent=0 // loop_footer
    %s17 = sadd.s32 1, %s13
  $region7: #{conv_block_forward.5} parent=0 // loop_footer_branch
    %12 = sbr.rel target = $region3
  $region8: #{conv_block_forward.5} parent=0 // loop_exit
    _

// kernel: conv_block_forward.4
$region0: #{conv_block_forward.4}
  #allocation0 [shape = 'u32[]', space=smem, size = 0x4, offset = 0x4, fixed_abs, tag = 'smem constant byte address 0x4 - core index']
  #allocation1 [shape = 'u32[144,128]{1,0:T(1,128)}', space=vmem, size = 0x12000, scoped, tag = 'internal scratch']
  %s0 = inlined_call_operand.vmem [shape: f32[2,3,288,4], index: 0, kind: input, shape index: {}]
  %s1 = inlined_call_operand.vmem [shape: bf16[9,4,8], index: 1, kind: input, shape index: {}]
  %s2 = inlined_call_operand.vmem [shape: f32[1,8], index: 2, kind: input, shape index: {}]
  %s3 = inlined_call_operand.vmem [shape: f32[2,256,8], index: 3, kind: output, shape index: {0}]
  %s4 = inlined_call_operand.vmem [shape: f32[1,8], index: 4, kind: output, shape index: {1}]
  %s5 = inlined_call_operand.vmem [shape: f32[1,8], index: 5, kind: output, shape index: {2}]
  %6 = xla_tuple %s3, %s4, %s5
  %s7 = sld [smem:[#allocation0]]
  $region65: #{conv_block_forward.4} parent=0
    _
  %s9 = ssub.s32 1, %s7
  %s10 = scalar_select 0, %s9, %s7
  loop: start=0, step=1, limit=4
  $region2: #{conv_block_forward.4} parent=0 // loop_pre_header
    _
  $region3: #{conv_block_forward.4} parent=0 // loop_header
    %s12 = sphi 0, %s16
    %p13 = scmp.ge.s32.totalorder %s12, 4
    %s22 = sphi 0, %s24
    %s25 = sphi 0, %s22
    %s26 = sphi 0, %s25
    %s42 = sphi 0, %s26
    %s46 = sphi 0, %s46
    %s48 = sphi 0, %s46
    %s49 = sphi 0, %s48
    %s63 = sphi 0, %s49
    %s67 = sphi 0, %s67
    %s69 = sphi 0, %s67
    %s70 = sphi 0, %s69
    %s84 = sphi 0, %s70
    %s90 = sphi 0, %s92
    %s93 = sphi 0, %s90
    %s94 = sphi 0, %s93
    %s110 = sphi 0, %s94
    %s114 = sphi 0, %s114
    %s116 = sphi 0, %s114
    %s117 = sphi 0, %s116
    %s131 = sphi 0, %s117
    %s135 = sphi 0, %s135
    %s137 = sphi 0, %s135
    %s138 = sphi 0, %s137
    %s152 = sphi 0, %s138
  $region4: #{conv_block_forward.4} parent=0 // loop_header_branch
    %15 = sbr.rel (%p13) target = $region8
  $region5: #{conv_block_forward.4} parent=0 // loop_body
    %s17 = ssub.s32 %s12, 1
    %s18 = ssub.s32 %s12, 2
    %s19 = sadd.s32 %s12, 1
    %s20 = ssub.s32 %s12, %s19
    %p21 = scmp.eq.s32.totalorder %s20, 0
    %s23 = sadd.s32 %s22, 1
    %s24 = scalar_select %p21, %s22, %s23
    %p27 = pneg %p21
    %p28 = scmp.eq.s32.totalorder %s12, 1
    %p29 = por %p27, %p28
    %p30 = scmp.ne.s32.totalorder %s22, %s25
    %p31 = scmp.eq.s32.totalorder %s12, 0
    %p32 = por %p30, %p31
    %p33 = scmp.ne.s32.totalorder %s22, %s25
    %p34 = scmp.eq.s32.totalorder %s17, 1
    %p35 = por %p33, %p34
    %p36 = scmp.ne.s32.totalorder %s25, %s26
    %p37 = scmp.eq.s32.totalorder %s17, 0
    %p38 = por %p36, %p37
    %p39 = scmp.ne.s32.totalorder %s25, %s26
    %p40 = scmp.eq.s32.totalorder %s18, 1
    %p41 = por %p39, %p40
    %p43 = scmp.ne.s32.totalorder %s26, %s42
    %p44 = scmp.eq.s32.totalorder %s18, 0
    %p45 = por %p43, %p44
    %s47 = sadd.s32 %s46, 1
    %p50 = scmp.eq.s32.totalorder %s12, 1
    %p51 = scmp.ne.s32.totalorder %s46, %s48
    %p52 = scmp.eq.s32.totalorder %s12, 0
    %p53 = por %p51, %p52
    %p54 = scmp.ne.s32.totalorder %s46, %s48
    %p55 = scmp.eq.s32.totalorder %s17, 1
    %p56 = por %p54, %p55
    %p57 = scmp.ne.s32.totalorder %s48, %s49
    %p58 = scmp.eq.s32.totalorder %s17, 0
    %p59 = por %p57, %p58
    %p60 = scmp.ne.s32.totalorder %s48, %s49
    %p61 = scmp.eq.s32.totalorder %s18, 1
    %p62 = por %p60, %p61
    %p64 = scmp.ne.s32.totalorder %s49, %s63
    %p65 = scmp.eq.s32.totalorder %s18, 0
    %p66 = por %p64, %p65
    %s68 = sadd.s32 %s67, 1
    %p71 = scmp.eq.s32.totalorder %s12, 1
    %p72 = scmp.ne.s32.totalorder %s67, %s69
    %p73 = scmp.eq.s32.totalorder %s12, 0
    %p74 = por %p72, %p73
    %p75 = scmp.ne.s32.totalorder %s67, %s69
    %p76 = scmp.eq.s32.totalorder %s17, 1
    %p77 = por %p75, %p76
    %p78 = scmp.ne.s32.totalorder %s69, %s70
    %p79 = scmp.eq.s32.totalorder %s17, 0
    %p80 = por %p78, %p79
    %p81 = scmp.ne.s32.totalorder %s69, %s70
    %p82 = scmp.eq.s32.totalorder %s18, 1
    %p83 = por %p81, %p82
    %p85 = scmp.ne.s32.totalorder %s70, %s84
    %p86 = scmp.eq.s32.totalorder %s18, 0
    %p87 = por %p85, %p86
    %s88 = ssub.s32 %s12, %s19
    %p89 = scmp.eq.s32.totalorder %s88, 0
    %s91 = sadd.s32 %s90, 1
    %s92 = scalar_select %p89, %s90, %s91
    %p95 = pneg %p89
    %p96 = scmp.eq.s32.totalorder %s12, 1
    %p97 = por %p95, %p96
    %p98 = scmp.ne.s32.totalorder %s90, %s93
    %p99 = scmp.eq.s32.totalorder %s12, 0
    %p100 = por %p98, %p99
    %p101 = scmp.ne.s32.totalorder %s90, %s93
    %p102 = scmp.eq.s32.totalorder %s17, 1
    %p103 = por %p101, %p102
    %p104 = scmp.ne.s32.totalorder %s93, %s94
    %p105 = scmp.eq.s32.totalorder %s17, 0
    %p106 = por %p104, %p105
    %p107 = scmp.ne.s32.totalorder %s93, %s94
    %p108 = scmp.eq.s32.totalorder %s18, 1
    %p109 = por %p107, %p108
    %p111 = scmp.ne.s32.totalorder %s94, %s110
    %p112 = scmp.eq.s32.totalorder %s18, 0
    %p113 = por %p111, %p112
    %s115 = sadd.s32 %s114, 1
    %p118 = scmp.eq.s32.totalorder %s12, 1
    %p119 = scmp.ne.s32.totalorder %s114, %s116
    %p120 = scmp.eq.s32.totalorder %s12, 0
    %p121 = por %p119, %p120
    %p122 = scmp.ne.s32.totalorder %s114, %s116
    %p123 = scmp.eq.s32.totalorder %s17, 1
    %p124 = por %p122, %p123
    %p125 = scmp.ne.s32.totalorder %s116, %s117
    %p126 = scmp.eq.s32.totalorder %s17, 0
    %p127 = por %p125, %p126
    %p128 = scmp.ne.s32.totalorder %s116, %s117
    %p129 = scmp.eq.s32.totalorder %s18, 1
    %p130 = por %p128, %p129
    %p132 = scmp.ne.s32.totalorder %s117, %s131
    %p133 = scmp.eq.s32.totalorder %s18, 0
    %p134 = por %p132, %p133
    %s136 = sadd.s32 %s135, 1
    %p139 = scmp.eq.s32.totalorder %s12, 1
    %p140 = scmp.ne.s32.totalorder %s135, %s137
    %p141 = scmp.eq.s32.totalorder %s12, 0
    %p142 = por %p140, %p141
    %p143 = scmp.ne.s32.totalorder %s135, %s137
    %p144 = scmp.eq.s32.totalorder %s17, 1
    %p145 = por %p143, %p144
    %p146 = scmp.ne.s32.totalorder %s137, %s138
    %p147 = scmp.eq.s32.totalorder %s17, 0
    %p148 = por %p146, %p147
    %p149 = scmp.ne.s32.totalorder %s137, %s138
    %p150 = scmp.eq.s32.totalorder %s18, 1
    %p151 = por %p149, %p150
    %p153 = scmp.ne.s32.totalorder %s138, %s152
    %p154 = scmp.eq.s32.totalorder %s18, 0
    %p155 = por %p153, %p154
    %p156 = scmp.le.s32.totalorder 1, %s12
    %p157 = scmp.lt.s32.totalorder %s12, 3
    %p158 = pnand %p156, %p157
    %p159 = pneg %p158
    // Predicated region
    $region9: #{conv_block_forward.4} parent=5 // pred_check
      _
    $region10: #{conv_block_forward.4} parent=5 // pred_check_branch
      %161 = sbr.rel (%p158) target = $region12
    $region11: #{conv_block_forward.4} parent=5 // pred_region
      %s162 = ssub.s32 %s12, 1
      // Predicated region
      $region13: #{conv_block_forward.4} parent=11 // pred_check
        %p163 = pneg %p59
      $region14: #{conv_block_forward.4} parent=11 // pred_check_branch
        %165 = sbr.rel (%p163) target = $region16
      $region15: #{conv_block_forward.4} parent=11 // pred_region
        _
      $region16: #{conv_block_forward.4} parent=11 // pred_fallthru
        _
      // Predicated region
      $region17: #{conv_block_forward.4} parent=11 // pred_check
        %p166 = pneg %p80
      $region18: #{conv_block_forward.4} parent=11 // pred_check_branch
        %168 = sbr.rel (%p166) target = $region20
      $region19: #{conv_block_forward.4} parent=11 // pred_region
        _
      $region20: #{conv_block_forward.4} parent=11 // pred_fallthru
        _
    $region12: #{conv_block_forward.4} parent=5 // pred_fallthru
      _
    %p169 = scmp.lt.s32.totalorder %s12, 2
    // Predicated region
    $region21: #{conv_block_forward.4} parent=5 // pred_check
      %p170 = pneg %p169
    $region22: #{conv_block_forward.4} parent=5 // pred_check_branch
      %172 = sbr.rel (%p170) target = $region24
    $region23: #{conv_block_forward.4} parent=5 // pred_region
      // Predicated region
      $region25: #{conv_block_forward.4} parent=23 // pred_check
        %p173 = pneg %p32
      $region26: #{conv_block_forward.4} parent=23 // pred_check_branch
        %175 = sbr.rel (%p173) target = $region28
      $region27: #{conv_block_forward.4} parent=23 // pred_region
        %p176 = scmp.lt.s32.totalorder %s12, 1
        %s177 = scalar_select %p176, %s12, 1
        %s178 = smul.addr %s177, 108
        %s179 = smul.addr %s178, 8
        %s180 = scalar_lea.vmem %s0, %s179
      $region28: #{conv_block_forward.4} parent=23 // pred_fallthru
        _
    $region24: #{conv_block_forward.4} parent=5 // pred_fallthru
      _
    %p181 = scmp.le.s32.totalorder 1, %s12
    %p182 = scmp.lt.s32.totalorder %s12, 3
    %p183 = pnand %p181, %p182
    %p184 = pneg %p183
    // Predicated region
    $region29: #{conv_block_forward.4} parent=5 // pred_check
      _
    $region30: #{conv_block_forward.4} parent=5 // pred_check_branch
      %186 = sbr.rel (%p183) target = $region32
    $region31: #{conv_block_forward.4} parent=5 // pred_region
      %s187 = ssub.s32 %s12, 1
      %p188 = scmp.lt.s32.totalorder %s17, 1
      %s189 = scalar_select %p188, %s17, 1
      %s190 = smul.addr %s189, 108
      %s191 = smul.addr %s190, 8
      %s192 = scalar_lea.vmem %s0, %s191
      %p193 = pneg %p38
      %p194 = pneg %p35
      %p195 = pneg %p59
      %p196 = pneg %p56
      %p197 = pneg %p80
      %p198 = pneg %p77
      %p199 = pneg %p106
      %p200 = pneg %p103
      %p201 = scmp.lt.s32.totalorder %s17, 1
      %s202 = scalar_select %p201, %s17, 1
      %s203 = smul.addr %s202, 32
      %s204 = smul.addr %s203, 8
      %s205 = scalar_lea.vmem %s3, %s204
      %p206 = pneg %p127
      %p207 = pneg %p124
      %p208 = pneg %p148
      %p209 = pneg %p145
      %p210 = scmp.lt.s32.totalorder %s17, 1
      %s211 = scalar_select %p210, %s17, 1
      %s212 = smul.addr %s211, 108
      %s213 = smul.addr %s212, 8
      %s214 = scalar_lea.vmem %s0, %s213
      %p215 = scmp.lt.s32.totalorder %s17, 1
      %s216 = scalar_select %p215, %s17, 1
      %s217 = smul.addr %s216, 32
      %s218 = smul.addr %s217, 8
      %s219 = scalar_lea.vmem %s3, %s218
      %p221 = scmp.eq.s32.totalorder %s17, 0
      // Predicated region
      $region33: #{conv_block_forward.4} parent=31 // pred_check
        %p222 = pneg %p221
      $region34: #{conv_block_forward.4} parent=31 // pred_check_branch
        %224 = sbr.rel (%p222) target = $region36
      $region35: #{conv_block_forward.4} parent=31 // pred_region
        %vm225 = vcmask 57344
        %226 = vst.msk [vmem:[%s4] sm:$0x1] %vm225, 0.0
        %227 = vst.msk [vmem:[%s5] sm:$0x1] %vm225, 0.0
      $region36: #{conv_block_forward.4} parent=31 // pred_fallthru
        _
      %v228 = vld [vmem:[%s214] sm:$0xff]
      %v229 = vld [vmem:[%s214 + $0x8] sm:$0xff]
      %v230 = vld [vmem:[%s214 + $0x10] sm:$0xff]
      %v231 = vld [vmem:[%s214 + $0x18] sm:$0xff]
      %v232 = vld [vmem:[%s214 + $0x20] sm:$0xff]
      %v233 = vld [vmem:[%s214 + $0x28] sm:$0xff]
      %v234 = vld [vmem:[%s214 + $0x30] sm:$0xff]
      %v235 = vld [vmem:[%s214 + $0x38] sm:$0xff]
      %v236 = vld [vmem:[%s214 + $0x40] sm:$0xff]
      %v237 = vld [vmem:[%s214 + $0x48] sm:$0xff]
      %v238 = vld [vmem:[%s214 + $0x50] sm:$0xff]
      %v239 = vld [vmem:[%s214 + $0x58] sm:$0xff]
      %v240 = vld [vmem:[%s214 + $0x60] sm:$0xff]
      %v241 = vld [vmem:[%s214 + $0x68] sm:$0xff]
      %v242 = vld [vmem:[%s214 + $0x70] sm:$0xff]
      %v243 = vld [vmem:[%s214 + $0x78] sm:$0xff]
      %v244 = vld [vmem:[%s214 + $0x80] sm:$0xff]
      %v245 = vld [vmem:[%s214 + $0x88] sm:$0xff]
      %v246 = vld [vmem:[%s214 + $0x90] sm:$0xff]
      %v247 = vld [vmem:[%s214 + $0x98] sm:$0xff]
      %v248 = vld [vmem:[%s214 + $0xa0] sm:$0xff]
      %v249 = vld [vmem:[%s214 + $0xa8] sm:$0xff]
      %v250 = vld [vmem:[%s214 + $0xb0] sm:$0xff]
      %v251 = vld [vmem:[%s214 + $0xb8] sm:$0xff]
      %v252 = vld [vmem:[%s214 + $0xc0] sm:$0xff]
      %v253 = vld [vmem:[%s214 + $0xc8] sm:$0xff]
      %v254 = vld [vmem:[%s214 + $0xd0] sm:$0xff]
      %v255 = vld [vmem:[%s214 + $0xd8] sm:$0xff]
      %v256 = vld [vmem:[%s214 + $0xe0] sm:$0xff]
      %v257 = vld [vmem:[%s214 + $0xe8] sm:$0xff]
      %v258 = vld [vmem:[%s214 + $0xf0] sm:$0xff]
      %v259 = vld [vmem:[%s214 + $0xf8] sm:$0xff]
      %v260 = vpack.c.bf16 %v229, %v228
      %v261 = vpack.c.bf16 %v231, %v230
      %v262 = vpack.c.bf16 %v233, %v232
      %v263 = vpack.c.bf16 %v235, %v234
      %v264 = vpack.c.bf16 %v237, %v236
      %v265 = vpack.c.bf16 %v239, %v238
      %v266 = vpack.c.bf16 %v241, %v240
      %v267 = vpack.c.bf16 %v243, %v242
      %v268 = vpack.c.bf16 %v245, %v244
      %v269 = vpack.c.bf16 %v247, %v246
      %v270 = vpack.c.bf16 %v249, %v248
      %v271 = vpack.c.bf16 %v251, %v250
      %v272 = vpack.c.bf16 %v253, %v252
      %v273 = vpack.c.bf16 %v255, %v254
      %v274 = vpack.c.bf16 %v257, %v256
      %v275 = vpack.c.bf16 %v259, %v258
      %v276 = vld [vmem:[%s1] sm:$0x3]
      %s277 = scalar_lea.vmem %s214, 288
      %v278 = vld [vmem:[%s277] sm:$0xff]
      %v279 = vld [vmem:[%s277 + $0x8] sm:$0xff]
      %v280 = vld [vmem:[%s277 + $0x10] sm:$0xff]
      %v281 = vld [vmem:[%s277 + $0x18] sm:$0xff]
      %v282 = vld [vmem:[%s277 + $0x20] sm:$0xff]
      %v283 = vld [vmem:[%s277 + $0x28] sm:$0xff]
      %v284 = vld [vmem:[%s277 + $0x30] sm:$0xff]
      %v285 = vld [vmem:[%s277 + $0x38] sm:$0xff]
      %v286 = vld [vmem:[%s277 + $0x40] sm:$0xff]
      %v287 = vld [vmem:[%s277 + $0x48] sm:$0xff]
      %v288 = vld [vmem:[%s277 + $0x50] sm:$0xff]
      %v289 = vld [vmem:[%s277 + $0x58] sm:$0xff]
      %v290 = vld [vmem:[%s277 + $0x60] sm:$0xff]
      %v291 = vld [vmem:[%s277 + $0x68] sm:$0xff]
      %v292 = vld [vmem:[%s277 + $0x70] sm:$0xff]
      %v293 = vld [vmem:[%s277 + $0x78] sm:$0xff]
      %v294 = vld [vmem:[%s277 + $0x80] sm:$0xff]
      %v295 = vld [vmem:[%s277 + $0x88] sm:$0xff]
      %v296 = vld [vmem:[%s277 + $0x90] sm:$0xff]
      %v297 = vld [vmem:[%s277 + $0x98] sm:$0xff]
      %v298 = vld [vmem:[%s277 + $0xa0] sm:$0xff]
      %v299 = vld [vmem:[%s277 + $0xa8] sm:$0xff]
      %v300 = vld [vmem:[%s277 + $0xb0] sm:$0xff]
      %v301 = vld [vmem:[%s277 + $0xb8] sm:$0xff]
      %v302 = vld [vmem:[%s277 + $0xc0] sm:$0xff]
      %v303 = vld [vmem:[%s277 + $0xc8] sm:$0xff]
      %v304 = vld [vmem:[%s277 + $0xd0] sm:$0xff]
      %v305 = vld [vmem:[%s277 + $0xd8] sm:$0xff]
      %v306 = vld [vmem:[%s277 + $0xe0] sm:$0xff]
      %v307 = vld [vmem:[%s277 + $0xe8] sm:$0xff]
      %v308 = vld [vmem:[%s277 + $0xf0] sm:$0xff]
      %v309 = vld [vmem:[%s277 + $0xf8] sm:$0xff]
      %v310 = vpack.c.bf16 %v279, %v278
      %v311 = vpack.c.bf16 %v281, %v280
      %v312 = vpack.c.bf16 %v283, %v282
      %v313 = vpack.c.bf16 %v285, %v284
      %v314 = vpack.c.bf16 %v287, %v286
      %v315 = vpack.c.bf16 %v289, %v288
      %v316 = vpack.c.bf16 %v291, %v290
      %v317 = vpack.c.bf16 %v293, %v292
      %v318 = vpack.c.bf16 %v295, %v294
      %v319 = vpack.c.bf16 %v297, %v296
      %v320 = vpack.c.bf16 %v299, %v298
      %v321 = vpack.c.bf16 %v301, %v300
      %v322 = vpack.c.bf16 %v303, %v302
      %v323 = vpack.c.bf16 %v305, %v304
      %v324 = vpack.c.bf16 %v307, %v306
      %v325 = vpack.c.bf16 %v309, %v308
      %s326 = scalar_lea.vmem %s1, 2
      %v327 = vld [vmem:[%s326] sm:$0x3]
      %vm328 = vcmask 31744
      %v330 = vsel %vm328, %v310, 0
      %v333 = vsel %vm328, %v311, 0
      %v336 = vsel %vm328, %v312, 0
      %v339 = vsel %vm328, %v313, 0
      %v342 = vsel %vm328, %v314, 0
      %v345 = vsel %vm328, %v315, 0
      %v348 = vsel %vm328, %v316, 0
      %v351 = vsel %vm328, %v317, 0
      %v354 = vsel %vm328, %v318, 0
      %v357 = vsel %vm328, %v319, 0
      %v360 = vsel %vm328, %v320, 0
      %v363 = vsel %vm328, %v321, 0
      %v366 = vsel %vm328, %v322, 0
      %v369 = vsel %vm328, %v323, 0
      %v372 = vsel %vm328, %v324, 0
      %v375 = vsel %vm328, %v325, 0
      %vm377 = vcmask 1041408
      %v379 = vsel %vm377, %v327, 0
      %381 = vmatprep.subr.bf16.mxu0 0
      %382 = vmatpush1.bf16.msra.mxu0 %v379
      %383 = vmatprep.subr.bf16.mxu0 0
      %384 = vmatpush1.bf16.msra.mxu0 0
      %385 = vmatprep.subr.bf16.mxu0 0
      %386 = vmatpush1.bf16.msra.mxu0 0
      %387 = vmatprep.subr.bf16.mxu0 0
      %388 = vmatpush1.bf16.msra.mxu0 0
      %389 = vmatprep.subr.bf16.mxu0 0
      %390 = vmatpush1.bf16.msra.mxu0 0
      %391 = vmatprep.subr.bf16.mxu0 0
      %392 = vmatpush1.bf16.msra.mxu0 0
      %393 = vmatprep.subr.bf16.mxu0 0
      %394 = vmatpush1.bf16.msra.mxu0 0
      %395 = vmatprep.subr.bf16.mxu0 0
      %396 = vmatpush1.bf16.msra.mxu0 0
      %397 = vmatprep.subr.bf16.mxu0 0
      %398 = vmatpush1.bf16.msra.mxu0 0
      %399 = vmatprep.subr.bf16.mxu0 0
      %400 = vmatpush1.bf16.msra.mxu0 0
      %401 = vmatprep.subr.bf16.mxu0 0
      %402 = vmatpush1.bf16.msra.mxu0 0
      %403 = vmatprep.subr.bf16.mxu0 0
      %404 = vmatpush1.bf16.msra.mxu0 0
      %405 = vmatprep.subr.bf16.mxu0 0
      %406 = vmatpush1.bf16.msra.mxu0 0
      %407 = vmatprep.subr.bf16.mxu0 0
      %408 = vmatpush1.bf16.msra.mxu0 0
      %409 = vmatprep.subr.bf16.mxu0 0
      %410 = vmatpush1.bf16.msra.mxu0 0
      %411 = vmatprep.subr.bf16.mxu0 0
      %412 = vmatpush1.bf16.msra.mxu0 0
      %413 = vmatprep.mubr.bf16.mxu0 0
      %414 = vmatmul.mubr.bf16.gmra.mrb[0].mxu0 %v330
      %v415 = vpop.f32.mrb[0].mxu0
      %v416 = vadd.f32 0.0, %v415
      %v417 = vpop.f32.mrb[0].mxu0
      %v418 = vpop.f32.mrb[0].mxu0
      %v419 = vadd.f32 0.0, %v418
      %v420 = vpop.f32.mrb[0].mxu0
      %421 = vmatprep.mubr.bf16.mxu0 0
      %422 = vmatmul.mubr.bf16.gmra.mrb[0].mxu0 %v333
      %v423 = vpop.f32.mrb[0].mxu0
      %v424 = vadd.f32 0.0, %v423
      %v425 = vpop.f32.mrb[0].mxu0
      %v426 = vpop.f32.mrb[0].mxu0
      %v427 = vadd.f32 0.0, %v426
      %v428 = vpop.f32.mrb[0].mxu0
      %429 = vmatprep.mubr.bf16.mxu0 0
      %430 = vmatmul.mubr.bf16.gmra.mrb[0].mxu0 %v336
      %v431 = vpop.f32.mrb[0].mxu0
      %v432 = vadd.f32 0.0, %v431
      %v433 = vpop.f32.mrb[0].mxu0
      %v434 = vpop.f32.mrb[0].mxu0
      %v435 = vadd.f32 0.0, %v434
      %v436 = vpop.f32.mrb[0].mxu0
      %437 = vmatprep.mubr.bf16.mxu0 0
      %438 = vmatmul.mubr.bf16.gmra.mrb[0].mxu0 %v339
      %v439 = vpop.f32.mrb[0].mxu0
      %v440 = vadd.f32 0.0, %v439
      %v441 = vpop.f32.mrb[0].mxu0
      %v442 = vpop.f32.mrb[0].mxu0
      %v443 = vadd.f32 0.0, %v442
      %v444 = vpop.f32.mrb[0].mxu0
      %445 = vmatprep.mubr.bf16.mxu0 0
      %446 = vmatmul.mubr.bf16.gmra.mrb[0].mxu0 %v342
      %v447 = vpop.f32.mrb[0].mxu0
      %v448 = vadd.f32 0.0, %v447
      %v449 = vpop.f32.mrb[0].mxu0
      %v450 = vpop.f32.mrb[0].mxu0
      %v451 = vadd.f32 0.0, %v450
      %v452 = vpop.f32.mrb[0].mxu0
      %453 = vmatprep.mubr.bf16.mxu0 0
      %454 = vmatmul.mubr.bf16.gmra.mrb[0].mxu0 %v345
      %v455 = vpop.f32.mrb[0].mxu0
      %v456 = vadd.f32 0.0, %v455
      %v457 = vpop.f32.mrb[0].mxu0
      %v458 = vpop.f32.mrb[0].mxu0
      %v459 = vadd.f32 0.0, %v458
      %v460 = vpop.f32.mrb[0].mxu0
      %461 = vmatprep.mubr.bf16.mxu0 0
      %462 = vmatmul.mubr.bf16.gmra.mrb[0].mxu0 %v348
      %v463 = vpop.f32.mrb[0].mxu0
      %v464 = vadd.f32 0.0, %v463
      %v465 = vpop.f32.mrb[0].mxu0
      %v466 = vpop.f32.mrb[0].mxu0
      %v467 = vadd.f32 0.0, %v466
      %v468 = vpop.f32.mrb[0].mxu0
      %469 = vmatprep.mubr.bf16.mxu0 0
      %470 = vmatmul.mubr.bf16.gmra.mrb[0].mxu0 %v351
      %v471 = vpop.f32.mrb[0].mxu0
      %v472 = vadd.f32 0.0, %v471
      %v473 = vpop.f32.mrb[0].mxu0
      %v474 = vpop.f32.mrb[0].mxu0
      %v475 = vadd.f32 0.0, %v474
      %v476 = vpop.f32.mrb[0].mxu0
      %477 = vmatprep.mubr.bf16.mxu0 0
      %478 = vmatmul.mubr.bf16.gmra.mrb[0].mxu0 %v354
      %v479 = vpop.f32.mrb[0].mxu0
      %v480 = vadd.f32 0.0, %v479
      %v481 = vpop.f32.mrb[0].mxu0
      %v482 = vpop.f32.mrb[0].mxu0
      %v483 = vadd.f32 0.0, %v482
      %v484 = vpop.f32.mrb[0].mxu0
      %485 = vmatprep.mubr.bf16.mxu0 0
      %486 = vmatmul.mubr.bf16.gmra.mrb[0].mxu0 %v357
      %v487 = vpop.f32.mrb[0].mxu0
      %v488 = vadd.f32 0.0, %v487
      %v489 = vpop.f32.mrb[0].mxu0
      %v490 = vpop.f32.mrb[0].mxu0
      %v491 = vadd.f32 0.0, %v490
      %v492 = vpop.f32.mrb[0].mxu0
      %493 = vmatprep.mubr.bf16.mxu0 0
      %494 = vmatmul.mubr.bf16.gmra.mrb[0].mxu0 %v360
      %v495 = vpop.f32.mrb[0].mxu0
      %v496 = vadd.f32 0.0, %v495
      %v497 = vpop.f32.mrb[0].mxu0
      %v498 = vpop.f32.mrb[0].mxu0
      %v499 = vadd.f32 0.0, %v498
      %v500 = vpop.f32.mrb[0].mxu0
      %501 = vmatprep.mubr.bf16.mxu0 0
      %502 = vmatmul.mubr.bf16.gmra.mrb[0].mxu0 %v363
      %v503 = vpop.f32.mrb[0].mxu0
      %v504 = vadd.f32 0.0, %v503
      %v505 = vpop.f32.mrb[0].mxu0
      %v506 = vpop.f32.mrb[0].mxu0
      %v507 = vadd.f32 0.0, %v506
      %v508 = vpop.f32.mrb[0].mxu0
      %509 = vmatprep.mubr.bf16.mxu0 0
      %510 = vmatmul.mubr.bf16.gmra.mrb[0].mxu0 %v366
      %v511 = vpop.f32.mrb[0].mxu0
      %v512 = vadd.f32 0.0, %v511
      %v513 = vpop.f32.mrb[0].mxu0
      %v514 = vpop.f32.mrb[0].mxu0
      %v515 = vadd.f32 0.0, %v514
      %v516 = vpop.f32.mrb[0].mxu0
      %517 = vmatprep.mubr.bf16.mxu0 0
      %518 = vmatmul.mubr.bf16.gmra.mrb[0].mxu0 %v369
      %v519 = vpop.f32.mrb[0].mxu0
      %v520 = vadd.f32 0.0, %v519
      %v521 = vpop.f32.mrb[0].mxu0
      %v522 = vpop.f32.mrb[0].mxu0
      %v523 = vadd.f32 0.0, %v522
      %v524 = vpop.f32.mrb[0].mxu0
      %525 = vmatprep.mubr.bf16.mxu0 0
      %526 = vmatmul.mubr.bf16.gmra.mrb[0].mxu0 %v372
      %v527 = vpop.f32.mrb[0].mxu0
      %v528 = vadd.f32 0.0, %v527
      %v529 = vpop.f32.mrb[0].mxu0
      %v530 = vpop.f32.mrb[0].mxu0
      %v531 = vadd.f32 0.0, %v530
      %v532 = vpop.f32.mrb[0].mxu0
      %533 = vmatprep.mubr.bf16.mxu0 0
      %534 = vmatmul.mubr.bf16.gmra.mrb[0].mxu0 %v375
      %v535 = vpop.f32.mrb[0].mxu0
      %v536 = vadd.f32 0.0, %v535
      %v537 = vpop.f32.mrb[0].mxu0
      %v538 = vpop.f32.mrb[0].mxu0
      %v539 = vadd.f32 0.0, %v538
      %v540 = vpop.f32.mrb[0].mxu0
      %541 = vdwg.mxu0
      %v543 = vsel %vm328, %v260, 0
      %v546 = vsel %vm328, %v261, 0
      %v549 = vsel %vm328, %v262, 0
      %v552 = vsel %vm328, %v263, 0
      %v555 = vsel %vm328, %v264, 0
      %v558 = vsel %vm328, %v265, 0
      %v561 = vsel %vm328, %v266, 0
      %v564 = vsel %vm328, %v267, 0
      %v567 = vsel %vm328, %v268, 0
      %v570 = vsel %vm328, %v269, 0
      %v573 = vsel %vm328, %v270, 0
      %v576 = vsel %vm328, %v271, 0
      %v579 = vsel %vm328, %v272, 0
      %v582 = vsel %vm328, %v273, 0
      %v585 = vsel %vm328, %v274, 0
      %v588 = vsel %vm328, %v275, 0
      %v591 = vsel %vm377, %v276, 0
      %593 = vmatprep.subr.bf16.mxu0 0
      %594 = vmatpush1.bf16.msra.mxu0 %v591
      %595 = vmatprep.subr.bf16.mxu0 0
      %596 = vmatpush1.bf16.msra.mxu0 0
      %597 = vmatprep.subr.bf16.mxu0 0
      %598 = vmatpush1.bf16.msra.mxu0 0
      %599 = vmatprep.subr.bf16.mxu0 0
      %600 = vmatpush1.bf16.msra.mxu0 0
      %601 = vmatprep.subr.bf16.mxu0 0
      %602 = vmatpush1.bf16.msra.mxu0 0
      %603 = vmatprep.subr.bf16.mxu0 0
      %604 = vmatpush1.bf16.msra.mxu0 0
      %605 = vmatprep.subr.bf16.mxu0 0
      %606 = vmatpush1.bf16.msra.mxu0 0
      %607 = vmatprep.subr.bf16.mxu0 0
      %608 = vmatpush1.bf16.msra.mxu0 0
      %609 = vmatprep.subr.bf16.mxu0 0
      %610 = vmatpush1.bf16.msra.mxu0 0
      %611 = vmatprep.subr.bf16.mxu0 0
      %612 = vmatpush1.bf16.msra.mxu0 0
      %613 = vmatprep.subr.bf16.mxu0 0
      %614 = vmatpush1.bf16.msra.mxu0 0
      %615 = vmatprep.subr.bf16.mxu0 0
      %616 = vmatpush1.bf16.msra.mxu0 0
      %617 = vmatprep.subr.bf16.mxu0 0
      %618 = vmatpush1.bf16.msra.mxu0 0
      %619 = vmatprep.subr.bf16.mxu0 0
      %620 = vmatpush1.bf16.msra.mxu0 0
      %621 = vmatprep.subr.bf16.mxu0 0
      %622 = vmatpush1.bf16.msra.mxu0 0
      %623 = vmatprep.subr.bf16.mxu0 0
      %624 = vmatpush1.bf16.msra.mxu0 0
      %625 = vmatprep.mubr.bf16.mxu0 0
      %626 = vmatmul.mubr.bf16.gmra.mrb[0].mxu0 %v543
      %v627 = vpop.f32.mrb[0].mxu0
      %v628 = vadd.f32 %v416, %v627
      %v629 = vpop.f32.mrb[0].mxu0
      %v630 = vpop.f32.mrb[0].mxu0
      %v631 = vadd.f32 %v419, %v630
      %v632 = vpop.f32.mrb[0].mxu0
      %633 = vmatprep.mubr.bf16.mxu0 0
      %634 = vmatmul.mubr.bf16.gmra.mrb[0].mxu0 %v546
      %v635 = vpop.f32.mrb[0].mxu0
      %v636 = vadd.f32 %v424, %v635
      %v637 = vpop.f32.mrb[0].mxu0
      %v638 = vpop.f32.mrb[0].mxu0
      %v639 = vadd.f32 %v427, %v638
      %v640 = vpop.f32.mrb[0].mxu0
      %641 = vmatprep.mubr.bf16.mxu0 0
      %642 = vmatmul.mubr.bf16.gmra.mrb[0].mxu0 %v549
      %v643 = vpop.f32.mrb[0].mxu0
      %v644 = vadd.f32 %v432, %v643
      %v645 = vpop.f32.mrb[0].mxu0
      %v646 = vpop.f32.mrb[0].mxu0
      %v647 = vadd.f32 %v435, %v646
      %v648 = vpop.f32.mrb[0].mxu0
      %649 = vmatprep.mubr.bf16.mxu0 0
      %650 = vmatmul.mubr.bf16.gmra.mrb[0].mxu0 %v552
      %v651 = vpop.f32.mrb[0].mxu0
      %v652 = vadd.f32 %v440, %v651
      %v653 = vpop.f32.mrb[0].mxu0
      %v654 = vpop.f32.mrb[0].mxu0
      %v655 = vadd.f32 %v443, %v654
      %v656 = vpop.f32.mrb[0].mxu0
      %657 = vmatprep.mubr.bf16.mxu0 0
      %658 = vmatmul.mubr.bf16.gmra.mrb[0].mxu0 %v555
      %v659 = vpop.f32.mrb[0].mxu0
      %v660 = vadd.f32 %v448, %v659
      %v661 = vpop.f32.mrb[0].mxu0
      %v662 = vpop.f32.mrb[0].mxu0
      %v663 = vadd.f32 %v451, %v662
      %v664 = vpop.f32.mrb[0].mxu0
      %665 = vmatprep.mubr.bf16.mxu0 0
      %666 = vmatmul.mubr.bf16.gmra.mrb[0].mxu0 %v558
      %v667 = vpop.f32.mrb[0].mxu0
      %v668 = vadd.f32 %v456, %v667
      %v669 = vpop.f32.mrb[0].mxu0
      %v670 = vpop.f32.mrb[0].mxu0
      %v671 = vadd.f32 %v459, %v670
      %v672 = vpop.f32.mrb[0].mxu0
      %673 = vmatprep.mubr.bf16.mxu0 0
      %674 = vmatmul.mubr.bf16.gmra.mrb[0].mxu0 %v561
      %v675 = vpop.f32.mrb[0].mxu0
      %v676 = vadd.f32 %v464, %v675
      %v677 = vpop.f32.mrb[0].mxu0
      %v678 = vpop.f32.mrb[0].mxu0
      %v679 = vadd.f32 %v467, %v678
      %v680 = vpop.f32.mrb[0].mxu0
      %681 = vmatprep.mubr.bf16.mxu0 0
      %682 = vmatmul.mubr.bf16.gmra.mrb[0].mxu0 %v564
      %v683 = vpop.f32.mrb[0].mxu0
      %v684 = vadd.f32 %v472, %v683
      %v685 = vpop.f32.mrb[0].mxu0
      %v686 = vpop.f32.mrb[0].mxu0
      %v687 = vadd.f32 %v475, %v686
      %v688 = vpop.f32.mrb[0].mxu0
      %689 = vmatprep.mubr.bf16.mxu0 0
      %690 = vmatmul.mubr.bf16.gmra.mrb[0].mxu0 %v567
      %v691 = vpop.f32.mrb[0].mxu0
      %v692 = vadd.f32 %v480, %v691
      %v693 = vpop.f32.mrb[0].mxu0
      %v694 = vpop.f32.mrb[0].mxu0
      %v695 = vadd.f32 %v483, %v694
      %v696 = vpop.f32.mrb[0].mxu0
      %697 = vmatprep.mubr.bf16.mxu0 0
      %698 = vmatmul.mubr.bf16.gmra.mrb[0].mxu0 %v570
      %v699 = vpop.f32.mrb[0].mxu0
      %v700 = vadd.f32 %v488, %v699
      %v701 = vpop.f32.mrb[0].mxu0
      %v702 = vpop.f32.mrb[0].mxu0
      %v703 = vadd.f32 %v491, %v702
      %v704 = vpop.f32.mrb[0].mxu0
      %705 = vmatprep.mubr.bf16.mxu0 0
      %706 = vmatmul.mubr.bf16.gmra.mrb[0].mxu0 %v573
      %v707 = vpop.f32.mrb[0].mxu0
      %v708 = vadd.f32 %v496, %v707
      %v709 = vpop.f32.mrb[0].mxu0
      %v710 = vpop.f32.mrb[0].mxu0
      %v711 = vadd.f32 %v499, %v710
      %v712 = vpop.f32.mrb[0].mxu0
      %713 = vmatprep.mubr.bf16.mxu0 0
      %714 = vmatmul.mubr.bf16.gmra.mrb[0].mxu0 %v576
      %v715 = vpop.f32.mrb[0].mxu0
      %v716 = vadd.f32 %v504, %v715
      %v717 = vpop.f32.mrb[0].mxu0
      %v718 = vpop.f32.mrb[0].mxu0
      %v719 = vadd.f32 %v507, %v718
      %v720 = vpop.f32.mrb[0].mxu0
      %721 = vmatprep.mubr.bf16.mxu0 0
      %722 = vmatmul.mubr.bf16.gmra.mrb[0].mxu0 %v579
      %v723 = vpop.f32.mrb[0].mxu0
      %v724 = vadd.f32 %v512, %v723
      %v725 = vpop.f32.mrb[0].mxu0
      %v726 = vpop.f32.mrb[0].mxu0
      %v727 = vadd.f32 %v515, %v726
      %v728 = vpop.f32.mrb[0].mxu0
      %729 = vmatprep.mubr.bf16.mxu0 0
      %730 = vmatmul.mubr.bf16.gmra.mrb[0].mxu0 %v582
      %v731 = vpop.f32.mrb[0].mxu0
      %v732 = vadd.f32 %v520, %v731
      %v733 = vpop.f32.mrb[0].mxu0
      %v734 = vpop.f32.mrb[0].mxu0
      %v735 = vadd.f32 %v523, %v734
      %v736 = vpop.f32.mrb[0].mxu0
      %737 = vmatprep.mubr.bf16.mxu0 0
      %738 = vmatmul.mubr.bf16.gmra.mrb[0].mxu0 %v585
      %v739 = vpop.f32.mrb[0].mxu0
      %v740 = vadd.f32 %v528, %v739
      %v741 = vpop.f32.mrb[0].mxu0
      %v742 = vpop.f32.mrb[0].mxu0
      %v743 = vadd.f32 %v531, %v742
      %v744 = vpop.f32.mrb[0].mxu0
      %745 = vmatprep.mubr.bf16.mxu0 0
      %746 = vmatmul.mubr.bf16.gmra.mrb[0].mxu0 %v588
      %v747 = vpop.f32.mrb[0].mxu0
      %v748 = vadd.f32 %v536, %v747
      %v749 = vpop.f32.mrb[0].mxu0
      %v750 = vpop.f32.mrb[0].mxu0
      %v751 = vadd.f32 %v539, %v750
      %v752 = vpop.f32.mrb[0].mxu0
      %753 = vdwg.mxu0
      %s754 = scalar_lea.vmem %s214, 576
      %v755 = vld [vmem:[%s754] sm:$0xff]
      %v756 = vld [vmem:[%s754 + $0x8] sm:$0xff]
      %v757 = vld [vmem:[%s754 + $0x10] sm:$0xff]
      %v758 = vld [vmem:[%s754 + $0x18] sm:$0xff]
      %v759 = vld [vmem:[%s754 + $0x20] sm:$0xff]
      %v760 = vld [vmem:[%s754 + $0x28] sm:$0xff]
      %v761 = vld [vmem:[%s754 + $0x30] sm:$0xff]
      %v762 = vld [vmem:[%s754 + $0x38] sm:$0xff]
      %v763 = vld [vmem:[%s754 + $0x40] sm:$0xff]
      %v764 = vld [vmem:[%s754 + $0x48] sm:$0xff]
      %v765 = vld [vmem:[%s754 + $0x50] sm:$0xff]
      %v766 = vld [vmem:[%s754 + $0x58] sm:$0xff]
      %v767 = vld [vmem:[%s754 + $0x60] sm:$0xff]
      %v768 = vld [vmem:[%s754 + $0x68] sm:$0xff]
      %v769 = vld [vmem:[%s754 + $0x70] sm:$0xff]
      %v770 = vld [vmem:[%s754 + $0x78] sm:$0xff]
      %v771 = vld [vmem:[%s754 + $0x80] sm:$0xff]
      %v772 = vld [vmem:[%s754 + $0x88] sm:$0xff]
      %v773 = vld [vmem:[%s754 + $0x90] sm:$0xff]
      %v774 = vld [vmem:[%s754 + $0x98] sm:$0xff]
      %v775 = vld [vmem:[%s754 + $0xa0] sm:$0xff]
      %v776 = vld [vmem:[%s754 + $0xa8] sm:$0xff]
      %v777 = vld [vmem:[%s754 + $0xb0] sm:$0xff]
      %v778 = vld [vmem:[%s754 + $0xb8] sm:$0xff]
      %v779 = vld [vmem:[%s754 + $0xc0] sm:$0xff]
      %v780 = vld [vmem:[%s754 + $0xc8] sm:$0xff]
      %v781 = vld [vmem:[%s754 + $0xd0] sm:$0xff]
      %v782 = vld [vmem:[%s754 + $0xd8] sm:$0xff]
      %v783 = vld [vmem:[%s754 + $0xe0] sm:$0xff]
      %v784 = vld [vmem:[%s754 + $0xe8] sm:$0xff]
      %v785 = vld [vmem:[%s754 + $0xf0] sm:$0xff]
      %v786 = vld [vmem:[%s754 + $0xf8] sm:$0xff]
      %v787 = vpack.c.bf16 %v756, %v755
      %v788 = vpack.c.bf16 %v758, %v757
      %v789 = vpack.c.bf16 %v760, %v759
      %v790 = vpack.c.bf16 %v762, %v761
      %v791 = vpack.c.bf16 %v764, %v763
      %v792 = vpack.c.bf16 %v766, %v765
      %v793 = vpack.c.bf16 %v768, %v767
      %v794 = vpack.c.bf16 %v770, %v769
      %v795 = vpack.c.bf16 %v772, %v771
      %v796 = vpack.c.bf16 %v774, %v773
      %v797 = vpack.c.bf16 %v776, %v775
      %v798 = vpack.c.bf16 %v778, %v777
      %v799 = vpack.c.bf16 %v780, %v779
      %v800 = vpack.c.bf16 %v782, %v781
      %v801 = vpack.c.bf16 %v784, %v783
      %v802 = vpack.c.bf16 %v786, %v785
      %s803 = scalar_lea.vmem %s1, 4
      %v804 = vld [vmem:[%s803] sm:$0x3]
      %v806 = vsel %vm328, %v787, 0
      %v809 = vsel %vm328, %v788, 0
      %v812 = vsel %vm328, %v789, 0
      %v815 = vsel %vm328, %v790, 0
      %v818 = vsel %vm328, %v791, 0
      %v821 = vsel %vm328, %v792, 0
      %v824 = vsel %vm328, %v793, 0
      %v827 = vsel %vm328, %v794, 0
      %v830 = vsel %vm328, %v795, 0
      %v833 = vsel %vm328, %v796, 0
      %v836 = vsel %vm328, %v797, 0
      %v839 = vsel %vm328, %v798, 0
      %v842 = vsel %vm328, %v799, 0
      %v845 = vsel %vm328, %v800, 0
      %v848 = vsel %vm328, %v801, 0
      %v851 = vsel %vm328, %v802, 0
      %v854 = vsel %vm377, %v804, 0
      %856 = vmatprep.subr.bf16.mxu0 0
      %857 = vmatpush1.bf16.msra.mxu0 %v854
      %858 = vmatprep.subr.bf16.mxu0 0
      %859 = vmatpush1.bf16.msra.mxu0 0
      %860 = vmatprep.subr.bf16.mxu0 0
      %861 = vmatpush1.bf16.msra.mxu0 0
      %862 = vmatprep.subr.bf16.mxu0 0
      %863 = vmatpush1.bf16.msra.mxu0 0
      %864 = vmatprep.subr.bf16.mxu0 0
      %865 = vmatpush1.bf16.msra.mxu0 0
      %866 = vmatprep.subr.bf16.mxu0 0
      %867 = vmatpush1.bf16.msra.mxu0 0
      %868 = vmatprep.subr.bf16.mxu0 0
      %869 = vmatpush1.bf16.msra.mxu0 0
      %870 = vmatprep.subr.bf16.mxu0 0
      %871 = vmatpush1.bf16.msra.mxu0 0
      %872 = vmatprep.subr.bf16.mxu0 0
      %873 = vmatpush1.bf16.msra.mxu0 0
      %874 = vmatprep.subr.bf16.mxu0 0
      %875 = vmatpush1.bf16.msra.mxu0 0
      %876 = vmatprep.subr.bf16.mxu0 0
      %877 = vmatpush1.bf16.msra.mxu0 0
      %878 = vmatprep.subr.bf16.mxu0 0
      %879 = vmatpush1.bf16.msra.mxu0 0
      %880 = vmatprep.subr.bf16.mxu0 0
      %881 = vmatpush1.bf16.msra.mxu0 0
      %882 = vmatprep.subr.bf16.mxu0 0
      %883 = vmatpush1.bf16.msra.mxu0 0
      %884 = vmatprep.subr.bf16.mxu0 0
      %885 = vmatpush1.bf16.msra.mxu0 0
      %886 = vmatprep.subr.bf16.mxu0 0
      %887 = vmatpush1.bf16.msra.mxu0 0
      %888 = vmatprep.mubr.bf16.mxu0 0
      %889 = vmatmul.mubr.bf16.gmra.mrb[0].mxu0 %v806
      %v890 = vpop.f32.mrb[0].mxu0
      %v891 = vadd.f32 0.0, %v890
      %v892 = vpop.f32.mrb[0].mxu0
      %v893 = vpop.f32.mrb[0].mxu0
      %v894 = vadd.f32 0.0, %v893
      %v895 = vpop.f32.mrb[0].mxu0
      %896 = vmatprep.mubr.bf16.mxu0 0
      %897 = vmatmul.mubr.bf16.gmra.mrb[0].mxu0 %v809
      %v898 = vpop.f32.mrb[0].mxu0
      %v899 = vadd.f32 0.0, %v898
      %v900 = vpop.f32.mrb[0].mxu0
      %v901 = vpop.f32.mrb[0].mxu0
      %v902 = vadd.f32 0.0, %v901
      %v903 = vpop.f32.mrb[0].mxu0
      %904 = vmatprep.mubr.bf16.mxu0 0
      %905 = vmatmul.mubr.bf16.gmra.mrb[0].mxu0 %v812
      %v906 = vpop.f32.mrb[0].mxu0
      %v907 = vadd.f32 0.0, %v906
      %v908 = vpop.f32.mrb[0].mxu0
      %v909 = vpop.f32.mrb[0].mxu0
      %v910 = vadd.f32 0.0, %v909
      %v911 = vpop.f32.mrb[0].mxu0
      %912 = vmatprep.mubr.bf16.mxu0 0
      %913 = vmatmul.mubr.bf16.gmra.mrb[0].mxu0 %v815
      %v914 = vpop.f32.mrb[0].mxu0
      %v915 = vadd.f32 0.0, %v914
      %v916 = vpop.f32.mrb[0].mxu0
      %v917 = vpop.f32.mrb[0].mxu0
      %v918 = vadd.f32 0.0, %v917
      %v919 = vpop.f32.mrb[0].mxu0
      %920 = vmatprep.mubr.bf16.mxu0 0
      %921 = vmatmul.mubr.bf16.gmra.mrb[0].mxu0 %v818
      %v922 = vpop.f32.mrb[0].mxu0
      %v923 = vadd.f32 0.0, %v922
      %v924 = vpop.f32.mrb[0].mxu0
      %v925 = vpop.f32.mrb[0].mxu0
      %v926 = vadd.f32 0.0, %v925
      %v927 = vpop.f32.mrb[0].mxu0
      %928 = vmatprep.mubr.bf16.mxu0 0
      %929 = vmatmul.mubr.bf16.gmra.mrb[0].mxu0 %v821
      %v930 = vpop.f32.mrb[0].mxu0
      %v931 = vadd.f32 0.0, %v930
      %v932 = vpop.f32.mrb[0].mxu0
      %v933 = vpop.f32.mrb[0].mxu0
      %v934 = vadd.f32 0.0, %v933
      %v935 = vpop.f32.mrb[0].mxu0
      %936 = vmatprep.mubr.bf16.mxu0 0
      %937 = vmatmul.mubr.bf16.gmra.mrb[0].mxu0 %v824
      %v938 = vpop.f32.mrb[0].mxu0
      %v939 = vadd.f32 0.0, %v938
      %v940 = vpop.f32.mrb[0].mxu0
      %v941 = vpop.f32.mrb[0].mxu0
      %v942 = vadd.f32 0.0, %v941
      %v943 = vpop.f32.mrb[0].mxu0
      %944 = vmatprep.mubr.bf16.mxu0 0
      %945 = vmatmul.mubr.bf16.gmra.mrb[0].mxu0 %v827
      %v946 = vpop.f32.mrb[0].mxu0
      %v947 = vadd.f32 0.0, %v946
      %v948 = vpop.f32.mrb[0].mxu0
      %v949 = vpop.f32.mrb[0].mxu0
      %v950 = vadd.f32 0.0, %v949
      %v951 = vpop.f32.mrb[0].mxu0
      %952 = vmatprep.mubr.bf16.mxu0 0
      %953 = vmatmul.mubr.bf16.gmra.mrb[0].mxu0 %v830
      %v954 = vpop.f32.mrb[0].mxu0
      %v955 = vadd.f32 0.0, %v954
      %v956 = vpop.f32.mrb[0].mxu0
      %v957 = vpop.f32.mrb[0].mxu0
      %v958 = vadd.f32 0.0, %v957
      %v959 = vpop.f32.mrb[0].mxu0
      %960 = vmatprep.mubr.bf16.mxu0 0
      %961 = vmatmul.mubr.bf16.gmra.mrb[0].mxu0 %v833
      %v962 = vpop.f32.mrb[0].mxu0
      %v963 = vadd.f32 0.0, %v962
      %v964 = vpop.f32.mrb[0].mxu0
      %v965 = vpop.f32.mrb[0].mxu0
      %v966 = vadd.f32 0.0, %v965
      %v967 = vpop.f32.mrb[0].mxu0
      %968 = vmatprep.mubr.bf16.mxu0 0
      %969 = vmatmul.mubr.bf16.gmra.mrb[0].mxu0 %v836
      %v970 = vpop.f32.mrb[0].mxu0
      %v971 = vadd.f32 0.0, %v970
      %v972 = vpop.f32.mrb[0].mxu0
      %v973 = vpop.f32.mrb[0].mxu0
      %v974 = vadd.f32 0.0, %v973
      %v975 = vpop.f32.mrb[0].mxu0
      %976 = vmatprep.mubr.bf16.mxu0 0
      %977 = vmatmul.mubr.bf16.gmra.mrb[0].mxu0 %v839
      %v978 = vpop.f32.mrb[0].mxu0
      %v979 = vadd.f32 0.0, %v978
      %v980 = vpop.f32.mrb[0].mxu0
      %v981 = vpop.f32.mrb[0].mxu0
      %v982 = vadd.f32 0.0, %v981
      %v983 = vpop.f32.mrb[0].mxu0
      %984 = vmatprep.mubr.bf16.mxu0 0
      %985 = vmatmul.mubr.bf16.gmra.mrb[0].mxu0 %v842
      %v986 = vpop.f32.mrb[0].mxu0
      %v987 = vadd.f32 0.0, %v986
      %v988 = vpop.f32.mrb[0].mxu0
      %v989 = vpop.f32.mrb[0].mxu0
      %v990 = vadd.f32 0.0, %v989
      %v991 = vpop.f32.mrb[0].mxu0
      %992 = vmatprep.mubr.bf16.mxu0 0
      %993 = vmatmul.mubr.bf16.gmra.mrb[0].mxu0 %v845
      %v994 = vpop.f32.mrb[0].mxu0
      %v995 = vadd.f32 0.0, %v994
      %v996 = vpop.f32.mrb[0].mxu0
      %v997 = vpop.f32.mrb[0].mxu0
      %v998 = vadd.f32 0.0, %v997
      %v999 = vpop.f32.mrb[0].mxu0
      %1000 = vmatprep.mubr.bf16.mxu0 0
      %1001 = vmatmul.mubr.bf16.gmra.mrb[0].mxu0 %v848
      %v1002 = vpop.f32.mrb[0].mxu0
      %v1003 = vadd.f32 0.0, %v1002
      %v1004 = vpop.f32.mrb[0].mxu0
      %v1005 = vpop.f32.mrb[0].mxu0
      %v1006 = vadd.f32 0.0, %v1005
      %v1007 = vpop.f32.mrb[0].mxu0
      %1008 = vmatprep.mubr.bf16.mxu0 0
      %1009 = vmatmul.mubr.bf16.gmra.mrb[0].mxu0 %v851
      %v1010 = vpop.f32.mrb[0].mxu0
      %v1011 = vadd.f32 0.0, %v1010
      %v1012 = vpop.f32.mrb[0].mxu0
      %v1013 = vpop.f32.mrb[0].mxu0
      %v1014 = vadd.f32 0.0, %v1013
      %v1015 = vpop.f32.mrb[0].mxu0
      %1016 = vdwg.mxu0
      %v1017 = vadd.f32 %v628, %v891
      %v1018 = vadd.f32 %v631, %v894
      %v1019 = vadd.f32 %v636, %v899
      %v1020 = vadd.f32 %v639, %v902
      %v1021 = vadd.f32 %v644, %v907
      %v1022 = vadd.f32 %v647, %v910
      %v1023 = vadd.f32 %v652, %v915
      %v1024 = vadd.f32 %v655, %v918
      %v1025 = vadd.f32 %v660, %v923
      %v1026 = vadd.f32 %v663, %v926
      %v1027 = vadd.f32 %v668, %v931
      %v1028 = vadd.f32 %v671, %v934
      %v1029 = vadd.f32 %v676, %v939
      %v1030 = vadd.f32 %v679, %v942
      %v1031 = vadd.f32 %v684, %v947
      %v1032 = vadd.f32 %v687, %v950
      %v1033 = vadd.f32 %v692, %v955
      %v1034 = vadd.f32 %v695, %v958
      %v1035 = vadd.f32 %v700, %v963
      %v1036 = vadd.f32 %v703, %v966
      %v1037 = vadd.f32 %v708, %v971
      %v1038 = vadd.f32 %v711, %v974
      %v1039 = vadd.f32 %v716, %v979
      %v1040 = vadd.f32 %v719, %v982
      %v1041 = vadd.f32 %v724, %v987
      %v1042 = vadd.f32 %v727, %v990
      %v1043 = vadd.f32 %v732, %v995
      %v1044 = vadd.f32 %v735, %v998
      %v1045 = vadd.f32 %v740, %v1003
      %v1046 = vadd.f32 %v743, %v1006
      %v1047 = vadd.f32 %v748, %v1011
      %v1048 = vadd.f32 %v751, %v1014
      %v1049 = vld [vmem:[%s214 + $0x10] sm:$0xff]
      %v1050 = vld [vmem:[%s214 + $0x18] sm:$0xff]
      %v1051 = vld [vmem:[%s214 + $0x20] sm:$0xff]
      %v1052 = vld [vmem:[%s214 + $0x28] sm:$0xff]
      %v1053 = vld [vmem:[%s214 + $0x30] sm:$0xff]
      %v1054 = vld [vmem:[%s214 + $0x38] sm:$0xff]
      %v1055 = vld [vmem:[%s214 + $0x40] sm:$0xff]
      %v1056 = vld [vmem:[%s214 + $0x48] sm:$0xff]
      %v1057 = vld [vmem:[%s214 + $0x50] sm:$0xff]
      %v1058 = vld [vmem:[%s214 + $0x58] sm:$0xff]
      %v1059 = vld [vmem:[%s214 + $0x60] sm:$0xff]
      %v1060 = vld [vmem:[%s214 + $0x68] sm:$0xff]
      %v1061 = vld [vmem:[%s214 + $0x70] sm:$0xff]
      %v1062 = vld [vmem:[%s214 + $0x78] sm:$0xff]
      %v1063 = vld [vmem:[%s214 + $0x80] sm:$0xff]
      %v1064 = vld [vmem:[%s214 + $0x88] sm:$0xff]
      %v1065 = vld [vmem:[%s214 + $0x90] sm:$0xff]
      %v1066 = vld [vmem:[%s214 + $0x98] sm:$0xff]
      %v1067 = vld [vmem:[%s214 + $0xa0] sm:$0xff]
      %v1068 = vld [vmem:[%s214 + $0xa8] sm:$0xff]
      %v1069 = vld [vmem:[%s214 + $0xb0] sm:$0xff]
      %v1070 = vld [vmem:[%s214 + $0xb8] sm:$0xff]
      %v1071 = vld [vmem:[%s214 + $0xc0] sm:$0xff]
      %v1072 = vld [vmem:[%s214 + $0xc8] sm:$0xff]
      %v1073 = vld [vmem:[%s214 + $0xd0] sm:$0xff]
      %v1074 = vld [vmem:[%s214 + $0xd8] sm:$0xff]
      %v1075 = vld [vmem:[%s214 + $0xe0] sm:$0xff]
      %v1076 = vld [vmem:[%s214 + $0xe8] sm:$0xff]
      %v1077 = vld [vmem:[%s214 + $0xf0] sm:$0xff]
      %v1078 = vld [vmem:[%s214 + $0xf8] sm:$0xff]
      %v1079 = vld [vmem:[%s214 + $0x100] sm:$0xff]
      %v1080 = vld [vmem:[%s214 + $0x108] sm:$0xff]
      %v1081 = vpack.c.bf16 %v1050, %v1049
      %v1082 = vpack.c.bf16 %v1052, %v1051
      %v1083 = vpack.c.bf16 %v1054, %v1053
      %v1084 = vpack.c.bf16 %v1056, %v1055
      %v1085 = vpack.c.bf16 %v1058, %v1057
      %v1086 = vpack.c.bf16 %v1060, %v1059
      %v1087 = vpack.c.bf16 %v1062, %v1061
      %v1088 = vpack.c.bf16 %v1064, %v1063
      %v1089 = vpack.c.bf16 %v1066, %v1065
      %v1090 = vpack.c.bf16 %v1068, %v1067
      %v1091 = vpack.c.bf16 %v1070, %v1069
      %v1092 = vpack.c.bf16 %v1072, %v1071
      %v1093 = vpack.c.bf16 %v1074, %v1073
      %v1094 = vpack.c.bf16 %v1076, %v1075
      %v1095 = vpack.c.bf16 %v1078, %v1077
      %v1096 = vpack.c.bf16 %v1080, %v1079
      %s1097 = scalar_lea.vmem %s1, 6
      %v1098 = vld [vmem:[%s1097] sm:$0x3]
      %v1100 = vsel %vm328, %v1081, 0
      %v1103 = vsel %vm328, %v1082, 0
      %v1106 = vsel %vm328, %v1083, 0
      %v1109 = vsel %vm328, %v1084, 0
      %v1112 = vsel %vm328, %v1085, 0
      %v1115 = vsel %vm328, %v1086, 0
      %v1118 = vsel %vm328, %v1087, 0
      %v1121 = vsel %vm328, %v1088, 0
      %v1124 = vsel %vm328, %v1089, 0
      %v1127 = vsel %vm328, %v1090, 0
      %v1130 = vsel %vm328, %v1091, 0
      %v1133 = vsel %vm328, %v1092, 0
      %v1136 = vsel %vm328, %v1093, 0
      %v1139 = vsel %vm328, %v1094, 0
      %v1142 = vsel %vm328, %v1095, 0
      %v1145 = vsel %vm328, %v1096, 0
      %v1148 = vsel %vm377, %v1098, 0
      %1150 = vmatprep.subr.bf16.mxu0 0
      %1151 = vmatpush1.bf16.msra.mxu0 %v1148
      %1152 = vmatprep.subr.bf16.mxu0 0
      %1153 = vmatpush1.bf16.msra.mxu0 0
      %1154 = vmatprep.subr.bf16.mxu0 0
      %1155 = vmatpush1.bf16.msra.mxu0 0
      %1156 = vmatprep.subr.bf16.mxu0 0
      %1157 = vmatpush1.bf16.msra.mxu0 0
      %1158 = vmatprep.subr.bf16.mxu0 0
      %1159 = vmatpush1.bf16.msra.mxu0 0
      %1160 = vmatprep.subr.bf16.mxu0 0
      %1161 = vmatpush1.bf16.msra.mxu0 0
      %1162 = vmatprep.subr.bf16.mxu0 0
      %1163 = vmatpush1.bf16.msra.mxu0 0
      %1164 = vmatprep.subr.bf16.mxu0 0
      %1165 = vmatpush1.bf16.msra.mxu0 0
      %1166 = vmatprep.subr.bf16.mxu0 0
      %1167 = vmatpush1.bf16.msra.mxu0 0
      %1168 = vmatprep.subr.bf16.mxu0 0
      %1169 = vmatpush1.bf16.msra.mxu0 0
      %1170 = vmatprep.subr.bf16.mxu0 0
      %1171 = vmatpush1.bf16.msra.mxu0 0
      %1172 = vmatprep.subr.bf16.mxu0 0
      %1173 = vmatpush1.bf16.msra.mxu0 0
      %1174 = vmatprep.subr.bf16.mxu0 0
      %1175 = vmatpush1.bf16.msra.mxu0 0
      %1176 = vmatprep.subr.bf16.mxu0 0
      %1177 = vmatpush1.bf16.msra.mxu0 0
      %1178 = vmatprep.subr.bf16.mxu0 0
      %1179 = vmatpush1.bf16.msra.mxu0 0
      %1180 = vmatprep.subr.bf16.mxu0 0
      %1181 = vmatpush1.bf16.msra.mxu0 0
      %1182 = vmatprep.mubr.bf16.mxu0 0
      %1183 = vmatmul.mubr.bf16.gmra.mrb[0].mxu0 %v1100
      %v1184 = vpop.f32.mrb[0].mxu0
      %v1185 = vadd.f32 0.0, %v1184
      %v1186 = vpop.f32.mrb[0].mxu0
      %v1187 = vpop.f32.mrb[0].mxu0
      %v1188 = vadd.f32 0.0, %v1187
      %v1189 = vpop.f32.mrb[0].mxu0
      %1190 = vmatprep.mubr.bf16.mxu0 0
      %1191 = vmatmul.mubr.bf16.gmra.mrb[0].mxu0 %v1103
      %v1192 = vpop.f32.mrb[0].mxu0
      %v1193 = vadd.f32 0.0, %v1192
      %v1194 = vpop.f32.mrb[0].mxu0
      %v1195 = vpop.f32.mrb[0].mxu0
      %v1196 = vadd.f32 0.0, %v1195
      %v1197 = vpop.f32.mrb[0].mxu0
      %1198 = vmatprep.mubr.bf16.mxu0 0
      %1199 = vmatmul.mubr.bf16.gmra.mrb[0].mxu0 %v1106
      %v1200 = vpop.f32.mrb[0].mxu0
      %v1201 = vadd.f32 0.0, %v1200
      %v1202 = vpop.f32.mrb[0].mxu0
      %v1203 = vpop.f32.mrb[0].mxu0
      %v1204 = vadd.f32 0.0, %v1203
      %v1205 = vpop.f32.mrb[0].mxu0
      %1206 = vmatprep.mubr.bf16.mxu0 0
      %1207 = vmatmul.mubr.bf16.gmra.mrb[0].mxu0 %v1109
      %v1208 = vpop.f32.mrb[0].mxu0
      %v1209 = vadd.f32 0.0, %v1208
      %v1210 = vpop.f32.mrb[0].mxu0
      %v1211 = vpop.f32.mrb[0].mxu0
      %v1212 = vadd.f32 0.0, %v1211
      %v1213 = vpop.f32.mrb[0].mxu0
      %1214 = vmatprep.mubr.bf16.mxu0 0
      %1215 = vmatmul.mubr.bf16.gmra.mrb[0].mxu0 %v1112
      %v1216 = vpop.f32.mrb[0].mxu0
      %v1217 = vadd.f32 0.0, %v1216
      %v1218 = vpop.f32.mrb[0].mxu0
      %v1219 = vpop.f32.mrb[0].mxu0
      %v1220 = vadd.f32 0.0, %v1219
      %v1221 = vpop.f32.mrb[0].mxu0
      %1222 = vmatprep.mubr.bf16.mxu0 0
      %1223 = vmatmul.mubr.bf16.gmra.mrb[0].mxu0 %v1115
      %v1224 = vpop.f32.mrb[0].mxu0
      %v1225 = vadd.f32 0.0, %v1224
      %v1226 = vpop.f32.mrb[0].mxu0
      %v1227 = vpop.f32.mrb[0].mxu0
      %v1228 = vadd.f32 0.0, %v1227
      %v1229 = vpop.f32.mrb[0].mxu0
      %1230 = vmatprep.mubr.bf16.mxu0 0
      %1231 = vmatmul.mubr.bf16.gmra.mrb[0].mxu0 %v1118
      %v1232 = vpop.f32.mrb[0].mxu0
      %v1233 = vadd.f32 0.0, %v1232
      %v1234 = vpop.f32.mrb[0].mxu0
      %v1235 = vpop.f32.mrb[0].mxu0
      %v1236 = vadd.f32 0.0, %v1235
      %v1237 = vpop.f32.mrb[0].mxu0
      %1238 = vmatprep.mubr.bf16.mxu0 0
      %1239 = vmatmul.mubr.bf16.gmra.mrb[0].mxu0 %v1121
      %v1240 = vpop.f32.mrb[0].mxu0
      %v1241 = vadd.f32 0.0, %v1240
      %v1242 = vpop.f32.mrb[0].mxu0
      %v1243 = vpop.f32.mrb[0].mxu0
      %v1244 = vadd.f32 0.0, %v1243
      %v1245 = vpop.f32.mrb[0].mxu0
      %1246 = vmatprep.mubr.bf16.mxu0 0
      %1247 = vmatmul.mubr.bf16.gmra.mrb[0].mxu0 %v1124
      %v1248 = vpop.f32.mrb[0].mxu0
      %v1249 = vadd.f32 0.0, %v1248
      %v1250 = vpop.f32.mrb[0].mxu0
      %v1251 = vpop.f32.mrb[0].mxu0
      %v1252 = vadd.f32 0.0, %v1251
      %v1253 = vpop.f32.mrb[0].mxu0
      %1254 = vmatprep.mubr.bf16.mxu0 0
      %1255 = vmatmul.mubr.bf16.gmra.mrb[0].mxu0 %v1127
      %v1256 = vpop.f32.mrb[0].mxu0
      %v1257 = vadd.f32 0.0, %v1256
      %v1258 = vpop.f32.mrb[0].mxu0
      %v1259 = vpop.f32.mrb[0].mxu0
      %v1260 = vadd.f32 0.0, %v1259
      %v1261 = vpop.f32.mrb[0].mxu0
      %1262 = vmatprep.mubr.bf16.mxu0 0
      %1263 = vmatmul.mubr.bf16.gmra.mrb[0].mxu0 %v1130
      %v1264 = vpop.f32.mrb[0].mxu0
      %v1265 = vadd.f32 0.0, %v1264
      %v1266 = vpop.f32.mrb[0].mxu0
      %v1267 = vpop.f32.mrb[0].mxu0
      %v1268 = vadd.f32 0.0, %v1267
      %v1269 = vpop.f32.mrb[0].mxu0
      %1270 = vmatprep.mubr.bf16.mxu0 0
      %1271 = vmatmul.mubr.bf16.gmra.mrb[0].mxu0 %v1133
      %v1272 = vpop.f32.mrb[0].mxu0
      %v1273 = vadd.f32 0.0, %v1272
      %v1274 = vpop.f32.mrb[0].mxu0
      %v1275 = vpop.f32.mrb[0].mxu0
      %v1276 = vadd.f32 0.0, %v1275
      %v1277 = vpop.f32.mrb[0].mxu0
      %1278 = vmatprep.mubr.bf16.mxu0 0
      %1279 = vmatmul.mubr.bf16.gmra.mrb[0].mxu0 %v1136
      %v1280 = vpop.f32.mrb[0].mxu0
      %v1281 = vadd.f32 0.0, %v1280
      %v1282 = vpop.f32.mrb[0].mxu0
      %v1283 = vpop.f32.mrb[0].mxu0
      %v1284 = vadd.f32 0.0, %v1283
      %v1285 = vpop.f32.mrb[0].mxu0
      %1286 = vmatprep.mubr.bf16.mxu0 0
      %1287 = vmatmul.mubr.bf16.gmra.mrb[0].mxu0 %v1139
      %v1288 = vpop.f32.mrb[0].mxu0
      %v1289 = vadd.f32 0.0, %v1288
      %v1290 = vpop.f32.mrb[0].mxu0
      %v1291 = vpop.f32.mrb[0].mxu0
      %v1292 = vadd.f32 0.0, %v1291
      %v1293 = vpop.f32.mrb[0].mxu0
      %1294 = vmatprep.mubr.bf16.mxu0 0
      %1295 = vmatmul.mubr.bf16.gmra.mrb[0].mxu0 %v1142
      %v1296 = vpop.f32.mrb[0].mxu0
      %v1297 = vadd.f32 0.0, %v1296
      %v1298 = vpop.f32.mrb[0].mxu0
      %v1299 = vpop.f32.mrb[0].mxu0
      %v1300 = vadd.f32 0.0, %v1299
      %v1301 = vpop.f32.mrb[0].mxu0
      %1302 = vmatprep.mubr.bf16.mxu0 0
      %1303 = vmatmul.mubr.bf16.gmra.mrb[0].mxu0 %v1145
      %v1304 = vpop.f32.mrb[0].mxu0
      %v1305 = vadd.f32 0.0, %v1304
      %v1306 = vpop.f32.mrb[0].mxu0
      %v1307 = vpop.f32.mrb[0].mxu0
      %v1308 = vadd.f32 0.0, %v1307
      %v1309 = vpop.f32.mrb[0].mxu0
      %1310 = vdwg.mxu0
      %v1311 = vadd.f32 %v1017, %v1185
      %v1312 = vadd.f32 %v1018, %v1188
      %v1313 = vadd.f32 %v1019, %v1193
      %v1314 = vadd.f32 %v1020, %v1196
      %v1315 = vadd.f32 %v1021, %v1201
      %v1316 = vadd.f32 %v1022, %v1204
      %v1317 = vadd.f32 %v1023, %v1209
      %v1318 = vadd.f32 %v1024, %v1212
      %v1319 = vadd.f32 %v1025, %v1217
      %v1320 = vadd.f32 %v1026, %v1220
      %v1321 = vadd.f32 %v1027, %v1225
      %v1322 = vadd.f32 %v1028, %v1228
      %v1323 = vadd.f32 %v1029, %v1233
      %v1324 = vadd.f32 %v1030, %v1236
      %v1325 = vadd.f32 %v1031, %v1241
      %v1326 = vadd.f32 %v1032, %v1244
      %v1327 = vadd.f32 %v1033, %v1249
      %v1328 = vadd.f32 %v1034, %v1252
      %v1329 = vadd.f32 %v1035, %v1257
      %v1330 = vadd.f32 %v1036, %v1260
      %v1331 = vadd.f32 %v1037, %v1265
      %v1332 = vadd.f32 %v1038, %v1268
      %v1333 = vadd.f32 %v1039, %v1273
      %v1334 = vadd.f32 %v1040, %v1276
      %v1335 = vadd.f32 %v1041, %v1281
      %v1336 = vadd.f32 %v1042, %v1284
      %v1337 = vadd.f32 %v1043, %v1289
      %v1338 = vadd.f32 %v1044, %v1292
      %v1339 = vadd.f32 %v1045, %v1297
      %v1340 = vadd.f32 %v1046, %v1300
      %v1341 = vadd.f32 %v1047, %v1305
      %v1342 = vadd.f32 %v1048, %v1308
      %v1343 = vld [vmem:[%s277 + $0x10] sm:$0xff]
      %v1344 = vld [vmem:[%s277 + $0x18] sm:$0xff]
      %v1345 = vld [vmem:[%s277 + $0x20] sm:$0xff]
      %v1346 = vld [vmem:[%s277 + $0x28] sm:$0xff]
      %v1347 = vld [vmem:[%s277 + $0x30] sm:$0xff]
      %v1348 = vld [vmem:[%s277 + $0x38] sm:$0xff]
      %v1349 = vld [vmem:[%s277 + $0x40] sm:$0xff]
      %v1350 = vld [vmem:[%s277 + $0x48] sm:$0xff]
      %v1351 = vld [vmem:[%s277 + $0x50] sm:$0xff]
      %v1352 = vld [vmem:[%s277 + $0x58] sm:$0xff]
      %v1353 = vld [vmem:[%s277 + $0x60] sm:$0xff]
      %v1354 = vld [vmem:[%s277 + $0x68] sm:$0xff]
      %v1355 = vld [vmem:[%s277 + $0x70] sm:$0xff]
      %v1356 = vld [vmem:[%s277 + $0x78] sm:$0xff]
      %v1357 = vld [vmem:[%s277 + $0x80] sm:$0xff]
      %v1358 = vld [vmem:[%s277 + $0x88] sm:$0xff]
      %v1359 = vld [vmem:[%s277 + $0x90] sm:$0xff]
      %v1360 = vld [vmem:[%s277 + $0x98] sm:$0xff]
      %v1361 = vld [vmem:[%s277 + $0xa0] sm:$0xff]
      %v1362 = vld [vmem:[%s277 + $0xa8] sm:$0xff]
      %v1363 = vld [vmem:[%s277 + $0xb0] sm:$0xff]
      %v1364 = vld [vmem:[%s277 + $0xb8] sm:$0xff]
      %v1365 = vld [vmem:[%s277 + $0xc0] sm:$0xff]
      %v1366 = vld [vmem:[%s277 + $0xc8] sm:$0xff]
      %v1367 = vld [vmem:[%s277 + $0xd0] sm:$0xff]
      %v1368 = vld [vmem:[%s277 + $0xd8] sm:$0xff]
      %v1369 = vld [vmem:[%s277 + $0xe0] sm:$0xff]
      %v1370 = vld [vmem:[%s277 + $0xe8] sm:$0xff]
      %v1371 = vld [vmem:[%s277 + $0xf0] sm:$0xff]
      %v1372 = vld [vmem:[%s277 + $0xf8] sm:$0xff]
      %v1373 = vld [vmem:[%s277 + $0x100] sm:$0xff]
      %v1374 = vld [vmem:[%s277 + $0x108] sm:$0xff]
      %v1375 = vpack.c.bf16 %v1344, %v1343
      %v1376 = vpack.c.bf16 %v1346, %v1345
      %v1377 = vpack.c.bf16 %v1348, %v1347
      %v1378 = vpack.c.bf16 %v1350, %v1349
      %v1379 = vpack.c.bf16 %v1352, %v1351
      %v1380 = vpack.c.bf16 %v1354, %v1353
      %v1381 = vpack.c.bf16 %v1356, %v1355
      %v1382 = vpack.c.bf16 %v1358, %v1357
      %v1383 = vpack.c.bf16 %v1360, %v1359
      %v1384 = vpack.c.bf16 %v1362, %v1361
      %v1385 = vpack.c.bf16 %v1364, %v1363
      %v1386 = vpack.c.bf16 %v1366, %v1365
      %v1387 = vpack.c.bf16 %v1368, %v1367
      %v1388 = vpack.c.bf16 %v1370, %v1369
      %v1389 = vpack.c.bf16 %v1372, %v1371
      %v1390 = vpack.c.bf16 %v1374, %v1373
      %s1391 = scalar_lea.vmem %s1, 8
      %v1392 = vld [vmem:[%s1391] sm:$0x3]
      %v1394 = vsel %vm328, %v1375, 0
      %v1397 = vsel %vm328, %v1376, 0
      %v1400 = vsel %vm328, %v1377, 0
      %v1403 = vsel %vm328, %v1378, 0
      %v1406 = vsel %vm328, %v1379, 0
      %v1409 = vsel %vm328, %v1380, 0
      %v1412 = vsel %vm328, %v1381, 0
      %v1415 = vsel %vm328, %v1382, 0
      %v1418 = vsel %vm328, %v1383, 0
      %v1421 = vsel %vm328, %v1384, 0
      %v1424 = vsel %vm328, %v1385, 0
      %v1427 = vsel %vm328, %v1386, 0
      %v1430 = vsel %vm328, %v1387, 0
      %v1433 = vsel %vm328, %v1388, 0
      %v1436 = vsel %vm328, %v1389, 0
      %v1439 = vsel %vm328, %v1390, 0
      %v1442 = vsel %vm377, %v1392, 0
      %1444 = vmatprep.subr.bf16.mxu0 0
      %1445 = vmatpush1.bf16.msra.mxu0 %v1442
      %1446 = vmatprep.subr.bf16.mxu0 0
      %1447 = vmatpush1.bf16.msra.mxu0 0
      %1448 = vmatprep.subr.bf16.mxu0 0
      %1449 = vmatpush1.bf16.msra.mxu0 0
      %1450 = vmatprep.subr.bf16.mxu0 0
      %1451 = vmatpush1.bf16.msra.mxu0 0
      %1452 = vmatprep.subr.bf16.mxu0 0
      %1453 = vmatpush1.bf16.msra.mxu0 0
      %1454 = vmatprep.subr.bf16.mxu0 0
      %1455 = vmatpush1.bf16.msra.mxu0 0
      %1456 = vmatprep.subr.bf16.mxu0 0
      %1457 = vmatpush1.bf16.msra.mxu0 0
      %1458 = vmatprep.subr.bf16.mxu0 0
      %1459 = vmatpush1.bf16.msra.mxu0 0
      %1460 = vmatprep.subr.bf16.mxu0 0
      %1461 = vmatpush1.bf16.msra.mxu0 0
      %1462 = vmatprep.subr.bf16.mxu0 0
      %1463 = vmatpush1.bf16.msra.mxu0 0
      %1464 = vmatprep.subr.bf16.mxu0 0
      %1465 = vmatpush1.bf16.msra.mxu0 0
      %1466 = vmatprep.subr.bf16.mxu0 0
      %1467 = vmatpush1.bf16.msra.mxu0 0
      %1468 = vmatprep.subr.bf16.mxu0 0
      %1469 = vmatpush1.bf16.msra.mxu0 0
      %1470 = vmatprep.subr.bf16.mxu0 0
      %1471 = vmatpush1.bf16.msra.mxu0 0
      %1472 = vmatprep.subr.bf16.mxu0 0
      %1473 = vmatpush1.bf16.msra.mxu0 0
      %1474 = vmatprep.subr.bf16.mxu0 0
      %1475 = vmatpush1.bf16.msra.mxu0 0
      %1476 = vmatprep.mubr.bf16.mxu0 0
      %1477 = vmatmul.mubr.bf16.gmra.mrb[0].mxu0 %v1394
      %v1478 = vpop.f32.mrb[0].mxu0
      %v1479 = vadd.f32 0.0, %v1478
      %v1480 = vpop.f32.mrb[0].mxu0
      %v1481 = vpop.f32.mrb[0].mxu0
      %v1482 = vadd.f32 0.0, %v1481
      %v1483 = vpop.f32.mrb[0].mxu0
      %1484 = vmatprep.mubr.bf16.mxu0 0
      %1485 = vmatmul.mubr.bf16.gmra.mrb[0].mxu0 %v1397
      %v1486 = vpop.f32.mrb[0].mxu0
      %v1487 = vadd.f32 0.0, %v1486
      %v1488 = vpop.f32.mrb[0].mxu0
      %v1489 = vpop.f32.mrb[0].mxu0
      %v1490 = vadd.f32 0.0, %v1489
      %v1491 = vpop.f32.mrb[0].mxu0
      %1492 = vmatprep.mubr.bf16.mxu0 0
      %1493 = vmatmul.mubr.bf16.gmra.mrb[0].mxu0 %v1400
      %v1494 = vpop.f32.mrb[0].mxu0
      %v1495 = vadd.f32 0.0, %v1494
      %v1496 = vpop.f32.mrb[0].mxu0
      %v1497 = vpop.f32.mrb[0].mxu0
      %v1498 = vadd.f32 0.0, %v1497
      %v1499 = vpop.f32.mrb[0].mxu0
      %1500 = vmatprep.mubr.bf16.mxu0 0
      %1501 = vmatmul.mubr.bf16.gmra.mrb[0].mxu0 %v1403
      %v1502 = vpop.f32.mrb[0].mxu0
      %v1503 = vadd.f32 0.0, %v1502
      %v1504 = vpop.f32.mrb[0].mxu0
      %v1505 = vpop.f32.mrb[0].mxu0
      %v1506 = vadd.f32 0.0, %v1505
      %v1507 = vpop.f32.mrb[0].mxu0
      %1508 = vmatprep.mubr.bf16.mxu0 0
      %1509 = vmatmul.mubr.bf16.gmra.mrb[0].mxu0 %v1406
      %v1510 = vpop.f32.mrb[0].mxu0
      %v1511 = vadd.f32 0.0, %v1510
      %v1512 = vpop.f32.mrb[0].mxu0
      %v1513 = vpop.f32.mrb[0].mxu0
      %v1514 = vadd.f32 0.0, %v1513
      %v1515 = vpop.f32.mrb[0].mxu0
      %1516 = vmatprep.mubr.bf16.mxu0 0
      %1517 = vmatmul.mubr.bf16.gmra.mrb[0].mxu0 %v1409
      %v1518 = vpop.f32.mrb[0].mxu0
      %v1519 = vadd.f32 0.0, %v1518
      %v1520 = vpop.f32.mrb[0].mxu0
      %v1521 = vpop.f32.mrb[0].mxu0
      %v1522 = vadd.f32 0.0, %v1521
      %v1523 = vpop.f32.mrb[0].mxu0
      %1524 = vmatprep.mubr.bf16.mxu0 0
      %1525 = vmatmul.mubr.bf16.gmra.mrb[0].mxu0 %v1412
      %v1526 = vpop.f32.mrb[0].mxu0
      %v1527 = vadd.f32 0.0, %v1526
      %v1528 = vpop.f32.mrb[0].mxu0
      %v1529 = vpop.f32.mrb[0].mxu0
      %v1530 = vadd.f32 0.0, %v1529
      %v1531 = vpop.f32.mrb[0].mxu0
      %1532 = vmatprep.mubr.bf16.mxu0 0
      %1533 = vmatmul.mubr.bf16.gmra.mrb[0].mxu0 %v1415
      %v1534 = vpop.f32.mrb[0].mxu0
      %v1535 = vadd.f32 0.0, %v1534
      %v1536 = vpop.f32.mrb[0].mxu0
      %v1537 = vpop.f32.mrb[0].mxu0
      %v1538 = vadd.f32 0.0, %v1537
      %v1539 = vpop.f32.mrb[0].mxu0
      %1540 = vmatprep.mubr.bf16.mxu0 0
      %1541 = vmatmul.mubr.bf16.gmra.mrb[0].mxu0 %v1418
      %v1542 = vpop.f32.mrb[0].mxu0
      %v1543 = vadd.f32 0.0, %v1542
      %v1544 = vpop.f32.mrb[0].mxu0
      %v1545 = vpop.f32.mrb[0].mxu0
      %v1546 = vadd.f32 0.0, %v1545
      %v1547 = vpop.f32.mrb[0].mxu0
      %1548 = vmatprep.mubr.bf16.mxu0 0
      %1549 = vmatmul.mubr.bf16.gmra.mrb[0].mxu0 %v1421
      %v1550 = vpop.f32.mrb[0].mxu0
      %v1551 = vadd.f32 0.0, %v1550
      %v1552 = vpop.f32.mrb[0].mxu0
      %v1553 = vpop.f32.mrb[0].mxu0
      %v1554 = vadd.f32 0.0, %v1553
      %v1555 = vpop.f32.mrb[0].mxu0
      %1556 = vmatprep.mubr.bf16.mxu0 0
      %1557 = vmatmul.mubr.bf16.gmra.mrb[0].mxu0 %v1424
      %v1558 = vpop.f32.mrb[0].mxu0
      %v1559 = vadd.f32 0.0, %v1558
      %v1560 = vpop.f32.mrb[0].mxu0
      %v1561 = vpop.f32.mrb[0].mxu0
      %v1562 = vadd.f32 0.0, %v1561
      %v1563 = vpop.f32.mrb[0].mxu0
      %1564 = vmatprep.mubr.bf16.mxu0 0
      %1565 = vmatmul.mubr.bf16.gmra.mrb[0].mxu0 %v1427
      %v1566 = vpop.f32.mrb[0].mxu0
      %v1567 = vadd.f32 0.0, %v1566
      %v1568 = vpop.f32.mrb[0].mxu0
      %v1569 = vpop.f32.mrb[0].mxu0
      %v1570 = vadd.f32 0.0, %v1569
      %v1571 = vpop.f32.mrb[0].mxu0
      %1572 = vmatprep.mubr.bf16.mxu0 0
      %1573 = vmatmul.mubr.bf16.gmra.mrb[0].mxu0 %v1430
      %v1574 = vpop.f32.mrb[0].mxu0
      %v1575 = vadd.f32 0.0, %v1574
      %v1576 = vpop.f32.mrb[0].mxu0
      %v1577 = vpop.f32.mrb[0].mxu0
      %v1578 = vadd.f32 0.0, %v1577
      %v1579 = vpop.f32.mrb[0].mxu0
      %1580 = vmatprep.mubr.bf16.mxu0 0
      %1581 = vmatmul.mubr.bf16.gmra.mrb[0].mxu0 %v1433
      %v1582 = vpop.f32.mrb[0].mxu0
      %v1583 = vadd.f32 0.0, %v1582
      %v1584 = vpop.f32.mrb[0].mxu0
      %v1585 = vpop.f32.mrb[0].mxu0
      %v1586 = vadd.f32 0.0, %v1585
      %v1587 = vpop.f32.mrb[0].mxu0
      %1588 = vmatprep.mubr.bf16.mxu0 0
      %1589 = vmatmul.mubr.bf16.gmra.mrb[0].mxu0 %v1436
      %v1590 = vpop.f32.mrb[0].mxu0
      %v1591 = vadd.f32 0.0, %v1590
      %v1592 = vpop.f32.mrb[0].mxu0
      %v1593 = vpop.f32.mrb[0].mxu0
      %v1594 = vadd.f32 0.0, %v1593
      %v1595 = vpop.f32.mrb[0].mxu0
      %1596 = vmatprep.mubr.bf16.mxu0 0
      %1597 = vmatmul.mubr.bf16.gmra.mrb[0].mxu0 %v1439
      %v1598 = vpop.f32.mrb[0].mxu0
      %v1599 = vadd.f32 0.0, %v1598
      %v1600 = vpop.f32.mrb[0].mxu0
      %v1601 = vpop.f32.mrb[0].mxu0
      %v1602 = vadd.f32 0.0, %v1601
      %v1603 = vpop.f32.mrb[0].mxu0
      %1604 = vdwg.mxu0
      %v1605 = vadd.f32 %v1311, %v1479
      %v1606 = vadd.f32 %v1312, %v1482
      %v1607 = vadd.f32 %v1313, %v1487
      %v1608 = vadd.f32 %v1314, %v1490
      %v1609 = vadd.f32 %v1315, %v1495
      %v1610 = vadd.f32 %v1316, %v1498
      %v1611 = vadd.f32 %v1317, %v1503
      %v1612 = vadd.f32 %v1318, %v1506
      %v1613 = vadd.f32 %v1319, %v1511
      %v1614 = vadd.f32 %v1320, %v1514
      %v1615 = vadd.f32 %v1321, %v1519
      %v1616 = vadd.f32 %v1322, %v1522
      %v1617 = vadd.f32 %v1323, %v1527
      %v1618 = vadd.f32 %v1324, %v1530
      %v1619 = vadd.f32 %v1325, %v1535
      %v1620 = vadd.f32 %v1326, %v1538
      %v1621 = vadd.f32 %v1327, %v1543
      %v1622 = vadd.f32 %v1328, %v1546
      %v1623 = vadd.f32 %v1329, %v1551
      %v1624 = vadd.f32 %v1330, %v1554
      %v1625 = vadd.f32 %v1331, %v1559
      %v1626 = vadd.f32 %v1332, %v1562
      %v1627 = vadd.f32 %v1333, %v1567
      %v1628 = vadd.f32 %v1334, %v1570
      %v1629 = vadd.f32 %v1335, %v1575
      %v1630 = vadd.f32 %v1336, %v1578
      %v1631 = vadd.f32 %v1337, %v1583
      %v1632 = vadd.f32 %v1338, %v1586
      %v1633 = vadd.f32 %v1339, %v1591
      %v1634 = vadd.f32 %v1340, %v1594
      %v1635 = vadd.f32 %v1341, %v1599
      %v1636 = vadd.f32 %v1342, %v1602
      %v1637 = vld [vmem:[%s754 + $0x10] sm:$0xff]
      %v1638 = vld [vmem:[%s754 + $0x18] sm:$0xff]
      %v1639 = vld [vmem:[%s754 + $0x20] sm:$0xff]
      %v1640 = vld [vmem:[%s754 + $0x28] sm:$0xff]
      %v1641 = vld [vmem:[%s754 + $0x30] sm:$0xff]
      %v1642 = vld [vmem:[%s754 + $0x38] sm:$0xff]
      %v1643 = vld [vmem:[%s754 + $0x40] sm:$0xff]
      %v1644 = vld [vmem:[%s754 + $0x48] sm:$0xff]
      %v1645 = vld [vmem:[%s754 + $0x50] sm:$0xff]
      %v1646 = vld [vmem:[%s754 + $0x58] sm:$0xff]
      %v1647 = vld [vmem:[%s754 + $0x60] sm:$0xff]
      %v1648 = vld [vmem:[%s754 + $0x68] sm:$0xff]
      %v1649 = vld [vmem:[%s754 + $0x70] sm:$0xff]
      %v1650 = vld [vmem:[%s754 + $0x78] sm:$0xff]
      %v1651 = vld [vmem:[%s754 + $0x80] sm:$0xff]
      %v1652 = vld [vmem:[%s754 + $0x88] sm:$0xff]
      %v1653 = vld [vmem:[%s754 + $0x90] sm:$0xff]
      %v1654 = vld [vmem:[%s754 + $0x98] sm:$0xff]
      %v1655 = vld [vmem:[%s754 + $0xa0] sm:$0xff]
      %v1656 = vld [vmem:[%s754 + $0xa8] sm:$0xff]
      %v1657 = vld [vmem:[%s754 + $0xb0] sm:$0xff]
      %v1658 = vld [vmem:[%s754 + $0xb8] sm:$0xff]
      %v1659 = vld [vmem:[%s754 + $0xc0] sm:$0xff]
      %v1660 = vld [vmem:[%s754 + $0xc8] sm:$0xff]
      %v1661 = vld [vmem:[%s754 + $0xd0] sm:$0xff]
      %v1662 = vld [vmem:[%s754 + $0xd8] sm:$0xff]
      %v1663 = vld [vmem:[%s754 + $0xe0] sm:$0xff]
      %v1664 = vld [vmem:[%s754 + $0xe8] sm:$0xff]
      %v1665 = vld [vmem:[%s754 + $0xf0] sm:$0xff]
      %v1666 = vld [vmem:[%s754 + $0xf8] sm:$0xff]
      %v1667 = vld [vmem:[%s754 + $0x100] sm:$0xff]
      %v1668 = vld [vmem:[%s754 + $0x108] sm:$0xff]
      %v1669 = vpack.c.bf16 %v1638, %v1637
      %v1670 = vpack.c.bf16 %v1640, %v1639
      %v1671 = vpack.c.bf16 %v1642, %v1641
      %v1672 = vpack.c.bf16 %v1644, %v1643
      %v1673 = vpack.c.bf16 %v1646, %v1645
      %v1674 = vpack.c.bf16 %v1648, %v1647
      %v1675 = vpack.c.bf16 %v1650, %v1649
      %v1676 = vpack.c.bf16 %v1652, %v1651
      %v1677 = vpack.c.bf16 %v1654, %v1653
      %v1678 = vpack.c.bf16 %v1656, %v1655
      %v1679 = vpack.c.bf16 %v1658, %v1657
      %v1680 = vpack.c.bf16 %v1660, %v1659
      %v1681 = vpack.c.bf16 %v1662, %v1661
      %v1682 = vpack.c.bf16 %v1664, %v1663
      %v1683 = vpack.c.bf16 %v1666, %v1665
      %v1684 = vpack.c.bf16 %v1668, %v1667
      %s1685 = scalar_lea.vmem %s1, 10
      %v1686 = vld [vmem:[%s1685] sm:$0x3]
      %v1688 = vsel %vm328, %v1669, 0
      %v1691 = vsel %vm328, %v1670, 0
      %v1694 = vsel %vm328, %v1671, 0
      %v1697 = vsel %vm328, %v1672, 0
      %v1700 = vsel %vm328, %v1673, 0
      %v1703 = vsel %vm328, %v1674, 0
      %v1706 = vsel %vm328, %v1675, 0
      %v1709 = vsel %vm328, %v1676, 0
      %v1712 = vsel %vm328, %v1677, 0
      %v1715 = vsel %vm328, %v1678, 0
      %v1718 = vsel %vm328, %v1679, 0
      %v1721 = vsel %vm328, %v1680, 0
      %v1724 = vsel %vm328, %v1681, 0
      %v1727 = vsel %vm328, %v1682, 0
      %v1730 = vsel %vm328, %v1683, 0
      %v1733 = vsel %vm328, %v1684, 0
      %v1736 = vsel %vm377, %v1686, 0
      %1738 = vmatprep.subr.bf16.mxu0 0
      %1739 = vmatpush1.bf16.msra.mxu0 %v1736
      %1740 = vmatprep.subr.bf16.mxu0 0
      %1741 = vmatpush1.bf16.msra.mxu0 0
      %1742 = vmatprep.subr.bf16.mxu0 0
      %1743 = vmatpush1.bf16.msra.mxu0 0
      %1744 = vmatprep.subr.bf16.mxu0 0
      %1745 = vmatpush1.bf16.msra.mxu0 0
      %1746 = vmatprep.subr.bf16.mxu0 0
      %1747 = vmatpush1.bf16.msra.mxu0 0
      %1748 = vmatprep.subr.bf16.mxu0 0
      %1749 = vmatpush1.bf16.msra.mxu0 0
      %1750 = vmatprep.subr.bf16.mxu0 0
      %1751 = vmatpush1.bf16.msra.mxu0 0
      %1752 = vmatprep.subr.bf16.mxu0 0
      %1753 = vmatpush1.bf16.msra.mxu0 0
      %1754 = vmatprep.subr.bf16.mxu0 0
      %1755 = vmatpush1.bf16.msra.mxu0 0
      %1756 = vmatprep.subr.bf16.mxu0 0
      %1757 = vmatpush1.bf16.msra.mxu0 0
      %1758 = vmatprep.subr.bf16.mxu0 0
      %1759 = vmatpush1.bf16.msra.mxu0 0
      %1760 = vmatprep.subr.bf16.mxu0 0
      %1761 = vmatpush1.bf16.msra.mxu0 0
      %1762 = vmatprep.subr.bf16.mxu0 0
      %1763 = vmatpush1.bf16.msra.mxu0 0
      %1764 = vmatprep.subr.bf16.mxu0 0
      %1765 = vmatpush1.bf16.msra.mxu0 0
      %1766 = vmatprep.subr.bf16.mxu0 0
      %1767 = vmatpush1.bf16.msra.mxu0 0
      %1768 = vmatprep.subr.bf16.mxu0 0
      %1769 = vmatpush1.bf16.msra.mxu0 0
      %1770 = vmatprep.mubr.bf16.mxu0 0
      %1771 = vmatmul.mubr.bf16.gmra.mrb[0].mxu0 %v1688
      %v1772 = vpop.f32.mrb[0].mxu0
      %v1773 = vadd.f32 0.0, %v1772
      %v1774 = vpop.f32.mrb[0].mxu0
      %v1775 = vpop.f32.mrb[0].mxu0
      %v1776 = vadd.f32 0.0, %v1775
      %v1777 = vpop.f32.mrb[0].mxu0
      %1778 = vmatprep.mubr.bf16.mxu0 0
      %1779 = vmatmul.mubr.bf16.gmra.mrb[0].mxu0 %v1691
      %v1780 = vpop.f32.mrb[0].mxu0
      %v1781 = vadd.f32 0.0, %v1780
      %v1782 = vpop.f32.mrb[0].mxu0
      %v1783 = vpop.f32.mrb[0].mxu0
      %v1784 = vadd.f32 0.0, %v1783
      %v1785 = vpop.f32.mrb[0].mxu0
      %1786 = vmatprep.mubr.bf16.mxu0 0
      %1787 = vmatmul.mubr.bf16.gmra.mrb[0].mxu0 %v1694
      %v1788 = vpop.f32.mrb[0].mxu0
      %v1789 = vadd.f32 0.0, %v1788
      %v1790 = vpop.f32.mrb[0].mxu0
      %v1791 = vpop.f32.mrb[0].mxu0
      %v1792 = vadd.f32 0.0, %v1791
      %v1793 = vpop.f32.mrb[0].mxu0
      %1794 = vmatprep.mubr.bf16.mxu0 0
      %1795 = vmatmul.mubr.bf16.gmra.mrb[0].mxu0 %v1697
      %v1796 = vpop.f32.mrb[0].mxu0
      %v1797 = vadd.f32 0.0, %v1796
      %v1798 = vpop.f32.mrb[0].mxu0
      %v1799 = vpop.f32.mrb[0].mxu0
      %v1800 = vadd.f32 0.0, %v1799
      %v1801 = vpop.f32.mrb[0].mxu0
      %1802 = vmatprep.mubr.bf16.mxu0 0
      %1803 = vmatmul.mubr.bf16.gmra.mrb[0].mxu0 %v1700
      %v1804 = vpop.f32.mrb[0].mxu0
      %v1805 = vadd.f32 0.0, %v1804
      %v1806 = vpop.f32.mrb[0].mxu0
      %v1807 = vpop.f32.mrb[0].mxu0
      %v1808 = vadd.f32 0.0, %v1807
      %v1809 = vpop.f32.mrb[0].mxu0
      %1810 = vmatprep.mubr.bf16.mxu0 0
      %1811 = vmatmul.mubr.bf16.gmra.mrb[0].mxu0 %v1703
      %v1812 = vpop.f32.mrb[0].mxu0
      %v1813 = vadd.f32 0.0, %v1812
      %v1814 = vpop.f32.mrb[0].mxu0
      %v1815 = vpop.f32.mrb[0].mxu0
      %v1816 = vadd.f32 0.0, %v1815
      %v1817 = vpop.f32.mrb[0].mxu0
      %1818 = vmatprep.mubr.bf16.mxu0 0
      %1819 = vmatmul.mubr.bf16.gmra.mrb[0].mxu0 %v1706
      %v1820 = vpop.f32.mrb[0].mxu0
      %v1821 = vadd.f32 0.0, %v1820
      %v1822 = vpop.f32.mrb[0].mxu0
      %v1823 = vpop.f32.mrb[0].mxu0
      %v1824 = vadd.f32 0.0, %v1823
      %v1825 = vpop.f32.mrb[0].mxu0
      %1826 = vmatprep.mubr.bf16.mxu0 0
      %1827 = vmatmul.mubr.bf16.gmra.mrb[0].mxu0 %v1709
      %v1828 = vpop.f32.mrb[0].mxu0
      %v1829 = vadd.f32 0.0, %v1828
      %v1830 = vpop.f32.mrb[0].mxu0
      %v1831 = vpop.f32.mrb[0].mxu0
      %v1832 = vadd.f32 0.0, %v1831
      %v1833 = vpop.f32.mrb[0].mxu0
      %1834 = vmatprep.mubr.bf16.mxu0 0
      %1835 = vmatmul.mubr.bf16.gmra.mrb[0].mxu0 %v1712
      %v1836 = vpop.f32.mrb[0].mxu0
      %v1837 = vadd.f32 0.0, %v1836
      %v1838 = vpop.f32.mrb[0].mxu0
      %v1839 = vpop.f32.mrb[0].mxu0
      %v1840 = vadd.f32 0.0, %v1839
      %v1841 = vpop.f32.mrb[0].mxu0
      %1842 = vmatprep.mubr.bf16.mxu0 0
      %1843 = vmatmul.mubr.bf16.gmra.mrb[0].mxu0 %v1715
      %v1844 = vpop.f32.mrb[0].mxu0
      %v1845 = vadd.f32 0.0, %v1844
      %v1846 = vpop.f32.mrb[0].mxu0
      %v1847 = vpop.f32.mrb[0].mxu0
      %v1848 = vadd.f32 0.0, %v1847
      %v1849 = vpop.f32.mrb[0].mxu0
      %1850 = vmatprep.mubr.bf16.mxu0 0
      %1851 = vmatmul.mubr.bf16.gmra.mrb[0].mxu0 %v1718
      %v1852 = vpop.f32.mrb[0].mxu0
      %v1853 = vadd.f32 0.0, %v1852
      %v1854 = vpop.f32.mrb[0].mxu0
      %v1855 = vpop.f32.mrb[0].mxu0
      %v1856 = vadd.f32 0.0, %v1855
      %v1857 = vpop.f32.mrb[0].mxu0
      %1858 = vmatprep.mubr.bf16.mxu0 0
      %1859 = vmatmul.mubr.bf16.gmra.mrb[0].mxu0 %v1721
      %v1860 = vpop.f32.mrb[0].mxu0
      %v1861 = vadd.f32 0.0, %v1860
      %v1862 = vpop.f32.mrb[0].mxu0
      %v1863 = vpop.f32.mrb[0].mxu0
      %v1864 = vadd.f32 0.0, %v1863
      %v1865 = vpop.f32.mrb[0].mxu0
      %1866 = vmatprep.mubr.bf16.mxu0 0
      %1867 = vmatmul.mubr.bf16.gmra.mrb[0].mxu0 %v1724
      %v1868 = vpop.f32.mrb[0].mxu0
      %v1869 = vadd.f32 0.0, %v1868
      %v1870 = vpop.f32.mrb[0].mxu0
      %v1871 = vpop.f32.mrb[0].mxu0
      %v1872 = vadd.f32 0.0, %v1871
      %v1873 = vpop.f32.mrb[0].mxu0
      %1874 = vmatprep.mubr.bf16.mxu0 0
      %1875 = vmatmul.mubr.bf16.gmra.mrb[0].mxu0 %v1727
      %v1876 = vpop.f32.mrb[0].mxu0
      %v1877 = vadd.f32 0.0, %v1876
      %v1878 = vpop.f32.mrb[0].mxu0
      %v1879 = vpop.f32.mrb[0].mxu0
      %v1880 = vadd.f32 0.0, %v1879
      %v1881 = vpop.f32.mrb[0].mxu0
      %1882 = vmatprep.mubr.bf16.mxu0 0
      %1883 = vmatmul.mubr.bf16.gmra.mrb[0].mxu0 %v1730
      %v1884 = vpop.f32.mrb[0].mxu0
      %v1885 = vadd.f32 0.0, %v1884
      %v1886 = vpop.f32.mrb[0].mxu0
      %v1887 = vpop.f32.mrb[0].mxu0
      %v1888 = vadd.f32 0.0, %v1887
      %v1889 = vpop.f32.mrb[0].mxu0
      %1890 = vmatprep.mubr.bf16.mxu0 0
      %1891 = vmatmul.mubr.bf16.gmra.mrb[0].mxu0 %v1733
      %v1892 = vpop.f32.mrb[0].mxu0
      %v1893 = vadd.f32 0.0, %v1892
      %v1894 = vpop.f32.mrb[0].mxu0
      %v1895 = vpop.f32.mrb[0].mxu0
      %v1896 = vadd.f32 0.0, %v1895
      %v1897 = vpop.f32.mrb[0].mxu0
      %1898 = vdwg.mxu0
      %v1899 = vadd.f32 %v1605, %v1773
      %v1900 = vadd.f32 %v1606, %v1776
      %v1901 = vadd.f32 %v1607, %v1781
      %v1902 = vadd.f32 %v1608, %v1784
      %v1903 = vadd.f32 %v1609, %v1789
      %v1904 = vadd.f32 %v1610, %v1792
      %v1905 = vadd.f32 %v1611, %v1797
      %v1906 = vadd.f32 %v1612, %v1800
      %v1907 = vadd.f32 %v1613, %v1805
      %v1908 = vadd.f32 %v1614, %v1808
      %v1909 = vadd.f32 %v1615, %v1813
      %v1910 = vadd.f32 %v1616, %v1816
      %v1911 = vadd.f32 %v1617, %v1821
      %v1912 = vadd.f32 %v1618, %v1824
      %v1913 = vadd.f32 %v1619, %v1829
      %v1914 = vadd.f32 %v1620, %v1832
      %v1915 = vadd.f32 %v1621, %v1837
      %v1916 = vadd.f32 %v1622, %v1840
      %v1917 = vadd.f32 %v1623, %v1845
      %v1918 = vadd.f32 %v1624, %v1848
      %v1919 = vadd.f32 %v1625, %v1853
      %v1920 = vadd.f32 %v1626, %v1856
      %v1921 = vadd.f32 %v1627, %v1861
      %v1922 = vadd.f32 %v1628, %v1864
      %v1923 = vadd.f32 %v1629, %v1869
      %v1924 = vadd.f32 %v1630, %v1872
      %v1925 = vadd.f32 %v1631, %v1877
      %v1926 = vadd.f32 %v1632, %v1880
      %v1927 = vadd.f32 %v1633, %v1885
      %v1928 = vadd.f32 %v1634, %v1888
      %v1929 = vadd.f32 %v1635, %v1893
      %v1930 = vadd.f32 %v1636, %v1896
      %v1931 = vld [vmem:[%s214 + $0x20] sm:$0xff]
      %v1932 = vld [vmem:[%s214 + $0x28] sm:$0xff]
      %v1933 = vld [vmem:[%s214 + $0x30] sm:$0xff]
      %v1934 = vld [vmem:[%s214 + $0x38] sm:$0xff]
      %v1935 = vld [vmem:[%s214 + $0x40] sm:$0xff]
      %v1936 = vld [vmem:[%s214 + $0x48] sm:$0xff]
      %v1937 = vld [vmem:[%s214 + $0x50] sm:$0xff]
      %v1938 = vld [vmem:[%s214 + $0x58] sm:$0xff]
      %v1939 = vld [vmem:[%s214 + $0x60] sm:$0xff]
      %v1940 = vld [vmem:[%s214 + $0x68] sm:$0xff]
      %v1941 = vld [vmem:[%s214 + $0x70] sm:$0xff]
      %v1942 = vld [vmem:[%s214 + $0x78] sm:$0xff]
      %v1943 = vld [vmem:[%s214 + $0x80] sm:$0xff]
      %v1944 = vld [vmem:[%s214 + $0x88] sm:$0xff]
      %v1945 = vld [vmem:[%s214 + $0x90] sm:$0xff]
      %v1946 = vld [vmem:[%s214 + $0x98] sm:$0xff]
      %v1947 = vld [vmem:[%s214 + $0xa0] sm:$0xff]
      %v1948 = vld [vmem:[%s214 + $0xa8] sm:$0xff]
      %v1949 = vld [vmem:[%s214 + $0xb0] sm:$0xff]
      %v1950 = vld [vmem:[%s214 + $0xb8] sm:$0xff]
      %v1951 = vld [vmem:[%s214 + $0xc0] sm:$0xff]
      %v1952 = vld [vmem:[%s214 + $0xc8] sm:$0xff]
      %v1953 = vld [vmem:[%s214 + $0xd0] sm:$0xff]
      %v1954 = vld [vmem:[%s214 + $0xd8] sm:$0xff]
      %v1955 = vld [vmem:[%s214 + $0xe0] sm:$0xff]
      %v1956 = vld [vmem:[%s214 + $0xe8] sm:$0xff]
      %v1957 = vld [vmem:[%s214 + $0xf0] sm:$0xff]
      %v1958 = vld [vmem:[%s214 + $0xf8] sm:$0xff]
      %v1959 = vld [vmem:[%s214 + $0x100] sm:$0xff]
      %v1960 = vld [vmem:[%s214 + $0x108] sm:$0xff]
      %v1961 = vld [vmem:[%s214 + $0x110] sm:$0xff]
      %v1962 = vld [vmem:[%s214 + $0x118] sm:$0xff]
      %v1963 = vpack.c.bf16 %v1932, %v1931
      %v1964 = vpack.c.bf16 %v1934, %v1933
      %v1965 = vpack.c.bf16 %v1936, %v1935
      %v1966 = vpack.c.bf16 %v1938, %v1937
      %v1967 = vpack.c.bf16 %v1940, %v1939
      %v1968 = vpack.c.bf16 %v1942, %v1941
      %v1969 = vpack.c.bf16 %v1944, %v1943
      %v1970 = vpack.c.bf16 %v1946, %v1945
      %v1971 = vpack.c.bf16 %v1948, %v1947
      %v1972 = vpack.c.bf16 %v1950, %v1949
      %v1973 = vpack.c.bf16 %v1952, %v1951
      %v1974 = vpack.c.bf16 %v1954, %v1953
      %v1975 = vpack.c.bf16 %v1956, %v1955
      %v1976 = vpack.c.bf16 %v1958, %v1957
      %v1977 = vpack.c.bf16 %v1960, %v1959
      %v1978 = vpack.c.bf16 %v1962, %v1961
      %s1979 = scalar_lea.vmem %s1, 12
      %v1980 = vld [vmem:[%s1979] sm:$0x3]
      %v1982 = vsel %vm328, %v1963, 0
      %v1985 = vsel %vm328, %v1964, 0
      %v1988 = vsel %vm328, %v1965, 0
      %v1991 = vsel %vm328, %v1966, 0
      %v1994 = vsel %vm328, %v1967, 0
      %v1997 = vsel %vm328, %v1968, 0
      %v2000 = vsel %vm328, %v1969, 0
      %v2003 = vsel %vm328, %v1970, 0
      %v2006 = vsel %vm328, %v1971, 0
      %v2009 = vsel %vm328, %v1972, 0
      %v2012 = vsel %vm328, %v1973, 0
      %v2015 = vsel %vm328, %v1974, 0
      %v2018 = vsel %vm328, %v1975, 0
      %v2021 = vsel %vm328, %v1976, 0
      %v2024 = vsel %vm328, %v1977, 0
      %v2027 = vsel %vm328, %v1978, 0
      %v2030 = vsel %vm377, %v1980, 0
      %2032 = vmatprep.subr.bf16.mxu0 0
      %2033 = vmatpush1.bf16.msra.mxu0 %v2030
      %2034 = vmatprep.subr.bf16.mxu0 0
      %2035 = vmatpush1.bf16.msra.mxu0 0
      %2036 = vmatprep.subr.bf16.mxu0 0
      %2037 = vmatpush1.bf16.msra.mxu0 0
      %2038 = vmatprep.subr.bf16.mxu0 0
      %2039 = vmatpush1.bf16.msra.mxu0 0
      %2040 = vmatprep.subr.bf16.mxu0 0
      %2041 = vmatpush1.bf16.msra.mxu0 0
      %2042 = vmatprep.subr.bf16.mxu0 0
      %2043 = vmatpush1.bf16.msra.mxu0 0
      %2044 = vmatprep.subr.bf16.mxu0 0
      %2045 = vmatpush1.bf16.msra.mxu0 0
      %2046 = vmatprep.subr.bf16.mxu0 0
      %2047 = vmatpush1.bf16.msra.mxu0 0
      %2048 = vmatprep.subr.bf16.mxu0 0
      %2049 = vmatpush1.bf16.msra.mxu0 0
      %2050 = vmatprep.subr.bf16.mxu0 0
      %2051 = vmatpush1.bf16.msra.mxu0 0
      %2052 = vmatprep.subr.bf16.mxu0 0
      %2053 = vmatpush1.bf16.msra.mxu0 0
      %2054 = vmatprep.subr.bf16.mxu0 0
      %2055 = vmatpush1.bf16.msra.mxu0 0
      %2056 = vmatprep.subr.bf16.mxu0 0
      %2057 = vmatpush1.bf16.msra.mxu0 0
      %2058 = vmatprep.subr.bf16.mxu0 0
      %2059 = vmatpush1.bf16.msra.mxu0 0
      %2060 = vmatprep.subr.bf16.mxu0 0
      %2061 = vmatpush1.bf16.msra.mxu0 0
      %2062 = vmatprep.subr.bf16.mxu0 0
      %2063 = vmatpush1.bf16.msra.mxu0 0
      %2064 = vmatprep.mubr.bf16.mxu0 0
      %2065 = vmatmul.mubr.bf16.gmra.mrb[0].mxu0 %v1982
      %v2066 = vpop.f32.mrb[0].mxu0
      %v2067 = vadd.f32 0.0, %v2066
      %v2068 = vpop.f32.mrb[0].mxu0
      %v2069 = vpop.f32.mrb[0].mxu0
      %v2070 = vadd.f32 0.0, %v2069
      %v2071 = vpop.f32.mrb[0].mxu0
      %2072 = vmatprep.mubr.bf16.mxu0 0
      %2073 = vmatmul.mubr.bf16.gmra.mrb[0].mxu0 %v1985
      %v2074 = vpop.f32.mrb[0].mxu0
      %v2075 = vadd.f32 0.0, %v2074
      %v2076 = vpop.f32.mrb[0].mxu0
      %v2077 = vpop.f32.mrb[0].mxu0
      %v2078 = vadd.f32 0.0, %v2077
      %v2079 = vpop.f32.mrb[0].mxu0
      %2080 = vmatprep.mubr.bf16.mxu0 0
      %2081 = vmatmul.mubr.bf16.gmra.mrb[0].mxu0 %v1988
      %v2082 = vpop.f32.mrb[0].mxu0
      %v2083 = vadd.f32 0.0, %v2082
      %v2084 = vpop.f32.mrb[0].mxu0
      %v2085 = vpop.f32.mrb[0].mxu0
      %v2086 = vadd.f32 0.0, %v2085
      %v2087 = vpop.f32.mrb[0].mxu0
      %2088 = vmatprep.mubr.bf16.mxu0 0
      %2089 = vmatmul.mubr.bf16.gmra.mrb[0].mxu0 %v1991
      %v2090 = vpop.f32.mrb[0].mxu0
      %v2091 = vadd.f32 0.0, %v2090
      %v2092 = vpop.f32.mrb[0].mxu0
      %v2093 = vpop.f32.mrb[0].mxu0
      %v2094 = vadd.f32 0.0, %v2093
      %v2095 = vpop.f32.mrb[0].mxu0
      %2096 = vmatprep.mubr.bf16.mxu0 0
      %2097 = vmatmul.mubr.bf16.gmra.mrb[0].mxu0 %v1994
      %v2098 = vpop.f32.mrb[0].mxu0
      %v2099 = vadd.f32 0.0, %v2098
      %v2100 = vpop.f32.mrb[0].mxu0
      %v2101 = vpop.f32.mrb[0].mxu0
      %v2102 = vadd.f32 0.0, %v2101
      %v2103 = vpop.f32.mrb[0].mxu0
      %2104 = vmatprep.mubr.bf16.mxu0 0
      %2105 = vmatmul.mubr.bf16.gmra.mrb[0].mxu0 %v1997
      %v2106 = vpop.f32.mrb[0].mxu0
      %v2107 = vadd.f32 0.0, %v2106
      %v2108 = vpop.f32.mrb[0].mxu0
      %v2109 = vpop.f32.mrb[0].mxu0
      %v2110 = vadd.f32 0.0, %v2109
      %v2111 = vpop.f32.mrb[0].mxu0
      %2112 = vmatprep.mubr.bf16.mxu0 0
      %2113 = vmatmul.mubr.bf16.gmra.mrb[0].mxu0 %v2000
      %v2114 = vpop.f32.mrb[0].mxu0
      %v2115 = vadd.f32 0.0, %v2114
      %v2116 = vpop.f32.mrb[0].mxu0
      %v2117 = vpop.f32.mrb[0].mxu0
      %v2118 = vadd.f32 0.0, %v2117
      %v2119 = vpop.f32.mrb[0].mxu0
      %2120 = vmatprep.mubr.bf16.mxu0 0
      %2121 = vmatmul.mubr.bf16.gmra.mrb[0].mxu0 %v2003
      %v2122 = vpop.f32.mrb[0].mxu0
      %v2123 = vadd.f32 0.0, %v2122
      %v2124 = vpop.f32.mrb[0].mxu0
      %v2125 = vpop.f32.mrb[0].mxu0
      %v2126 = vadd.f32 0.0, %v2125
      %v2127 = vpop.f32.mrb[0].mxu0
      %2128 = vmatprep.mubr.bf16.mxu0 0
      %2129 = vmatmul.mubr.bf16.gmra.mrb[0].mxu0 %v2006
      %v2130 = vpop.f32.mrb[0].mxu0
      %v2131 = vadd.f32 0.0, %v2130
      %v2132 = vpop.f32.mrb[0].mxu0
      %v2133 = vpop.f32.mrb[0].mxu0
      %v2134 = vadd.f32 0.0, %v2133
      %v2135 = vpop.f32.mrb[0].mxu0
      %2136 = vmatprep.mubr.bf16.mxu0 0
      %2137 = vmatmul.mubr.bf16.gmra.mrb[0].mxu0 %v2009
      %v2138 = vpop.f32.mrb[0].mxu0
      %v2139 = vadd.f32 0.0, %v2138
      %v2140 = vpop.f32.mrb[0].mxu0
      %v2141 = vpop.f32.mrb[0].mxu0
      %v2142 = vadd.f32 0.0, %v2141
      %v2143 = vpop.f32.mrb[0].mxu0
      %2144 = vmatprep.mubr.bf16.mxu0 0
      %2145 = vmatmul.mubr.bf16.gmra.mrb[0].mxu0 %v2012
      %v2146 = vpop.f32.mrb[0].mxu0
      %v2147 = vadd.f32 0.0, %v2146
      %v2148 = vpop.f32.mrb[0].mxu0
      %v2149 = vpop.f32.mrb[0].mxu0
      %v2150 = vadd.f32 0.0, %v2149
      %v2151 = vpop.f32.mrb[0].mxu0
      %2152 = vmatprep.mubr.bf16.mxu0 0
      %2153 = vmatmul.mubr.bf16.gmra.mrb[0].mxu0 %v2015
      %v2154 = vpop.f32.mrb[0].mxu0
      %v2155 = vadd.f32 0.0, %v2154
      %v2156 = vpop.f32.mrb[0].mxu0
      %v2157 = vpop.f32.mrb[0].mxu0
      %v2158 = vadd.f32 0.0, %v2157
      %v2159 = vpop.f32.mrb[0].mxu0
      %2160 = vmatprep.mubr.bf16.mxu0 0
      %2161 = vmatmul.mubr.bf16.gmra.mrb[0].mxu0 %v2018
      %v2162 = vpop.f32.mrb[0].mxu0
      %v2163 = vadd.f32 0.0, %v2162
      %v2164 = vpop.f32.mrb[0].mxu0
      %v2165 = vpop.f32.mrb[0].mxu0
      %v2166 = vadd.f32 0.0, %v2165
      %v2167 = vpop.f32.mrb[0].mxu0
      %2168 = vmatprep.mubr.bf16.mxu0 0
      %2169 = vmatmul.mubr.bf16.gmra.mrb[0].mxu0 %v2021
      %v2170 = vpop.f32.mrb[0].mxu0
      %v2171 = vadd.f32 0.0, %v2170
      %v2172 = vpop.f32.mrb[0].mxu0
      %v2173 = vpop.f32.mrb[0].mxu0
      %v2174 = vadd.f32 0.0, %v2173
      %v2175 = vpop.f32.mrb[0].mxu0
      %2176 = vmatprep.mubr.bf16.mxu0 0
      %2177 = vmatmul.mubr.bf16.gmra.mrb[0].mxu0 %v2024
      %v2178 = vpop.f32.mrb[0].mxu0
      %v2179 = vadd.f32 0.0, %v2178
      %v2180 = vpop.f32.mrb[0].mxu0
      %v2181 = vpop.f32.mrb[0].mxu0
      %v2182 = vadd.f32 0.0, %v2181
      %v2183 = vpop.f32.mrb[0].mxu0
      %2184 = vmatprep.mubr.bf16.mxu0 0
      %2185 = vmatmul.mubr.bf16.gmra.mrb[0].mxu0 %v2027
      %v2186 = vpop.f32.mrb[0].mxu0
      %v2187 = vadd.f32 0.0, %v2186
      %v2188 = vpop.f32.mrb[0].mxu0
      %v2189 = vpop.f32.mrb[0].mxu0
      %v2190 = vadd.f32 0.0, %v2189
      %v2191 = vpop.f32.mrb[0].mxu0
      %2192 = vdwg.mxu0
      %v2193 = vadd.f32 %v1899, %v2067
      %v2194 = vadd.f32 %v1900, %v2070
      %v2195 = vadd.f32 %v1901, %v2075
      %v2196 = vadd.f32 %v1902, %v2078
      %v2197 = vadd.f32 %v1903, %v2083
      %v2198 = vadd.f32 %v1904, %v2086
      %v2199 = vadd.f32 %v1905, %v2091
      %v2200 = vadd.f32 %v1906, %v2094
      %v2201 = vadd.f32 %v1907, %v2099
      %v2202 = vadd.f32 %v1908, %v2102
      %v2203 = vadd.f32 %v1909, %v2107
      %v2204 = vadd.f32 %v1910, %v2110
      %v2205 = vadd.f32 %v1911, %v2115
      %v2206 = vadd.f32 %v1912, %v2118
      %v2207 = vadd.f32 %v1913, %v2123
      %v2208 = vadd.f32 %v1914, %v2126
      %v2209 = vadd.f32 %v1915, %v2131
      %v2210 = vadd.f32 %v1916, %v2134
      %v2211 = vadd.f32 %v1917, %v2139
      %v2212 = vadd.f32 %v1918, %v2142
      %v2213 = vadd.f32 %v1919, %v2147
      %v2214 = vadd.f32 %v1920, %v2150
      %v2215 = vadd.f32 %v1921, %v2155
      %v2216 = vadd.f32 %v1922, %v2158
      %v2217 = vadd.f32 %v1923, %v2163
      %v2218 = vadd.f32 %v1924, %v2166
      %v2219 = vadd.f32 %v1925, %v2171
      %v2220 = vadd.f32 %v1926, %v2174
      %v2221 = vadd.f32 %v1927, %v2179
      %v2222 = vadd.f32 %v1928, %v2182
      %v2223 = vadd.f32 %v1929, %v2187
      %v2224 = vadd.f32 %v1930, %v2190
      %v2225 = vld [vmem:[%s277 + $0x20] sm:$0xff]
      %v2226 = vld [vmem:[%s277 + $0x28] sm:$0xff]
      %v2227 = vld [vmem:[%s277 + $0x30] sm:$0xff]
      %v2228 = vld [vmem:[%s277 + $0x38] sm:$0xff]
      %v2229 = vld [vmem:[%s277 + $0x40] sm:$0xff]
      %v2230 = vld [vmem:[%s277 + $0x48] sm:$0xff]
      %v2231 = vld [vmem:[%s277 + $0x50] sm:$0xff]
      %v2232 = vld [vmem:[%s277 + $0x58] sm:$0xff]
      %v2233 = vld [vmem:[%s277 + $0x60] sm:$0xff]
      %v2234 = vld [vmem:[%s277 + $0x68] sm:$0xff]
      %v2235 = vld [vmem:[%s277 + $0x70] sm:$0xff]
      %v2236 = vld [vmem:[%s277 + $0x78] sm:$0xff]
      %v2237 = vld [vmem:[%s277 + $0x80] sm:$0xff]
      %v2238 = vld [vmem:[%s277 + $0x88] sm:$0xff]
      %v2239 = vld [vmem:[%s277 + $0x90] sm:$0xff]
      %v2240 = vld [vmem:[%s277 + $0x98] sm:$0xff]
      %v2241 = vld [vmem:[%s277 + $0xa0] sm:$0xff]
      %v2242 = vld [vmem:[%s277 + $0xa8] sm:$0xff]
      %v2243 = vld [vmem:[%s277 + $0xb0] sm:$0xff]
      %v2244 = vld [vmem:[%s277 + $0xb8] sm:$0xff]
      %v2245 = vld [vmem:[%s277 + $0xc0] sm:$0xff]
      %v2246 = vld [vmem:[%s277 + $0xc8] sm:$0xff]
      %v2247 = vld [vmem:[%s277 + $0xd0] sm:$0xff]
      %v2248 = vld [vmem:[%s277 + $0xd8] sm:$0xff]
      %v2249 = vld [vmem:[%s277 + $0xe0] sm:$0xff]
      %v2250 = vld [vmem:[%s277 + $0xe8] sm:$0xff]
      %v2251 = vld [vmem:[%s277 + $0xf0] sm:$0xff]
      %v2252 = vld [vmem:[%s277 + $0xf8] sm:$0xff]
      %v2253 = vld [vmem:[%s277 + $0x100] sm:$0xff]
      %v2254 = vld [vmem:[%s277 + $0x108] sm:$0xff]
      %v2255 = vld [vmem:[%s277 + $0x110] sm:$0xff]
      %v2256 = vld [vmem:[%s277 + $0x118] sm:$0xff]
      %v2257 = vpack.c.bf16 %v2226, %v2225
      %v2258 = vpack.c.bf16 %v2228, %v2227
      %v2259 = vpack.c.bf16 %v2230, %v2229
      %v2260 = vpack.c.bf16 %v2232, %v2231
      %v2261 = vpack.c.bf16 %v2234, %v2233
      %v2262 = vpack.c.bf16 %v2236, %v2235
      %v2263 = vpack.c.bf16 %v2238, %v2237
      %v2264 = vpack.c.bf16 %v2240, %v2239
      %v2265 = vpack.c.bf16 %v2242, %v2241
      %v2266 = vpack.c.bf16 %v2244, %v2243
      %v2267 = vpack.c.bf16 %v2246, %v2245
      %v2268 = vpack.c.bf16 %v2248, %v2247
      %v2269 = vpack.c.bf16 %v2250, %v2249
      %v2270 = vpack.c.bf16 %v2252, %v2251
      %v2271 = vpack.c.bf16 %v2254, %v2253
      %v2272 = vpack.c.bf16 %v2256, %v2255
      %s2273 = scalar_lea.vmem %s1, 14
      %v2274 = vld [vmem:[%s2273] sm:$0x3]
      %v2276 = vsel %vm328, %v2257, 0
      %v2279 = vsel %vm328, %v2258, 0
      %v2282 = vsel %vm328, %v2259, 0
      %v2285 = vsel %vm328, %v2260, 0
      %v2288 = vsel %vm328, %v2261, 0
      %v2291 = vsel %vm328, %v2262, 0
      %v2294 = vsel %vm328, %v2263, 0
      %v2297 = vsel %vm328, %v2264, 0
      %v2300 = vsel %vm328, %v2265, 0
      %v2303 = vsel %vm328, %v2266, 0
      %v2306 = vsel %vm328, %v2267, 0
      %v2309 = vsel %vm328, %v2268, 0
      %v2312 = vsel %vm328, %v2269, 0
      %v2315 = vsel %vm328, %v2270, 0
      %v2318 = vsel %vm328, %v2271, 0
      %v2321 = vsel %vm328, %v2272, 0
      %v2324 = vsel %vm377, %v2274, 0
      %2326 = vmatprep.subr.bf16.mxu0 0
      %2327 = vmatpush1.bf16.msra.mxu0 %v2324
      %2328 = vmatprep.subr.bf16.mxu0 0
      %2329 = vmatpush1.bf16.msra.mxu0 0
      %2330 = vmatprep.subr.bf16.mxu0 0
      %2331 = vmatpush1.bf16.msra.mxu0 0
      %2332 = vmatprep.subr.bf16.mxu0 0
      %2333 = vmatpush1.bf16.msra.mxu0 0
      %2334 = vmatprep.subr.bf16.mxu0 0
      %2335 = vmatpush1.bf16.msra.mxu0 0
      %2336 = vmatprep.subr.bf16.mxu0 0
      %2337 = vmatpush1.bf16.msra.mxu0 0
      %2338 = vmatprep.subr.bf16.mxu0 0
      %2339 = vmatpush1.bf16.msra.mxu0 0
      %2340 = vmatprep.subr.bf16.mxu0 0
      %2341 = vmatpush1.bf16.msra.mxu0 0
      %2342 = vmatprep.subr.bf16.mxu0 0
      %2343 = vmatpush1.bf16.msra.mxu0 0
      %2344 = vmatprep.subr.bf16.mxu0 0
      %2345 = vmatpush1.bf16.msra.mxu0 0
      %2346 = vmatprep.subr.bf16.mxu0 0
      %2347 = vmatpush1.bf16.msra.mxu0 0
      %2348 = vmatprep.subr.bf16.mxu0 0
      %2349 = vmatpush1.bf16.msra.mxu0 0
      %2350 = vmatprep.subr.bf16.mxu0 0
      %2351 = vmatpush1.bf16.msra.mxu0 0
      %2352 = vmatprep.subr.bf16.mxu0 0
      %2353 = vmatpush1.bf16.msra.mxu0 0
      %2354 = vmatprep.subr.bf16.mxu0 0
      %2355 = vmatpush1.bf16.msra.mxu0 0
      %2356 = vmatprep.subr.bf16.mxu0 0
      %2357 = vmatpush1.bf16.msra.mxu0 0
      %2358 = vmatprep.mubr.bf16.mxu0 0
      %2359 = vmatmul.mubr.bf16.gmra.mrb[0].mxu0 %v2276
      %v2360 = vpop.f32.mrb[0].mxu0
      %v2361 = vadd.f32 0.0, %v2360
      %v2362 = vpop.f32.mrb[0].mxu0
      %v2363 = vpop.f32.mrb[0].mxu0
      %v2364 = vadd.f32 0.0, %v2363
      %v2365 = vpop.f32.mrb[0].mxu0
      %2366 = vmatprep.mubr.bf16.mxu0 0
      %2367 = vmatmul.mubr.bf16.gmra.mrb[0].mxu0 %v2279
      %v2368 = vpop.f32.mrb[0].mxu0
      %v2369 = vadd.f32 0.0, %v2368
      %v2370 = vpop.f32.mrb[0].mxu0
      %v2371 = vpop.f32.mrb[0].mxu0
      %v2372 = vadd.f32 0.0, %v2371
      %v2373 = vpop.f32.mrb[0].mxu0
      %2374 = vmatprep.mubr.bf16.mxu0 0
      %2375 = vmatmul.mubr.bf16.gmra.mrb[0].mxu0 %v2282
      %v2376 = vpop.f32.mrb[0].mxu0
      %v2377 = vadd.f32 0.0, %v2376
      %v2378 = vpop.f32.mrb[0].mxu0
      %v2379 = vpop.f32.mrb[0].mxu0
      %v2380 = vadd.f32 0.0, %v2379
      %v2381 = vpop.f32.mrb[0].mxu0
      %2382 = vmatprep.mubr.bf16.mxu0 0
      %2383 = vmatmul.mubr.bf16.gmra.mrb[0].mxu0 %v2285
      %v2384 = vpop.f32.mrb[0].mxu0
      %v2385 = vadd.f32 0.0, %v2384
      %v2386 = vpop.f32.mrb[0].mxu0
      %v2387 = vpop.f32.mrb[0].mxu0
      %v2388 = vadd.f32 0.0, %v2387
      %v2389 = vpop.f32.mrb[0].mxu0
      %2390 = vmatprep.mubr.bf16.mxu0 0
      %2391 = vmatmul.mubr.bf16.gmra.mrb[0].mxu0 %v2288
      %v2392 = vpop.f32.mrb[0].mxu0
      %v2393 = vadd.f32 0.0, %v2392
      %v2394 = vpop.f32.mrb[0].mxu0
      %v2395 = vpop.f32.mrb[0].mxu0
      %v2396 = vadd.f32 0.0, %v2395
      %v2397 = vpop.f32.mrb[0].mxu0
      %2398 = vmatprep.mubr.bf16.mxu0 0
      %2399 = vmatmul.mubr.bf16.gmra.mrb[0].mxu0 %v2291
      %v2400 = vpop.f32.mrb[0].mxu0
      %v2401 = vadd.f32 0.0, %v2400
      %v2402 = vpop.f32.mrb[0].mxu0
      %v2403 = vpop.f32.mrb[0].mxu0
      %v2404 = vadd.f32 0.0, %v2403
      %v2405 = vpop.f32.mrb[0].mxu0
      %2406 = vmatprep.mubr.bf16.mxu0 0
      %2407 = vmatmul.mubr.bf16.gmra.mrb[0].mxu0 %v2294
      %v2408 = vpop.f32.mrb[0].mxu0
      %v2409 = vadd.f32 0.0, %v2408
      %v2410 = vpop.f32.mrb[0].mxu0
      %v2411 = vpop.f32.mrb[0].mxu0
      %v2412 = vadd.f32 0.0, %v2411
      %v2413 = vpop.f32.mrb[0].mxu0
      %2414 = vmatprep.mubr.bf16.mxu0 0
      %2415 = vmatmul.mubr.bf16.gmra.mrb[0].mxu0 %v2297
      %v2416 = vpop.f32.mrb[0].mxu0
      %v2417 = vadd.f32 0.0, %v2416
      %v2418 = vpop.f32.mrb[0].mxu0
      %v2419 = vpop.f32.mrb[0].mxu0
      %v2420 = vadd.f32 0.0, %v2419
      %v2421 = vpop.f32.mrb[0].mxu0
      %2422 = vmatprep.mubr.bf16.mxu0 0
      %2423 = vmatmul.mubr.bf16.gmra.mrb[0].mxu0 %v2300
      %v2424 = vpop.f32.mrb[0].mxu0
      %v2425 = vadd.f32 0.0, %v2424
      %v2426 = vpop.f32.mrb[0].mxu0
      %v2427 = vpop.f32.mrb[0].mxu0
      %v2428 = vadd.f32 0.0, %v2427
      %v2429 = vpop.f32.mrb[0].mxu0
      %2430 = vmatprep.mubr.bf16.mxu0 0
      %2431 = vmatmul.mubr.bf16.gmra.mrb[0].mxu0 %v2303
      %v2432 = vpop.f32.mrb[0].mxu0
      %v2433 = vadd.f32 0.0, %v2432
      %v2434 = vpop.f32.mrb[0].mxu0
      %v2435 = vpop.f32.mrb[0].mxu0
      %v2436 = vadd.f32 0.0, %v2435
      %v2437 = vpop.f32.mrb[0].mxu0
      %2438 = vmatprep.mubr.bf16.mxu0 0
      %2439 = vmatmul.mubr.bf16.gmra.mrb[0].mxu0 %v2306
      %v2440 = vpop.f32.mrb[0].mxu0
      %v2441 = vadd.f32 0.0, %v2440
      %v2442 = vpop.f32.mrb[0].mxu0
      %v2443 = vpop.f32.mrb[0].mxu0
      %v2444 = vadd.f32 0.0, %v2443
      %v2445 = vpop.f32.mrb[0].mxu0
      %2446 = vmatprep.mubr.bf16.mxu0 0
      %2447 = vmatmul.mubr.bf16.gmra.mrb[0].mxu0 %v2309
      %v2448 = vpop.f32.mrb[0].mxu0
      %v2449 = vadd.f32 0.0, %v2448
      %v2450 = vpop.f32.mrb[0].mxu0
      %v2451 = vpop.f32.mrb[0].mxu0
      %v2452 = vadd.f32 0.0, %v2451
      %v2453 = vpop.f32.mrb[0].mxu0
      %2454 = vmatprep.mubr.bf16.mxu0 0
      %2455 = vmatmul.mubr.bf16.gmra.mrb[0].mxu0 %v2312
      %v2456 = vpop.f32.mrb[0].mxu0
      %v2457 = vadd.f32 0.0, %v2456
      %v2458 = vpop.f32.mrb[0].mxu0
      %v2459 = vpop.f32.mrb[0].mxu0
      %v2460 = vadd.f32 0.0, %v2459
      %v2461 = vpop.f32.mrb[0].mxu0
      %2462 = vmatprep.mubr.bf16.mxu0 0
      %2463 = vmatmul.mubr.bf16.gmra.mrb[0].mxu0 %v2315
      %v2464 = vpop.f32.mrb[0].mxu0
      %v2465 = vadd.f32 0.0, %v2464
      %v2466 = vpop.f32.mrb[0].mxu0
      %v2467 = vpop.f32.mrb[0].mxu0
      %v2468 = vadd.f32 0.0, %v2467
      %v2469 = vpop.f32.mrb[0].mxu0
      %2470 = vmatprep.mubr.bf16.mxu0 0
      %2471 = vmatmul.mubr.bf16.gmra.mrb[0].mxu0 %v2318
      %v2472 = vpop.f32.mrb[0].mxu0
      %v2473 = vadd.f32 0.0, %v2472
      %v2474 = vpop.f32.mrb[0].mxu0
      %v2475 = vpop.f32.mrb[0].mxu0
      %v2476 = vadd.f32 0.0, %v2475
      %v2477 = vpop.f32.mrb[0].mxu0
      %2478 = vmatprep.mubr.bf16.mxu0 0
      %2479 = vmatmul.mubr.bf16.gmra.mrb[0].mxu0 %v2321
      %v2480 = vpop.f32.mrb[0].mxu0
      %v2481 = vadd.f32 0.0, %v2480
      %v2482 = vpop.f32.mrb[0].mxu0
      %v2483 = vpop.f32.mrb[0].mxu0
      %v2484 = vadd.f32 0.0, %v2483
      %v2485 = vpop.f32.mrb[0].mxu0
      %2486 = vdwg.mxu0
      %v2487 = vadd.f32 %v2193, %v2361
      %v2488 = vadd.f32 %v2194, %v2364
      %v2489 = vadd.f32 %v2195, %v2369
      %v2490 = vadd.f32 %v2196, %v2372
      %v2491 = vadd.f32 %v2197, %v2377
      %v2492 = vadd.f32 %v2198, %v2380
      %v2493 = vadd.f32 %v2199, %v2385
      %v2494 = vadd.f32 %v2200, %v2388
      %v2495 = vadd.f32 %v2201, %v2393
      %v2496 = vadd.f32 %v2202, %v2396
      %v2497 = vadd.f32 %v2203, %v2401
      %v2498 = vadd.f32 %v2204, %v2404
      %v2499 = vadd.f32 %v2205, %v2409
      %v2500 = vadd.f32 %v2206, %v2412
      %v2501 = vadd.f32 %v2207, %v2417
      %v2502 = vadd.f32 %v2208, %v2420
      %v2503 = vadd.f32 %v2209, %v2425
      %v2504 = vadd.f32 %v2210, %v2428
      %v2505 = vadd.f32 %v2211, %v2433
      %v2506 = vadd.f32 %v2212, %v2436
      %v2507 = vadd.f32 %v2213, %v2441
      %v2508 = vadd.f32 %v2214, %v2444
      %v2509 = vadd.f32 %v2215, %v2449
      %v2510 = vadd.f32 %v2216, %v2452
      %v2511 = vadd.f32 %v2217, %v2457
      %v2512 = vadd.f32 %v2218, %v2460
      %v2513 = vadd.f32 %v2219, %v2465
      %v2514 = vadd.f32 %v2220, %v2468
      %v2515 = vadd.f32 %v2221, %v2473
      %v2516 = vadd.f32 %v2222, %v2476
      %v2517 = vadd.f32 %v2223, %v2481
      %v2518 = vadd.f32 %v2224, %v2484
      %v2519 = vld [vmem:[%s754 + $0x20] sm:$0xff]
      %v2520 = vld [vmem:[%s754 + $0x28] sm:$0xff]
      %v2521 = vld [vmem:[%s754 + $0x30] sm:$0xff]
      %v2522 = vld [vmem:[%s754 + $0x38] sm:$0xff]
      %v2523 = vld [vmem:[%s754 + $0x40] sm:$0xff]
      %v2524 = vld [vmem:[%s754 + $0x48] sm:$0xff]
      %v2525 = vld [vmem:[%s754 + $0x50] sm:$0xff]
      %v2526 = vld [vmem:[%s754 + $0x58] sm:$0xff]
      %v2527 = vld [vmem:[%s754 + $0x60] sm:$0xff]
      %v2528 = vld [vmem:[%s754 + $0x68] sm:$0xff]
      %v2529 = vld [vmem:[%s754 + $0x70] sm:$0xff]
      %v2530 = vld [vmem:[%s754 + $0x78] sm:$0xff]
      %v2531 = vld [vmem:[%s754 + $0x80] sm:$0xff]
      %v2532 = vld [vmem:[%s754 + $0x88] sm:$0xff]
      %v2533 = vld [vmem:[%s754 + $0x90] sm:$0xff]
      %v2534 = vld [vmem:[%s754 + $0x98] sm:$0xff]
      %v2535 = vld [vmem:[%s754 + $0xa0] sm:$0xff]
      %v2536 = vld [vmem:[%s754 + $0xa8] sm:$0xff]
      %v2537 = vld [vmem:[%s754 + $0xb0] sm:$0xff]
      %v2538 = vld [vmem:[%s754 + $0xb8] sm:$0xff]
      %v2539 = vld [vmem:[%s754 + $0xc0] sm:$0xff]
      %v2540 = vld [vmem:[%s754 + $0xc8] sm:$0xff]
      %v2541 = vld [vmem:[%s754 + $0xd0] sm:$0xff]
      %v2542 = vld [vmem:[%s754 + $0xd8] sm:$0xff]
      %v2543 = vld [vmem:[%s754 + $0xe0] sm:$0xff]
      %v2544 = vld [vmem:[%s754 + $0xe8] sm:$0xff]
      %v2545 = vld [vmem:[%s754 + $0xf0] sm:$0xff]
      %v2546 = vld [vmem:[%s754 + $0xf8] sm:$0xff]
      %v2547 = vld [vmem:[%s754 + $0x100] sm:$0xff]
      %v2548 = vld [vmem:[%s754 + $0x108] sm:$0xff]
      %v2549 = vld [vmem:[%s754 + $0x110] sm:$0xff]
      %v2550 = vld [vmem:[%s754 + $0x118] sm:$0xff]
      %v2551 = vpack.c.bf16 %v2520, %v2519
      %v2552 = vpack.c.bf16 %v2522, %v2521
      %v2553 = vpack.c.bf16 %v2524, %v2523
      %v2554 = vpack.c.bf16 %v2526, %v2525
      %v2555 = vpack.c.bf16 %v2528, %v2527
      %v2556 = vpack.c.bf16 %v2530, %v2529
      %v2557 = vpack.c.bf16 %v2532, %v2531
      %v2558 = vpack.c.bf16 %v2534, %v2533
      %v2559 = vpack.c.bf16 %v2536, %v2535
      %v2560 = vpack.c.bf16 %v2538, %v2537
      %v2561 = vpack.c.bf16 %v2540, %v2539
      %v2562 = vpack.c.bf16 %v2542, %v2541
      %v2563 = vpack.c.bf16 %v2544, %v2543
      %v2564 = vpack.c.bf16 %v2546, %v2545
      %v2565 = vpack.c.bf16 %v2548, %v2547
      %v2566 = vpack.c.bf16 %v2550, %v2549
      %s2567 = scalar_lea.vmem %s1, 16
      %v2568 = vld [vmem:[%s2567] sm:$0x3]
      %v2570 = vsel %vm328, %v2551, 0
      %v2573 = vsel %vm328, %v2552, 0
      %v2576 = vsel %vm328, %v2553, 0
      %v2579 = vsel %vm328, %v2554, 0
      %v2582 = vsel %vm328, %v2555, 0
      %v2585 = vsel %vm328, %v2556, 0
      %v2588 = vsel %vm328, %v2557, 0
      %v2591 = vsel %vm328, %v2558, 0
      %v2594 = vsel %vm328, %v2559, 0
      %v2597 = vsel %vm328, %v2560, 0
      %v2600 = vsel %vm328, %v2561, 0
      %v2603 = vsel %vm328, %v2562, 0
      %v2606 = vsel %vm328, %v2563, 0
      %v2609 = vsel %vm328, %v2564, 0
      %v2612 = vsel %vm328, %v2565, 0
      %v2615 = vsel %vm328, %v2566, 0
      %v2618 = vsel %vm377, %v2568, 0
      %2620 = vmatprep.subr.bf16.mxu0 0
      %2621 = vmatpush1.bf16.msra.mxu0 %v2618
      %2622 = vmatprep.subr.bf16.mxu0 0
      %2623 = vmatpush1.bf16.msra.mxu0 0
      %2624 = vmatprep.subr.bf16.mxu0 0
      %2625 = vmatpush1.bf16.msra.mxu0 0
      %2626 = vmatprep.subr.bf16.mxu0 0
      %2627 = vmatpush1.bf16.msra.mxu0 0
      %2628 = vmatprep.subr.bf16.mxu0 0
      %2629 = vmatpush1.bf16.msra.mxu0 0
      %2630 = vmatprep.subr.bf16.mxu0 0
      %2631 = vmatpush1.bf16.msra.mxu0 0
      %2632 = vmatprep.subr.bf16.mxu0 0
      %2633 = vmatpush1.bf16.msra.mxu0 0
      %2634 = vmatprep.subr.bf16.mxu0 0
      %2635 = vmatpush1.bf16.msra.mxu0 0
      %2636 = vmatprep.subr.bf16.mxu0 0
      %2637 = vmatpush1.bf16.msra.mxu0 0
      %2638 = vmatprep.subr.bf16.mxu0 0
      %2639 = vmatpush1.bf16.msra.mxu0 0
      %2640 = vmatprep.subr.bf16.mxu0 0
      %2641 = vmatpush1.bf16.msra.mxu0 0
      %2642 = vmatprep.subr.bf16.mxu0 0
      %2643 = vmatpush1.bf16.msra.mxu0 0
      %2644 = vmatprep.subr.bf16.mxu0 0
      %2645 = vmatpush1.bf16.msra.mxu0 0
      %2646 = vmatprep.subr.bf16.mxu0 0
      %2647 = vmatpush1.bf16.msra.mxu0 0
      %2648 = vmatprep.subr.bf16.mxu0 0
      %2649 = vmatpush1.bf16.msra.mxu0 0
      %2650 = vmatprep.subr.bf16.mxu0 0
      %2651 = vmatpush1.bf16.msra.mxu0 0
      %2652 = vmatprep.mubr.bf16.mxu0 0
      %2653 = vmatmul.mubr.bf16.gmra.mrb[0].mxu0 %v2570
      %v2654 = vpop.f32.mrb[0].mxu0
      %v2655 = vadd.f32 0.0, %v2654
      %v2656 = vpop.f32.mrb[0].mxu0
      %v2657 = vpop.f32.mrb[0].mxu0
      %v2658 = vadd.f32 0.0, %v2657
      %v2659 = vpop.f32.mrb[0].mxu0
      %2660 = vmatprep.mubr.bf16.mxu0 0
      %2661 = vmatmul.mubr.bf16.gmra.mrb[0].mxu0 %v2573
      %v2662 = vpop.f32.mrb[0].mxu0
      %v2663 = vadd.f32 0.0, %v2662
      %v2664 = vpop.f32.mrb[0].mxu0
      %v2665 = vpop.f32.mrb[0].mxu0
      %v2666 = vadd.f32 0.0, %v2665
      %v2667 = vpop.f32.mrb[0].mxu0
      %2668 = vmatprep.mubr.bf16.mxu0 0
      %2669 = vmatmul.mubr.bf16.gmra.mrb[0].mxu0 %v2576
      %v2670 = vpop.f32.mrb[0].mxu0
      %v2671 = vadd.f32 0.0, %v2670
      %v2672 = vpop.f32.mrb[0].mxu0
      %v2673 = vpop.f32.mrb[0].mxu0
      %v2674 = vadd.f32 0.0, %v2673
      %v2675 = vpop.f32.mrb[0].mxu0
      %2676 = vmatprep.mubr.bf16.mxu0 0
      %2677 = vmatmul.mubr.bf16.gmra.mrb[0].mxu0 %v2579
      %v2678 = vpop.f32.mrb[0].mxu0
      %v2679 = vadd.f32 0.0, %v2678
      %v2680 = vpop.f32.mrb[0].mxu0
      %v2681 = vpop.f32.mrb[0].mxu0
      %v2682 = vadd.f32 0.0, %v2681
      %v2683 = vpop.f32.mrb[0].mxu0
      %2684 = vmatprep.mubr.bf16.mxu0 0
      %2685 = vmatmul.mubr.bf16.gmra.mrb[0].mxu0 %v2582
      %v2686 = vpop.f32.mrb[0].mxu0
      %v2687 = vadd.f32 0.0, %v2686
      %v2688 = vpop.f32.mrb[0].mxu0
      %v2689 = vpop.f32.mrb[0].mxu0
      %v2690 = vadd.f32 0.0, %v2689
      %v2691 = vpop.f32.mrb[0].mxu0
      %2692 = vmatprep.mubr.bf16.mxu0 0
      %2693 = vmatmul.mubr.bf16.gmra.mrb[0].mxu0 %v2585
      %v2694 = vpop.f32.mrb[0].mxu0
      %v2695 = vadd.f32 0.0, %v2694
      %v2696 = vpop.f32.mrb[0].mxu0
      %v2697 = vpop.f32.mrb[0].mxu0
      %v2698 = vadd.f32 0.0, %v2697
      %v2699 = vpop.f32.mrb[0].mxu0
      %2700 = vmatprep.mubr.bf16.mxu0 0
      %2701 = vmatmul.mubr.bf16.gmra.mrb[0].mxu0 %v2588
      %v2702 = vpop.f32.mrb[0].mxu0
      %v2703 = vadd.f32 0.0, %v2702
      %v2704 = vpop.f32.mrb[0].mxu0
      %v2705 = vpop.f32.mrb[0].mxu0
      %v2706 = vadd.f32 0.0, %v2705
      %v2707 = vpop.f32.mrb[0].mxu0
      %2708 = vmatprep.mubr.bf16.mxu0 0
      %2709 = vmatmul.mubr.bf16.gmra.mrb[0].mxu0 %v2591
      %v2710 = vpop.f32.mrb[0].mxu0
      %v2711 = vadd.f32 0.0, %v2710
      %v2712 = vpop.f32.mrb[0].mxu0
      %v2713 = vpop.f32.mrb[0].mxu0
      %v2714 = vadd.f32 0.0, %v2713
      %v2715 = vpop.f32.mrb[0].mxu0
      %2716 = vmatprep.mubr.bf16.mxu0 0
      %2717 = vmatmul.mubr.bf16.gmra.mrb[0].mxu0 %v2594
      %v2718 = vpop.f32.mrb[0].mxu0
      %v2719 = vadd.f32 0.0, %v2718
      %v2720 = vpop.f32.mrb[0].mxu0
      %v2721 = vpop.f32.mrb[0].mxu0
      %v2722 = vadd.f32 0.0, %v2721
      %v2723 = vpop.f32.mrb[0].mxu0
      %2724 = vmatprep.mubr.bf16.mxu0 0
      %2725 = vmatmul.mubr.bf16.gmra.mrb[0].mxu0 %v2597
      %v2726 = vpop.f32.mrb[0].mxu0
      %v2727 = vadd.f32 0.0, %v2726
      %v2728 = vpop.f32.mrb[0].mxu0
      %v2729 = vpop.f32.mrb[0].mxu0
      %v2730 = vadd.f32 0.0, %v2729
      %v2731 = vpop.f32.mrb[0].mxu0
      %2732 = vmatprep.mubr.bf16.mxu0 0
      %2733 = vmatmul.mubr.bf16.gmra.mrb[0].mxu0 %v2600
      %v2734 = vpop.f32.mrb[0].mxu0
      %v2735 = vadd.f32 0.0, %v2734
      %v2736 = vpop.f32.mrb[0].mxu0
      %v2737 = vpop.f32.mrb[0].mxu0
      %v2738 = vadd.f32 0.0, %v2737
      %v2739 = vpop.f32.mrb[0].mxu0
      %2740 = vmatprep.mubr.bf16.mxu0 0
      %2741 = vmatmul.mubr.bf16.gmra.mrb[0].mxu0 %v2603
      %v2742 = vpop.f32.mrb[0].mxu0
      %v2743 = vadd.f32 0.0, %v2742
      %v2744 = vpop.f32.mrb[0].mxu0
      %v2745 = vpop.f32.mrb[0].mxu0
      %v2746 = vadd.f32 0.0, %v2745
      %v2747 = vpop.f32.mrb[0].mxu0
      %2748 = vmatprep.mubr.bf16.mxu0 0
      %2749 = vmatmul.mubr.bf16.gmra.mrb[0].mxu0 %v2606
      %v2750 = vpop.f32.mrb[0].mxu0
      %v2751 = vadd.f32 0.0, %v2750
      %v2752 = vpop.f32.mrb[0].mxu0
      %v2753 = vpop.f32.mrb[0].mxu0
      %v2754 = vadd.f32 0.0, %v2753
      %v2755 = vpop.f32.mrb[0].mxu0
      %2756 = vmatprep.mubr.bf16.mxu0 0
      %2757 = vmatmul.mubr.bf16.gmra.mrb[0].mxu0 %v2609
      %v2758 = vpop.f32.mrb[0].mxu0
      %v2759 = vadd.f32 0.0, %v2758
      %v2760 = vpop.f32.mrb[0].mxu0
      %v2761 = vpop.f32.mrb[0].mxu0
      %v2762 = vadd.f32 0.0, %v2761
      %v2763 = vpop.f32.mrb[0].mxu0
      %2764 = vmatprep.mubr.bf16.mxu0 0
      %2765 = vmatmul.mubr.bf16.gmra.mrb[0].mxu0 %v2612
      %v2766 = vpop.f32.mrb[0].mxu0
      %v2767 = vadd.f32 0.0, %v2766
      %v2768 = vpop.f32.mrb[0].mxu0
      %v2769 = vpop.f32.mrb[0].mxu0
      %v2770 = vadd.f32 0.0, %v2769
      %v2771 = vpop.f32.mrb[0].mxu0
      %2772 = vmatprep.mubr.bf16.mxu0 0
      %2773 = vmatmul.mubr.bf16.gmra.mrb[0].mxu0 %v2615
      %v2774 = vpop.f32.mrb[0].mxu0
      %v2775 = vadd.f32 0.0, %v2774
      %v2776 = vpop.f32.mrb[0].mxu0
      %v2777 = vpop.f32.mrb[0].mxu0
      %v2778 = vadd.f32 0.0, %v2777
      %v2779 = vpop.f32.mrb[0].mxu0
      %2780 = vdwg.mxu0
      %v2781 = vadd.f32 %v2487, %v2655
      %v2782 = vadd.f32 %v2488, %v2658
      %v2783 = vadd.f32 %v2489, %v2663
      %v2784 = vadd.f32 %v2490, %v2666
      %v2785 = vadd.f32 %v2491, %v2671
      %v2786 = vadd.f32 %v2492, %v2674
      %v2787 = vadd.f32 %v2493, %v2679
      %v2788 = vadd.f32 %v2494, %v2682
      %v2789 = vadd.f32 %v2495, %v2687
      %v2790 = vadd.f32 %v2496, %v2690
      %v2791 = vadd.f32 %v2497, %v2695
      %v2792 = vadd.f32 %v2498, %v2698
      %v2793 = vadd.f32 %v2499, %v2703
      %v2794 = vadd.f32 %v2500, %v2706
      %v2795 = vadd.f32 %v2501, %v2711
      %v2796 = vadd.f32 %v2502, %v2714
      %v2797 = vadd.f32 %v2503, %v2719
      %v2798 = vadd.f32 %v2504, %v2722
      %v2799 = vadd.f32 %v2505, %v2727
      %v2800 = vadd.f32 %v2506, %v2730
      %v2801 = vadd.f32 %v2507, %v2735
      %v2802 = vadd.f32 %v2508, %v2738
      %v2803 = vadd.f32 %v2509, %v2743
      %v2804 = vadd.f32 %v2510, %v2746
      %v2805 = vadd.f32 %v2511, %v2751
      %v2806 = vadd.f32 %v2512, %v2754
      %v2807 = vadd.f32 %v2513, %v2759
      %v2808 = vadd.f32 %v2514, %v2762
      %v2809 = vadd.f32 %v2515, %v2767
      %v2810 = vadd.f32 %v2516, %v2770
      %v2811 = vadd.f32 %v2517, %v2775
      %v2812 = vadd.f32 %v2518, %v2778
      %v2813 = vld [vmem:[%s2] sm:$0x1]
      %v2815 = vlaneseq
      %v2816 = vshrl.u32 %v2815, 7
      %v2817 = vsub.s32 0, %v2816
      %v2818 = vrot.slane %v2813, %v2817
      %v2820 = vadd.f32 %v2781, %v2818
      %v2821 = vadd.f32 %v2782, %v2818
      %v2822 = vadd.f32 %v2783, %v2818
      %v2823 = vadd.f32 %v2784, %v2818
      %v2824 = vadd.f32 %v2785, %v2818
      %v2825 = vadd.f32 %v2786, %v2818
      %v2826 = vadd.f32 %v2787, %v2818
      %v2827 = vadd.f32 %v2788, %v2818
      %v2828 = vadd.f32 %v2789, %v2818
      %v2829 = vadd.f32 %v2790, %v2818
      %v2830 = vadd.f32 %v2791, %v2818
      %v2831 = vadd.f32 %v2792, %v2818
      %v2832 = vadd.f32 %v2793, %v2818
      %v2833 = vadd.f32 %v2794, %v2818
      %v2834 = vadd.f32 %v2795, %v2818
      %v2835 = vadd.f32 %v2796, %v2818
      %v2836 = vadd.f32 %v2797, %v2818
      %v2837 = vadd.f32 %v2798, %v2818
      %v2838 = vadd.f32 %v2799, %v2818
      %v2839 = vadd.f32 %v2800, %v2818
      %v2840 = vadd.f32 %v2801, %v2818
      %v2841 = vadd.f32 %v2802, %v2818
      %v2842 = vadd.f32 %v2803, %v2818
      %v2843 = vadd.f32 %v2804, %v2818
      %v2844 = vadd.f32 %v2805, %v2818
      %v2845 = vadd.f32 %v2806, %v2818
      %v2846 = vadd.f32 %v2807, %v2818
      %v2847 = vadd.f32 %v2808, %v2818
      %v2848 = vadd.f32 %v2809, %v2818
      %v2849 = vadd.f32 %v2810, %v2818
      %v2850 = vadd.f32 %v2811, %v2818
      %v2851 = vadd.f32 %v2812, %v2818
      %vm2852 = vcmask 64512
      %2853 = vst.msk [vmem:[%s219] sm:$0xff] %vm2852, %v2820
      %2854 = vst.msk [vmem:[%s219 + $0x8] sm:$0xff] %vm2852, %v2821
      %2855 = vst.msk [vmem:[%s219 + $0x10] sm:$0xff] %vm2852, %v2822
      %2856 = vst.msk [vmem:[%s219 + $0x18] sm:$0xff] %vm2852, %v2823
      %2857 = vst.msk [vmem:[%s219 + $0x20] sm:$0xff] %vm2852, %v2824
      %2858 = vst.msk [vmem:[%s219 + $0x28] sm:$0xff] %vm2852, %v2825
      %2859 = vst.msk [vmem:[%s219 + $0x30] sm:$0xff] %vm2852, %v2826
      %2860 = vst.msk [vmem:[%s219 + $0x38] sm:$0xff] %vm2852, %v2827
      %2861 = vst.msk [vmem:[%s219 + $0x40] sm:$0xff] %vm2852, %v2828
      %2862 = vst.msk [vmem:[%s219 + $0x48] sm:$0xff] %vm2852, %v2829
      %2863 = vst.msk [vmem:[%s219 + $0x50] sm:$0xff] %vm2852, %v2830
      %2864 = vst.msk [vmem:[%s219 + $0x58] sm:$0xff] %vm2852, %v2831
      %2865 = vst.msk [vmem:[%s219 + $0x60] sm:$0xff] %vm2852, %v2832
      %2866 = vst.msk [vmem:[%s219 + $0x68] sm:$0xff] %vm2852, %v2833
      %2867 = vst.msk [vmem:[%s219 + $0x70] sm:$0xff] %vm2852, %v2834
      %2868 = vst.msk [vmem:[%s219 + $0x78] sm:$0xff] %vm2852, %v2835
      %2869 = vst.msk [vmem:[%s219 + $0x80] sm:$0xff] %vm2852, %v2836
      %2870 = vst.msk [vmem:[%s219 + $0x88] sm:$0xff] %vm2852, %v2837
      %2871 = vst.msk [vmem:[%s219 + $0x90] sm:$0xff] %vm2852, %v2838
      %2872 = vst.msk [vmem:[%s219 + $0x98] sm:$0xff] %vm2852, %v2839
      %2873 = vst.msk [vmem:[%s219 + $0xa0] sm:$0xff] %vm2852, %v2840
      %2874 = vst.msk [vmem:[%s219 + $0xa8] sm:$0xff] %vm2852, %v2841
      %2875 = vst.msk [vmem:[%s219 + $0xb0] sm:$0xff] %vm2852, %v2842
      %2876 = vst.msk [vmem:[%s219 + $0xb8] sm:$0xff] %vm2852, %v2843
      %2877 = vst.msk [vmem:[%s219 + $0xc0] sm:$0xff] %vm2852, %v2844
      %2878 = vst.msk [vmem:[%s219 + $0xc8] sm:$0xff] %vm2852, %v2845
      %2879 = vst.msk [vmem:[%s219 + $0xd0] sm:$0xff] %vm2852, %v2846
      %2880 = vst.msk [vmem:[%s219 + $0xd8] sm:$0xff] %vm2852, %v2847
      %2881 = vst.msk [vmem:[%s219 + $0xe0] sm:$0xff] %vm2852, %v2848
      %2882 = vst.msk [vmem:[%s219 + $0xe8] sm:$0xff] %vm2852, %v2849
      %2883 = vst.msk [vmem:[%s219 + $0xf0] sm:$0xff] %vm2852, %v2850
      %2884 = vst.msk [vmem:[%s219 + $0xf8] sm:$0xff] %vm2852, %v2851
      %v2885 = vld [vmem:[%s4] sm:$0x1]
      %v2886 = vsel %vm2852, %v2820, 0.0
      %v2887 = vsel %vm2852, %v2821, 0.0
      %v2888 = vadd.f32 %v2886, %v2887
      %v2889 = vsel %vm2852, %v2822, 0.0
      %v2890 = vadd.f32 %v2888, %v2889
      %v2891 = vsel %vm2852, %v2823, 0.0
      %v2892 = vadd.f32 %v2890, %v2891
      %v2893 = vsel %vm2852, %v2824, 0.0
      %v2894 = vadd.f32 %v2892, %v2893
      %v2895 = vsel %vm2852, %v2825, 0.0
      %v2896 = vadd.f32 %v2894, %v2895
      %v2897 = vsel %vm2852, %v2826, 0.0
      %v2898 = vadd.f32 %v2896, %v2897
      %v2899 = vsel %vm2852, %v2827, 0.0
      %v2900 = vadd.f32 %v2898, %v2899
      %v2901 = vsel %vm2852, %v2828, 0.0
      %v2902 = vadd.f32 %v2900, %v2901
      %v2903 = vsel %vm2852, %v2829, 0.0
      %v2904 = vadd.f32 %v2902, %v2903
      %v2905 = vsel %vm2852, %v2830, 0.0
      %v2906 = vadd.f32 %v2904, %v2905
      %v2907 = vsel %vm2852, %v2831, 0.0
      %v2908 = vadd.f32 %v2906, %v2907
      %v2909 = vsel %vm2852, %v2832, 0.0
      %v2910 = vadd.f32 %v2908, %v2909
      %v2911 = vsel %vm2852, %v2833, 0.0
      %v2912 = vadd.f32 %v2910, %v2911
      %v2913 = vsel %vm2852, %v2834, 0.0
      %v2914 = vadd.f32 %v2912, %v2913
      %v2915 = vsel %vm2852, %v2835, 0.0
      %v2916 = vadd.f32 %v2914, %v2915
      %v2917 = vsel %vm2852, %v2836, 0.0
      %v2918 = vadd.f32 %v2916, %v2917
      %v2919 = vsel %vm2852, %v2837, 0.0
      %v2920 = vadd.f32 %v2918, %v2919
      %v2921 = vsel %vm2852, %v2838, 0.0
      %v2922 = vadd.f32 %v2920, %v2921
      %v2923 = vsel %vm2852, %v2839, 0.0
      %v2924 = vadd.f32 %v2922, %v2923
      %v2925 = vsel %vm2852, %v2840, 0.0
      %v2926 = vadd.f32 %v2924, %v2925
      %v2927 = vsel %vm2852, %v2841, 0.0
      %v2928 = vadd.f32 %v2926, %v2927
      %v2929 = vsel %vm2852, %v2842, 0.0
      %v2930 = vadd.f32 %v2928, %v2929
      %v2931 = vsel %vm2852, %v2843, 0.0
      %v2932 = vadd.f32 %v2930, %v2931
      %v2933 = vsel %vm2852, %v2844, 0.0
      %v2934 = vadd.f32 %v2932, %v2933
      %v2935 = vsel %vm2852, %v2845, 0.0
      %v2936 = vadd.f32 %v2934, %v2935
      %v2937 = vsel %vm2852, %v2846, 0.0
      %v2938 = vadd.f32 %v2936, %v2937
      %v2939 = vsel %vm2852, %v2847, 0.0
      %v2940 = vadd.f32 %v2938, %v2939
      %v2941 = vsel %vm2852, %v2848, 0.0
      %v2942 = vadd.f32 %v2940, %v2941
      %v2943 = vsel %vm2852, %v2849, 0.0
      %v2944 = vadd.f32 %v2942, %v2943
      %v2945 = vsel %vm2852, %v2850, 0.0
      %v2946 = vadd.f32 %v2944, %v2945
      %v2947 = vsel %vm2852, %v2851, 0.0
      %v2948 = vadd.f32 %v2946, %v2947
      %v2949 = vrot.slane %v2948, 4
      %v2950 = vadd.f32 %v2948, %v2949
      %v2951 = vrot.slane %v2950, 2
      %v2952 = vadd.f32 %v2950, %v2951
      %v2953 = vrot.slane %v2952, 1
      %v2954 = vadd.f32 %v2952, %v2953
      %v2955 = vadd.f32 %v2885, %v2954
      %vm2956 = vcmask 57344
      %2957 = vst.msk [vmem:[%s4] sm:$0x1] %vm2956, %v2955
      %v2958 = vld [vmem:[%s5] sm:$0x1]
      %v2959 = vmul.f32 %v2820, %v2820
      %v2960 = vmul.f32 %v2821, %v2821
      %v2961 = vmul.f32 %v2822, %v2822
      %v2962 = vmul.f32 %v2823, %v2823
      %v2963 = vmul.f32 %v2824, %v2824
      %v2964 = vmul.f32 %v2825, %v2825
      %v2965 = vmul.f32 %v2826, %v2826
      %v2966 = vmul.f32 %v2827, %v2827
      %v2967 = vmul.f32 %v2828, %v2828
      %v2968 = vmul.f32 %v2829, %v2829
      %v2969 = vmul.f32 %v2830, %v2830
      %v2970 = vmul.f32 %v2831, %v2831
      %v2971 = vmul.f32 %v2832, %v2832
      %v2972 = vmul.f32 %v2833, %v2833
      %v2973 = vmul.f32 %v2834, %v2834
      %v2974 = vmul.f32 %v2835, %v2835
      %v2975 = vmul.f32 %v2836, %v2836
      %v2976 = vmul.f32 %v2837, %v2837
      %v2977 = vmul.f32 %v2838, %v2838
      %v2978 = vmul.f32 %v2839, %v2839
      %v2979 = vmul.f32 %v2840, %v2840
      %v2980 = vmul.f32 %v2841, %v2841
      %v2981 = vmul.f32 %v2842, %v2842
      %v2982 = vmul.f32 %v2843, %v2843
      %v2983 = vmul.f32 %v2844, %v2844
      %v2984 = vmul.f32 %v2845, %v2845
      %v2985 = vmul.f32 %v2846, %v2846
      %v2986 = vmul.f32 %v2847, %v2847
      %v2987 = vmul.f32 %v2848, %v2848
      %v2988 = vmul.f32 %v2849, %v2849
      %v2989 = vmul.f32 %v2850, %v2850
      %v2990 = vmul.f32 %v2851, %v2851
      %v2991 = vsel %vm2852, %v2959, 0.0
      %v2992 = vsel %vm2852, %v2960, 0.0
      %v2993 = vadd.f32 %v2991, %v2992
      %v2994 = vsel %vm2852, %v2961, 0.0
      %v2995 = vadd.f32 %v2993, %v2994
      %v2996 = vsel %vm2852, %v2962, 0.0
      %v2997 = vadd.f32 %v2995, %v2996
      %v2998 = vsel %vm2852, %v2963, 0.0
      %v2999 = vadd.f32 %v2997, %v2998
      %v3000 = vsel %vm2852, %v2964, 0.0
      %v3001 = vadd.f32 %v2999, %v3000
      %v3002 = vsel %vm2852, %v2965, 0.0
      %v3003 = vadd.f32 %v3001, %v3002
      %v3004 = vsel %vm2852, %v2966, 0.0
      %v3005 = vadd.f32 %v3003, %v3004
      %v3006 = vsel %vm2852, %v2967, 0.0
      %v3007 = vadd.f32 %v3005, %v3006
      %v3008 = vsel %vm2852, %v2968, 0.0
      %v3009 = vadd.f32 %v3007, %v3008
      %v3010 = vsel %vm2852, %v2969, 0.0
      %v3011 = vadd.f32 %v3009, %v3010
      %v3012 = vsel %vm2852, %v2970, 0.0
      %v3013 = vadd.f32 %v3011, %v3012
      %v3014 = vsel %vm2852, %v2971, 0.0
      %v3015 = vadd.f32 %v3013, %v3014
      %v3016 = vsel %vm2852, %v2972, 0.0
      %v3017 = vadd.f32 %v3015, %v3016
      %v3018 = vsel %vm2852, %v2973, 0.0
      %v3019 = vadd.f32 %v3017, %v3018
      %v3020 = vsel %vm2852, %v2974, 0.0
      %v3021 = vadd.f32 %v3019, %v3020
      %v3022 = vsel %vm2852, %v2975, 0.0
      %v3023 = vadd.f32 %v3021, %v3022
      %v3024 = vsel %vm2852, %v2976, 0.0
      %v3025 = vadd.f32 %v3023, %v3024
      %v3026 = vsel %vm2852, %v2977, 0.0
      %v3027 = vadd.f32 %v3025, %v3026
      %v3028 = vsel %vm2852, %v2978, 0.0
      %v3029 = vadd.f32 %v3027, %v3028
      %v3030 = vsel %vm2852, %v2979, 0.0
      %v3031 = vadd.f32 %v3029, %v3030
      %v3032 = vsel %vm2852, %v2980, 0.0
      %v3033 = vadd.f32 %v3031, %v3032
      %v3034 = vsel %vm2852, %v2981, 0.0
      %v3035 = vadd.f32 %v3033, %v3034
      %v3036 = vsel %vm2852, %v2982, 0.0
      %v3037 = vadd.f32 %v3035, %v3036
      %v3038 = vsel %vm2852, %v2983, 0.0
      %v3039 = vadd.f32 %v3037, %v3038
      %v3040 = vsel %vm2852, %v2984, 0.0
      %v3041 = vadd.f32 %v3039, %v3040
      %v3042 = vsel %vm2852, %v2985, 0.0
      %v3043 = vadd.f32 %v3041, %v3042
      %v3044 = vsel %vm2852, %v2986, 0.0
      %v3045 = vadd.f32 %v3043, %v3044
      %v3046 = vsel %vm2852, %v2987, 0.0
      %v3047 = vadd.f32 %v3045, %v3046
      %v3048 = vsel %vm2852, %v2988, 0.0
      %v3049 = vadd.f32 %v3047, %v3048
      %v3050 = vsel %vm2852, %v2989, 0.0
      %v3051 = vadd.f32 %v3049, %v3050
      %v3052 = vsel %vm2852, %v2990, 0.0
      %v3053 = vadd.f32 %v3051, %v3052
      %v3054 = vrot.slane %v3053, 4
      %v3055 = vadd.f32 %v3053, %v3054
      %v3056 = vrot.slane %v3055, 2
      %v3057 = vadd.f32 %v3055, %v3056
      %v3058 = vrot.slane %v3057, 1
      %v3059 = vadd.f32 %v3057, %v3058
      %v3060 = vadd.f32 %v2958, %v3059
      %3061 = vst.msk [vmem:[%s5] sm:$0x1] %vm2956, %v3060
      %p3062 = scmp.lt.s32.totalorder %s17, 1
      %s3063 = scalar_select %p3062, %s17, 1
      %s3064 = smul.addr %s3063, 32
      %s3065 = smul.addr %s3064, 8
      %s3066 = scalar_lea.vmem %s3, %s3065
      // Predicated region
      $region37: #{conv_block_forward.4} parent=31 // pred_check
        %p3067 = pneg %p103
      $region38: #{conv_block_forward.4} parent=31 // pred_check_branch
        %3069 = sbr.rel (%p3067) target = $region40
      $region39: #{conv_block_forward.4} parent=31 // pred_region
        _
      $region40: #{conv_block_forward.4} parent=31 // pred_fallthru
        _
      // Predicated region
      $region41: #{conv_block_forward.4} parent=31 // pred_check
        %p3070 = pneg %p124
      $region42: #{conv_block_forward.4} parent=31 // pred_check_branch
        %3072 = sbr.rel (%p3070) target = $region44
      $region43: #{conv_block_forward.4} parent=31 // pred_region
        _
      $region44: #{conv_block_forward.4} parent=31 // pred_fallthru
        _
      // Predicated region
      $region45: #{conv_block_forward.4} parent=31 // pred_check
        %p3073 = pneg %p145
      $region46: #{conv_block_forward.4} parent=31 // pred_check_branch
        %3075 = sbr.rel (%p3073) target = $region48
      $region47: #{conv_block_forward.4} parent=31 // pred_region
        _
      $region48: #{conv_block_forward.4} parent=31 // pred_fallthru
        _
      // Predicated region
      $region49: #{conv_block_forward.4} parent=31 // pred_check
        %p3076 = pneg %p124
      $region50: #{conv_block_forward.4} parent=31 // pred_check_branch
        %3078 = sbr.rel (%p3076) target = $region52
      $region51: #{conv_block_forward.4} parent=31 // pred_region
        _
      $region52: #{conv_block_forward.4} parent=31 // pred_fallthru
        _
      // Predicated region
      $region53: #{conv_block_forward.4} parent=31 // pred_check
        %p3079 = pneg %p145
      $region54: #{conv_block_forward.4} parent=31 // pred_check_branch
        %3081 = sbr.rel (%p3079) target = $region56
      $region55: #{conv_block_forward.4} parent=31 // pred_region
        _
      $region56: #{conv_block_forward.4} parent=31 // pred_fallthru
        _
    $region32: #{conv_block_forward.4} parent=5 // pred_fallthru
      _
    %p3082 = scmp.le.s32.totalorder 2, %s12
    // Predicated region
    $region57: #{conv_block_forward.4} parent=5 // pred_check
      %p3083 = pneg %p3082
    $region58: #{conv_block_forward.4} parent=5 // pred_check_branch
      %3085 = sbr.rel (%p3083) target = $region60
    $region59: #{conv_block_forward.4} parent=5 // pred_region
      %s3086 = ssub.s32 %s12, 2
      // Predicated region
      $region61: #{conv_block_forward.4} parent=59 // pred_check
        %p3087 = pneg %p109
      $region62: #{conv_block_forward.4} parent=59 // pred_check_branch
        %3089 = sbr.rel (%p3087) target = $region64
      $region63: #{conv_block_forward.4} parent=59 // pred_region
        %p3090 = scmp.lt.s32.totalorder %s18, 1
        %s3091 = scalar_select %p3090, %s18, 1
        %s3092 = smul.addr %s3091, 32
        %s3093 = smul.addr %s3092, 8
        %s3094 = scalar_lea.vmem %s3, %s3093
      $region64: #{conv_block_forward.4} parent=59 // pred_fallthru
        _
    $region60: #{conv_block_forward.4} parent=5 // pred_fallthru
      _
  $region6: #{conv_block_forward.4} parent=0 // loop_footer
    %s16 = sadd.s32 1, %s12
  $region7: #{conv_block_forward.4} parent=0 // loop_footer_branch
    %11 = sbr.rel target = $region3
  $region8: #{conv_block_forward.4} parent=0 // loop_exit
    _

// kernel: conv_block_forward.6
$region0: #{conv_block_forward.6}
  #allocation0 [shape = 'u32[]', space=smem, size = 0x4, offset = 0x4, fixed_abs, tag = 'smem constant byte address 0x4 - core index']
  #allocation1 [shape = 'u32[144,128]{1,0:T(1,128)}', space=vmem, size = 0x12000, scoped, tag = 'internal scratch']
  %s0 = inlined_call_operand.vmem [shape: f32[2,3,288,8], index: 0, kind: input, shape index: {}]
  %s1 = inlined_call_operand.vmem [shape: bf16[9,8,8], index: 1, kind: input, shape index: {}]
  %s2 = inlined_call_operand.vmem [shape: f32[1,8], index: 2, kind: input, shape index: {}]
  %s3 = inlined_call_operand.vmem [shape: f32[2,256,8], index: 3, kind: output, shape index: {0}]
  %s4 = inlined_call_operand.vmem [shape: f32[1,8], index: 4, kind: output, shape index: {1}]
  %s5 = inlined_call_operand.vmem [shape: f32[1,8], index: 5, kind: output, shape index: {2}]
  %6 = xla_tuple %s3, %s4, %s5
  %s7 = sld [smem:[#allocation0]]
  $region65: #{conv_block_forward.6} parent=0
    _
  %s9 = ssub.s32 1, %s7
  %s10 = scalar_select 0, %s9, %s7
  loop: start=0, step=1, limit=4
  $region2: #{conv_block_forward.6} parent=0 // loop_pre_header
    _
  $region3: #{conv_block_forward.6} parent=0 // loop_header
    %s12 = sphi 0, %s16
    %p13 = scmp.ge.s32.totalorder %s12, 4
    %s22 = sphi 0, %s24
    %s25 = sphi 0, %s22
    %s26 = sphi 0, %s25
    %s42 = sphi 0, %s26
    %s46 = sphi 0, %s46
    %s48 = sphi 0, %s46
    %s49 = sphi 0, %s48
    %s63 = sphi 0, %s49
    %s67 = sphi 0, %s67
    %s69 = sphi 0, %s67
    %s70 = sphi 0, %s69
    %s84 = sphi 0, %s70
    %s90 = sphi 0, %s92
    %s93 = sphi 0, %s90
    %s94 = sphi 0, %s93
    %s110 = sphi 0, %s94
    %s114 = sphi 0, %s114
    %s116 = sphi 0, %s114
    %s117 = sphi 0, %s116
    %s131 = sphi 0, %s117
    %s135 = sphi 0, %s135
    %s137 = sphi 0, %s135
    %s138 = sphi 0, %s137
    %s152 = sphi 0, %s138
  $region4: #{conv_block_forward.6} parent=0 // loop_header_branch
    %15 = sbr.rel (%p13) target = $region8
  $region5: #{conv_block_forward.6} parent=0 // loop_body
    %s17 = ssub.s32 %s12, 1
    %s18 = ssub.s32 %s12, 2
    %s19 = sadd.s32 %s12, 1
    %s20 = ssub.s32 %s12, %s19
    %p21 = scmp.eq.s32.totalorder %s20, 0
    %s23 = sadd.s32 %s22, 1
    %s24 = scalar_select %p21, %s22, %s23
    %p27 = pneg %p21
    %p28 = scmp.eq.s32.totalorder %s12, 1
    %p29 = por %p27, %p28
    %p30 = scmp.ne.s32.totalorder %s22, %s25
    %p31 = scmp.eq.s32.totalorder %s12, 0
    %p32 = por %p30, %p31
    %p33 = scmp.ne.s32.totalorder %s22, %s25
    %p34 = scmp.eq.s32.totalorder %s17, 1
    %p35 = por %p33, %p34
    %p36 = scmp.ne.s32.totalorder %s25, %s26
    %p37 = scmp.eq.s32.totalorder %s17, 0
    %p38 = por %p36, %p37
    %p39 = scmp.ne.s32.totalorder %s25, %s26
    %p40 = scmp.eq.s32.totalorder %s18, 1
    %p41 = por %p39, %p40
    %p43 = scmp.ne.s32.totalorder %s26, %s42
    %p44 = scmp.eq.s32.totalorder %s18, 0
    %p45 = por %p43, %p44
    %s47 = sadd.s32 %s46, 1
    %p50 = scmp.eq.s32.totalorder %s12, 1
    %p51 = scmp.ne.s32.totalorder %s46, %s48
    %p52 = scmp.eq.s32.totalorder %s12, 0
    %p53 = por %p51, %p52
    %p54 = scmp.ne.s32.totalorder %s46, %s48
    %p55 = scmp.eq.s32.totalorder %s17, 1
    %p56 = por %p54, %p55
    %p57 = scmp.ne.s32.totalorder %s48, %s49
    %p58 = scmp.eq.s32.totalorder %s17, 0
    %p59 = por %p57, %p58
    %p60 = scmp.ne.s32.totalorder %s48, %s49
    %p61 = scmp.eq.s32.totalorder %s18, 1
    %p62 = por %p60, %p61
    %p64 = scmp.ne.s32.totalorder %s49, %s63
    %p65 = scmp.eq.s32.totalorder %s18, 0
    %p66 = por %p64, %p65
    %s68 = sadd.s32 %s67, 1
    %p71 = scmp.eq.s32.totalorder %s12, 1
    %p72 = scmp.ne.s32.totalorder %s67, %s69
    %p73 = scmp.eq.s32.totalorder %s12, 0
    %p74 = por %p72, %p73
    %p75 = scmp.ne.s32.totalorder %s67, %s69
    %p76 = scmp.eq.s32.totalorder %s17, 1
    %p77 = por %p75, %p76
    %p78 = scmp.ne.s32.totalorder %s69, %s70
    %p79 = scmp.eq.s32.totalorder %s17, 0
    %p80 = por %p78, %p79
    %p81 = scmp.ne.s32.totalorder %s69, %s70
    %p82 = scmp.eq.s32.totalorder %s18, 1
    %p83 = por %p81, %p82
    %p85 = scmp.ne.s32.totalorder %s70, %s84
    %p86 = scmp.eq.s32.totalorder %s18, 0
    %p87 = por %p85, %p86
    %s88 = ssub.s32 %s12, %s19
    %p89 = scmp.eq.s32.totalorder %s88, 0
    %s91 = sadd.s32 %s90, 1
    %s92 = scalar_select %p89, %s90, %s91
    %p95 = pneg %p89
    %p96 = scmp.eq.s32.totalorder %s12, 1
    %p97 = por %p95, %p96
    %p98 = scmp.ne.s32.totalorder %s90, %s93
    %p99 = scmp.eq.s32.totalorder %s12, 0
    %p100 = por %p98, %p99
    %p101 = scmp.ne.s32.totalorder %s90, %s93
    %p102 = scmp.eq.s32.totalorder %s17, 1
    %p103 = por %p101, %p102
    %p104 = scmp.ne.s32.totalorder %s93, %s94
    %p105 = scmp.eq.s32.totalorder %s17, 0
    %p106 = por %p104, %p105
    %p107 = scmp.ne.s32.totalorder %s93, %s94
    %p108 = scmp.eq.s32.totalorder %s18, 1
    %p109 = por %p107, %p108
    %p111 = scmp.ne.s32.totalorder %s94, %s110
    %p112 = scmp.eq.s32.totalorder %s18, 0
    %p113 = por %p111, %p112
    %s115 = sadd.s32 %s114, 1
    %p118 = scmp.eq.s32.totalorder %s12, 1
    %p119 = scmp.ne.s32.totalorder %s114, %s116
    %p120 = scmp.eq.s32.totalorder %s12, 0
    %p121 = por %p119, %p120
    %p122 = scmp.ne.s32.totalorder %s114, %s116
    %p123 = scmp.eq.s32.totalorder %s17, 1
    %p124 = por %p122, %p123
    %p125 = scmp.ne.s32.totalorder %s116, %s117
    %p126 = scmp.eq.s32.totalorder %s17, 0
    %p127 = por %p125, %p126
    %p128 = scmp.ne.s32.totalorder %s116, %s117
    %p129 = scmp.eq.s32.totalorder %s18, 1
    %p130 = por %p128, %p129
    %p132 = scmp.ne.s32.totalorder %s117, %s131
    %p133 = scmp.eq.s32.totalorder %s18, 0
    %p134 = por %p132, %p133
    %s136 = sadd.s32 %s135, 1
    %p139 = scmp.eq.s32.totalorder %s12, 1
    %p140 = scmp.ne.s32.totalorder %s135, %s137
    %p141 = scmp.eq.s32.totalorder %s12, 0
    %p142 = por %p140, %p141
    %p143 = scmp.ne.s32.totalorder %s135, %s137
    %p144 = scmp.eq.s32.totalorder %s17, 1
    %p145 = por %p143, %p144
    %p146 = scmp.ne.s32.totalorder %s137, %s138
    %p147 = scmp.eq.s32.totalorder %s17, 0
    %p148 = por %p146, %p147
    %p149 = scmp.ne.s32.totalorder %s137, %s138
    %p150 = scmp.eq.s32.totalorder %s18, 1
    %p151 = por %p149, %p150
    %p153 = scmp.ne.s32.totalorder %s138, %s152
    %p154 = scmp.eq.s32.totalorder %s18, 0
    %p155 = por %p153, %p154
    %p156 = scmp.le.s32.totalorder 1, %s12
    %p157 = scmp.lt.s32.totalorder %s12, 3
    %p158 = pnand %p156, %p157
    %p159 = pneg %p158
    // Predicated region
    $region9: #{conv_block_forward.6} parent=5 // pred_check
      _
    $region10: #{conv_block_forward.6} parent=5 // pred_check_branch
      %161 = sbr.rel (%p158) target = $region12
    $region11: #{conv_block_forward.6} parent=5 // pred_region
      %s162 = ssub.s32 %s12, 1
      // Predicated region
      $region13: #{conv_block_forward.6} parent=11 // pred_check
        %p163 = pneg %p59
      $region14: #{conv_block_forward.6} parent=11 // pred_check_branch
        %165 = sbr.rel (%p163) target = $region16
      $region15: #{conv_block_forward.6} parent=11 // pred_region
        _
      $region16: #{conv_block_forward.6} parent=11 // pred_fallthru
        _
      // Predicated region
      $region17: #{conv_block_forward.6} parent=11 // pred_check
        %p166 = pneg %p80
      $region18: #{conv_block_forward.6} parent=11 // pred_check_branch
        %168 = sbr.rel (%p166) target = $region20
      $region19: #{conv_block_forward.6} parent=11 // pred_region
        _
      $region20: #{conv_block_forward.6} parent=11 // pred_fallthru
        _
    $region12: #{conv_block_forward.6} parent=5 // pred_fallthru
      _
    %p169 = scmp.lt.s32.totalorder %s12, 2
    // Predicated region
    $region21: #{conv_block_forward.6} parent=5 // pred_check
      %p170 = pneg %p169
    $region22: #{conv_block_forward.6} parent=5 // pred_check_branch
      %172 = sbr.rel (%p170) target = $region24
    $region23: #{conv_block_forward.6} parent=5 // pred_region
      // Predicated region
      $region25: #{conv_block_forward.6} parent=23 // pred_check
        %p173 = pneg %p32
      $region26: #{conv_block_forward.6} parent=23 // pred_check_branch
        %175 = sbr.rel (%p173) target = $region28
      $region27: #{conv_block_forward.6} parent=23 // pred_region
        %p176 = scmp.lt.s32.totalorder %s12, 1
        %s177 = scalar_select %p176, %s12, 1
        %s178 = smul.addr %s177, 108
        %s179 = smul.addr %s178, 8
        %s180 = scalar_lea.vmem %s0, %s179
      $region28: #{conv_block_forward.6} parent=23 // pred_fallthru
        _
    $region24: #{conv_block_forward.6} parent=5 // pred_fallthru
      _
    %p181 = scmp.le.s32.totalorder 1, %s12
    %p182 = scmp.lt.s32.totalorder %s12, 3
    %p183 = pnand %p181, %p182
    %p184 = pneg %p183
    // Predicated region
    $region29: #{conv_block_forward.6} parent=5 // pred_check
      _
    $region30: #{conv_block_forward.6} parent=5 // pred_check_branch
      %186 = sbr.rel (%p183) target = $region32
    $region31: #{conv_block_forward.6} parent=5 // pred_region
      %s187 = ssub.s32 %s12, 1
      %p188 = scmp.lt.s32.totalorder %s17, 1
      %s189 = scalar_select %p188, %s17, 1
      %s190 = smul.addr %s189, 108
      %s191 = smul.addr %s190, 8
      %s192 = scalar_lea.vmem %s0, %s191
      %p193 = pneg %p38
      %p194 = pneg %p35
      %p195 = pneg %p59
      %p196 = pneg %p56
      %p197 = pneg %p80
      %p198 = pneg %p77
      %p199 = pneg %p106
      %p200 = pneg %p103
      %p201 = scmp.lt.s32.totalorder %s17, 1
      %s202 = scalar_select %p201, %s17, 1
      %s203 = smul.addr %s202, 32
      %s204 = smul.addr %s203, 8
      %s205 = scalar_lea.vmem %s3, %s204
      %p206 = pneg %p127
      %p207 = pneg %p124
      %p208 = pneg %p148
      %p209 = pneg %p145
      %p210 = scmp.lt.s32.totalorder %s17, 1
      %s211 = scalar_select %p210, %s17, 1
      %s212 = smul.addr %s211, 108
      %s213 = smul.addr %s212, 8
      %s214 = scalar_lea.vmem %s0, %s213
      %p215 = scmp.lt.s32.totalorder %s17, 1
      %s216 = scalar_select %p215, %s17, 1
      %s217 = smul.addr %s216, 32
      %s218 = smul.addr %s217, 8
      %s219 = scalar_lea.vmem %s3, %s218
      %p221 = scmp.eq.s32.totalorder %s17, 0
      // Predicated region
      $region33: #{conv_block_forward.6} parent=31 // pred_check
        %p222 = pneg %p221
      $region34: #{conv_block_forward.6} parent=31 // pred_check_branch
        %224 = sbr.rel (%p222) target = $region36
      $region35: #{conv_block_forward.6} parent=31 // pred_region
        %vm225 = vcmask 57344
        %226 = vst.msk [vmem:[%s4] sm:$0x1] %vm225, 0.0
        %227 = vst.msk [vmem:[%s5] sm:$0x1] %vm225, 0.0
      $region36: #{conv_block_forward.6} parent=31 // pred_fallthru
        _
      %v228 = vld [vmem:[%s214] sm:$0xff]
      %v229 = vld [vmem:[%s214 + $0x8] sm:$0xff]
      %v230 = vld [vmem:[%s214 + $0x10] sm:$0xff]
      %v231 = vld [vmem:[%s214 + $0x18] sm:$0xff]
      %v232 = vld [vmem:[%s214 + $0x20] sm:$0xff]
      %v233 = vld [vmem:[%s214 + $0x28] sm:$0xff]
      %v234 = vld [vmem:[%s214 + $0x30] sm:$0xff]
      %v235 = vld [vmem:[%s214 + $0x38] sm:$0xff]
      %v236 = vld [vmem:[%s214 + $0x40] sm:$0xff]
      %v237 = vld [vmem:[%s214 + $0x48] sm:$0xff]
      %v238 = vld [vmem:[%s214 + $0x50] sm:$0xff]
      %v239 = vld [vmem:[%s214 + $0x58] sm:$0xff]
      %v240 = vld [vmem:[%s214 + $0x60] sm:$0xff]
      %v241 = vld [vmem:[%s214 + $0x68] sm:$0xff]
      %v242 = vld [vmem:[%s214 + $0x70] sm:$0xff]
      %v243 = vld [vmem:[%s214 + $0x78] sm:$0xff]
      %v244 = vld [vmem:[%s214 + $0x80] sm:$0xff]
      %v245 = vld [vmem:[%s214 + $0x88] sm:$0xff]
      %v246 = vld [vmem:[%s214 + $0x90] sm:$0xff]
      %v247 = vld [vmem:[%s214 + $0x98] sm:$0xff]
      %v248 = vld [vmem:[%s214 + $0xa0] sm:$0xff]
      %v249 = vld [vmem:[%s214 + $0xa8] sm:$0xff]
      %v250 = vld [vmem:[%s214 + $0xb0] sm:$0xff]
      %v251 = vld [vmem:[%s214 + $0xb8] sm:$0xff]
      %v252 = vld [vmem:[%s214 + $0xc0] sm:$0xff]
      %v253 = vld [vmem:[%s214 + $0xc8] sm:$0xff]
      %v254 = vld [vmem:[%s214 + $0xd0] sm:$0xff]
      %v255 = vld [vmem:[%s214 + $0xd8] sm:$0xff]
      %v256 = vld [vmem:[%s214 + $0xe0] sm:$0xff]
      %v257 = vld [vmem:[%s214 + $0xe8] sm:$0xff]
      %v258 = vld [vmem:[%s214 + $0xf0] sm:$0xff]
      %v259 = vld [vmem:[%s214 + $0xf8] sm:$0xff]
      %v260 = vpack.c.bf16 %v229, %v228
      %v261 = vpack.c.bf16 %v231, %v230
      %v262 = vpack.c.bf16 %v233, %v232
      %v263 = vpack.c.bf16 %v235, %v234
      %v264 = vpack.c.bf16 %v237, %v236
      %v265 = vpack.c.bf16 %v239, %v238
      %v266 = vpack.c.bf16 %v241, %v240
      %v267 = vpack.c.bf16 %v243, %v242
      %v268 = vpack.c.bf16 %v245, %v244
      %v269 = vpack.c.bf16 %v247, %v246
      %v270 = vpack.c.bf16 %v249, %v248
      %v271 = vpack.c.bf16 %v251, %v250
      %v272 = vpack.c.bf16 %v253, %v252
      %v273 = vpack.c.bf16 %v255, %v254
      %v274 = vpack.c.bf16 %v257, %v256
      %v275 = vpack.c.bf16 %v259, %v258
      %v276 = vld [vmem:[%s1] sm:$0xf]
      %s277 = scalar_lea.vmem %s214, 288
      %v278 = vld [vmem:[%s277] sm:$0xff]
      %v279 = vld [vmem:[%s277 + $0x8] sm:$0xff]
      %v280 = vld [vmem:[%s277 + $0x10] sm:$0xff]
      %v281 = vld [vmem:[%s277 + $0x18] sm:$0xff]
      %v282 = vld [vmem:[%s277 + $0x20] sm:$0xff]
      %v283 = vld [vmem:[%s277 + $0x28] sm:$0xff]
      %v284 = vld [vmem:[%s277 + $0x30] sm:$0xff]
      %v285 = vld [vmem:[%s277 + $0x38] sm:$0xff]
      %v286 = vld [vmem:[%s277 + $0x40] sm:$0xff]
      %v287 = vld [vmem:[%s277 + $0x48] sm:$0xff]
      %v288 = vld [vmem:[%s277 + $0x50] sm:$0xff]
      %v289 = vld [vmem:[%s277 + $0x58] sm:$0xff]
      %v290 = vld [vmem:[%s277 + $0x60] sm:$0xff]
      %v291 = vld [vmem:[%s277 + $0x68] sm:$0xff]
      %v292 = vld [vmem:[%s277 + $0x70] sm:$0xff]
      %v293 = vld [vmem:[%s277 + $0x78] sm:$0xff]
      %v294 = vld [vmem:[%s277 + $0x80] sm:$0xff]
      %v295 = vld [vmem:[%s277 + $0x88] sm:$0xff]
      %v296 = vld [vmem:[%s277 + $0x90] sm:$0xff]
      %v297 = vld [vmem:[%s277 + $0x98] sm:$0xff]
      %v298 = vld [vmem:[%s277 + $0xa0] sm:$0xff]
      %v299 = vld [vmem:[%s277 + $0xa8] sm:$0xff]
      %v300 = vld [vmem:[%s277 + $0xb0] sm:$0xff]
      %v301 = vld [vmem:[%s277 + $0xb8] sm:$0xff]
      %v302 = vld [vmem:[%s277 + $0xc0] sm:$0xff]
      %v303 = vld [vmem:[%s277 + $0xc8] sm:$0xff]
      %v304 = vld [vmem:[%s277 + $0xd0] sm:$0xff]
      %v305 = vld [vmem:[%s277 + $0xd8] sm:$0xff]
      %v306 = vld [vmem:[%s277 + $0xe0] sm:$0xff]
      %v307 = vld [vmem:[%s277 + $0xe8] sm:$0xff]
      %v308 = vld [vmem:[%s277 + $0xf0] sm:$0xff]
      %v309 = vld [vmem:[%s277 + $0xf8] sm:$0xff]
      %v310 = vpack.c.bf16 %v279, %v278
      %v311 = vpack.c.bf16 %v281, %v280
      %v312 = vpack.c.bf16 %v283, %v282
      %v313 = vpack.c.bf16 %v285, %v284
      %v314 = vpack.c.bf16 %v287, %v286
      %v315 = vpack.c.bf16 %v289, %v288
      %v316 = vpack.c.bf16 %v291, %v290
      %v317 = vpack.c.bf16 %v293, %v292
      %v318 = vpack.c.bf16 %v295, %v294
      %v319 = vpack.c.bf16 %v297, %v296
      %v320 = vpack.c.bf16 %v299, %v298
      %v321 = vpack.c.bf16 %v301, %v300
      %v322 = vpack.c.bf16 %v303, %v302
      %v323 = vpack.c.bf16 %v305, %v304
      %v324 = vpack.c.bf16 %v307, %v306
      %v325 = vpack.c.bf16 %v309, %v308
      %s326 = scalar_lea.vmem %s1, 4
      %v327 = vld [vmem:[%s326] sm:$0xf]
      %vm328 = vcmask 64512
      %v330 = vsel %vm328, %v310, 0
      %v333 = vsel %vm328, %v311, 0
      %v336 = vsel %vm328, %v312, 0
      %v339 = vsel %vm328, %v313, 0
      %v342 = vsel %vm328, %v314, 0
      %v345 = vsel %vm328, %v315, 0
      %v348 = vsel %vm328, %v316, 0
      %v351 = vsel %vm328, %v317, 0
      %v354 = vsel %vm328, %v318, 0
      %v357 = vsel %vm328, %v319, 0
      %v360 = vsel %vm328, %v320, 0
      %v363 = vsel %vm328, %v321, 0
      %v366 = vsel %vm328, %v322, 0
      %v369 = vsel %vm328, %v323, 0
      %v372 = vsel %vm328, %v324, 0
      %v375 = vsel %vm328, %v325, 0
      %vm377 = vcmask 1043456
      %v379 = vsel %vm377, %v327, 0
      %381 = vmatprep.subr.bf16.mxu0 0
      %382 = vmatpush1.bf16.msra.mxu0 %v379
      %383 = vmatprep.subr.bf16.mxu0 0
      %384 = vmatpush1.bf16.msra.mxu0 0
      %385 = vmatprep.subr.bf16.mxu0 0
      %386 = vmatpush1.bf16.msra.mxu0 0
      %387 = vmatprep.subr.bf16.mxu0 0
      %388 = vmatpush1.bf16.msra.mxu0 0
      %389 = vmatprep.subr.bf16.mxu0 0
      %390 = vmatpush1.bf16.msra.mxu0 0
      %391 = vmatprep.subr.bf16.mxu0 0
      %392 = vmatpush1.bf16.msra.mxu0 0
      %393 = vmatprep.subr.bf16.mxu0 0
      %394 = vmatpush1.bf16.msra.mxu0 0
      %395 = vmatprep.subr.bf16.mxu0 0
      %396 = vmatpush1.bf16.msra.mxu0 0
      %397 = vmatprep.subr.bf16.mxu0 0
      %398 = vmatpush1.bf16.msra.mxu0 0
      %399 = vmatprep.subr.bf16.mxu0 0
      %400 = vmatpush1.bf16.msra.mxu0 0
      %401 = vmatprep.subr.bf16.mxu0 0
      %402 = vmatpush1.bf16.msra.mxu0 0
      %403 = vmatprep.subr.bf16.mxu0 0
      %404 = vmatpush1.bf16.msra.mxu0 0
      %405 = vmatprep.subr.bf16.mxu0 0
      %406 = vmatpush1.bf16.msra.mxu0 0
      %407 = vmatprep.subr.bf16.mxu0 0
      %408 = vmatpush1.bf16.msra.mxu0 0
      %409 = vmatprep.subr.bf16.mxu0 0
      %410 = vmatpush1.bf16.msra.mxu0 0
      %411 = vmatprep.subr.bf16.mxu0 0
      %412 = vmatpush1.bf16.msra.mxu0 0
      %413 = vmatprep.mubr.bf16.mxu0 0
      %414 = vmatmul.mubr.bf16.gmra.mrb[0].mxu0 %v330
      %v415 = vpop.f32.mrb[0].mxu0
      %v416 = vadd.f32 0.0, %v415
      %v417 = vpop.f32.mrb[0].mxu0
      %v418 = vpop.f32.mrb[0].mxu0
      %v419 = vadd.f32 0.0, %v418
      %v420 = vpop.f32.mrb[0].mxu0
      %421 = vmatprep.mubr.bf16.mxu0 0
      %422 = vmatmul.mubr.bf16.gmra.mrb[0].mxu0 %v333
      %v423 = vpop.f32.mrb[0].mxu0
      %v424 = vadd.f32 0.0, %v423
      %v425 = vpop.f32.mrb[0].mxu0
      %v426 = vpop.f32.mrb[0].mxu0
      %v427 = vadd.f32 0.0, %v426
      %v428 = vpop.f32.mrb[0].mxu0
      %429 = vmatprep.mubr.bf16.mxu0 0
      %430 = vmatmul.mubr.bf16.gmra.mrb[0].mxu0 %v336
      %v431 = vpop.f32.mrb[0].mxu0
      %v432 = vadd.f32 0.0, %v431
      %v433 = vpop.f32.mrb[0].mxu0
      %v434 = vpop.f32.mrb[0].mxu0
      %v435 = vadd.f32 0.0, %v434
      %v436 = vpop.f32.mrb[0].mxu0
      %437 = vmatprep.mubr.bf16.mxu0 0
      %438 = vmatmul.mubr.bf16.gmra.mrb[0].mxu0 %v339
      %v439 = vpop.f32.mrb[0].mxu0
      %v440 = vadd.f32 0.0, %v439
      %v441 = vpop.f32.mrb[0].mxu0
      %v442 = vpop.f32.mrb[0].mxu0
      %v443 = vadd.f32 0.0, %v442
      %v444 = vpop.f32.mrb[0].mxu0
      %445 = vmatprep.mubr.bf16.mxu0 0
      %446 = vmatmul.mubr.bf16.gmra.mrb[0].mxu0 %v342
      %v447 = vpop.f32.mrb[0].mxu0
      %v448 = vadd.f32 0.0, %v447
      %v449 = vpop.f32.mrb[0].mxu0
      %v450 = vpop.f32.mrb[0].mxu0
      %v451 = vadd.f32 0.0, %v450
      %v452 = vpop.f32.mrb[0].mxu0
      %453 = vmatprep.mubr.bf16.mxu0 0
      %454 = vmatmul.mubr.bf16.gmra.mrb[0].mxu0 %v345
      %v455 = vpop.f32.mrb[0].mxu0
      %v456 = vadd.f32 0.0, %v455
      %v457 = vpop.f32.mrb[0].mxu0
      %v458 = vpop.f32.mrb[0].mxu0
      %v459 = vadd.f32 0.0, %v458
      %v460 = vpop.f32.mrb[0].mxu0
      %461 = vmatprep.mubr.bf16.mxu0 0
      %462 = vmatmul.mubr.bf16.gmra.mrb[0].mxu0 %v348
      %v463 = vpop.f32.mrb[0].mxu0
      %v464 = vadd.f32 0.0, %v463
      %v465 = vpop.f32.mrb[0].mxu0
      %v466 = vpop.f32.mrb[0].mxu0
      %v467 = vadd.f32 0.0, %v466
      %v468 = vpop.f32.mrb[0].mxu0
      %469 = vmatprep.mubr.bf16.mxu0 0
      %470 = vmatmul.mubr.bf16.gmra.mrb[0].mxu0 %v351
      %v471 = vpop.f32.mrb[0].mxu0
      %v472 = vadd.f32 0.0, %v471
      %v473 = vpop.f32.mrb[0].mxu0
      %v474 = vpop.f32.mrb[0].mxu0
      %v475 = vadd.f32 0.0, %v474
      %v476 = vpop.f32.mrb[0].mxu0
      %477 = vmatprep.mubr.bf16.mxu0 0
      %478 = vmatmul.mubr.bf16.gmra.mrb[0].mxu0 %v354
      %v479 = vpop.f32.mrb[0].mxu0
      %v480 = vadd.f32 0.0, %v479
      %v481 = vpop.f32.mrb[0].mxu0
      %v482 = vpop.f32.mrb[0].mxu0
      %v483 = vadd.f32 0.0, %v482
      %v484 = vpop.f32.mrb[0].mxu0
      %485 = vmatprep.mubr.bf16.mxu0 0
      %486 = vmatmul.mubr.bf16.gmra.mrb[0].mxu0 %v357
      %v487 = vpop.f32.mrb[0].mxu0
      %v488 = vadd.f32 0.0, %v487
      %v489 = vpop.f32.mrb[0].mxu0
      %v490 = vpop.f32.mrb[0].mxu0
      %v491 = vadd.f32 0.0, %v490
      %v492 = vpop.f32.mrb[0].mxu0
      %493 = vmatprep.mubr.bf16.mxu0 0
      %494 = vmatmul.mubr.bf16.gmra.mrb[0].mxu0 %v360
      %v495 = vpop.f32.mrb[0].mxu0
      %v496 = vadd.f32 0.0, %v495
      %v497 = vpop.f32.mrb[0].mxu0
      %v498 = vpop.f32.mrb[0].mxu0
      %v499 = vadd.f32 0.0, %v498
      %v500 = vpop.f32.mrb[0].mxu0
      %501 = vmatprep.mubr.bf16.mxu0 0
      %502 = vmatmul.mubr.bf16.gmra.mrb[0].mxu0 %v363
      %v503 = vpop.f32.mrb[0].mxu0
      %v504 = vadd.f32 0.0, %v503
      %v505 = vpop.f32.mrb[0].mxu0
      %v506 = vpop.f32.mrb[0].mxu0
      %v507 = vadd.f32 0.0, %v506
      %v508 = vpop.f32.mrb[0].mxu0
      %509 = vmatprep.mubr.bf16.mxu0 0
      %510 = vmatmul.mubr.bf16.gmra.mrb[0].mxu0 %v366
      %v511 = vpop.f32.mrb[0].mxu0
      %v512 = vadd.f32 0.0, %v511
      %v513 = vpop.f32.mrb[0].mxu0
      %v514 = vpop.f32.mrb[0].mxu0
      %v515 = vadd.f32 0.0, %v514
      %v516 = vpop.f32.mrb[0].mxu0
      %517 = vmatprep.mubr.bf16.mxu0 0
      %518 = vmatmul.mubr.bf16.gmra.mrb[0].mxu0 %v369
      %v519 = vpop.f32.mrb[0].mxu0
      %v520 = vadd.f32 0.0, %v519
      %v521 = vpop.f32.mrb[0].mxu0
      %v522 = vpop.f32.mrb[0].mxu0
      %v523 = vadd.f32 0.0, %v522
      %v524 = vpop.f32.mrb[0].mxu0
      %525 = vmatprep.mubr.bf16.mxu0 0
      %526 = vmatmul.mubr.bf16.gmra.mrb[0].mxu0 %v372
      %v527 = vpop.f32.mrb[0].mxu0
      %v528 = vadd.f32 0.0, %v527
      %v529 = vpop.f32.mrb[0].mxu0
      %v530 = vpop.f32.mrb[0].mxu0
      %v531 = vadd.f32 0.0, %v530
      %v532 = vpop.f32.mrb[0].mxu0
      %533 = vmatprep.mubr.bf16.mxu0 0
      %534 = vmatmul.mubr.bf16.gmra.mrb[0].mxu0 %v375
      %v535 = vpop.f32.mrb[0].mxu0
      %v536 = vadd.f32 0.0, %v535
      %v537 = vpop.f32.mrb[0].mxu0
      %v538 = vpop.f32.mrb[0].mxu0
      %v539 = vadd.f32 0.0, %v538
      %v540 = vpop.f32.mrb[0].mxu0
      %541 = vdwg.mxu0
      %v543 = vsel %vm328, %v260, 0
      %v546 = vsel %vm328, %v261, 0
      %v549 = vsel %vm328, %v262, 0
      %v552 = vsel %vm328, %v263, 0
      %v555 = vsel %vm328, %v264, 0
      %v558 = vsel %vm328, %v265, 0
      %v561 = vsel %vm328, %v266, 0
      %v564 = vsel %vm328, %v267, 0
      %v567 = vsel %vm328, %v268, 0
      %v570 = vsel %vm328, %v269, 0
      %v573 = vsel %vm328, %v270, 0
      %v576 = vsel %vm328, %v271, 0
      %v579 = vsel %vm328, %v272, 0
      %v582 = vsel %vm328, %v273, 0
      %v585 = vsel %vm328, %v274, 0
      %v588 = vsel %vm328, %v275, 0
      %v591 = vsel %vm377, %v276, 0
      %593 = vmatprep.subr.bf16.mxu0 0
      %594 = vmatpush1.bf16.msra.mxu0 %v591
      %595 = vmatprep.subr.bf16.mxu0 0
      %596 = vmatpush1.bf16.msra.mxu0 0
      %597 = vmatprep.subr.bf16.mxu0 0
      %598 = vmatpush1.bf16.msra.mxu0 0
      %599 = vmatprep.subr.bf16.mxu0 0
      %600 = vmatpush1.bf16.msra.mxu0 0
      %601 = vmatprep.subr.bf16.mxu0 0
      %602 = vmatpush1.bf16.msra.mxu0 0
      %603 = vmatprep.subr.bf16.mxu0 0
      %604 = vmatpush1.bf16.msra.mxu0 0
      %605 = vmatprep.subr.bf16.mxu0 0
      %606 = vmatpush1.bf16.msra.mxu0 0
      %607 = vmatprep.subr.bf16.mxu0 0
      %608 = vmatpush1.bf16.msra.mxu0 0
      %609 = vmatprep.subr.bf16.mxu0 0
      %610 = vmatpush1.bf16.msra.mxu0 0
      %611 = vmatprep.subr.bf16.mxu0 0
      %612 = vmatpush1.bf16.msra.mxu0 0
      %613 = vmatprep.subr.bf16.mxu0 0
      %614 = vmatpush1.bf16.msra.mxu0 0
      %615 = vmatprep.subr.bf16.mxu0 0
      %616 = vmatpush1.bf16.msra.mxu0 0
      %617 = vmatprep.subr.bf16.mxu0 0
      %618 = vmatpush1.bf16.msra.mxu0 0
      %619 = vmatprep.subr.bf16.mxu0 0
      %620 = vmatpush1.bf16.msra.mxu0 0
      %621 = vmatprep.subr.bf16.mxu0 0
      %622 = vmatpush1.bf16.msra.mxu0 0
      %623 = vmatprep.subr.bf16.mxu0 0
      %624 = vmatpush1.bf16.msra.mxu0 0
      %625 = vmatprep.mubr.bf16.mxu0 0
      %626 = vmatmul.mubr.bf16.gmra.mrb[0].mxu0 %v543
      %v627 = vpop.f32.mrb[0].mxu0
      %v628 = vadd.f32 %v416, %v627
      %v629 = vpop.f32.mrb[0].mxu0
      %v630 = vpop.f32.mrb[0].mxu0
      %v631 = vadd.f32 %v419, %v630
      %v632 = vpop.f32.mrb[0].mxu0
      %633 = vmatprep.mubr.bf16.mxu0 0
      %634 = vmatmul.mubr.bf16.gmra.mrb[0].mxu0 %v546
      %v635 = vpop.f32.mrb[0].mxu0
      %v636 = vadd.f32 %v424, %v635
      %v637 = vpop.f32.mrb[0].mxu0
      %v638 = vpop.f32.mrb[0].mxu0
      %v639 = vadd.f32 %v427, %v638
      %v640 = vpop.f32.mrb[0].mxu0
      %641 = vmatprep.mubr.bf16.mxu0 0
      %642 = vmatmul.mubr.bf16.gmra.mrb[0].mxu0 %v549
      %v643 = vpop.f32.mrb[0].mxu0
      %v644 = vadd.f32 %v432, %v643
      %v645 = vpop.f32.mrb[0].mxu0
      %v646 = vpop.f32.mrb[0].mxu0
      %v647 = vadd.f32 %v435, %v646
      %v648 = vpop.f32.mrb[0].mxu0
      %649 = vmatprep.mubr.bf16.mxu0 0
      %650 = vmatmul.mubr.bf16.gmra.mrb[0].mxu0 %v552
      %v651 = vpop.f32.mrb[0].mxu0
      %v652 = vadd.f32 %v440, %v651
      %v653 = vpop.f32.mrb[0].mxu0
      %v654 = vpop.f32.mrb[0].mxu0
      %v655 = vadd.f32 %v443, %v654
      %v656 = vpop.f32.mrb[0].mxu0
      %657 = vmatprep.mubr.bf16.mxu0 0
      %658 = vmatmul.mubr.bf16.gmra.mrb[0].mxu0 %v555
      %v659 = vpop.f32.mrb[0].mxu0
      %v660 = vadd.f32 %v448, %v659
      %v661 = vpop.f32.mrb[0].mxu0
      %v662 = vpop.f32.mrb[0].mxu0
      %v663 = vadd.f32 %v451, %v662
      %v664 = vpop.f32.mrb[0].mxu0
      %665 = vmatprep.mubr.bf16.mxu0 0
      %666 = vmatmul.mubr.bf16.gmra.mrb[0].mxu0 %v558
      %v667 = vpop.f32.mrb[0].mxu0
      %v668 = vadd.f32 %v456, %v667
      %v669 = vpop.f32.mrb[0].mxu0
      %v670 = vpop.f32.mrb[0].mxu0
      %v671 = vadd.f32 %v459, %v670
      %v672 = vpop.f32.mrb[0].mxu0
      %673 = vmatprep.mubr.bf16.mxu0 0
      %674 = vmatmul.mubr.bf16.gmra.mrb[0].mxu0 %v561
      %v675 = vpop.f32.mrb[0].mxu0
      %v676 = vadd.f32 %v464, %v675
      %v677 = vpop.f32.mrb[0].mxu0
      %v678 = vpop.f32.mrb[0].mxu0
      %v679 = vadd.f32 %v467, %v678
      %v680 = vpop.f32.mrb[0].mxu0
      %681 = vmatprep.mubr.bf16.mxu0 0
      %682 = vmatmul.mubr.bf16.gmra.mrb[0].mxu0 %v564
      %v683 = vpop.f32.mrb[0].mxu0
      %v684 = vadd.f32 %v472, %v683
      %v685 = vpop.f32.mrb[0].mxu0
      %v686 = vpop.f32.mrb[0].mxu0
      %v687 = vadd.f32 %v475, %v686
      %v688 = vpop.f32.mrb[0].mxu0
      %689 = vmatprep.mubr.bf16.mxu0 0
      %690 = vmatmul.mubr.bf16.gmra.mrb[0].mxu0 %v567
      %v691 = vpop.f32.mrb[0].mxu0
      %v692 = vadd.f32 %v480, %v691
      %v693 = vpop.f32.mrb[0].mxu0
      %v694 = vpop.f32.mrb[0].mxu0
      %v695 = vadd.f32 %v483, %v694
      %v696 = vpop.f32.mrb[0].mxu0
      %697 = vmatprep.mubr.bf16.mxu0 0
      %698 = vmatmul.mubr.bf16.gmra.mrb[0].mxu0 %v570
      %v699 = vpop.f32.mrb[0].mxu0
      %v700 = vadd.f32 %v488, %v699
      %v701 = vpop.f32.mrb[0].mxu0
      %v702 = vpop.f32.mrb[0].mxu0
      %v703 = vadd.f32 %v491, %v702
      %v704 = vpop.f32.mrb[0].mxu0
      %705 = vmatprep.mubr.bf16.mxu0 0
      %706 = vmatmul.mubr.bf16.gmra.mrb[0].mxu0 %v573
      %v707 = vpop.f32.mrb[0].mxu0
      %v708 = vadd.f32 %v496, %v707
      %v709 = vpop.f32.mrb[0].mxu0
      %v710 = vpop.f32.mrb[0].mxu0
      %v711 = vadd.f32 %v499, %v710
      %v712 = vpop.f32.mrb[0].mxu0
      %713 = vmatprep.mubr.bf16.mxu0 0
      %714 = vmatmul.mubr.bf16.gmra.mrb[0].mxu0 %v576
      %v715 = vpop.f32.mrb[0].mxu0
      %v716 = vadd.f32 %v504, %v715
      %v717 = vpop.f32.mrb[0].mxu0
      %v718 = vpop.f32.mrb[0].mxu0
      %v719 = vadd.f32 %v507, %v718
      %v720 = vpop.f32.mrb[0].mxu0
      %721 = vmatprep.mubr.bf16.mxu0 0
      %722 = vmatmul.mubr.bf16.gmra.mrb[0].mxu0 %v579
      %v723 = vpop.f32.mrb[0].mxu0
      %v724 = vadd.f32 %v512, %v723
      %v725 = vpop.f32.mrb[0].mxu0
      %v726 = vpop.f32.mrb[0].mxu0
      %v727 = vadd.f32 %v515, %v726
      %v728 = vpop.f32.mrb[0].mxu0
      %729 = vmatprep.mubr.bf16.mxu0 0
      %730 = vmatmul.mubr.bf16.gmra.mrb[0].mxu0 %v582
      %v731 = vpop.f32.mrb[0].mxu0
      %v732 = vadd.f32 %v520, %v731
      %v733 = vpop.f32.mrb[0].mxu0
      %v734 = vpop.f32.mrb[0].mxu0
      %v735 = vadd.f32 %v523, %v734
      %v736 = vpop.f32.mrb[0].mxu0
      %737 = vmatprep.mubr.bf16.mxu0 0
      %738 = vmatmul.mubr.bf16.gmra.mrb[0].mxu0 %v585
      %v739 = vpop.f32.mrb[0].mxu0
      %v740 = vadd.f32 %v528, %v739
      %v741 = vpop.f32.mrb[0].mxu0
      %v742 = vpop.f32.mrb[0].mxu0
      %v743 = vadd.f32 %v531, %v742
      %v744 = vpop.f32.mrb[0].mxu0
      %745 = vmatprep.mubr.bf16.mxu0 0
      %746 = vmatmul.mubr.bf16.gmra.mrb[0].mxu0 %v588
      %v747 = vpop.f32.mrb[0].mxu0
      %v748 = vadd.f32 %v536, %v747
      %v749 = vpop.f32.mrb[0].mxu0
      %v750 = vpop.f32.mrb[0].mxu0
      %v751 = vadd.f32 %v539, %v750
      %v752 = vpop.f32.mrb[0].mxu0
      %753 = vdwg.mxu0
      %s754 = scalar_lea.vmem %s214, 576
      %v755 = vld [vmem:[%s754] sm:$0xff]
      %v756 = vld [vmem:[%s754 + $0x8] sm:$0xff]
      %v757 = vld [vmem:[%s754 + $0x10] sm:$0xff]
      %v758 = vld [vmem:[%s754 + $0x18] sm:$0xff]
      %v759 = vld [vmem:[%s754 + $0x20] sm:$0xff]
      %v760 = vld [vmem:[%s754 + $0x28] sm:$0xff]
      %v761 = vld [vmem:[%s754 + $0x30] sm:$0xff]
      %v762 = vld [vmem:[%s754 + $0x38] sm:$0xff]
      %v763 = vld [vmem:[%s754 + $0x40] sm:$0xff]
      %v764 = vld [vmem:[%s754 + $0x48] sm:$0xff]
      %v765 = vld [vmem:[%s754 + $0x50] sm:$0xff]
      %v766 = vld [vmem:[%s754 + $0x58] sm:$0xff]
      %v767 = vld [vmem:[%s754 + $0x60] sm:$0xff]
      %v768 = vld [vmem:[%s754 + $0x68] sm:$0xff]
      %v769 = vld [vmem:[%s754 + $0x70] sm:$0xff]
      %v770 = vld [vmem:[%s754 + $0x78] sm:$0xff]
      %v771 = vld [vmem:[%s754 + $0x80] sm:$0xff]
      %v772 = vld [vmem:[%s754 + $0x88] sm:$0xff]
      %v773 = vld [vmem:[%s754 + $0x90] sm:$0xff]
      %v774 = vld [vmem:[%s754 + $0x98] sm:$0xff]
      %v775 = vld [vmem:[%s754 + $0xa0] sm:$0xff]
      %v776 = vld [vmem:[%s754 + $0xa8] sm:$0xff]
      %v777 = vld [vmem:[%s754 + $0xb0] sm:$0xff]
      %v778 = vld [vmem:[%s754 + $0xb8] sm:$0xff]
      %v779 = vld [vmem:[%s754 + $0xc0] sm:$0xff]
      %v780 = vld [vmem:[%s754 + $0xc8] sm:$0xff]
      %v781 = vld [vmem:[%s754 + $0xd0] sm:$0xff]
      %v782 = vld [vmem:[%s754 + $0xd8] sm:$0xff]
      %v783 = vld [vmem:[%s754 + $0xe0] sm:$0xff]
      %v784 = vld [vmem:[%s754 + $0xe8] sm:$0xff]
      %v785 = vld [vmem:[%s754 + $0xf0] sm:$0xff]
      %v786 = vld [vmem:[%s754 + $0xf8] sm:$0xff]
      %v787 = vpack.c.bf16 %v756, %v755
      %v788 = vpack.c.bf16 %v758, %v757
      %v789 = vpack.c.bf16 %v760, %v759
      %v790 = vpack.c.bf16 %v762, %v761
      %v791 = vpack.c.bf16 %v764, %v763
      %v792 = vpack.c.bf16 %v766, %v765
      %v793 = vpack.c.bf16 %v768, %v767
      %v794 = vpack.c.bf16 %v770, %v769
      %v795 = vpack.c.bf16 %v772, %v771
      %v796 = vpack.c.bf16 %v774, %v773
      %v797 = vpack.c.bf16 %v776, %v775
      %v798 = vpack.c.bf16 %v778, %v777
      %v799 = vpack.c.bf16 %v780, %v779
      %v800 = vpack.c.bf16 %v782, %v781
      %v801 = vpack.c.bf16 %v784, %v783
      %v802 = vpack.c.bf16 %v786, %v785
      %s803 = scalar_lea.vmem %s1, 8
      %v804 = vld [vmem:[%s803] sm:$0xf]
      %v806 = vsel %vm328, %v787, 0
      %v809 = vsel %vm328, %v788, 0
      %v812 = vsel %vm328, %v789, 0
      %v815 = vsel %vm328, %v790, 0
      %v818 = vsel %vm328, %v791, 0
      %v821 = vsel %vm328, %v792, 0
      %v824 = vsel %vm328, %v793, 0
      %v827 = vsel %vm328, %v794, 0
      %v830 = vsel %vm328, %v795, 0
      %v833 = vsel %vm328, %v796, 0
      %v836 = vsel %vm328, %v797, 0
      %v839 = vsel %vm328, %v798, 0
      %v842 = vsel %vm328, %v799, 0
      %v845 = vsel %vm328, %v800, 0
      %v848 = vsel %vm328, %v801, 0
      %v851 = vsel %vm328, %v802, 0
      %v854 = vsel %vm377, %v804, 0
      %856 = vmatprep.subr.bf16.mxu0 0
      %857 = vmatpush1.bf16.msra.mxu0 %v854
      %858 = vmatprep.subr.bf16.mxu0 0
      %859 = vmatpush1.bf16.msra.mxu0 0
      %860 = vmatprep.subr.bf16.mxu0 0
      %861 = vmatpush1.bf16.msra.mxu0 0
      %862 = vmatprep.subr.bf16.mxu0 0
      %863 = vmatpush1.bf16.msra.mxu0 0
      %864 = vmatprep.subr.bf16.mxu0 0
      %865 = vmatpush1.bf16.msra.mxu0 0
      %866 = vmatprep.subr.bf16.mxu0 0
      %867 = vmatpush1.bf16.msra.mxu0 0
      %868 = vmatprep.subr.bf16.mxu0 0
      %869 = vmatpush1.bf16.msra.mxu0 0
      %870 = vmatprep.subr.bf16.mxu0 0
      %871 = vmatpush1.bf16.msra.mxu0 0
      %872 = vmatprep.subr.bf16.mxu0 0
      %873 = vmatpush1.bf16.msra.mxu0 0
      %874 = vmatprep.subr.bf16.mxu0 0
      %875 = vmatpush1.bf16.msra.mxu0 0
      %876 = vmatprep.subr.bf16.mxu0 0
      %877 = vmatpush1.bf16.msra.mxu0 0
      %878 = vmatprep.subr.bf16.mxu0 0
      %879 = vmatpush1.bf16.msra.mxu0 0
      %880 = vmatprep.subr.bf16.mxu0 0
      %881 = vmatpush1.bf16.msra.mxu0 0
      %882 = vmatprep.subr.bf16.mxu0 0
      %883 = vmatpush1.bf16.msra.mxu0 0
      %884 = vmatprep.subr.bf16.mxu0 0
      %885 = vmatpush1.bf16.msra.mxu0 0
      %886 = vmatprep.subr.bf16.mxu0 0
      %887 = vmatpush1.bf16.msra.mxu0 0
      %888 = vmatprep.mubr.bf16.mxu0 0
      %889 = vmatmul.mubr.bf16.gmra.mrb[0].mxu0 %v806
      %v890 = vpop.f32.mrb[0].mxu0
      %v891 = vadd.f32 0.0, %v890
      %v892 = vpop.f32.mrb[0].mxu0
      %v893 = vpop.f32.mrb[0].mxu0
      %v894 = vadd.f32 0.0, %v893
      %v895 = vpop.f32.mrb[0].mxu0
      %896 = vmatprep.mubr.bf16.mxu0 0
      %897 = vmatmul.mubr.bf16.gmra.mrb[0].mxu0 %v809
      %v898 = vpop.f32.mrb[0].mxu0
      %v899 = vadd.f32 0.0, %v898
      %v900 = vpop.f32.mrb[0].mxu0
      %v901 = vpop.f32.mrb[0].mxu0
      %v902 = vadd.f32 0.0, %v901
      %v903 = vpop.f32.mrb[0].mxu0
      %904 = vmatprep.mubr.bf16.mxu0 0
      %905 = vmatmul.mubr.bf16.gmra.mrb[0].mxu0 %v812
      %v906 = vpop.f32.mrb[0].mxu0
      %v907 = vadd.f32 0.0, %v906
      %v908 = vpop.f32.mrb[0].mxu0
      %v909 = vpop.f32.mrb[0].mxu0
      %v910 = vadd.f32 0.0, %v909
      %v911 = vpop.f32.mrb[0].mxu0
      %912 = vmatprep.mubr.bf16.mxu0 0
      %913 = vmatmul.mubr.bf16.gmra.mrb[0].mxu0 %v815
      %v914 = vpop.f32.mrb[0].mxu0
      %v915 = vadd.f32 0.0, %v914
      %v916 = vpop.f32.mrb[0].mxu0
      %v917 = vpop.f32.mrb[0].mxu0
      %v918 = vadd.f32 0.0, %v917
      %v919 = vpop.f32.mrb[0].mxu0
      %920 = vmatprep.mubr.bf16.mxu0 0
      %921 = vmatmul.mubr.bf16.gmra.mrb[0].mxu0 %v818
      %v922 = vpop.f32.mrb[0].mxu0
      %v923 = vadd.f32 0.0, %v922
      %v924 = vpop.f32.mrb[0].mxu0
      %v925 = vpop.f32.mrb[0].mxu0
      %v926 = vadd.f32 0.0, %v925
      %v927 = vpop.f32.mrb[0].mxu0
      %928 = vmatprep.mubr.bf16.mxu0 0
      %929 = vmatmul.mubr.bf16.gmra.mrb[0].mxu0 %v821
      %v930 = vpop.f32.mrb[0].mxu0
      %v931 = vadd.f32 0.0, %v930
      %v932 = vpop.f32.mrb[0].mxu0
      %v933 = vpop.f32.mrb[0].mxu0
      %v934 = vadd.f32 0.0, %v933
      %v935 = vpop.f32.mrb[0].mxu0
      %936 = vmatprep.mubr.bf16.mxu0 0
      %937 = vmatmul.mubr.bf16.gmra.mrb[0].mxu0 %v824
      %v938 = vpop.f32.mrb[0].mxu0
      %v939 = vadd.f32 0.0, %v938
      %v940 = vpop.f32.mrb[0].mxu0
      %v941 = vpop.f32.mrb[0].mxu0
      %v942 = vadd.f32 0.0, %v941
      %v943 = vpop.f32.mrb[0].mxu0
      %944 = vmatprep.mubr.bf16.mxu0 0
      %945 = vmatmul.mubr.bf16.gmra.mrb[0].mxu0 %v827
      %v946 = vpop.f32.mrb[0].mxu0
      %v947 = vadd.f32 0.0, %v946
      %v948 = vpop.f32.mrb[0].mxu0
      %v949 = vpop.f32.mrb[0].mxu0
      %v950 = vadd.f32 0.0, %v949
      %v951 = vpop.f32.mrb[0].mxu0
      %952 = vmatprep.mubr.bf16.mxu0 0
      %953 = vmatmul.mubr.bf16.gmra.mrb[0].mxu0 %v830
      %v954 = vpop.f32.mrb[0].mxu0
      %v955 = vadd.f32 0.0, %v954
      %v956 = vpop.f32.mrb[0].mxu0
      %v957 = vpop.f32.mrb[0].mxu0
      %v958 = vadd.f32 0.0, %v957
      %v959 = vpop.f32.mrb[0].mxu0
      %960 = vmatprep.mubr.bf16.mxu0 0
      %961 = vmatmul.mubr.bf16.gmra.mrb[0].mxu0 %v833
      %v962 = vpop.f32.mrb[0].mxu0
      %v963 = vadd.f32 0.0, %v962
      %v964 = vpop.f32.mrb[0].mxu0
      %v965 = vpop.f32.mrb[0].mxu0
      %v966 = vadd.f32 0.0, %v965
      %v967 = vpop.f32.mrb[0].mxu0
      %968 = vmatprep.mubr.bf16.mxu0 0
      %969 = vmatmul.mubr.bf16.gmra.mrb[0].mxu0 %v836
      %v970 = vpop.f32.mrb[0].mxu0
      %v971 = vadd.f32 0.0, %v970
      %v972 = vpop.f32.mrb[0].mxu0
      %v973 = vpop.f32.mrb[0].mxu0
      %v974 = vadd.f32 0.0, %v973
      %v975 = vpop.f32.mrb[0].mxu0
      %976 = vmatprep.mubr.bf16.mxu0 0
      %977 = vmatmul.mubr.bf16.gmra.mrb[0].mxu0 %v839
      %v978 = vpop.f32.mrb[0].mxu0
      %v979 = vadd.f32 0.0, %v978
      %v980 = vpop.f32.mrb[0].mxu0
      %v981 = vpop.f32.mrb[0].mxu0
      %v982 = vadd.f32 0.0, %v981
      %v983 = vpop.f32.mrb[0].mxu0
      %984 = vmatprep.mubr.bf16.mxu0 0
      %985 = vmatmul.mubr.bf16.gmra.mrb[0].mxu0 %v842
      %v986 = vpop.f32.mrb[0].mxu0
      %v987 = vadd.f32 0.0, %v986
      %v988 = vpop.f32.mrb[0].mxu0
      %v989 = vpop.f32.mrb[0].mxu0
      %v990 = vadd.f32 0.0, %v989
      %v991 = vpop.f32.mrb[0].mxu0
      %992 = vmatprep.mubr.bf16.mxu0 0
      %993 = vmatmul.mubr.bf16.gmra.mrb[0].mxu0 %v845
      %v994 = vpop.f32.mrb[0].mxu0
      %v995 = vadd.f32 0.0, %v994
      %v996 = vpop.f32.mrb[0].mxu0
      %v997 = vpop.f32.mrb[0].mxu0
      %v998 = vadd.f32 0.0, %v997
      %v999 = vpop.f32.mrb[0].mxu0
      %1000 = vmatprep.mubr.bf16.mxu0 0
      %1001 = vmatmul.mubr.bf16.gmra.mrb[0].mxu0 %v848
      %v1002 = vpop.f32.mrb[0].mxu0
      %v1003 = vadd.f32 0.0, %v1002
      %v1004 = vpop.f32.mrb[0].mxu0
      %v1005 = vpop.f32.mrb[0].mxu0
      %v1006 = vadd.f32 0.0, %v1005
      %v1007 = vpop.f32.mrb[0].mxu0
      %1008 = vmatprep.mubr.bf16.mxu0 0
      %1009 = vmatmul.mubr.bf16.gmra.mrb[0].mxu0 %v851
      %v1010 = vpop.f32.mrb[0].mxu0
      %v1011 = vadd.f32 0.0, %v1010
      %v1012 = vpop.f32.mrb[0].mxu0
      %v1013 = vpop.f32.mrb[0].mxu0
      %v1014 = vadd.f32 0.0, %v1013
      %v1015 = vpop.f32.mrb[0].mxu0
      %1016 = vdwg.mxu0
      %v1017 = vadd.f32 %v628, %v891
      %v1018 = vadd.f32 %v631, %v894
      %v1019 = vadd.f32 %v636, %v899
      %v1020 = vadd.f32 %v639, %v902
      %v1021 = vadd.f32 %v644, %v907
      %v1022 = vadd.f32 %v647, %v910
      %v1023 = vadd.f32 %v652, %v915
      %v1024 = vadd.f32 %v655, %v918
      %v1025 = vadd.f32 %v660, %v923
      %v1026 = vadd.f32 %v663, %v926
      %v1027 = vadd.f32 %v668, %v931
      %v1028 = vadd.f32 %v671, %v934
      %v1029 = vadd.f32 %v676, %v939
      %v1030 = vadd.f32 %v679, %v942
      %v1031 = vadd.f32 %v684, %v947
      %v1032 = vadd.f32 %v687, %v950
      %v1033 = vadd.f32 %v692, %v955
      %v1034 = vadd.f32 %v695, %v958
      %v1035 = vadd.f32 %v700, %v963
      %v1036 = vadd.f32 %v703, %v966
      %v1037 = vadd.f32 %v708, %v971
      %v1038 = vadd.f32 %v711, %v974
      %v1039 = vadd.f32 %v716, %v979
      %v1040 = vadd.f32 %v719, %v982
      %v1041 = vadd.f32 %v724, %v987
      %v1042 = vadd.f32 %v727, %v990
      %v1043 = vadd.f32 %v732, %v995
      %v1044 = vadd.f32 %v735, %v998
      %v1045 = vadd.f32 %v740, %v1003
      %v1046 = vadd.f32 %v743, %v1006
      %v1047 = vadd.f32 %v748, %v1011
      %v1048 = vadd.f32 %v751, %v1014
      %v1049 = vld [vmem:[%s214 + $0x10] sm:$0xff]
      %v1050 = vld [vmem:[%s214 + $0x18] sm:$0xff]
      %v1051 = vld [vmem:[%s214 + $0x20] sm:$0xff]
      %v1052 = vld [vmem:[%s214 + $0x28] sm:$0xff]
      %v1053 = vld [vmem:[%s214 + $0x30] sm:$0xff]
      %v1054 = vld [vmem:[%s214 + $0x38] sm:$0xff]
      %v1055 = vld [vmem:[%s214 + $0x40] sm:$0xff]
      %v1056 = vld [vmem:[%s214 + $0x48] sm:$0xff]
      %v1057 = vld [vmem:[%s214 + $0x50] sm:$0xff]
      %v1058 = vld [vmem:[%s214 + $0x58] sm:$0xff]
      %v1059 = vld [vmem:[%s214 + $0x60] sm:$0xff]
      %v1060 = vld [vmem:[%s214 + $0x68] sm:$0xff]
      %v1061 = vld [vmem:[%s214 + $0x70] sm:$0xff]
      %v1062 = vld [vmem:[%s214 + $0x78] sm:$0xff]
      %v1063 = vld [vmem:[%s214 + $0x80] sm:$0xff]
      %v1064 = vld [vmem:[%s214 + $0x88] sm:$0xff]
      %v1065 = vld [vmem:[%s214 + $0x90] sm:$0xff]
      %v1066 = vld [vmem:[%s214 + $0x98] sm:$0xff]
      %v1067 = vld [vmem:[%s214 + $0xa0] sm:$0xff]
      %v1068 = vld [vmem:[%s214 + $0xa8] sm:$0xff]
      %v1069 = vld [vmem:[%s214 + $0xb0] sm:$0xff]
      %v1070 = vld [vmem:[%s214 + $0xb8] sm:$0xff]
      %v1071 = vld [vmem:[%s214 + $0xc0] sm:$0xff]
      %v1072 = vld [vmem:[%s214 + $0xc8] sm:$0xff]
      %v1073 = vld [vmem:[%s214 + $0xd0] sm:$0xff]
      %v1074 = vld [vmem:[%s214 + $0xd8] sm:$0xff]
      %v1075 = vld [vmem:[%s214 + $0xe0] sm:$0xff]
      %v1076 = vld [vmem:[%s214 + $0xe8] sm:$0xff]
      %v1077 = vld [vmem:[%s214 + $0xf0] sm:$0xff]
      %v1078 = vld [vmem:[%s214 + $0xf8] sm:$0xff]
      %v1079 = vld [vmem:[%s214 + $0x100] sm:$0xff]
      %v1080 = vld [vmem:[%s214 + $0x108] sm:$0xff]
      %v1081 = vpack.c.bf16 %v1050, %v1049
      %v1082 = vpack.c.bf16 %v1052, %v1051
      %v1083 = vpack.c.bf16 %v1054, %v1053
      %v1084 = vpack.c.bf16 %v1056, %v1055
      %v1085 = vpack.c.bf16 %v1058, %v1057
      %v1086 = vpack.c.bf16 %v1060, %v1059
      %v1087 = vpack.c.bf16 %v1062, %v1061
      %v1088 = vpack.c.bf16 %v1064, %v1063
      %v1089 = vpack.c.bf16 %v1066, %v1065
      %v1090 = vpack.c.bf16 %v1068, %v1067
      %v1091 = vpack.c.bf16 %v1070, %v1069
      %v1092 = vpack.c.bf16 %v1072, %v1071
      %v1093 = vpack.c.bf16 %v1074, %v1073
      %v1094 = vpack.c.bf16 %v1076, %v1075
      %v1095 = vpack.c.bf16 %v1078, %v1077
      %v1096 = vpack.c.bf16 %v1080, %v1079
      %s1097 = scalar_lea.vmem %s1, 12
      %v1098 = vld [vmem:[%s1097] sm:$0xf]
      %v1100 = vsel %vm328, %v1081, 0
      %v1103 = vsel %vm328, %v1082, 0
      %v1106 = vsel %vm328, %v1083, 0
      %v1109 = vsel %vm328, %v1084, 0
      %v1112 = vsel %vm328, %v1085, 0
      %v1115 = vsel %vm328, %v1086, 0
      %v1118 = vsel %vm328, %v1087, 0
      %v1121 = vsel %vm328, %v1088, 0
      %v1124 = vsel %vm328, %v1089, 0
      %v1127 = vsel %vm328, %v1090, 0
      %v1130 = vsel %vm328, %v1091, 0
      %v1133 = vsel %vm328, %v1092, 0
      %v1136 = vsel %vm328, %v1093, 0
      %v1139 = vsel %vm328, %v1094, 0
      %v1142 = vsel %vm328, %v1095, 0
      %v1145 = vsel %vm328, %v1096, 0
      %v1148 = vsel %vm377, %v1098, 0
      %1150 = vmatprep.subr.bf16.mxu0 0
      %1151 = vmatpush1.bf16.msra.mxu0 %v1148
      %1152 = vmatprep.subr.bf16.mxu0 0
      %1153 = vmatpush1.bf16.msra.mxu0 0
      %1154 = vmatprep.subr.bf16.mxu0 0
      %1155 = vmatpush1.bf16.msra.mxu0 0
      %1156 = vmatprep.subr.bf16.mxu0 0
      %1157 = vmatpush1.bf16.msra.mxu0 0
      %1158 = vmatprep.subr.bf16.mxu0 0
      %1159 = vmatpush1.bf16.msra.mxu0 0
      %1160 = vmatprep.subr.bf16.mxu0 0
      %1161 = vmatpush1.bf16.msra.mxu0 0
      %1162 = vmatprep.subr.bf16.mxu0 0
      %1163 = vmatpush1.bf16.msra.mxu0 0
      %1164 = vmatprep.subr.bf16.mxu0 0
      %1165 = vmatpush1.bf16.msra.mxu0 0
      %1166 = vmatprep.subr.bf16.mxu0 0
      %1167 = vmatpush1.bf16.msra.mxu0 0
      %1168 = vmatprep.subr.bf16.mxu0 0
      %1169 = vmatpush1.bf16.msra.mxu0 0
      %1170 = vmatprep.subr.bf16.mxu0 0
      %1171 = vmatpush1.bf16.msra.mxu0 0
      %1172 = vmatprep.subr.bf16.mxu0 0
      %1173 = vmatpush1.bf16.msra.mxu0 0
      %1174 = vmatprep.subr.bf16.mxu0 0
      %1175 = vmatpush1.bf16.msra.mxu0 0
      %1176 = vmatprep.subr.bf16.mxu0 0
      %1177 = vmatpush1.bf16.msra.mxu0 0
      %1178 = vmatprep.subr.bf16.mxu0 0
      %1179 = vmatpush1.bf16.msra.mxu0 0
      %1180 = vmatprep.subr.bf16.mxu0 0
      %1181 = vmatpush1.bf16.msra.mxu0 0
      %1182 = vmatprep.mubr.bf16.mxu0 0
      %1183 = vmatmul.mubr.bf16.gmra.mrb[0].mxu0 %v1100
      %v1184 = vpop.f32.mrb[0].mxu0
      %v1185 = vadd.f32 0.0, %v1184
      %v1186 = vpop.f32.mrb[0].mxu0
      %v1187 = vpop.f32.mrb[0].mxu0
      %v1188 = vadd.f32 0.0, %v1187
      %v1189 = vpop.f32.mrb[0].mxu0
      %1190 = vmatprep.mubr.bf16.mxu0 0
      %1191 = vmatmul.mubr.bf16.gmra.mrb[0].mxu0 %v1103
      %v1192 = vpop.f32.mrb[0].mxu0
      %v1193 = vadd.f32 0.0, %v1192
      %v1194 = vpop.f32.mrb[0].mxu0
      %v1195 = vpop.f32.mrb[0].mxu0
      %v1196 = vadd.f32 0.0, %v1195
      %v1197 = vpop.f32.mrb[0].mxu0
      %1198 = vmatprep.mubr.bf16.mxu0 0
      %1199 = vmatmul.mubr.bf16.gmra.mrb[0].mxu0 %v1106
      %v1200 = vpop.f32.mrb[0].mxu0
      %v1201 = vadd.f32 0.0, %v1200
      %v1202 = vpop.f32.mrb[0].mxu0
      %v1203 = vpop.f32.mrb[0].mxu0
      %v1204 = vadd.f32 0.0, %v1203
      %v1205 = vpop.f32.mrb[0].mxu0
      %1206 = vmatprep.mubr.bf16.mxu0 0
      %1207 = vmatmul.mubr.bf16.gmra.mrb[0].mxu0 %v1109
      %v1208 = vpop.f32.mrb[0].mxu0
      %v1209 = vadd.f32 0.0, %v1208
      %v1210 = vpop.f32.mrb[0].mxu0
      %v1211 = vpop.f32.mrb[0].mxu0
      %v1212 = vadd.f32 0.0, %v1211
      %v1213 = vpop.f32.mrb[0].mxu0
      %1214 = vmatprep.mubr.bf16.mxu0 0
      %1215 = vmatmul.mubr.bf16.gmra.mrb[0].mxu0 %v1112
      %v1216 = vpop.f32.mrb[0].mxu0
      %v1217 = vadd.f32 0.0, %v1216
      %v1218 = vpop.f32.mrb[0].mxu0
      %v1219 = vpop.f32.mrb[0].mxu0
      %v1220 = vadd.f32 0.0, %v1219
      %v1221 = vpop.f32.mrb[0].mxu0
      %1222 = vmatprep.mubr.bf16.mxu0 0
      %1223 = vmatmul.mubr.bf16.gmra.mrb[0].mxu0 %v1115
      %v1224 = vpop.f32.mrb[0].mxu0
      %v1225 = vadd.f32 0.0, %v1224
      %v1226 = vpop.f32.mrb[0].mxu0
      %v1227 = vpop.f32.mrb[0].mxu0
      %v1228 = vadd.f32 0.0, %v1227
      %v1229 = vpop.f32.mrb[0].mxu0
      %1230 = vmatprep.mubr.bf16.mxu0 0
      %1231 = vmatmul.mubr.bf16.gmra.mrb[0].mxu0 %v1118
      %v1232 = vpop.f32.mrb[0].mxu0
      %v1233 = vadd.f32 0.0, %v1232
      %v1234 = vpop.f32.mrb[0].mxu0
      %v1235 = vpop.f32.mrb[0].mxu0
      %v1236 = vadd.f32 0.0, %v1235
      %v1237 = vpop.f32.mrb[0].mxu0
      %1238 = vmatprep.mubr.bf16.mxu0 0
      %1239 = vmatmul.mubr.bf16.gmra.mrb[0].mxu0 %v1121
      %v1240 = vpop.f32.mrb[0].mxu0
      %v1241 = vadd.f32 0.0, %v1240
      %v1242 = vpop.f32.mrb[0].mxu0
      %v1243 = vpop.f32.mrb[0].mxu0
      %v1244 = vadd.f32 0.0, %v1243
      %v1245 = vpop.f32.mrb[0].mxu0
      %1246 = vmatprep.mubr.bf16.mxu0 0
      %1247 = vmatmul.mubr.bf16.gmra.mrb[0].mxu0 %v1124
      %v1248 = vpop.f32.mrb[0].mxu0
      %v1249 = vadd.f32 0.0, %v1248
      %v1250 = vpop.f32.mrb[0].mxu0
      %v1251 = vpop.f32.mrb[0].mxu0
      %v1252 = vadd.f32 0.0, %v1251
      %v1253 = vpop.f32.mrb[0].mxu0
      %1254 = vmatprep.mubr.bf16.mxu0 0
      %1255 = vmatmul.mubr.bf16.gmra.mrb[0].mxu0 %v1127
      %v1256 = vpop.f32.mrb[0].mxu0
      %v1257 = vadd.f32 0.0, %v1256
      %v1258 = vpop.f32.mrb[0].mxu0
      %v1259 = vpop.f32.mrb[0].mxu0
      %v1260 = vadd.f32 0.0, %v1259
      %v1261 = vpop.f32.mrb[0].mxu0
      %1262 = vmatprep.mubr.bf16.mxu0 0
      %1263 = vmatmul.mubr.bf16.gmra.mrb[0].mxu0 %v1130
      %v1264 = vpop.f32.mrb[0].mxu0
      %v1265 = vadd.f32 0.0, %v1264
      %v1266 = vpop.f32.mrb[0].mxu0
      %v1267 = vpop.f32.mrb[0].mxu0
      %v1268 = vadd.f32 0.0, %v1267
      %v1269 = vpop.f32.mrb[0].mxu0
      %1270 = vmatprep.mubr.bf16.mxu0 0
      %1271 = vmatmul.mubr.bf16.gmra.mrb[0].mxu0 %v1133
      %v1272 = vpop.f32.mrb[0].mxu0
      %v1273 = vadd.f32 0.0, %v1272
      %v1274 = vpop.f32.mrb[0].mxu0
      %v1275 = vpop.f32.mrb[0].mxu0
      %v1276 = vadd.f32 0.0, %v1275
      %v1277 = vpop.f32.mrb[0].mxu0
      %1278 = vmatprep.mubr.bf16.mxu0 0
      %1279 = vmatmul.mubr.bf16.gmra.mrb[0].mxu0 %v1136
      %v1280 = vpop.f32.mrb[0].mxu0
      %v1281 = vadd.f32 0.0, %v1280
      %v1282 = vpop.f32.mrb[0].mxu0
      %v1283 = vpop.f32.mrb[0].mxu0
      %v1284 = vadd.f32 0.0, %v1283
      %v1285 = vpop.f32.mrb[0].mxu0
      %1286 = vmatprep.mubr.bf16.mxu0 0
      %1287 = vmatmul.mubr.bf16.gmra.mrb[0].mxu0 %v1139
      %v1288 = vpop.f32.mrb[0].mxu0
      %v1289 = vadd.f32 0.0, %v1288
      %v1290 = vpop.f32.mrb[0].mxu0
      %v1291 = vpop.f32.mrb[0].mxu0
      %v1292 = vadd.f32 0.0, %v1291
      %v1293 = vpop.f32.mrb[0].mxu0
      %1294 = vmatprep.mubr.bf16.mxu0 0
      %1295 = vmatmul.mubr.bf16.gmra.mrb[0].mxu0 %v1142
      %v1296 = vpop.f32.mrb[0].mxu0
      %v1297 = vadd.f32 0.0, %v1296
      %v1298 = vpop.f32.mrb[0].mxu0
      %v1299 = vpop.f32.mrb[0].mxu0
      %v1300 = vadd.f32 0.0, %v1299
      %v1301 = vpop.f32.mrb[0].mxu0
      %1302 = vmatprep.mubr.bf16.mxu0 0
      %1303 = vmatmul.mubr.bf16.gmra.mrb[0].mxu0 %v1145
      %v1304 = vpop.f32.mrb[0].mxu0
      %v1305 = vadd.f32 0.0, %v1304
      %v1306 = vpop.f32.mrb[0].mxu0
      %v1307 = vpop.f32.mrb[0].mxu0
      %v1308 = vadd.f32 0.0, %v1307
      %v1309 = vpop.f32.mrb[0].mxu0
      %1310 = vdwg.mxu0
      %v1311 = vadd.f32 %v1017, %v1185
      %v1312 = vadd.f32 %v1018, %v1188
      %v1313 = vadd.f32 %v1019, %v1193
      %v1314 = vadd.f32 %v1020, %v1196
      %v1315 = vadd.f32 %v1021, %v1201
      %v1316 = vadd.f32 %v1022, %v1204
      %v1317 = vadd.f32 %v1023, %v1209
      %v1318 = vadd.f32 %v1024, %v1212
      %v1319 = vadd.f32 %v1025, %v1217
      %v1320 = vadd.f32 %v1026, %v1220
      %v1321 = vadd.f32 %v1027, %v1225
      %v1322 = vadd.f32 %v1028, %v1228
      %v1323 = vadd.f32 %v1029, %v1233
      %v1324 = vadd.f32 %v1030, %v1236
      %v1325 = vadd.f32 %v1031, %v1241
      %v1326 = vadd.f32 %v1032, %v1244
      %v1327 = vadd.f32 %v1033, %v1249
      %v1328 = vadd.f32 %v1034, %v1252
      %v1329 = vadd.f32 %v1035, %v1257
      %v1330 = vadd.f32 %v1036, %v1260
      %v1331 = vadd.f32 %v1037, %v1265
      %v1332 = vadd.f32 %v1038, %v1268
      %v1333 = vadd.f32 %v1039, %v1273
      %v1334 = vadd.f32 %v1040, %v1276
      %v1335 = vadd.f32 %v1041, %v1281
      %v1336 = vadd.f32 %v1042, %v1284
      %v1337 = vadd.f32 %v1043, %v1289
      %v1338 = vadd.f32 %v1044, %v1292
      %v1339 = vadd.f32 %v1045, %v1297
      %v1340 = vadd.f32 %v1046, %v1300
      %v1341 = vadd.f32 %v1047, %v1305
      %v1342 = vadd.f32 %v1048, %v1308
      %v1343 = vld [vmem:[%s277 + $0x10] sm:$0xff]
      %v1344 = vld [vmem:[%s277 + $0x18] sm:$0xff]
      %v1345 = vld [vmem:[%s277 + $0x20] sm:$0xff]
      %v1346 = vld [vmem:[%s277 + $0x28] sm:$0xff]
      %v1347 = vld [vmem:[%s277 + $0x30] sm:$0xff]
      %v1348 = vld [vmem:[%s277 + $0x38] sm:$0xff]
      %v1349 = vld [vmem:[%s277 + $0x40] sm:$0xff]
      %v1350 = vld [vmem:[%s277 + $0x48] sm:$0xff]
      %v1351 = vld [vmem:[%s277 + $0x50] sm:$0xff]
      %v1352 = vld [vmem:[%s277 + $0x58] sm:$0xff]
      %v1353 = vld [vmem:[%s277 + $0x60] sm:$0xff]
      %v1354 = vld [vmem:[%s277 + $0x68] sm:$0xff]
      %v1355 = vld [vmem:[%s277 + $0x70] sm:$0xff]
      %v1356 = vld [vmem:[%s277 + $0x78] sm:$0xff]
      %v1357 = vld [vmem:[%s277 + $0x80] sm:$0xff]
      %v1358 = vld [vmem:[%s277 + $0x88] sm:$0xff]
      %v1359 = vld [vmem:[%s277 + $0x90] sm:$0xff]
      %v1360 = vld [vmem:[%s277 + $0x98] sm:$0xff]
      %v1361 = vld [vmem:[%s277 + $0xa0] sm:$0xff]
      %v1362 = vld [vmem:[%s277 + $0xa8] sm:$0xff]
      %v1363 = vld [vmem:[%s277 + $0xb0] sm:$0xff]
      %v1364 = vld [vmem:[%s277 + $0xb8] sm:$0xff]
      %v1365 = vld [vmem:[%s277 + $0xc0] sm:$0xff]
      %v1366 = vld [vmem:[%s277 + $0xc8] sm:$0xff]
      %v1367 = vld [vmem:[%s277 + $0xd0] sm:$0xff]
      %v1368 = vld [vmem:[%s277 + $0xd8] sm:$0xff]
      %v1369 = vld [vmem:[%s277 + $0xe0] sm:$0xff]
      %v1370 = vld [vmem:[%s277 + $0xe8] sm:$0xff]
      %v1371 = vld [vmem:[%s277 + $0xf0] sm:$0xff]
      %v1372 = vld [vmem:[%s277 + $0xf8] sm:$0xff]
      %v1373 = vld [vmem:[%s277 + $0x100] sm:$0xff]
      %v1374 = vld [vmem:[%s277 + $0x108] sm:$0xff]
      %v1375 = vpack.c.bf16 %v1344, %v1343
      %v1376 = vpack.c.bf16 %v1346, %v1345
      %v1377 = vpack.c.bf16 %v1348, %v1347
      %v1378 = vpack.c.bf16 %v1350, %v1349
      %v1379 = vpack.c.bf16 %v1352, %v1351
      %v1380 = vpack.c.bf16 %v1354, %v1353
      %v1381 = vpack.c.bf16 %v1356, %v1355
      %v1382 = vpack.c.bf16 %v1358, %v1357
      %v1383 = vpack.c.bf16 %v1360, %v1359
      %v1384 = vpack.c.bf16 %v1362, %v1361
      %v1385 = vpack.c.bf16 %v1364, %v1363
      %v1386 = vpack.c.bf16 %v1366, %v1365
      %v1387 = vpack.c.bf16 %v1368, %v1367
      %v1388 = vpack.c.bf16 %v1370, %v1369
      %v1389 = vpack.c.bf16 %v1372, %v1371
      %v1390 = vpack.c.bf16 %v1374, %v1373
      %s1391 = scalar_lea.vmem %s1, 16
      %v1392 = vld [vmem:[%s1391] sm:$0xf]
      %v1394 = vsel %vm328, %v1375, 0
      %v1397 = vsel %vm328, %v1376, 0
      %v1400 = vsel %vm328, %v1377, 0
      %v1403 = vsel %vm328, %v1378, 0
      %v1406 = vsel %vm328, %v1379, 0
      %v1409 = vsel %vm328, %v1380, 0
      %v1412 = vsel %vm328, %v1381, 0
      %v1415 = vsel %vm328, %v1382, 0
      %v1418 = vsel %vm328, %v1383, 0
      %v1421 = vsel %vm328, %v1384, 0
      %v1424 = vsel %vm328, %v1385, 0
      %v1427 = vsel %vm328, %v1386, 0
      %v1430 = vsel %vm328, %v1387, 0
      %v1433 = vsel %vm328, %v1388, 0
      %v1436 = vsel %vm328, %v1389, 0
      %v1439 = vsel %vm328, %v1390, 0
      %v1442 = vsel %vm377, %v1392, 0
      %1444 = vmatprep.subr.bf16.mxu0 0
      %1445 = vmatpush1.bf16.msra.mxu0 %v1442
      %1446 = vmatprep.subr.bf16.mxu0 0
      %1447 = vmatpush1.bf16.msra.mxu0 0
      %1448 = vmatprep.subr.bf16.mxu0 0
      %1449 = vmatpush1.bf16.msra.mxu0 0
      %1450 = vmatprep.subr.bf16.mxu0 0
      %1451 = vmatpush1.bf16.msra.mxu0 0
      %1452 = vmatprep.subr.bf16.mxu0 0
      %1453 = vmatpush1.bf16.msra.mxu0 0
      %1454 = vmatprep.subr.bf16.mxu0 0
      %1455 = vmatpush1.bf16.msra.mxu0 0
      %1456 = vmatprep.subr.bf16.mxu0 0
      %1457 = vmatpush1.bf16.msra.mxu0 0
      %1458 = vmatprep.subr.bf16.mxu0 0
      %1459 = vmatpush1.bf16.msra.mxu0 0
      %1460 = vmatprep.subr.bf16.mxu0 0
      %1461 = vmatpush1.bf16.msra.mxu0 0
      %1462 = vmatprep.subr.bf16.mxu0 0
      %1463 = vmatpush1.bf16.msra.mxu0 0
      %1464 = vmatprep.subr.bf16.mxu0 0
      %1465 = vmatpush1.bf16.msra.mxu0 0
      %1466 = vmatprep.subr.bf16.mxu0 0
      %1467 = vmatpush1.bf16.msra.mxu0 0
      %1468 = vmatprep.subr.bf16.mxu0 0
      %1469 = vmatpush1.bf16.msra.mxu0 0
      %1470 = vmatprep.subr.bf16.mxu0 0
      %1471 = vmatpush1.bf16.msra.mxu0 0
      %1472 = vmatprep.subr.bf16.mxu0 0
      %1473 = vmatpush1.bf16.msra.mxu0 0
      %1474 = vmatprep.subr.bf16.mxu0 0
      %1475 = vmatpush1.bf16.msra.mxu0 0
      %1476 = vmatprep.mubr.bf16.mxu0 0
      %1477 = vmatmul.mubr.bf16.gmra.mrb[0].mxu0 %v1394
      %v1478 = vpop.f32.mrb[0].mxu0
      %v1479 = vadd.f32 0.0, %v1478
      %v1480 = vpop.f32.mrb[0].mxu0
      %v1481 = vpop.f32.mrb[0].mxu0
      %v1482 = vadd.f32 0.0, %v1481
      %v1483 = vpop.f32.mrb[0].mxu0
      %1484 = vmatprep.mubr.bf16.mxu0 0
      %1485 = vmatmul.mubr.bf16.gmra.mrb[0].mxu0 %v1397
      %v1486 = vpop.f32.mrb[0].mxu0
      %v1487 = vadd.f32 0.0, %v1486
      %v1488 = vpop.f32.mrb[0].mxu0
      %v1489 = vpop.f32.mrb[0].mxu0
      %v1490 = vadd.f32 0.0, %v1489
      %v1491 = vpop.f32.mrb[0].mxu0
      %1492 = vmatprep.mubr.bf16.mxu0 0
      %1493 = vmatmul.mubr.bf16.gmra.mrb[0].mxu0 %v1400
      %v1494 = vpop.f32.mrb[0].mxu0
      %v1495 = vadd.f32 0.0, %v1494
      %v1496 = vpop.f32.mrb[0].mxu0
      %v1497 = vpop.f32.mrb[0].mxu0
      %v1498 = vadd.f32 0.0, %v1497
      %v1499 = vpop.f32.mrb[0].mxu0
      %1500 = vmatprep.mubr.bf16.mxu0 0
      %1501 = vmatmul.mubr.bf16.gmra.mrb[0].mxu0 %v1403
      %v1502 = vpop.f32.mrb[0].mxu0
      %v1503 = vadd.f32 0.0, %v1502
      %v1504 = vpop.f32.mrb[0].mxu0
      %v1505 = vpop.f32.mrb[0].mxu0
      %v1506 = vadd.f32 0.0, %v1505
      %v1507 = vpop.f32.mrb[0].mxu0
      %1508 = vmatprep.mubr.bf16.mxu0 0
      %1509 = vmatmul.mubr.bf16.gmra.mrb[0].mxu0 %v1406
      %v1510 = vpop.f32.mrb[0].mxu0
      %v1511 = vadd.f32 0.0, %v1510
      %v1512 = vpop.f32.mrb[0].mxu0
      %v1513 = vpop.f32.mrb[0].mxu0
      %v1514 = vadd.f32 0.0, %v1513
      %v1515 = vpop.f32.mrb[0].mxu0
      %1516 = vmatprep.mubr.bf16.mxu0 0
      %1517 = vmatmul.mubr.bf16.gmra.mrb[0].mxu0 %v1409
      %v1518 = vpop.f32.mrb[0].mxu0
      %v1519 = vadd.f32 0.0, %v1518
      %v1520 = vpop.f32.mrb[0].mxu0
      %v1521 = vpop.f32.mrb[0].mxu0
      %v1522 = vadd.f32 0.0, %v1521
      %v1523 = vpop.f32.mrb[0].mxu0
      %1524 = vmatprep.mubr.bf16.mxu0 0
      %1525 = vmatmul.mubr.bf16.gmra.mrb[0].mxu0 %v1412
      %v1526 = vpop.f32.mrb[0].mxu0
      %v1527 = vadd.f32 0.0, %v1526
      %v1528 = vpop.f32.mrb[0].mxu0
      %v1529 = vpop.f32.mrb[0].mxu0
      %v1530 = vadd.f32 0.0, %v1529
      %v1531 = vpop.f32.mrb[0].mxu0
      %1532 = vmatprep.mubr.bf16.mxu0 0
      %1533 = vmatmul.mubr.bf16.gmra.mrb[0].mxu0 %v1415
      %v1534 = vpop.f32.mrb[0].mxu0
      %v1535 = vadd.f32 0.0, %v1534
      %v1536 = vpop.f32.mrb[0].mxu0
      %v1537 = vpop.f32.mrb[0].mxu0
      %v1538 = vadd.f32 0.0, %v1537
      %v1539 = vpop.f32.mrb[0].mxu0
      %1540 = vmatprep.mubr.bf16.mxu0 0
      %1541 = vmatmul.mubr.bf16.gmra.mrb[0].mxu0 %v1418
      %v1542 = vpop.f32.mrb[0].mxu0
      %v1543 = vadd.f32 0.0, %v1542
      %v1544 = vpop.f32.mrb[0].mxu0
      %v1545 = vpop.f32.mrb[0].mxu0
      %v1546 = vadd.f32 0.0, %v1545
      %v1547 = vpop.f32.mrb[0].mxu0
      %1548 = vmatprep.mubr.bf16.mxu0 0
      %1549 = vmatmul.mubr.bf16.gmra.mrb[0].mxu0 %v1421
      %v1550 = vpop.f32.mrb[0].mxu0
      %v1551 = vadd.f32 0.0, %v1550
      %v1552 = vpop.f32.mrb[0].mxu0
      %v1553 = vpop.f32.mrb[0].mxu0
      %v1554 = vadd.f32 0.0, %v1553
      %v1555 = vpop.f32.mrb[0].mxu0
      %1556 = vmatprep.mubr.bf16.mxu0 0
      %1557 = vmatmul.mubr.bf16.gmra.mrb[0].mxu0 %v1424
      %v1558 = vpop.f32.mrb[0].mxu0
      %v1559 = vadd.f32 0.0, %v1558
      %v1560 = vpop.f32.mrb[0].mxu0
      %v1561 = vpop.f32.mrb[0].mxu0
      %v1562 = vadd.f32 0.0, %v1561
      %v1563 = vpop.f32.mrb[0].mxu0
      %1564 = vmatprep.mubr.bf16.mxu0 0
      %1565 = vmatmul.mubr.bf16.gmra.mrb[0].mxu0 %v1427
      %v1566 = vpop.f32.mrb[0].mxu0
      %v1567 = vadd.f32 0.0, %v1566
      %v1568 = vpop.f32.mrb[0].mxu0
      %v1569 = vpop.f32.mrb[0].mxu0
      %v1570 = vadd.f32 0.0, %v1569
      %v1571 = vpop.f32.mrb[0].mxu0
      %1572 = vmatprep.mubr.bf16.mxu0 0
      %1573 = vmatmul.mubr.bf16.gmra.mrb[0].mxu0 %v1430
      %v1574 = vpop.f32.mrb[0].mxu0
      %v1575 = vadd.f32 0.0, %v1574
      %v1576 = vpop.f32.mrb[0].mxu0
      %v1577 = vpop.f32.mrb[0].mxu0
      %v1578 = vadd.f32 0.0, %v1577
      %v1579 = vpop.f32.mrb[0].mxu0
      %1580 = vmatprep.mubr.bf16.mxu0 0
      %1581 = vmatmul.mubr.bf16.gmra.mrb[0].mxu0 %v1433
      %v1582 = vpop.f32.mrb[0].mxu0
      %v1583 = vadd.f32 0.0, %v1582
      %v1584 = vpop.f32.mrb[0].mxu0
      %v1585 = vpop.f32.mrb[0].mxu0
      %v1586 = vadd.f32 0.0, %v1585
      %v1587 = vpop.f32.mrb[0].mxu0
      %1588 = vmatprep.mubr.bf16.mxu0 0
      %1589 = vmatmul.mubr.bf16.gmra.mrb[0].mxu0 %v1436
      %v1590 = vpop.f32.mrb[0].mxu0
      %v1591 = vadd.f32 0.0, %v1590
      %v1592 = vpop.f32.mrb[0].mxu0
      %v1593 = vpop.f32.mrb[0].mxu0
      %v1594 = vadd.f32 0.0, %v1593
      %v1595 = vpop.f32.mrb[0].mxu0
      %1596 = vmatprep.mubr.bf16.mxu0 0
      %1597 = vmatmul.mubr.bf16.gmra.mrb[0].mxu0 %v1439
      %v1598 = vpop.f32.mrb[0].mxu0
      %v1599 = vadd.f32 0.0, %v1598
      %v1600 = vpop.f32.mrb[0].mxu0
      %v1601 = vpop.f32.mrb[0].mxu0
      %v1602 = vadd.f32 0.0, %v1601
      %v1603 = vpop.f32.mrb[0].mxu0
      %1604 = vdwg.mxu0
      %v1605 = vadd.f32 %v1311, %v1479
      %v1606 = vadd.f32 %v1312, %v1482
      %v1607 = vadd.f32 %v1313, %v1487
      %v1608 = vadd.f32 %v1314, %v1490
      %v1609 = vadd.f32 %v1315, %v1495
      %v1610 = vadd.f32 %v1316, %v1498
      %v1611 = vadd.f32 %v1317, %v1503
      %v1612 = vadd.f32 %v1318, %v1506
      %v1613 = vadd.f32 %v1319, %v1511
      %v1614 = vadd.f32 %v1320, %v1514
      %v1615 = vadd.f32 %v1321, %v1519
      %v1616 = vadd.f32 %v1322, %v1522
      %v1617 = vadd.f32 %v1323, %v1527
      %v1618 = vadd.f32 %v1324, %v1530
      %v1619 = vadd.f32 %v1325, %v1535
      %v1620 = vadd.f32 %v1326, %v1538
      %v1621 = vadd.f32 %v1327, %v1543
      %v1622 = vadd.f32 %v1328, %v1546
      %v1623 = vadd.f32 %v1329, %v1551
      %v1624 = vadd.f32 %v1330, %v1554
      %v1625 = vadd.f32 %v1331, %v1559
      %v1626 = vadd.f32 %v1332, %v1562
      %v1627 = vadd.f32 %v1333, %v1567
      %v1628 = vadd.f32 %v1334, %v1570
      %v1629 = vadd.f32 %v1335, %v1575
      %v1630 = vadd.f32 %v1336, %v1578
      %v1631 = vadd.f32 %v1337, %v1583
      %v1632 = vadd.f32 %v1338, %v1586
      %v1633 = vadd.f32 %v1339, %v1591
      %v1634 = vadd.f32 %v1340, %v1594
      %v1635 = vadd.f32 %v1341, %v1599
      %v1636 = vadd.f32 %v1342, %v1602
      %v1637 = vld [vmem:[%s754 + $0x10] sm:$0xff]
      %v1638 = vld [vmem:[%s754 + $0x18] sm:$0xff]
      %v1639 = vld [vmem:[%s754 + $0x20] sm:$0xff]
      %v1640 = vld [vmem:[%s754 + $0x28] sm:$0xff]
      %v1641 = vld [vmem:[%s754 + $0x30] sm:$0xff]
      %v1642 = vld [vmem:[%s754 + $0x38] sm:$0xff]
      %v1643 = vld [vmem:[%s754 + $0x40] sm:$0xff]
      %v1644 = vld [vmem:[%s754 + $0x48] sm:$0xff]
      %v1645 = vld [vmem:[%s754 + $0x50] sm:$0xff]
      %v1646 = vld [vmem:[%s754 + $0x58] sm:$0xff]
      %v1647 = vld [vmem:[%s754 + $0x60] sm:$0xff]
      %v1648 = vld [vmem:[%s754 + $0x68] sm:$0xff]
      %v1649 = vld [vmem:[%s754 + $0x70] sm:$0xff]
      %v1650 = vld [vmem:[%s754 + $0x78] sm:$0xff]
      %v1651 = vld [vmem:[%s754 + $0x80] sm:$0xff]
      %v1652 = vld [vmem:[%s754 + $0x88] sm:$0xff]
      %v1653 = vld [vmem:[%s754 + $0x90] sm:$0xff]
      %v1654 = vld [vmem:[%s754 + $0x98] sm:$0xff]
      %v1655 = vld [vmem:[%s754 + $0xa0] sm:$0xff]
      %v1656 = vld [vmem:[%s754 + $0xa8] sm:$0xff]
      %v1657 = vld [vmem:[%s754 + $0xb0] sm:$0xff]
      %v1658 = vld [vmem:[%s754 + $0xb8] sm:$0xff]
      %v1659 = vld [vmem:[%s754 + $0xc0] sm:$0xff]
      %v1660 = vld [vmem:[%s754 + $0xc8] sm:$0xff]
      %v1661 = vld [vmem:[%s754 + $0xd0] sm:$0xff]
      %v1662 = vld [vmem:[%s754 + $0xd8] sm:$0xff]
      %v1663 = vld [vmem:[%s754 + $0xe0] sm:$0xff]
      %v1664 = vld [vmem:[%s754 + $0xe8] sm:$0xff]
      %v1665 = vld [vmem:[%s754 + $0xf0] sm:$0xff]
      %v1666 = vld [vmem:[%s754 + $0xf8] sm:$0xff]
      %v1667 = vld [vmem:[%s754 + $0x100] sm:$0xff]
      %v1668 = vld [vmem:[%s754 + $0x108] sm:$0xff]
      %v1669 = vpack.c.bf16 %v1638, %v1637
      %v1670 = vpack.c.bf16 %v1640, %v1639
      %v1671 = vpack.c.bf16 %v1642, %v1641
      %v1672 = vpack.c.bf16 %v1644, %v1643
      %v1673 = vpack.c.bf16 %v1646, %v1645
      %v1674 = vpack.c.bf16 %v1648, %v1647
      %v1675 = vpack.c.bf16 %v1650, %v1649
      %v1676 = vpack.c.bf16 %v1652, %v1651
      %v1677 = vpack.c.bf16 %v1654, %v1653
      %v1678 = vpack.c.bf16 %v1656, %v1655
      %v1679 = vpack.c.bf16 %v1658, %v1657
      %v1680 = vpack.c.bf16 %v1660, %v1659
      %v1681 = vpack.c.bf16 %v1662, %v1661
      %v1682 = vpack.c.bf16 %v1664, %v1663
      %v1683 = vpack.c.bf16 %v1666, %v1665
      %v1684 = vpack.c.bf16 %v1668, %v1667
      %s1685 = scalar_lea.vmem %s1, 20
      %v1686 = vld [vmem:[%s1685] sm:$0xf]
      %v1688 = vsel %vm328, %v1669, 0
      %v1691 = vsel %vm328, %v1670, 0
      %v1694 = vsel %vm328, %v1671, 0
      %v1697 = vsel %vm328, %v1672, 0
      %v1700 = vsel %vm328, %v1673, 0
      %v1703 = vsel %vm328, %v1674, 0
      %v1706 = vsel %vm328, %v1675, 0
      %v1709 = vsel %vm328, %v1676, 0
      %v1712 = vsel %vm328, %v1677, 0
      %v1715 = vsel %vm328, %v1678, 0
      %v1718 = vsel %vm328, %v1679, 0
      %v1721 = vsel %vm328, %v1680, 0
      %v1724 = vsel %vm328, %v1681, 0
      %v1727 = vsel %vm328, %v1682, 0
      %v1730 = vsel %vm328, %v1683, 0
      %v1733 = vsel %vm328, %v1684, 0
      %v1736 = vsel %vm377, %v1686, 0
      %1738 = vmatprep.subr.bf16.mxu0 0
      %1739 = vmatpush1.bf16.msra.mxu0 %v1736
      %1740 = vmatprep.subr.bf16.mxu0 0
      %1741 = vmatpush1.bf16.msra.mxu0 0
      %1742 = vmatprep.subr.bf16.mxu0 0
      %1743 = vmatpush1.bf16.msra.mxu0 0
      %1744 = vmatprep.subr.bf16.mxu0 0
      %1745 = vmatpush1.bf16.msra.mxu0 0
      %1746 = vmatprep.subr.bf16.mxu0 0
      %1747 = vmatpush1.bf16.msra.mxu0 0
      %1748 = vmatprep.subr.bf16.mxu0 0
      %1749 = vmatpush1.bf16.msra.mxu0 0
      %1750 = vmatprep.subr.bf16.mxu0 0
      %1751 = vmatpush1.bf16.msra.mxu0 0
      %1752 = vmatprep.subr.bf16.mxu0 0
      %1753 = vmatpush1.bf16.msra.mxu0 0
      %1754 = vmatprep.subr.bf16.mxu0 0
      %1755 = vmatpush1.bf16.msra.mxu0 0
      %1756 = vmatprep.subr.bf16.mxu0 0
      %1757 = vmatpush1.bf16.msra.mxu0 0
      %1758 = vmatprep.subr.bf16.mxu0 0
      %1759 = vmatpush1.bf16.msra.mxu0 0
      %1760 = vmatprep.subr.bf16.mxu0 0
      %1761 = vmatpush1.bf16.msra.mxu0 0
      %1762 = vmatprep.subr.bf16.mxu0 0
      %1763 = vmatpush1.bf16.msra.mxu0 0
      %1764 = vmatprep.subr.bf16.mxu0 0
      %1765 = vmatpush1.bf16.msra.mxu0 0
      %1766 = vmatprep.subr.bf16.mxu0 0
      %1767 = vmatpush1.bf16.msra.mxu0 0
      %1768 = vmatprep.subr.bf16.mxu0 0
      %1769 = vmatpush1.bf16.msra.mxu0 0
      %1770 = vmatprep.mubr.bf16.mxu0 0
      %1771 = vmatmul.mubr.bf16.gmra.mrb[0].mxu0 %v1688
      %v1772 = vpop.f32.mrb[0].mxu0
      %v1773 = vadd.f32 0.0, %v1772
      %v1774 = vpop.f32.mrb[0].mxu0
      %v1775 = vpop.f32.mrb[0].mxu0
      %v1776 = vadd.f32 0.0, %v1775
      %v1777 = vpop.f32.mrb[0].mxu0
      %1778 = vmatprep.mubr.bf16.mxu0 0
      %1779 = vmatmul.mubr.bf16.gmra.mrb[0].mxu0 %v1691
      %v1780 = vpop.f32.mrb[0].mxu0
      %v1781 = vadd.f32 0.0, %v1780
      %v1782 = vpop.f32.mrb[0].mxu0
      %v1783 = vpop.f32.mrb[0].mxu0
      %v1784 = vadd.f32 0.0, %v1783
      %v1785 = vpop.f32.mrb[0].mxu0
      %1786 = vmatprep.mubr.bf16.mxu0 0
      %1787 = vmatmul.mubr.bf16.gmra.mrb[0].mxu0 %v1694
      %v1788 = vpop.f32.mrb[0].mxu0
      %v1789 = vadd.f32 0.0, %v1788
      %v1790 = vpop.f32.mrb[0].mxu0
      %v1791 = vpop.f32.mrb[0].mxu0
      %v1792 = vadd.f32 0.0, %v1791
      %v1793 = vpop.f32.mrb[0].mxu0
      %1794 = vmatprep.mubr.bf16.mxu0 0
      %1795 = vmatmul.mubr.bf16.gmra.mrb[0].mxu0 %v1697
      %v1796 = vpop.f32.mrb[0].mxu0
      %v1797 = vadd.f32 0.0, %v1796
      %v1798 = vpop.f32.mrb[0].mxu0
      %v1799 = vpop.f32.mrb[0].mxu0
      %v1800 = vadd.f32 0.0, %v1799
      %v1801 = vpop.f32.mrb[0].mxu0
      %1802 = vmatprep.mubr.bf16.mxu0 0
      %1803 = vmatmul.mubr.bf16.gmra.mrb[0].mxu0 %v1700
      %v1804 = vpop.f32.mrb[0].mxu0
      %v1805 = vadd.f32 0.0, %v1804
      %v1806 = vpop.f32.mrb[0].mxu0
      %v1807 = vpop.f32.mrb[0].mxu0
      %v1808 = vadd.f32 0.0, %v1807
      %v1809 = vpop.f32.mrb[0].mxu0
      %1810 = vmatprep.mubr.bf16.mxu0 0
      %1811 = vmatmul.mubr.bf16.gmra.mrb[0].mxu0 %v1703
      %v1812 = vpop.f32.mrb[0].mxu0
      %v1813 = vadd.f32 0.0, %v1812
      %v1814 = vpop.f32.mrb[0].mxu0
      %v1815 = vpop.f32.mrb[0].mxu0
      %v1816 = vadd.f32 0.0, %v1815
      %v1817 = vpop.f32.mrb[0].mxu0
      %1818 = vmatprep.mubr.bf16.mxu0 0
      %1819 = vmatmul.mubr.bf16.gmra.mrb[0].mxu0 %v1706
      %v1820 = vpop.f32.mrb[0].mxu0
      %v1821 = vadd.f32 0.0, %v1820
      %v1822 = vpop.f32.mrb[0].mxu0
      %v1823 = vpop.f32.mrb[0].mxu0
      %v1824 = vadd.f32 0.0, %v1823
      %v1825 = vpop.f32.mrb[0].mxu0
      %1826 = vmatprep.mubr.bf16.mxu0 0
      %1827 = vmatmul.mubr.bf16.gmra.mrb[0].mxu0 %v1709
      %v1828 = vpop.f32.mrb[0].mxu0
      %v1829 = vadd.f32 0.0, %v1828
      %v1830 = vpop.f32.mrb[0].mxu0
      %v1831 = vpop.f32.mrb[0].mxu0
      %v1832 = vadd.f32 0.0, %v1831
      %v1833 = vpop.f32.mrb[0].mxu0
      %1834 = vmatprep.mubr.bf16.mxu0 0
      %1835 = vmatmul.mubr.bf16.gmra.mrb[0].mxu0 %v1712
      %v1836 = vpop.f32.mrb[0].mxu0
      %v1837 = vadd.f32 0.0, %v1836
      %v1838 = vpop.f32.mrb[0].mxu0
      %v1839 = vpop.f32.mrb[0].mxu0
      %v1840 = vadd.f32 0.0, %v1839
      %v1841 = vpop.f32.mrb[0].mxu0
      %1842 = vmatprep.mubr.bf16.mxu0 0
      %1843 = vmatmul.mubr.bf16.gmra.mrb[0].mxu0 %v1715
      %v1844 = vpop.f32.mrb[0].mxu0
      %v1845 = vadd.f32 0.0, %v1844
      %v1846 = vpop.f32.mrb[0].mxu0
      %v1847 = vpop.f32.mrb[0].mxu0
      %v1848 = vadd.f32 0.0, %v1847
      %v1849 = vpop.f32.mrb[0].mxu0
      %1850 = vmatprep.mubr.bf16.mxu0 0
      %1851 = vmatmul.mubr.bf16.gmra.mrb[0].mxu0 %v1718
      %v1852 = vpop.f32.mrb[0].mxu0
      %v1853 = vadd.f32 0.0, %v1852
      %v1854 = vpop.f32.mrb[0].mxu0
      %v1855 = vpop.f32.mrb[0].mxu0
      %v1856 = vadd.f32 0.0, %v1855
      %v1857 = vpop.f32.mrb[0].mxu0
      %1858 = vmatprep.mubr.bf16.mxu0 0
      %1859 = vmatmul.mubr.bf16.gmra.mrb[0].mxu0 %v1721
      %v1860 = vpop.f32.mrb[0].mxu0
      %v1861 = vadd.f32 0.0, %v1860
      %v1862 = vpop.f32.mrb[0].mxu0
      %v1863 = vpop.f32.mrb[0].mxu0
      %v1864 = vadd.f32 0.0, %v1863
      %v1865 = vpop.f32.mrb[0].mxu0
      %1866 = vmatprep.mubr.bf16.mxu0 0
      %1867 = vmatmul.mubr.bf16.gmra.mrb[0].mxu0 %v1724
      %v1868 = vpop.f32.mrb[0].mxu0
      %v1869 = vadd.f32 0.0, %v1868
      %v1870 = vpop.f32.mrb[0].mxu0
      %v1871 = vpop.f32.mrb[0].mxu0
      %v1872 = vadd.f32 0.0, %v1871
      %v1873 = vpop.f32.mrb[0].mxu0
      %1874 = vmatprep.mubr.bf16.mxu0 0
      %1875 = vmatmul.mubr.bf16.gmra.mrb[0].mxu0 %v1727
      %v1876 = vpop.f32.mrb[0].mxu0
      %v1877 = vadd.f32 0.0, %v1876
      %v1878 = vpop.f32.mrb[0].mxu0
      %v1879 = vpop.f32.mrb[0].mxu0
      %v1880 = vadd.f32 0.0, %v1879
      %v1881 = vpop.f32.mrb[0].mxu0
      %1882 = vmatprep.mubr.bf16.mxu0 0
      %1883 = vmatmul.mubr.bf16.gmra.mrb[0].mxu0 %v1730
      %v1884 = vpop.f32.mrb[0].mxu0
      %v1885 = vadd.f32 0.0, %v1884
      %v1886 = vpop.f32.mrb[0].mxu0
      %v1887 = vpop.f32.mrb[0].mxu0
      %v1888 = vadd.f32 0.0, %v1887
      %v1889 = vpop.f32.mrb[0].mxu0
      %1890 = vmatprep.mubr.bf16.mxu0 0
      %1891 = vmatmul.mubr.bf16.gmra.mrb[0].mxu0 %v1733
      %v1892 = vpop.f32.mrb[0].mxu0
      %v1893 = vadd.f32 0.0, %v1892
      %v1894 = vpop.f32.mrb[0].mxu0
      %v1895 = vpop.f32.mrb[0].mxu0
      %v1896 = vadd.f32 0.0, %v1895
      %v1897 = vpop.f32.mrb[0].mxu0
      %1898 = vdwg.mxu0
      %v1899 = vadd.f32 %v1605, %v1773
      %v1900 = vadd.f32 %v1606, %v1776
      %v1901 = vadd.f32 %v1607, %v1781
      %v1902 = vadd.f32 %v1608, %v1784
      %v1903 = vadd.f32 %v1609, %v1789
      %v1904 = vadd.f32 %v1610, %v1792
      %v1905 = vadd.f32 %v1611, %v1797
      %v1906 = vadd.f32 %v1612, %v1800
      %v1907 = vadd.f32 %v1613, %v1805
      %v1908 = vadd.f32 %v1614, %v1808
      %v1909 = vadd.f32 %v1615, %v1813
      %v1910 = vadd.f32 %v1616, %v1816
      %v1911 = vadd.f32 %v1617, %v1821
      %v1912 = vadd.f32 %v1618, %v1824
      %v1913 = vadd.f32 %v1619, %v1829
      %v1914 = vadd.f32 %v1620, %v1832
      %v1915 = vadd.f32 %v1621, %v1837
      %v1916 = vadd.f32 %v1622, %v1840
      %v1917 = vadd.f32 %v1623, %v1845
      %v1918 = vadd.f32 %v1624, %v1848
      %v1919 = vadd.f32 %v1625, %v1853
      %v1920 = vadd.f32 %v1626, %v1856
      %v1921 = vadd.f32 %v1627, %v1861
      %v1922 = vadd.f32 %v1628, %v1864
      %v1923 = vadd.f32 %v1629, %v1869
      %v1924 = vadd.f32 %v1630, %v1872
      %v1925 = vadd.f32 %v1631, %v1877
      %v1926 = vadd.f32 %v1632, %v1880
      %v1927 = vadd.f32 %v1633, %v1885
      %v1928 = vadd.f32 %v1634, %v1888
      %v1929 = vadd.f32 %v1635, %v1893
      %v1930 = vadd.f32 %v1636, %v1896
      %v1931 = vld [vmem:[%s214 + $0x20] sm:$0xff]
      %v1932 = vld [vmem:[%s214 + $0x28] sm:$0xff]
      %v1933 = vld [vmem:[%s214 + $0x30] sm:$0xff]
      %v1934 = vld [vmem:[%s214 + $0x38] sm:$0xff]
      %v1935 = vld [vmem:[%s214 + $0x40] sm:$0xff]
      %v1936 = vld [vmem:[%s214 + $0x48] sm:$0xff]
      %v1937 = vld [vmem:[%s214 + $0x50] sm:$0xff]
      %v1938 = vld [vmem:[%s214 + $0x58] sm:$0xff]
      %v1939 = vld [vmem:[%s214 + $0x60] sm:$0xff]
      %v1940 = vld [vmem:[%s214 + $0x68] sm:$0xff]
      %v1941 = vld [vmem:[%s214 + $0x70] sm:$0xff]
      %v1942 = vld [vmem:[%s214 + $0x78] sm:$0xff]
      %v1943 = vld [vmem:[%s214 + $0x80] sm:$0xff]
      %v1944 = vld [vmem:[%s214 + $0x88] sm:$0xff]
      %v1945 = vld [vmem:[%s214 + $0x90] sm:$0xff]
      %v1946 = vld [vmem:[%s214 + $0x98] sm:$0xff]
      %v1947 = vld [vmem:[%s214 + $0xa0] sm:$0xff]
      %v1948 = vld [vmem:[%s214 + $0xa8] sm:$0xff]
      %v1949 = vld [vmem:[%s214 + $0xb0] sm:$0xff]
      %v1950 = vld [vmem:[%s214 + $0xb8] sm:$0xff]
      %v1951 = vld [vmem:[%s214 + $0xc0] sm:$0xff]
      %v1952 = vld [vmem:[%s214 + $0xc8] sm:$0xff]
      %v1953 = vld [vmem:[%s214 + $0xd0] sm:$0xff]
      %v1954 = vld [vmem:[%s214 + $0xd8] sm:$0xff]
      %v1955 = vld [vmem:[%s214 + $0xe0] sm:$0xff]
      %v1956 = vld [vmem:[%s214 + $0xe8] sm:$0xff]
      %v1957 = vld [vmem:[%s214 + $0xf0] sm:$0xff]
      %v1958 = vld [vmem:[%s214 + $0xf8] sm:$0xff]
      %v1959 = vld [vmem:[%s214 + $0x100] sm:$0xff]
      %v1960 = vld [vmem:[%s214 + $0x108] sm:$0xff]
      %v1961 = vld [vmem:[%s214 + $0x110] sm:$0xff]
      %v1962 = vld [vmem:[%s214 + $0x118] sm:$0xff]
      %v1963 = vpack.c.bf16 %v1932, %v1931
      %v1964 = vpack.c.bf16 %v1934, %v1933
      %v1965 = vpack.c.bf16 %v1936, %v1935
      %v1966 = vpack.c.bf16 %v1938, %v1937
      %v1967 = vpack.c.bf16 %v1940, %v1939
      %v1968 = vpack.c.bf16 %v1942, %v1941
      %v1969 = vpack.c.bf16 %v1944, %v1943
      %v1970 = vpack.c.bf16 %v1946, %v1945
      %v1971 = vpack.c.bf16 %v1948, %v1947
      %v1972 = vpack.c.bf16 %v1950, %v1949
      %v1973 = vpack.c.bf16 %v1952, %v1951
      %v1974 = vpack.c.bf16 %v1954, %v1953
      %v1975 = vpack.c.bf16 %v1956, %v1955
      %v1976 = vpack.c.bf16 %v1958, %v1957
      %v1977 = vpack.c.bf16 %v1960, %v1959
      %v1978 = vpack.c.bf16 %v1962, %v1961
      %s1979 = scalar_lea.vmem %s1, 24
      %v1980 = vld [vmem:[%s1979] sm:$0xf]
      %v1982 = vsel %vm328, %v1963, 0
      %v1985 = vsel %vm328, %v1964, 0
      %v1988 = vsel %vm328, %v1965, 0
      %v1991 = vsel %vm328, %v1966, 0
      %v1994 = vsel %vm328, %v1967, 0
      %v1997 = vsel %vm328, %v1968, 0
      %v2000 = vsel %vm328, %v1969, 0
      %v2003 = vsel %vm328, %v1970, 0
      %v2006 = vsel %vm328, %v1971, 0
      %v2009 = vsel %vm328, %v1972, 0
      %v2012 = vsel %vm328, %v1973, 0
      %v2015 = vsel %vm328, %v1974, 0
      %v2018 = vsel %vm328, %v1975, 0
      %v2021 = vsel %vm328, %v1976, 0
      %v2024 = vsel %vm328, %v1977, 0
      %v2027 = vsel %vm328, %v1978, 0
      %v2030 = vsel %vm377, %v1980, 0
      %2032 = vmatprep.subr.bf16.mxu0 0
      %2033 = vmatpush1.bf16.msra.mxu0 %v2030
      %2034 = vmatprep.subr.bf16.mxu0 0
      %2035 = vmatpush1.bf16.msra.mxu0 0
      %2036 = vmatprep.subr.bf16.mxu0 0
      %2037 = vmatpush1.bf16.msra.mxu0 0
      %2038 = vmatprep.subr.bf16.mxu0 0
      %2039 = vmatpush1.bf16.msra.mxu0 0
      %2040 = vmatprep.subr.bf16.mxu0 0
      %2041 = vmatpush1.bf16.msra.mxu0 0
      %2042 = vmatprep.subr.bf16.mxu0 0
      %2043 = vmatpush1.bf16.msra.mxu0 0
      %2044 = vmatprep.subr.bf16.mxu0 0
      %2045 = vmatpush1.bf16.msra.mxu0 0
      %2046 = vmatprep.subr.bf16.mxu0 0
      %2047 = vmatpush1.bf16.msra.mxu0 0
      %2048 = vmatprep.subr.bf16.mxu0 0
      %2049 = vmatpush1.bf16.msra.mxu0 0
      %2050 = vmatprep.subr.bf16.mxu0 0
      %2051 = vmatpush1.bf16.msra.mxu0 0
      %2052 = vmatprep.subr.bf16.mxu0 0
      %2053 = vmatpush1.bf16.msra.mxu0 0
      %2054 = vmatprep.subr.bf16.mxu0 0
      %2055 = vmatpush1.bf16.msra.mxu0 0
      %2056 = vmatprep.subr.bf16.mxu0 0
      %2057 = vmatpush1.bf16.msra.mxu0 0
      %2058 = vmatprep.subr.bf16.mxu0 0
      %2059 = vmatpush1.bf16.msra.mxu0 0
      %2060 = vmatprep.subr.bf16.mxu0 0
      %2061 = vmatpush1.bf16.msra.mxu0 0
      %2062 = vmatprep.subr.bf16.mxu0 0
      %2063 = vmatpush1.bf16.msra.mxu0 0
      %2064 = vmatprep.mubr.bf16.mxu0 0
      %2065 = vmatmul.mubr.bf16.gmra.mrb[0].mxu0 %v1982
      %v2066 = vpop.f32.mrb[0].mxu0
      %v2067 = vadd.f32 0.0, %v2066
      %v2068 = vpop.f32.mrb[0].mxu0
      %v2069 = vpop.f32.mrb[0].mxu0
      %v2070 = vadd.f32 0.0, %v2069
      %v2071 = vpop.f32.mrb[0].mxu0
      %2072 = vmatprep.mubr.bf16.mxu0 0
      %2073 = vmatmul.mubr.bf16.gmra.mrb[0].mxu0 %v1985
      %v2074 = vpop.f32.mrb[0].mxu0
      %v2075 = vadd.f32 0.0, %v2074
      %v2076 = vpop.f32.mrb[0].mxu0
      %v2077 = vpop.f32.mrb[0].mxu0
      %v2078 = vadd.f32 0.0, %v2077
      %v2079 = vpop.f32.mrb[0].mxu0
      %2080 = vmatprep.mubr.bf16.mxu0 0
      %2081 = vmatmul.mubr.bf16.gmra.mrb[0].mxu0 %v1988
      %v2082 = vpop.f32.mrb[0].mxu0
      %v2083 = vadd.f32 0.0, %v2082
      %v2084 = vpop.f32.mrb[0].mxu0
      %v2085 = vpop.f32.mrb[0].mxu0
      %v2086 = vadd.f32 0.0, %v2085
      %v2087 = vpop.f32.mrb[0].mxu0
      %2088 = vmatprep.mubr.bf16.mxu0 0
      %2089 = vmatmul.mubr.bf16.gmra.mrb[0].mxu0 %v1991
      %v2090 = vpop.f32.mrb[0].mxu0
      %v2091 = vadd.f32 0.0, %v2090
      %v2092 = vpop.f32.mrb[0].mxu0
      %v2093 = vpop.f32.mrb[0].mxu0
      %v2094 = vadd.f32 0.0, %v2093
      %v2095 = vpop.f32.mrb[0].mxu0
      %2096 = vmatprep.mubr.bf16.mxu0 0
      %2097 = vmatmul.mubr.bf16.gmra.mrb[0].mxu0 %v1994
      %v2098 = vpop.f32.mrb[0].mxu0
      %v2099 = vadd.f32 0.0, %v2098
      %v2100 = vpop.f32.mrb[0].mxu0
      %v2101 = vpop.f32.mrb[0].mxu0
      %v2102 = vadd.f32 0.0, %v2101
      %v2103 = vpop.f32.mrb[0].mxu0
      %2104 = vmatprep.mubr.bf16.mxu0 0
      %2105 = vmatmul.mubr.bf16.gmra.mrb[0].mxu0 %v1997
      %v2106 = vpop.f32.mrb[0].mxu0
      %v2107 = vadd.f32 0.0, %v2106
      %v2108 = vpop.f32.mrb[0].mxu0
      %v2109 = vpop.f32.mrb[0].mxu0
      %v2110 = vadd.f32 0.0, %v2109
      %v2111 = vpop.f32.mrb[0].mxu0
      %2112 = vmatprep.mubr.bf16.mxu0 0
      %2113 = vmatmul.mubr.bf16.gmra.mrb[0].mxu0 %v2000
      %v2114 = vpop.f32.mrb[0].mxu0
      %v2115 = vadd.f32 0.0, %v2114
      %v2116 = vpop.f32.mrb[0].mxu0
      %v2117 = vpop.f32.mrb[0].mxu0
      %v2118 = vadd.f32 0.0, %v2117
      %v2119 = vpop.f32.mrb[0].mxu0
      %2120 = vmatprep.mubr.bf16.mxu0 0
      %2121 = vmatmul.mubr.bf16.gmra.mrb[0].mxu0 %v2003
      %v2122 = vpop.f32.mrb[0].mxu0
      %v2123 = vadd.f32 0.0, %v2122
      %v2124 = vpop.f32.mrb[0].mxu0
      %v2125 = vpop.f32.mrb[0].mxu0
      %v2126 = vadd.f32 0.0, %v2125
      %v2127 = vpop.f32.mrb[0].mxu0
      %2128 = vmatprep.mubr.bf16.mxu0 0
      %2129 = vmatmul.mubr.bf16.gmra.mrb[0].mxu0 %v2006
      %v2130 = vpop.f32.mrb[0].mxu0
      %v2131 = vadd.f32 0.0, %v2130
      %v2132 = vpop.f32.mrb[0].mxu0
      %v2133 = vpop.f32.mrb[0].mxu0
      %v2134 = vadd.f32 0.0, %v2133
      %v2135 = vpop.f32.mrb[0].mxu0
      %2136 = vmatprep.mubr.bf16.mxu0 0
      %2137 = vmatmul.mubr.bf16.gmra.mrb[0].mxu0 %v2009
      %v2138 = vpop.f32.mrb[0].mxu0
      %v2139 = vadd.f32 0.0, %v2138
      %v2140 = vpop.f32.mrb[0].mxu0
      %v2141 = vpop.f32.mrb[0].mxu0
      %v2142 = vadd.f32 0.0, %v2141
      %v2143 = vpop.f32.mrb[0].mxu0
      %2144 = vmatprep.mubr.bf16.mxu0 0
      %2145 = vmatmul.mubr.bf16.gmra.mrb[0].mxu0 %v2012
      %v2146 = vpop.f32.mrb[0].mxu0
      %v2147 = vadd.f32 0.0, %v2146
      %v2148 = vpop.f32.mrb[0].mxu0
      %v2149 = vpop.f32.mrb[0].mxu0
      %v2150 = vadd.f32 0.0, %v2149
      %v2151 = vpop.f32.mrb[0].mxu0
      %2152 = vmatprep.mubr.bf16.mxu0 0
      %2153 = vmatmul.mubr.bf16.gmra.mrb[0].mxu0 %v2015
      %v2154 = vpop.f32.mrb[0].mxu0
      %v2155 = vadd.f32 0.0, %v2154
      %v2156 = vpop.f32.mrb[0].mxu0
      %v2157 = vpop.f32.mrb[0].mxu0
      %v2158 = vadd.f32 0.0, %v2157
      %v2159 = vpop.f32.mrb[0].mxu0
      %2160 = vmatprep.mubr.bf16.mxu0 0
      %2161 = vmatmul.mubr.bf16.gmra.mrb[0].mxu0 %v2018
      %v2162 = vpop.f32.mrb[0].mxu0
      %v2163 = vadd.f32 0.0, %v2162
      %v2164 = vpop.f32.mrb[0].mxu0
      %v2165 = vpop.f32.mrb[0].mxu0
      %v2166 = vadd.f32 0.0, %v2165
      %v2167 = vpop.f32.mrb[0].mxu0
      %2168 = vmatprep.mubr.bf16.mxu0 0
      %2169 = vmatmul.mubr.bf16.gmra.mrb[0].mxu0 %v2021
      %v2170 = vpop.f32.mrb[0].mxu0
      %v2171 = vadd.f32 0.0, %v2170
      %v2172 = vpop.f32.mrb[0].mxu0
      %v2173 = vpop.f32.mrb[0].mxu0
      %v2174 = vadd.f32 0.0, %v2173
      %v2175 = vpop.f32.mrb[0].mxu0
      %2176 = vmatprep.mubr.bf16.mxu0 0
      %2177 = vmatmul.mubr.bf16.gmra.mrb[0].mxu0 %v2024
      %v2178 = vpop.f32.mrb[0].mxu0
      %v2179 = vadd.f32 0.0, %v2178
      %v2180 = vpop.f32.mrb[0].mxu0
      %v2181 = vpop.f32.mrb[0].mxu0
      %v2182 = vadd.f32 0.0, %v2181
      %v2183 = vpop.f32.mrb[0].mxu0
      %2184 = vmatprep.mubr.bf16.mxu0 0
      %2185 = vmatmul.mubr.bf16.gmra.mrb[0].mxu0 %v2027
      %v2186 = vpop.f32.mrb[0].mxu0
      %v2187 = vadd.f32 0.0, %v2186
      %v2188 = vpop.f32.mrb[0].mxu0
      %v2189 = vpop.f32.mrb[0].mxu0
      %v2190 = vadd.f32 0.0, %v2189
      %v2191 = vpop.f32.mrb[0].mxu0
      %2192 = vdwg.mxu0
      %v2193 = vadd.f32 %v1899, %v2067
      %v2194 = vadd.f32 %v1900, %v2070
      %v2195 = vadd.f32 %v1901, %v2075
      %v2196 = vadd.f32 %v1902, %v2078
      %v2197 = vadd.f32 %v1903, %v2083
      %v2198 = vadd.f32 %v1904, %v2086
      %v2199 = vadd.f32 %v1905, %v2091
      %v2200 = vadd.f32 %v1906, %v2094
      %v2201 = vadd.f32 %v1907, %v2099
      %v2202 = vadd.f32 %v1908, %v2102
      %v2203 = vadd.f32 %v1909, %v2107
      %v2204 = vadd.f32 %v1910, %v2110
      %v2205 = vadd.f32 %v1911, %v2115
      %v2206 = vadd.f32 %v1912, %v2118
      %v2207 = vadd.f32 %v1913, %v2123
      %v2208 = vadd.f32 %v1914, %v2126
      %v2209 = vadd.f32 %v1915, %v2131
      %v2210 = vadd.f32 %v1916, %v2134
      %v2211 = vadd.f32 %v1917, %v2139
      %v2212 = vadd.f32 %v1918, %v2142
      %v2213 = vadd.f32 %v1919, %v2147
      %v2214 = vadd.f32 %v1920, %v2150
      %v2215 = vadd.f32 %v1921, %v2155
      %v2216 = vadd.f32 %v1922, %v2158
      %v2217 = vadd.f32 %v1923, %v2163
      %v2218 = vadd.f32 %v1924, %v2166
      %v2219 = vadd.f32 %v1925, %v2171
      %v2220 = vadd.f32 %v1926, %v2174
      %v2221 = vadd.f32 %v1927, %v2179
      %v2222 = vadd.f32 %v1928, %v2182
      %v2223 = vadd.f32 %v1929, %v2187
      %v2224 = vadd.f32 %v1930, %v2190
      %v2225 = vld [vmem:[%s277 + $0x20] sm:$0xff]
      %v2226 = vld [vmem:[%s277 + $0x28] sm:$0xff]
      %v2227 = vld [vmem:[%s277 + $0x30] sm:$0xff]
      %v2228 = vld [vmem:[%s277 + $0x38] sm:$0xff]
      %v2229 = vld [vmem:[%s277 + $0x40] sm:$0xff]
      %v2230 = vld [vmem:[%s277 + $0x48] sm:$0xff]
      %v2231 = vld [vmem:[%s277 + $0x50] sm:$0xff]
      %v2232 = vld [vmem:[%s277 + $0x58] sm:$0xff]
      %v2233 = vld [vmem:[%s277 + $0x60] sm:$0xff]
      %v2234 = vld [vmem:[%s277 + $0x68] sm:$0xff]
      %v2235 = vld [vmem:[%s277 + $0x70] sm:$0xff]
      %v2236 = vld [vmem:[%s277 + $0x78] sm:$0xff]
      %v2237 = vld [vmem:[%s277 + $0x80] sm:$0xff]
      %v2238 = vld [vmem:[%s277 + $0x88] sm:$0xff]
      %v2239 = vld [vmem:[%s277 + $0x90] sm:$0xff]
      %v2240 = vld [vmem:[%s277 + $0x98] sm:$0xff]
      %v2241 = vld [vmem:[%s277 + $0xa0] sm:$0xff]
      %v2242 = vld [vmem:[%s277 + $0xa8] sm:$0xff]
      %v2243 = vld [vmem:[%s277 + $0xb0] sm:$0xff]
      %v2244 = vld [vmem:[%s277 + $0xb8] sm:$0xff]
      %v2245 = vld [vmem:[%s277 + $0xc0] sm:$0xff]
      %v2246 = vld [vmem:[%s277 + $0xc8] sm:$0xff]
      %v2247 = vld [vmem:[%s277 + $0xd0] sm:$0xff]
      %v2248 = vld [vmem:[%s277 + $0xd8] sm:$0xff]
      %v2249 = vld [vmem:[%s277 + $0xe0] sm:$0xff]
      %v2250 = vld [vmem:[%s277 + $0xe8] sm:$0xff]
      %v2251 = vld [vmem:[%s277 + $0xf0] sm:$0xff]
      %v2252 = vld [vmem:[%s277 + $0xf8] sm:$0xff]
      %v2253 = vld [vmem:[%s277 + $0x100] sm:$0xff]
      %v2254 = vld [vmem:[%s277 + $0x108] sm:$0xff]
      %v2255 = vld [vmem:[%s277 + $0x110] sm:$0xff]
      %v2256 = vld [vmem:[%s277 + $0x118] sm:$0xff]
      %v2257 = vpack.c.bf16 %v2226, %v2225
      %v2258 = vpack.c.bf16 %v2228, %v2227
      %v2259 = vpack.c.bf16 %v2230, %v2229
      %v2260 = vpack.c.bf16 %v2232, %v2231
      %v2261 = vpack.c.bf16 %v2234, %v2233
      %v2262 = vpack.c.bf16 %v2236, %v2235
      %v2263 = vpack.c.bf16 %v2238, %v2237
      %v2264 = vpack.c.bf16 %v2240, %v2239
      %v2265 = vpack.c.bf16 %v2242, %v2241
      %v2266 = vpack.c.bf16 %v2244, %v2243
      %v2267 = vpack.c.bf16 %v2246, %v2245
      %v2268 = vpack.c.bf16 %v2248, %v2247
      %v2269 = vpack.c.bf16 %v2250, %v2249
      %v2270 = vpack.c.bf16 %v2252, %v2251
      %v2271 = vpack.c.bf16 %v2254, %v2253
      %v2272 = vpack.c.bf16 %v2256, %v2255
      %s2273 = scalar_lea.vmem %s1, 28
      %v2274 = vld [vmem:[%s2273] sm:$0xf]
      %v2276 = vsel %vm328, %v2257, 0
      %v2279 = vsel %vm328, %v2258, 0
      %v2282 = vsel %vm328, %v2259, 0
      %v2285 = vsel %vm328, %v2260, 0
      %v2288 = vsel %vm328, %v2261, 0
      %v2291 = vsel %vm328, %v2262, 0
      %v2294 = vsel %vm328, %v2263, 0
      %v2297 = vsel %vm328, %v2264, 0
      %v2300 = vsel %vm328, %v2265, 0
      %v2303 = vsel %vm328, %v2266, 0
      %v2306 = vsel %vm328, %v2267, 0
      %v2309 = vsel %vm328, %v2268, 0
      %v2312 = vsel %vm328, %v2269, 0
      %v2315 = vsel %vm328, %v2270, 0
      %v2318 = vsel %vm328, %v2271, 0
      %v2321 = vsel %vm328, %v2272, 0
      %v2324 = vsel %vm377, %v2274, 0
      %2326 = vmatprep.subr.bf16.mxu0 0
      %2327 = vmatpush1.bf16.msra.mxu0 %v2324
      %2328 = vmatprep.subr.bf16.mxu0 0
      %2329 = vmatpush1.bf16.msra.mxu0 0
      %2330 = vmatprep.subr.bf16.mxu0 0
      %2331 = vmatpush1.bf16.msra.mxu0 0
      %2332 = vmatprep.subr.bf16.mxu0 0
      %2333 = vmatpush1.bf16.msra.mxu0 0
      %2334 = vmatprep.subr.bf16.mxu0 0
      %2335 = vmatpush1.bf16.msra.mxu0 0
      %2336 = vmatprep.subr.bf16.mxu0 0
      %2337 = vmatpush1.bf16.msra.mxu0 0
      %2338 = vmatprep.subr.bf16.mxu0 0
      %2339 = vmatpush1.bf16.msra.mxu0 0
      %2340 = vmatprep.subr.bf16.mxu0 0
      %2341 = vmatpush1.bf16.msra.mxu0 0
      %2342 = vmatprep.subr.bf16.mxu0 0
      %2343 = vmatpush1.bf16.msra.mxu0 0
      %2344 = vmatprep.subr.bf16.mxu0 0
      %2345 = vmatpush1.bf16.msra.mxu0 0
      %2346 = vmatprep.subr.bf16.mxu0 0
      %2347 = vmatpush1.bf16.msra.mxu0 0
      %2348 = vmatprep.subr.bf16.mxu0 0
      %2349 = vmatpush1.bf16.msra.mxu0 0
      %2350 = vmatprep.subr.bf16.mxu0 0
      %2351 = vmatpush1.bf16.msra.mxu0 0
      %2352 = vmatprep.subr.bf16.mxu0 0
      %2353 = vmatpush1.bf16.msra.mxu0 0
      %2354 = vmatprep.subr.bf16.mxu0 0
      %2355 = vmatpush1.bf16.msra.mxu0 0
      %2356 = vmatprep.subr.bf16.mxu0 0
      %2357 = vmatpush1.bf16.msra.mxu0 0
      %2358 = vmatprep.mubr.bf16.mxu0 0
      %2359 = vmatmul.mubr.bf16.gmra.mrb[0].mxu0 %v2276
      %v2360 = vpop.f32.mrb[0].mxu0
      %v2361 = vadd.f32 0.0, %v2360
      %v2362 = vpop.f32.mrb[0].mxu0
      %v2363 = vpop.f32.mrb[0].mxu0
      %v2364 = vadd.f32 0.0, %v2363
      %v2365 = vpop.f32.mrb[0].mxu0
      %2366 = vmatprep.mubr.bf16.mxu0 0
      %2367 = vmatmul.mubr.bf16.gmra.mrb[0].mxu0 %v2279
      %v2368 = vpop.f32.mrb[0].mxu0
      %v2369 = vadd.f32 0.0, %v2368
      %v2370 = vpop.f32.mrb[0].mxu0
      %v2371 = vpop.f32.mrb[0].mxu0
      %v2372 = vadd.f32 0.0, %v2371
      %v2373 = vpop.f32.mrb[0].mxu0
      %2374 = vmatprep.mubr.bf16.mxu0 0
      %2375 = vmatmul.mubr.bf16.gmra.mrb[0].mxu0 %v2282
      %v2376 = vpop.f32.mrb[0].mxu0
      %v2377 = vadd.f32 0.0, %v2376
      %v2378 = vpop.f32.mrb[0].mxu0
      %v2379 = vpop.f32.mrb[0].mxu0
      %v2380 = vadd.f32 0.0, %v2379
      %v2381 = vpop.f32.mrb[0].mxu0
      %2382 = vmatprep.mubr.bf16.mxu0 0
      %2383 = vmatmul.mubr.bf16.gmra.mrb[0].mxu0 %v2285
      %v2384 = vpop.f32.mrb[0].mxu0
      %v2385 = vadd.f32 0.0, %v2384
      %v2386 = vpop.f32.mrb[0].mxu0
      %v2387 = vpop.f32.mrb[0].mxu0
      %v2388 = vadd.f32 0.0, %v2387
      %v2389 = vpop.f32.mrb[0].mxu0
      %2390 = vmatprep.mubr.bf16.mxu0 0
      %2391 = vmatmul.mubr.bf16.gmra.mrb[0].mxu0 %v2288
      %v2392 = vpop.f32.mrb[0].mxu0
      %v2393 = vadd.f32 0.0, %v2392
      %v2394 = vpop.f32.mrb[0].mxu0
      %v2395 = vpop.f32.mrb[0].mxu0
      %v2396 = vadd.f32 0.0, %v2395
      %v2397 = vpop.f32.mrb[0].mxu0
      %2398 = vmatprep.mubr.bf16.mxu0 0
      %2399 = vmatmul.mubr.bf16.gmra.mrb[0].mxu0 %v2291
      %v2400 = vpop.f32.mrb[0].mxu0
      %v2401 = vadd.f32 0.0, %v2400
      %v2402 = vpop.f32.mrb[0].mxu0
      %v2403 = vpop.f32.mrb[0].mxu0
      %v2404 = vadd.f32 0.0, %v2403
      %v2405 = vpop.f32.mrb[0].mxu0
      %2406 = vmatprep.mubr.bf16.mxu0 0
      %2407 = vmatmul.mubr.bf16.gmra.mrb[0].mxu0 %v2294
      %v2408 = vpop.f32.mrb[0].mxu0
      %v2409 = vadd.f32 0.0, %v2408
      %v2410 = vpop.f32.mrb[0].mxu0
      %v2411 = vpop.f32.mrb[0].mxu0
      %v2412 = vadd.f32 0.0, %v2411
      %v2413 = vpop.f32.mrb[0].mxu0
      %2414 = vmatprep.mubr.bf16.mxu0 0
      %2415 = vmatmul.mubr.bf16.gmra.mrb[0].mxu0 %v2297
      %v2416 = vpop.f32.mrb[0].mxu0
      %v2417 = vadd.f32 0.0, %v2416
      %v2418 = vpop.f32.mrb[0].mxu0
      %v2419 = vpop.f32.mrb[0].mxu0
      %v2420 = vadd.f32 0.0, %v2419
      %v2421 = vpop.f32.mrb[0].mxu0
      %2422 = vmatprep.mubr.bf16.mxu0 0
      %2423 = vmatmul.mubr.bf16.gmra.mrb[0].mxu0 %v2300
      %v2424 = vpop.f32.mrb[0].mxu0
      %v2425 = vadd.f32 0.0, %v2424
      %v2426 = vpop.f32.mrb[0].mxu0
      %v2427 = vpop.f32.mrb[0].mxu0
      %v2428 = vadd.f32 0.0, %v2427
      %v2429 = vpop.f32.mrb[0].mxu0
      %2430 = vmatprep.mubr.bf16.mxu0 0
      %2431 = vmatmul.mubr.bf16.gmra.mrb[0].mxu0 %v2303
      %v2432 = vpop.f32.mrb[0].mxu0
      %v2433 = vadd.f32 0.0, %v2432
      %v2434 = vpop.f32.mrb[0].mxu0
      %v2435 = vpop.f32.mrb[0].mxu0
      %v2436 = vadd.f32 0.0, %v2435
      %v2437 = vpop.f32.mrb[0].mxu0
      %2438 = vmatprep.mubr.bf16.mxu0 0
      %2439 = vmatmul.mubr.bf16.gmra.mrb[0].mxu0 %v2306
      %v2440 = vpop.f32.mrb[0].mxu0
      %v2441 = vadd.f32 0.0, %v2440
      %v2442 = vpop.f32.mrb[0].mxu0
      %v2443 = vpop.f32.mrb[0].mxu0
      %v2444 = vadd.f32 0.0, %v2443
      %v2445 = vpop.f32.mrb[0].mxu0
      %2446 = vmatprep.mubr.bf16.mxu0 0
      %2447 = vmatmul.mubr.bf16.gmra.mrb[0].mxu0 %v2309
      %v2448 = vpop.f32.mrb[0].mxu0
      %v2449 = vadd.f32 0.0, %v2448
      %v2450 = vpop.f32.mrb[0].mxu0
      %v2451 = vpop.f32.mrb[0].mxu0
      %v2452 = vadd.f32 0.0, %v2451
      %v2453 = vpop.f32.mrb[0].mxu0
      %2454 = vmatprep.mubr.bf16.mxu0 0
      %2455 = vmatmul.mubr.bf16.gmra.mrb[0].mxu0 %v2312
      %v2456 = vpop.f32.mrb[0].mxu0
      %v2457 = vadd.f32 0.0, %v2456
      %v2458 = vpop.f32.mrb[0].mxu0
      %v2459 = vpop.f32.mrb[0].mxu0
      %v2460 = vadd.f32 0.0, %v2459
      %v2461 = vpop.f32.mrb[0].mxu0
      %2462 = vmatprep.mubr.bf16.mxu0 0
      %2463 = vmatmul.mubr.bf16.gmra.mrb[0].mxu0 %v2315
      %v2464 = vpop.f32.mrb[0].mxu0
      %v2465 = vadd.f32 0.0, %v2464
      %v2466 = vpop.f32.mrb[0].mxu0
      %v2467 = vpop.f32.mrb[0].mxu0
      %v2468 = vadd.f32 0.0, %v2467
      %v2469 = vpop.f32.mrb[0].mxu0
      %2470 = vmatprep.mubr.bf16.mxu0 0
      %2471 = vmatmul.mubr.bf16.gmra.mrb[0].mxu0 %v2318
      %v2472 = vpop.f32.mrb[0].mxu0
      %v2473 = vadd.f32 0.0, %v2472
      %v2474 = vpop.f32.mrb[0].mxu0
      %v2475 = vpop.f32.mrb[0].mxu0
      %v2476 = vadd.f32 0.0, %v2475
      %v2477 = vpop.f32.mrb[0].mxu0
      %2478 = vmatprep.mubr.bf16.mxu0 0
      %2479 = vmatmul.mubr.bf16.gmra.mrb[0].mxu0 %v2321
      %v2480 = vpop.f32.mrb[0].mxu0
      %v2481 = vadd.f32 0.0, %v2480
      %v2482 = vpop.f32.mrb[0].mxu0
      %v2483 = vpop.f32.mrb[0].mxu0
      %v2484 = vadd.f32 0.0, %v2483
      %v2485 = vpop.f32.mrb[0].mxu0
      %2486 = vdwg.mxu0
      %v2487 = vadd.f32 %v2193, %v2361
      %v2488 = vadd.f32 %v2194, %v2364
      %v2489 = vadd.f32 %v2195, %v2369
      %v2490 = vadd.f32 %v2196, %v2372
      %v2491 = vadd.f32 %v2197, %v2377
      %v2492 = vadd.f32 %v2198, %v2380
      %v2493 = vadd.f32 %v2199, %v2385
      %v2494 = vadd.f32 %v2200, %v2388
      %v2495 = vadd.f32 %v2201, %v2393
      %v2496 = vadd.f32 %v2202, %v2396
      %v2497 = vadd.f32 %v2203, %v2401
      %v2498 = vadd.f32 %v2204, %v2404
      %v2499 = vadd.f32 %v2205, %v2409
      %v2500 = vadd.f32 %v2206, %v2412
      %v2501 = vadd.f32 %v2207, %v2417
      %v2502 = vadd.f32 %v2208, %v2420
      %v2503 = vadd.f32 %v2209, %v2425
      %v2504 = vadd.f32 %v2210, %v2428
      %v2505 = vadd.f32 %v2211, %v2433
      %v2506 = vadd.f32 %v2212, %v2436
      %v2507 = vadd.f32 %v2213, %v2441
      %v2508 = vadd.f32 %v2214, %v2444
      %v2509 = vadd.f32 %v2215, %v2449
      %v2510 = vadd.f32 %v2216, %v2452
      %v2511 = vadd.f32 %v2217, %v2457
      %v2512 = vadd.f32 %v2218, %v2460
      %v2513 = vadd.f32 %v2219, %v2465
      %v2514 = vadd.f32 %v2220, %v2468
      %v2515 = vadd.f32 %v2221, %v2473
      %v2516 = vadd.f32 %v2222, %v2476
      %v2517 = vadd.f32 %v2223, %v2481
      %v2518 = vadd.f32 %v2224, %v2484
      %v2519 = vld [vmem:[%s754 + $0x20] sm:$0xff]
      %v2520 = vld [vmem:[%s754 + $0x28] sm:$0xff]
      %v2521 = vld [vmem:[%s754 + $0x30] sm:$0xff]
      %v2522 = vld [vmem:[%s754 + $0x38] sm:$0xff]
      %v2523 = vld [vmem:[%s754 + $0x40] sm:$0xff]
      %v2524 = vld [vmem:[%s754 + $0x48] sm:$0xff]
      %v2525 = vld [vmem:[%s754 + $0x50] sm:$0xff]
      %v2526 = vld [vmem:[%s754 + $0x58] sm:$0xff]
      %v2527 = vld [vmem:[%s754 + $0x60] sm:$0xff]
      %v2528 = vld [vmem:[%s754 + $0x68] sm:$0xff]
      %v2529 = vld [vmem:[%s754 + $0x70] sm:$0xff]
      %v2530 = vld [vmem:[%s754 + $0x78] sm:$0xff]
      %v2531 = vld [vmem:[%s754 + $0x80] sm:$0xff]
      %v2532 = vld [vmem:[%s754 + $0x88] sm:$0xff]
      %v2533 = vld [vmem:[%s754 + $0x90] sm:$0xff]
      %v2534 = vld [vmem:[%s754 + $0x98] sm:$0xff]
      %v2535 = vld [vmem:[%s754 + $0xa0] sm:$0xff]
      %v2536 = vld [vmem:[%s754 + $0xa8] sm:$0xff]
      %v2537 = vld [vmem:[%s754 + $0xb0] sm:$0xff]
      %v2538 = vld [vmem:[%s754 + $0xb8] sm:$0xff]
      %v2539 = vld [vmem:[%s754 + $0xc0] sm:$0xff]
      %v2540 = vld [vmem:[%s754 + $0xc8] sm:$0xff]
      %v2541 = vld [vmem:[%s754 + $0xd0] sm:$0xff]
      %v2542 = vld [vmem:[%s754 + $0xd8] sm:$0xff]
      %v2543 = vld [vmem:[%s754 + $0xe0] sm:$0xff]
      %v2544 = vld [vmem:[%s754 + $0xe8] sm:$0xff]
      %v2545 = vld [vmem:[%s754 + $0xf0] sm:$0xff]
      %v2546 = vld [vmem:[%s754 + $0xf8] sm:$0xff]
      %v2547 = vld [vmem:[%s754 + $0x100] sm:$0xff]
      %v2548 = vld [vmem:[%s754 + $0x108] sm:$0xff]
      %v2549 = vld [vmem:[%s754 + $0x110] sm:$0xff]
      %v2550 = vld [vmem:[%s754 + $0x118] sm:$0xff]
      %v2551 = vpack.c.bf16 %v2520, %v2519
      %v2552 = vpack.c.bf16 %v2522, %v2521
      %v2553 = vpack.c.bf16 %v2524, %v2523
      %v2554 = vpack.c.bf16 %v2526, %v2525
      %v2555 = vpack.c.bf16 %v2528, %v2527
      %v2556 = vpack.c.bf16 %v2530, %v2529
      %v2557 = vpack.c.bf16 %v2532, %v2531
      %v2558 = vpack.c.bf16 %v2534, %v2533
      %v2559 = vpack.c.bf16 %v2536, %v2535
      %v2560 = vpack.c.bf16 %v2538, %v2537
      %v2561 = vpack.c.bf16 %v2540, %v2539
      %v2562 = vpack.c.bf16 %v2542, %v2541
      %v2563 = vpack.c.bf16 %v2544, %v2543
      %v2564 = vpack.c.bf16 %v2546, %v2545
      %v2565 = vpack.c.bf16 %v2548, %v2547
      %v2566 = vpack.c.bf16 %v2550, %v2549
      %s2567 = scalar_lea.vmem %s1, 32
      %v2568 = vld [vmem:[%s2567] sm:$0xf]
      %v2570 = vsel %vm328, %v2551, 0
      %v2573 = vsel %vm328, %v2552, 0
      %v2576 = vsel %vm328, %v2553, 0
      %v2579 = vsel %vm328, %v2554, 0
      %v2582 = vsel %vm328, %v2555, 0
      %v2585 = vsel %vm328, %v2556, 0
      %v2588 = vsel %vm328, %v2557, 0
      %v2591 = vsel %vm328, %v2558, 0
      %v2594 = vsel %vm328, %v2559, 0
      %v2597 = vsel %vm328, %v2560, 0
      %v2600 = vsel %vm328, %v2561, 0
      %v2603 = vsel %vm328, %v2562, 0
      %v2606 = vsel %vm328, %v2563, 0
      %v2609 = vsel %vm328, %v2564, 0
      %v2612 = vsel %vm328, %v2565, 0
      %v2615 = vsel %vm328, %v2566, 0
      %v2618 = vsel %vm377, %v2568, 0
      %2620 = vmatprep.subr.bf16.mxu0 0
      %2621 = vmatpush1.bf16.msra.mxu0 %v2618
      %2622 = vmatprep.subr.bf16.mxu0 0
      %2623 = vmatpush1.bf16.msra.mxu0 0
      %2624 = vmatprep.subr.bf16.mxu0 0
      %2625 = vmatpush1.bf16.msra.mxu0 0
      %2626 = vmatprep.subr.bf16.mxu0 0
      %2627 = vmatpush1.bf16.msra.mxu0 0
      %2628 = vmatprep.subr.bf16.mxu0 0
      %2629 = vmatpush1.bf16.msra.mxu0 0
      %2630 = vmatprep.subr.bf16.mxu0 0
      %2631 = vmatpush1.bf16.msra.mxu0 0
      %2632 = vmatprep.subr.bf16.mxu0 0
      %2633 = vmatpush1.bf16.msra.mxu0 0
      %2634 = vmatprep.subr.bf16.mxu0 0
      %2635 = vmatpush1.bf16.msra.mxu0 0
      %2636 = vmatprep.subr.bf16.mxu0 0
      %2637 = vmatpush1.bf16.msra.mxu0 0
      %2638 = vmatprep.subr.bf16.mxu0 0
      %2639 = vmatpush1.bf16.msra.mxu0 0
      %2640 = vmatprep.subr.bf16.mxu0 0
      %2641 = vmatpush1.bf16.msra.mxu0 0
      %2642 = vmatprep.subr.bf16.mxu0 0
      %2643 = vmatpush1.bf16.msra.mxu0 0
      %2644 = vmatprep.subr.bf16.mxu0 0
      %2645 = vmatpush1.bf16.msra.mxu0 0
      %2646 = vmatprep.subr.bf16.mxu0 0
      %2647 = vmatpush1.bf16.msra.mxu0 0
      %2648 = vmatprep.subr.bf16.mxu0 0
      %2649 = vmatpush1.bf16.msra.mxu0 0
      %2650 = vmatprep.subr.bf16.mxu0 0
      %2651 = vmatpush1.bf16.msra.mxu0 0
      %2652 = vmatprep.mubr.bf16.mxu0 0
      %2653 = vmatmul.mubr.bf16.gmra.mrb[0].mxu0 %v2570
      %v2654 = vpop.f32.mrb[0].mxu0
      %v2655 = vadd.f32 0.0, %v2654
      %v2656 = vpop.f32.mrb[0].mxu0
      %v2657 = vpop.f32.mrb[0].mxu0
      %v2658 = vadd.f32 0.0, %v2657
      %v2659 = vpop.f32.mrb[0].mxu0
      %2660 = vmatprep.mubr.bf16.mxu0 0
      %2661 = vmatmul.mubr.bf16.gmra.mrb[0].mxu0 %v2573
      %v2662 = vpop.f32.mrb[0].mxu0
      %v2663 = vadd.f32 0.0, %v2662
      %v2664 = vpop.f32.mrb[0].mxu0
      %v2665 = vpop.f32.mrb[0].mxu0
      %v2666 = vadd.f32 0.0, %v2665
      %v2667 = vpop.f32.mrb[0].mxu0
      %2668 = vmatprep.mubr.bf16.mxu0 0
      %2669 = vmatmul.mubr.bf16.gmra.mrb[0].mxu0 %v2576
      %v2670 = vpop.f32.mrb[0].mxu0
      %v2671 = vadd.f32 0.0, %v2670
      %v2672 = vpop.f32.mrb[0].mxu0
      %v2673 = vpop.f32.mrb[0].mxu0
      %v2674 = vadd.f32 0.0, %v2673
      %v2675 = vpop.f32.mrb[0].mxu0
      %2676 = vmatprep.mubr.bf16.mxu0 0
      %2677 = vmatmul.mubr.bf16.gmra.mrb[0].mxu0 %v2579
      %v2678 = vpop.f32.mrb[0].mxu0
      %v2679 = vadd.f32 0.0, %v2678
      %v2680 = vpop.f32.mrb[0].mxu0
      %v2681 = vpop.f32.mrb[0].mxu0
      %v2682 = vadd.f32 0.0, %v2681
      %v2683 = vpop.f32.mrb[0].mxu0
      %2684 = vmatprep.mubr.bf16.mxu0 0
      %2685 = vmatmul.mubr.bf16.gmra.mrb[0].mxu0 %v2582
      %v2686 = vpop.f32.mrb[0].mxu0
      %v2687 = vadd.f32 0.0, %v2686
      %v2688 = vpop.f32.mrb[0].mxu0
      %v2689 = vpop.f32.mrb[0].mxu0
      %v2690 = vadd.f32 0.0, %v2689
      %v2691 = vpop.f32.mrb[0].mxu0
      %2692 = vmatprep.mubr.bf16.mxu0 0
      %2693 = vmatmul.mubr.bf16.gmra.mrb[0].mxu0 %v2585
      %v2694 = vpop.f32.mrb[0].mxu0
      %v2695 = vadd.f32 0.0, %v2694
      %v2696 = vpop.f32.mrb[0].mxu0
      %v2697 = vpop.f32.mrb[0].mxu0
      %v2698 = vadd.f32 0.0, %v2697
      %v2699 = vpop.f32.mrb[0].mxu0
      %2700 = vmatprep.mubr.bf16.mxu0 0
      %2701 = vmatmul.mubr.bf16.gmra.mrb[0].mxu0 %v2588
      %v2702 = vpop.f32.mrb[0].mxu0
      %v2703 = vadd.f32 0.0, %v2702
      %v2704 = vpop.f32.mrb[0].mxu0
      %v2705 = vpop.f32.mrb[0].mxu0
      %v2706 = vadd.f32 0.0, %v2705
      %v2707 = vpop.f32.mrb[0].mxu0
      %2708 = vmatprep.mubr.bf16.mxu0 0
      %2709 = vmatmul.mubr.bf16.gmra.mrb[0].mxu0 %v2591
      %v2710 = vpop.f32.mrb[0].mxu0
      %v2711 = vadd.f32 0.0, %v2710
      %v2712 = vpop.f32.mrb[0].mxu0
      %v2713 = vpop.f32.mrb[0].mxu0
      %v2714 = vadd.f32 0.0, %v2713
      %v2715 = vpop.f32.mrb[0].mxu0
      %2716 = vmatprep.mubr.bf16.mxu0 0
      %2717 = vmatmul.mubr.bf16.gmra.mrb[0].mxu0 %v2594
      %v2718 = vpop.f32.mrb[0].mxu0
      %v2719 = vadd.f32 0.0, %v2718
      %v2720 = vpop.f32.mrb[0].mxu0
      %v2721 = vpop.f32.mrb[0].mxu0
      %v2722 = vadd.f32 0.0, %v2721
      %v2723 = vpop.f32.mrb[0].mxu0
      %2724 = vmatprep.mubr.bf16.mxu0 0
      %2725 = vmatmul.mubr.bf16.gmra.mrb[0].mxu0 %v2597
      %v2726 = vpop.f32.mrb[0].mxu0
      %v2727 = vadd.f32 0.0, %v2726
      %v2728 = vpop.f32.mrb[0].mxu0
      %v2729 = vpop.f32.mrb[0].mxu0
      %v2730 = vadd.f32 0.0, %v2729
      %v2731 = vpop.f32.mrb[0].mxu0
      %2732 = vmatprep.mubr.bf16.mxu0 0
      %2733 = vmatmul.mubr.bf16.gmra.mrb[0].mxu0 %v2600
      %v2734 = vpop.f32.mrb[0].mxu0
      %v2735 = vadd.f32 0.0, %v2734
      %v2736 = vpop.f32.mrb[0].mxu0
      %v2737 = vpop.f32.mrb[0].mxu0
      %v2738 = vadd.f32 0.0, %v2737
      %v2739 = vpop.f32.mrb[0].mxu0
      %2740 = vmatprep.mubr.bf16.mxu0 0
      %2741 = vmatmul.mubr.bf16.gmra.mrb[0].mxu0 %v2603
      %v2742 = vpop.f32.mrb[0].mxu0
      %v2743 = vadd.f32 0.0, %v2742
      %v2744 = vpop.f32.mrb[0].mxu0
      %v2745 = vpop.f32.mrb[0].mxu0
      %v2746 = vadd.f32 0.0, %v2745
      %v2747 = vpop.f32.mrb[0].mxu0
      %2748 = vmatprep.mubr.bf16.mxu0 0
      %2749 = vmatmul.mubr.bf16.gmra.mrb[0].mxu0 %v2606
      %v2750 = vpop.f32.mrb[0].mxu0
      %v2751 = vadd.f32 0.0, %v2750
      %v2752 = vpop.f32.mrb[0].mxu0
      %v2753 = vpop.f32.mrb[0].mxu0
      %v2754 = vadd.f32 0.0, %v2753
      %v2755 = vpop.f32.mrb[0].mxu0
      %2756 = vmatprep.mubr.bf16.mxu0 0
      %2757 = vmatmul.mubr.bf16.gmra.mrb[0].mxu0 %v2609
      %v2758 = vpop.f32.mrb[0].mxu0
      %v2759 = vadd.f32 0.0, %v2758
      %v2760 = vpop.f32.mrb[0].mxu0
      %v2761 = vpop.f32.mrb[0].mxu0
      %v2762 = vadd.f32 0.0, %v2761
      %v2763 = vpop.f32.mrb[0].mxu0
      %2764 = vmatprep.mubr.bf16.mxu0 0
      %2765 = vmatmul.mubr.bf16.gmra.mrb[0].mxu0 %v2612
      %v2766 = vpop.f32.mrb[0].mxu0
      %v2767 = vadd.f32 0.0, %v2766
      %v2768 = vpop.f32.mrb[0].mxu0
      %v2769 = vpop.f32.mrb[0].mxu0
      %v2770 = vadd.f32 0.0, %v2769
      %v2771 = vpop.f32.mrb[0].mxu0
      %2772 = vmatprep.mubr.bf16.mxu0 0
      %2773 = vmatmul.mubr.bf16.gmra.mrb[0].mxu0 %v2615
      %v2774 = vpop.f32.mrb[0].mxu0
      %v2775 = vadd.f32 0.0, %v2774
      %v2776 = vpop.f32.mrb[0].mxu0
      %v2777 = vpop.f32.mrb[0].mxu0
      %v2778 = vadd.f32 0.0, %v2777
      %v2779 = vpop.f32.mrb[0].mxu0
      %2780 = vdwg.mxu0
      %v2781 = vadd.f32 %v2487, %v2655
      %v2782 = vadd.f32 %v2488, %v2658
      %v2783 = vadd.f32 %v2489, %v2663
      %v2784 = vadd.f32 %v2490, %v2666
      %v2785 = vadd.f32 %v2491, %v2671
      %v2786 = vadd.f32 %v2492, %v2674
      %v2787 = vadd.f32 %v2493, %v2679
      %v2788 = vadd.f32 %v2494, %v2682
      %v2789 = vadd.f32 %v2495, %v2687
      %v2790 = vadd.f32 %v2496, %v2690
      %v2791 = vadd.f32 %v2497, %v2695
      %v2792 = vadd.f32 %v2498, %v2698
      %v2793 = vadd.f32 %v2499, %v2703
      %v2794 = vadd.f32 %v2500, %v2706
      %v2795 = vadd.f32 %v2501, %v2711
      %v2796 = vadd.f32 %v2502, %v2714
      %v2797 = vadd.f32 %v2503, %v2719
      %v2798 = vadd.f32 %v2504, %v2722
      %v2799 = vadd.f32 %v2505, %v2727
      %v2800 = vadd.f32 %v2506, %v2730
      %v2801 = vadd.f32 %v2507, %v2735
      %v2802 = vadd.f32 %v2508, %v2738
      %v2803 = vadd.f32 %v2509, %v2743
      %v2804 = vadd.f32 %v2510, %v2746
      %v2805 = vadd.f32 %v2511, %v2751
      %v2806 = vadd.f32 %v2512, %v2754
      %v2807 = vadd.f32 %v2513, %v2759
      %v2808 = vadd.f32 %v2514, %v2762
      %v2809 = vadd.f32 %v2515, %v2767
      %v2810 = vadd.f32 %v2516, %v2770
      %v2811 = vadd.f32 %v2517, %v2775
      %v2812 = vadd.f32 %v2518, %v2778
      %v2813 = vld [vmem:[%s2] sm:$0x1]
      %v2815 = vlaneseq
      %v2816 = vshrl.u32 %v2815, 7
      %v2817 = vsub.s32 0, %v2816
      %v2818 = vrot.slane %v2813, %v2817
      %v2820 = vadd.f32 %v2781, %v2818
      %v2821 = vadd.f32 %v2782, %v2818
      %v2822 = vadd.f32 %v2783, %v2818
      %v2823 = vadd.f32 %v2784, %v2818
      %v2824 = vadd.f32 %v2785, %v2818
      %v2825 = vadd.f32 %v2786, %v2818
      %v2826 = vadd.f32 %v2787, %v2818
      %v2827 = vadd.f32 %v2788, %v2818
      %v2828 = vadd.f32 %v2789, %v2818
      %v2829 = vadd.f32 %v2790, %v2818
      %v2830 = vadd.f32 %v2791, %v2818
      %v2831 = vadd.f32 %v2792, %v2818
      %v2832 = vadd.f32 %v2793, %v2818
      %v2833 = vadd.f32 %v2794, %v2818
      %v2834 = vadd.f32 %v2795, %v2818
      %v2835 = vadd.f32 %v2796, %v2818
      %v2836 = vadd.f32 %v2797, %v2818
      %v2837 = vadd.f32 %v2798, %v2818
      %v2838 = vadd.f32 %v2799, %v2818
      %v2839 = vadd.f32 %v2800, %v2818
      %v2840 = vadd.f32 %v2801, %v2818
      %v2841 = vadd.f32 %v2802, %v2818
      %v2842 = vadd.f32 %v2803, %v2818
      %v2843 = vadd.f32 %v2804, %v2818
      %v2844 = vadd.f32 %v2805, %v2818
      %v2845 = vadd.f32 %v2806, %v2818
      %v2846 = vadd.f32 %v2807, %v2818
      %v2847 = vadd.f32 %v2808, %v2818
      %v2848 = vadd.f32 %v2809, %v2818
      %v2849 = vadd.f32 %v2810, %v2818
      %v2850 = vadd.f32 %v2811, %v2818
      %v2851 = vadd.f32 %v2812, %v2818
      %2852 = vst.msk [vmem:[%s219] sm:$0xff] %vm328, %v2820
      %2853 = vst.msk [vmem:[%s219 + $0x8] sm:$0xff] %vm328, %v2821
      %2854 = vst.msk [vmem:[%s219 + $0x10] sm:$0xff] %vm328, %v2822
      %2855 = vst.msk [vmem:[%s219 + $0x18] sm:$0xff] %vm328, %v2823
      %2856 = vst.msk [vmem:[%s219 + $0x20] sm:$0xff] %vm328, %v2824
      %2857 = vst.msk [vmem:[%s219 + $0x28] sm:$0xff] %vm328, %v2825
      %2858 = vst.msk [vmem:[%s219 + $0x30] sm:$0xff] %vm328, %v2826
      %2859 = vst.msk [vmem:[%s219 + $0x38] sm:$0xff] %vm328, %v2827
      %2860 = vst.msk [vmem:[%s219 + $0x40] sm:$0xff] %vm328, %v2828
      %2861 = vst.msk [vmem:[%s219 + $0x48] sm:$0xff] %vm328, %v2829
      %2862 = vst.msk [vmem:[%s219 + $0x50] sm:$0xff] %vm328, %v2830
      %2863 = vst.msk [vmem:[%s219 + $0x58] sm:$0xff] %vm328, %v2831
      %2864 = vst.msk [vmem:[%s219 + $0x60] sm:$0xff] %vm328, %v2832
      %2865 = vst.msk [vmem:[%s219 + $0x68] sm:$0xff] %vm328, %v2833
      %2866 = vst.msk [vmem:[%s219 + $0x70] sm:$0xff] %vm328, %v2834
      %2867 = vst.msk [vmem:[%s219 + $0x78] sm:$0xff] %vm328, %v2835
      %2868 = vst.msk [vmem:[%s219 + $0x80] sm:$0xff] %vm328, %v2836
      %2869 = vst.msk [vmem:[%s219 + $0x88] sm:$0xff] %vm328, %v2837
      %2870 = vst.msk [vmem:[%s219 + $0x90] sm:$0xff] %vm328, %v2838
      %2871 = vst.msk [vmem:[%s219 + $0x98] sm:$0xff] %vm328, %v2839
      %2872 = vst.msk [vmem:[%s219 + $0xa0] sm:$0xff] %vm328, %v2840
      %2873 = vst.msk [vmem:[%s219 + $0xa8] sm:$0xff] %vm328, %v2841
      %2874 = vst.msk [vmem:[%s219 + $0xb0] sm:$0xff] %vm328, %v2842
      %2875 = vst.msk [vmem:[%s219 + $0xb8] sm:$0xff] %vm328, %v2843
      %2876 = vst.msk [vmem:[%s219 + $0xc0] sm:$0xff] %vm328, %v2844
      %2877 = vst.msk [vmem:[%s219 + $0xc8] sm:$0xff] %vm328, %v2845
      %2878 = vst.msk [vmem:[%s219 + $0xd0] sm:$0xff] %vm328, %v2846
      %2879 = vst.msk [vmem:[%s219 + $0xd8] sm:$0xff] %vm328, %v2847
      %2880 = vst.msk [vmem:[%s219 + $0xe0] sm:$0xff] %vm328, %v2848
      %2881 = vst.msk [vmem:[%s219 + $0xe8] sm:$0xff] %vm328, %v2849
      %2882 = vst.msk [vmem:[%s219 + $0xf0] sm:$0xff] %vm328, %v2850
      %2883 = vst.msk [vmem:[%s219 + $0xf8] sm:$0xff] %vm328, %v2851
      %v2884 = vld [vmem:[%s4] sm:$0x1]
      %v2885 = vsel %vm328, %v2820, 0.0
      %v2886 = vsel %vm328, %v2821, 0.0
      %v2887 = vadd.f32 %v2885, %v2886
      %v2888 = vsel %vm328, %v2822, 0.0
      %v2889 = vadd.f32 %v2887, %v2888
      %v2890 = vsel %vm328, %v2823, 0.0
      %v2891 = vadd.f32 %v2889, %v2890
      %v2892 = vsel %vm328, %v2824, 0.0
      %v2893 = vadd.f32 %v2891, %v2892
      %v2894 = vsel %vm328, %v2825, 0.0
      %v2895 = vadd.f32 %v2893, %v2894
      %v2896 = vsel %vm328, %v2826, 0.0
      %v2897 = vadd.f32 %v2895, %v2896
      %v2898 = vsel %vm328, %v2827, 0.0
      %v2899 = vadd.f32 %v2897, %v2898
      %v2900 = vsel %vm328, %v2828, 0.0
      %v2901 = vadd.f32 %v2899, %v2900
      %v2902 = vsel %vm328, %v2829, 0.0
      %v2903 = vadd.f32 %v2901, %v2902
      %v2904 = vsel %vm328, %v2830, 0.0
      %v2905 = vadd.f32 %v2903, %v2904
      %v2906 = vsel %vm328, %v2831, 0.0
      %v2907 = vadd.f32 %v2905, %v2906
      %v2908 = vsel %vm328, %v2832, 0.0
      %v2909 = vadd.f32 %v2907, %v2908
      %v2910 = vsel %vm328, %v2833, 0.0
      %v2911 = vadd.f32 %v2909, %v2910
      %v2912 = vsel %vm328, %v2834, 0.0
      %v2913 = vadd.f32 %v2911, %v2912
      %v2914 = vsel %vm328, %v2835, 0.0
      %v2915 = vadd.f32 %v2913, %v2914
      %v2916 = vsel %vm328, %v2836, 0.0
      %v2917 = vadd.f32 %v2915, %v2916
      %v2918 = vsel %vm328, %v2837, 0.0
      %v2919 = vadd.f32 %v2917, %v2918
      %v2920 = vsel %vm328, %v2838, 0.0
      %v2921 = vadd.f32 %v2919, %v2920
      %v2922 = vsel %vm328, %v2839, 0.0
      %v2923 = vadd.f32 %v2921, %v2922
      %v2924 = vsel %vm328, %v2840, 0.0
      %v2925 = vadd.f32 %v2923, %v2924
      %v2926 = vsel %vm328, %v2841, 0.0
      %v2927 = vadd.f32 %v2925, %v2926
      %v2928 = vsel %vm328, %v2842, 0.0
      %v2929 = vadd.f32 %v2927, %v2928
      %v2930 = vsel %vm328, %v2843, 0.0
      %v2931 = vadd.f32 %v2929, %v2930
      %v2932 = vsel %vm328, %v2844, 0.0
      %v2933 = vadd.f32 %v2931, %v2932
      %v2934 = vsel %vm328, %v2845, 0.0
      %v2935 = vadd.f32 %v2933, %v2934
      %v2936 = vsel %vm328, %v2846, 0.0
      %v2937 = vadd.f32 %v2935, %v2936
      %v2938 = vsel %vm328, %v2847, 0.0
      %v2939 = vadd.f32 %v2937, %v2938
      %v2940 = vsel %vm328, %v2848, 0.0
      %v2941 = vadd.f32 %v2939, %v2940
      %v2942 = vsel %vm328, %v2849, 0.0
      %v2943 = vadd.f32 %v2941, %v2942
      %v2944 = vsel %vm328, %v2850, 0.0
      %v2945 = vadd.f32 %v2943, %v2944
      %v2946 = vsel %vm328, %v2851, 0.0
      %v2947 = vadd.f32 %v2945, %v2946
      %v2948 = vrot.slane %v2947, 4
      %v2949 = vadd.f32 %v2947, %v2948
      %v2950 = vrot.slane %v2949, 2
      %v2951 = vadd.f32 %v2949, %v2950
      %v2952 = vrot.slane %v2951, 1
      %v2953 = vadd.f32 %v2951, %v2952
      %v2954 = vadd.f32 %v2884, %v2953
      %vm2955 = vcmask 57344
      %2956 = vst.msk [vmem:[%s4] sm:$0x1] %vm2955, %v2954
      %v2957 = vld [vmem:[%s5] sm:$0x1]
      %v2958 = vmul.f32 %v2820, %v2820
      %v2959 = vmul.f32 %v2821, %v2821
      %v2960 = vmul.f32 %v2822, %v2822
      %v2961 = vmul.f32 %v2823, %v2823
      %v2962 = vmul.f32 %v2824, %v2824
      %v2963 = vmul.f32 %v2825, %v2825
      %v2964 = vmul.f32 %v2826, %v2826
      %v2965 = vmul.f32 %v2827, %v2827
      %v2966 = vmul.f32 %v2828, %v2828
      %v2967 = vmul.f32 %v2829, %v2829
      %v2968 = vmul.f32 %v2830, %v2830
      %v2969 = vmul.f32 %v2831, %v2831
      %v2970 = vmul.f32 %v2832, %v2832
      %v2971 = vmul.f32 %v2833, %v2833
      %v2972 = vmul.f32 %v2834, %v2834
      %v2973 = vmul.f32 %v2835, %v2835
      %v2974 = vmul.f32 %v2836, %v2836
      %v2975 = vmul.f32 %v2837, %v2837
      %v2976 = vmul.f32 %v2838, %v2838
      %v2977 = vmul.f32 %v2839, %v2839
      %v2978 = vmul.f32 %v2840, %v2840
      %v2979 = vmul.f32 %v2841, %v2841
      %v2980 = vmul.f32 %v2842, %v2842
      %v2981 = vmul.f32 %v2843, %v2843
      %v2982 = vmul.f32 %v2844, %v2844
      %v2983 = vmul.f32 %v2845, %v2845
      %v2984 = vmul.f32 %v2846, %v2846
      %v2985 = vmul.f32 %v2847, %v2847
      %v2986 = vmul.f32 %v2848, %v2848
      %v2987 = vmul.f32 %v2849, %v2849
      %v2988 = vmul.f32 %v2850, %v2850
      %v2989 = vmul.f32 %v2851, %v2851
      %v2990 = vsel %vm328, %v2958, 0.0
      %v2991 = vsel %vm328, %v2959, 0.0
      %v2992 = vadd.f32 %v2990, %v2991
      %v2993 = vsel %vm328, %v2960, 0.0
      %v2994 = vadd.f32 %v2992, %v2993
      %v2995 = vsel %vm328, %v2961, 0.0
      %v2996 = vadd.f32 %v2994, %v2995
      %v2997 = vsel %vm328, %v2962, 0.0
      %v2998 = vadd.f32 %v2996, %v2997
      %v2999 = vsel %vm328, %v2963, 0.0
      %v3000 = vadd.f32 %v2998, %v2999
      %v3001 = vsel %vm328, %v2964, 0.0
      %v3002 = vadd.f32 %v3000, %v3001
      %v3003 = vsel %vm328, %v2965, 0.0
      %v3004 = vadd.f32 %v3002, %v3003
      %v3005 = vsel %vm328, %v2966, 0.0
      %v3006 = vadd.f32 %v3004, %v3005
      %v3007 = vsel %vm328, %v2967, 0.0
      %v3008 = vadd.f32 %v3006, %v3007
      %v3009 = vsel %vm328, %v2968, 0.0
      %v3010 = vadd.f32 %v3008, %v3009
      %v3011 = vsel %vm328, %v2969, 0.0
      %v3012 = vadd.f32 %v3010, %v3011
      %v3013 = vsel %vm328, %v2970, 0.0
      %v3014 = vadd.f32 %v3012, %v3013
      %v3015 = vsel %vm328, %v2971, 0.0
      %v3016 = vadd.f32 %v3014, %v3015
      %v3017 = vsel %vm328, %v2972, 0.0
      %v3018 = vadd.f32 %v3016, %v3017
      %v3019 = vsel %vm328, %v2973, 0.0
      %v3020 = vadd.f32 %v3018, %v3019
      %v3021 = vsel %vm328, %v2974, 0.0
      %v3022 = vadd.f32 %v3020, %v3021
      %v3023 = vsel %vm328, %v2975, 0.0
      %v3024 = vadd.f32 %v3022, %v3023
      %v3025 = vsel %vm328, %v2976, 0.0
      %v3026 = vadd.f32 %v3024, %v3025
      %v3027 = vsel %vm328, %v2977, 0.0
      %v3028 = vadd.f32 %v3026, %v3027
      %v3029 = vsel %vm328, %v2978, 0.0
      %v3030 = vadd.f32 %v3028, %v3029
      %v3031 = vsel %vm328, %v2979, 0.0
      %v3032 = vadd.f32 %v3030, %v3031
      %v3033 = vsel %vm328, %v2980, 0.0
      %v3034 = vadd.f32 %v3032, %v3033
      %v3035 = vsel %vm328, %v2981, 0.0
      %v3036 = vadd.f32 %v3034, %v3035
      %v3037 = vsel %vm328, %v2982, 0.0
      %v3038 = vadd.f32 %v3036, %v3037
      %v3039 = vsel %vm328, %v2983, 0.0
      %v3040 = vadd.f32 %v3038, %v3039
      %v3041 = vsel %vm328, %v2984, 0.0
      %v3042 = vadd.f32 %v3040, %v3041
      %v3043 = vsel %vm328, %v2985, 0.0
      %v3044 = vadd.f32 %v3042, %v3043
      %v3045 = vsel %vm328, %v2986, 0.0
      %v3046 = vadd.f32 %v3044, %v3045
      %v3047 = vsel %vm328, %v2987, 0.0
      %v3048 = vadd.f32 %v3046, %v3047
      %v3049 = vsel %vm328, %v2988, 0.0
      %v3050 = vadd.f32 %v3048, %v3049
      %v3051 = vsel %vm328, %v2989, 0.0
      %v3052 = vadd.f32 %v3050, %v3051
      %v3053 = vrot.slane %v3052, 4
      %v3054 = vadd.f32 %v3052, %v3053
      %v3055 = vrot.slane %v3054, 2
      %v3056 = vadd.f32 %v3054, %v3055
      %v3057 = vrot.slane %v3056, 1
      %v3058 = vadd.f32 %v3056, %v3057
      %v3059 = vadd.f32 %v2957, %v3058
      %3060 = vst.msk [vmem:[%s5] sm:$0x1] %vm2955, %v3059
      %p3061 = scmp.lt.s32.totalorder %s17, 1
      %s3062 = scalar_select %p3061, %s17, 1
      %s3063 = smul.addr %s3062, 32
      %s3064 = smul.addr %s3063, 8
      %s3065 = scalar_lea.vmem %s3, %s3064
      // Predicated region
      $region37: #{conv_block_forward.6} parent=31 // pred_check
        %p3066 = pneg %p103
      $region38: #{conv_block_forward.6} parent=31 // pred_check_branch
        %3068 = sbr.rel (%p3066) target = $region40
      $region39: #{conv_block_forward.6} parent=31 // pred_region
        _
      $region40: #{conv_block_forward.6} parent=31 // pred_fallthru
        _
      // Predicated region
      $region41: #{conv_block_forward.6} parent=31 // pred_check
        %p3069 = pneg %p124
      $region42: #{conv_block_forward.6} parent=31 // pred_check_branch
        %3071 = sbr.rel (%p3069) target = $region44
      $region43: #{conv_block_forward.6} parent=31 // pred_region
        _
      $region44: #{conv_block_forward.6} parent=31 // pred_fallthru
        _
      // Predicated region
      $region45: #{conv_block_forward.6} parent=31 // pred_check
        %p3072 = pneg %p145
      $region46: #{conv_block_forward.6} parent=31 // pred_check_branch
        %3074 = sbr.rel (%p3072) target = $region48
      $region47: #{conv_block_forward.6} parent=31 // pred_region
        _
      $region48: #{conv_block_forward.6} parent=31 // pred_fallthru
        _
      // Predicated region
      $region49: #{conv_block_forward.6} parent=31 // pred_check
        %p3075 = pneg %p124
      $region50: #{conv_block_forward.6} parent=31 // pred_check_branch
        %3077 = sbr.rel (%p3075) target = $region52
      $region51: #{conv_block_forward.6} parent=31 // pred_region
        _
      $region52: #{conv_block_forward.6} parent=31 // pred_fallthru
        _
      // Predicated region
      $region53: #{conv_block_forward.6} parent=31 // pred_check
        %p3078 = pneg %p145
      $region54: #{conv_block_forward.6} parent=31 // pred_check_branch
        %3080 = sbr.rel (%p3078) target = $region56
      $region55: #{conv_block_forward.6} parent=31 // pred_region
        _
      $region56: #{conv_block_forward.6} parent=31 // pred_fallthru
        _
    $region32: #{conv_block_forward.6} parent=5 // pred_fallthru
      _
    %p3081 = scmp.le.s32.totalorder 2, %s12
    // Predicated region
    $region57: #{conv_block_forward.6} parent=5 // pred_check
      %p3082 = pneg %p3081
    $region58: #{conv_block_forward.6} parent=5 // pred_check_branch
      %3084 = sbr.rel (%p3082) target = $region60
    $region59: #{conv_block_forward.6} parent=5 // pred_region
      %s3085 = ssub.s32 %s12, 2
      // Predicated region
      $region61: #{conv_block_forward.6} parent=59 // pred_check
        %p3086 = pneg %p109
      $region62: #{conv_block_forward.6} parent=59 // pred_check_branch
        %3088 = sbr.rel (%p3086) target = $region64
      $region63: #{conv_block_forward.6} parent=59 // pred_region
        %p3089 = scmp.lt.s32.totalorder %s18, 1
        %s3090 = scalar_select %p3089, %s18, 1
        %s3091 = smul.addr %s3090, 32
        %s3092 = smul.addr %s3091, 8
        %s3093 = scalar_lea.vmem %s3, %s3092
      $region64: #{conv_block_forward.6} parent=59 // pred_fallthru
        _
    $region60: #{conv_block_forward.6} parent=5 // pred_fallthru
      _
  $region6: #{conv_block_forward.6} parent=0 // loop_footer
    %s16 = sadd.s32 1, %s12
  $region7: #{conv_block_forward.6} parent=0 // loop_footer_branch
    %11 = sbr.rel target = $region3
  $region8: #{conv_block_forward.6} parent=0 // loop_exit
    _

</llo_original>
